<compile_context>
chip_gen: v7x
topology: tpu7x:2x2x1
jax: 0.10.0
libtpu: 0.0.40
codegen_flags: <defaults>
</compile_context>

<pallas_src>
import functools

import jax
import jax.numpy as jnp
from jax import lax
from jax.experimental import pallas as pl
from jax.experimental.pallas import tpu as pltpu


# ----------------------------------------------------------------------------
# Pallas kernels
# ----------------------------------------------------------------------------
def _gemm_bn_relu_kernel(x_ref, w_ref, g_ref, b_ref, o_ref, *, groups, eps):
    """out = ReLU(BatchNorm(x @ w)) with training-mode batch statistics.

    x: (M, K) f32, w: (K, Cg) f32, g/b: (1, Cg) f32 (already tiled per column).
    Columns are ordered (phase, channel) with `groups` phases of Cg//groups
    channels each; BN statistics are pooled across phases of the same channel
    (groups == 1 is a plain conv / per-column BN).
    """
    K = x_ref.shape[1]
    Cg = w_ref.shape[1]
    Co = Cg // groups
    M = x_ref.shape[0]

    if K <= 8:
        # Tiny contraction (conv1, K=4): VPU FMA loop, skip the MXU entirely.
        x = x_ref[...]
        w = w_ref[...]
        acc = x[:, 0:1] * w[0:1, :]
        for j in range(1, K):
            acc = acc + x[:, j:j + 1] * w[j:j + 1, :]
    else:
        acc = jnp.dot(x_ref[...].astype(jnp.bfloat16),
                      w_ref[...].astype(jnp.bfloat16),
                      preferred_element_type=jnp.float32)

    cnt = float(M * groups)

    def pool(v):  # (1, Cg): sum over the `groups` phases of each channel.
        if groups == 1:
            return v
        p = v[:, 0:Co]
        for g in range(1, groups):
            p = p + v[:, g * Co:(g + 1) * Co]
        return jnp.concatenate([p] * groups, axis=1)

    mean = pool(jnp.sum(acc, axis=0, keepdims=True)) * (1.0 / cnt)
    d = acc - mean                                   # centered -> stable var
    var = pool(jnp.sum(d * d, axis=0, keepdims=True)) * (1.0 / cnt)
    inv = lax.rsqrt(var + eps)                       # EUP
    y = d * inv * g_ref[...] + b_ref[...]
    o_ref[...] = jnp.maximum(y, 0.0)                 # ReLU


def _bottleneck_kernel(x_ref, w1_ref, b1_ref, w2_ref, b2_ref, o_ref):
    """Fused encoder-FC + decoder-FC: (x @ W1 + b1) @ W2 + b2."""
    h = jnp.dot(x_ref[...].astype(jnp.bfloat16),
                w1_ref[...].astype(jnp.bfloat16),
                preferred_element_type=jnp.float32) + b1_ref[...]
    y = jnp.dot(h.astype(jnp.bfloat16),
                w2_ref[...].astype(jnp.bfloat16),
                preferred_element_type=jnp.float32) + b2_ref[...]
    o_ref[...] = y


# ----------------------------------------------------------------------------
# pallas_call wrappers (full-array blocks, no host padding)
# ----------------------------------------------------------------------------
def _gemm_bn_relu(x, w2d, gamma_row, beta_row, groups):
    M, K = x.shape
    Cg = w2d.shape[1]
    kern = functools.partial(_gemm_bn_relu_kernel, groups=groups, eps=1e-5)
    return pl.pallas_call(
        kern,
        out_shape=jax.ShapeDtypeStruct((M, Cg), jnp.float32),
        grid=(1,),
        in_specs=[pl.BlockSpec((M, K), lambda i: (0, 0)),
                  pl.BlockSpec((K, Cg), lambda i: (0, 0)),
                  pl.BlockSpec((1, Cg), lambda i: (0, 0)),
                  pl.BlockSpec((1, Cg), lambda i: (0, 0))],
        out_specs=pl.BlockSpec((M, Cg), lambda i: (0, 0)),
        compiler_params=pltpu.CompilerParams(
            dimension_semantics=("arbitrary",)),
    )(x, w2d, gamma_row, beta_row)


def _bottleneck(x, w1, b1, w2, b2):
    M, D1 = x.shape
    Dh = w1.shape[1]
    D2 = w2.shape[1]
    return pl.pallas_call(
        _bottleneck_kernel,
        out_shape=jax.ShapeDtypeStruct((M, D2), jnp.float32),
        grid=(1,),
        in_specs=[pl.BlockSpec((M, D1), lambda i: (0, 0)),
                  pl.BlockSpec((D1, Dh), lambda i: (0, 0)),
                  pl.BlockSpec((1, Dh), lambda i: (0, 0)),
                  pl.BlockSpec((Dh, D2), lambda i: (0, 0)),
                  pl.BlockSpec((1, D2), lambda i: (0, 0))],
        out_specs=pl.BlockSpec((M, D2), lambda i: (0, 0)),
        compiler_params=pltpu.CompilerParams(
            dimension_semantics=("arbitrary",)),
    )(x, w1, b1, w2, b2)


# ----------------------------------------------------------------------------
# Minimal NHWC glue (slices / reshapes only; no NCHW<->NHWC transposes)
# ----------------------------------------------------------------------------
def _im2col_nhwc(x, k, s):
    """x: (N,H,W,C) NHWC -> (N*Ho*Wo, k*k*C), column order (ky, kx, c)."""
    N, H, W, C = x.shape
    Ho = (H - k) // s + 1
    Wo = (W - k) // s + 1
    cols = [x[:, dy:dy + s * Ho:s, dx:dx + s * Wo:s, :]
            for dy in range(k) for dx in range(k)]
    p = jnp.concatenate(cols, axis=-1)              # (N, Ho, Wo, k*k*C)
    return p.reshape(N * Ho * Wo, k * k * C), (N, Ho, Wo)


def _pixel_shuffle(y2d, N, H, W, k, Co):
    """(N*H*W, k*k*Co) with cols (ky,kx,co) -> NHWC (N, H*k, W*k, Co)."""
    y = y2d.reshape(N, H, W, k, k, Co)
    y = y.transpose(0, 1, 3, 2, 4, 5)               # (N, H, ky, W, kx, Co)
    return y.reshape(N, H * k, W * k, Co)


def _dilate2d_nhwc(x, s):
    N, H, W, C = x.shape
    Hd, Wd = (H - 1) * s + 1, (W - 1) * s + 1
    return jnp.zeros((N, Hd, Wd, C), x.dtype).at[:, ::s, ::s, :].set(x)


# ----------------------------------------------------------------------------
# Parameters (PyTorch layout) and one-time conversion to kernel layout
# ----------------------------------------------------------------------------
def init_params():
    keys = jax.random.split(jax.random.PRNGKey(0), 32)
    ki = iter(range(32))

    def w(shape, scale=0.1):
        return scale * jax.random.normal(keys[next(ki)], shape, jnp.float32)

    def bn(c):
        gamma = 1.0 + 0.1 * jax.random.normal(keys[next(ki)], (c,), jnp.float32)
        beta = 0.1 * jax.random.normal(keys[next(ki)], (c,), jnp.float32)
        return gamma, beta

    p = {}
    # Encoder (PyTorch layouts)
    p["conv1_w"] = w((32, 1, 2, 2));    p["bn1_g"], p["bn1_b"] = bn(32)
    p["conv2_w"] = w((64, 32, 2, 2));   p["bn2_g"], p["bn2_b"] = bn(64)
    p["conv3_w"] = w((128, 64, 3, 3));  p["bn3_g"], p["bn3_b"] = bn(128)
    p["enc_fc_w"] = w((10, 1152));      p["enc_fc_b"] = w((10,))
    # Decoder
    p["dec_fc_w"] = w((1152, 10));      p["dec_fc_b"] = w((1152,))
    p["dconv3_w"] = w((128, 64, 3, 3)); p["dbn3_g"], p["dbn3_b"] = bn(64)
    p["dconv2_w"] = w((64, 32, 2, 2));  p["dbn2_g"], p["dbn2_b"] = bn(32)
    p["dconv1_w"] = w((32, 1, 2, 2));   p["dbn1_g"], p["dbn1_b"] = bn(1)
    return p


def prepare_params(p):
    """One-time conversion of PyTorch-layout weights to GEMM/NHWC layout."""
    row = lambda v: v.reshape(1, -1)
    kp = {}
    # Encoder convs: w (Co,Ci,k,k) -> (k*k*Ci, Co), rows ordered (ky,kx,ci).
    kp["c1_w"] = p["conv1_w"].transpose(2, 3, 1, 0).reshape(2 * 2 * 1, 32)
    kp["c1_g"], kp["c1_b"] = row(p["bn1_g"]), row(p["bn1_b"])
    kp["c2_w"] = p["conv2_w"].transpose(2, 3, 1, 0).reshape(2 * 2 * 32, 64)
    kp["c2_g"], kp["c2_b"] = row(p["bn2_g"]), row(p["bn2_b"])
    kp["c3_w"] = p["conv3_w"].transpose(2, 3, 1, 0).reshape(3 * 3 * 64, 128)
    kp["c3_g"], kp["c3_b"] = row(p["bn3_g"]), row(p["bn3_b"])
    # Encoder FC: PyTorch flattens NCHW (c*9+h*3+w); our flatten is NHWC.
    kp["fc1_w"] = (p["enc_fc_w"].reshape(10, 128, 3, 3)
                   .transpose(2, 3, 1, 0).reshape(1152, 10))
    kp["fc1_b"] = row(p["enc_fc_b"])
    # Decoder FC: permute output rows so the result is already NHWC-flattened.
    kp["fc2_w"] = (p["dec_fc_w"].reshape(128, 3, 3, 10)
                   .transpose(1, 2, 0, 3).reshape(1152, 10).T)
    kp["fc2_b"] = row(p["dec_fc_b"].reshape(128, 3, 3)
                      .transpose(1, 2, 0).reshape(1152))
    # deconv3 (k=3,s=2, overlapping): stride-1 conv over dilated+padded input
    # with the spatially flipped kernel.  wt (Ci,Co,k,k).
    kp["d3_w"] = (jnp.flip(p["dconv3_w"], axis=(2, 3))
                  .transpose(2, 3, 0, 1).reshape(3 * 3 * 128, 64))
    kp["d3_g"], kp["d3_b"] = row(p["dbn3_g"]), row(p["dbn3_b"])
    # deconv2 / deconv1 (k == s == 2): dense sub-pixel GEMM, cols (ky,kx,co);
    # gamma/beta tiled across the 4 phases for the grouped-BN kernel.
    kp["d2_w"] = p["dconv2_w"].transpose(0, 2, 3, 1).reshape(64, 2 * 2 * 32)
    kp["d2_g"] = row(jnp.tile(p["dbn2_g"], 4))
    kp["d2_b"] = row(jnp.tile(p["dbn2_b"], 4))
    kp["d1_w"] = p["dconv1_w"].transpose(0, 2, 3, 1).reshape(32, 2 * 2 * 1)
    kp["d1_g"] = row(jnp.tile(p["dbn1_g"], 4))
    kp["d1_b"] = row(jnp.tile(p["dbn1_b"], 4))
    return kp


# ----------------------------------------------------------------------------
# Forward pass
# ----------------------------------------------------------------------------
def cae_forward(kp, x_nchw):
    N = x_nchw.shape[0]
    x = x_nchw.reshape(N, 28, 28, 1)                 # C=1: pure reshape to NHWC

    # ---- Encoder ----
    p1, _ = _im2col_nhwc(x, 2, 2)                    # (N*196, 4)
    a1 = _gemm_bn_relu(p1, kp["c1_w"], kp["c1_g"], kp["c1_b"], 1)
    a1 = a1.reshape(N, 14, 14, 32)
    p2, _ = _im2col_nhwc(a1, 2, 2)                   # (N*49, 128)
    a2 = _gemm_bn_relu(p2, kp["c2_w"], kp["c2_g"], kp["c2_b"], 1)
    a2 = a2.reshape(N, 7, 7, 64)
    p3, _ = _im2col_nhwc(a2, 3, 2)                   # (N*9, 576)
    a3 = _gemm_bn_relu(p3, kp["c3_w"], kp["c3_g"], kp["c3_b"], 1)  # (N*9, 128)
    flat = a3.reshape(N, 1152)                       # NHWC flatten

    # ---- Bottleneck (encoder Linear + decoder Linear fused) ----
    z = _bottleneck(flat, kp["fc1_w"], kp["fc1_b"], kp["fc2_w"], kp["fc2_b"])

    # ---- Decoder ----
    d = z.reshape(N, 3, 3, 128)                      # NHWC
    # deconv3: k=3, s=2 (overlapping) -> dilate + pad + stride-1 conv GEMM.
    xd = jnp.pad(_dilate2d_nhwc(d, 2), ((0, 0), (2, 2), (2, 2), (0, 0)))
    pd3, _ = _im2col_nhwc(xd, 3, 1)                  # (N*49, 1152)
    d3 = _gemm_bn_relu(pd3, kp["d3_w"], kp["d3_g"], kp["d3_b"], 1)
    d3 = d3.reshape(N, 7, 7, 64)
    # deconv2: k==s -> dense GEMM over undilated input + pixel shuffle.
    d2 = _gemm_bn_relu(d3.reshape(N * 49, 64),
                       kp["d2_w"], kp["d2_g"], kp["d2_b"], 4)
    d2 = _pixel_shuffle(d2, N, 7, 7, 2, 32)          # (N,14,14,32)
    # deconv1: k==s, Co=1.
    d1 = _gemm_bn_relu(d2.reshape(N * 196, 32),
                       kp["d1_w"], kp["d1_g"], kp["d1_b"], 4)
    d1 = _pixel_shuffle(d1, N, 14, 14, 2, 1)         # (N,28,28,1)

    return d1.reshape(N, 1, 28, 28)                  # C=1: pure reshape to NCHW


if __name__ == "__main__":
    params = init_params()
    kparams = prepare_params(params)
    x = jax.random.normal(jax.random.PRNGKey(0), (2, 1, 28, 28), jnp.float32)
    y = jax.jit(cae_forward)(kparams, x)
    jax.block_until_ready(y)
    assert y.shape == (2, 1, 28, 28), y.shape
    assert bool(jnp.all(jnp.isfinite(y)))
    print("KERNEL_OK")
</pallas_src>

<mosaic_0001>
module attributes {stable_mosaic.version = 11 : i64} {
  func.func @_gemm_bn_relu_kernel(%arg0: i32, %arg1: memref<392x4xf32, #tpu.memory_space<vmem>>, %arg2: memref<4x32xf32, #tpu.memory_space<vmem>>, %arg3: memref<1x32xf32, #tpu.memory_space<vmem>>, %arg4: memref<1x32xf32, #tpu.memory_space<vmem>>, %arg5: memref<392x32xf32, #tpu.memory_space<vmem>>) attributes {dimension_semantics = [#tpu.dimension_semantics<arbitrary>], iteration_bounds = array<i64: 1>, scalar_prefetch = 0 : i64, scratch_operands = 0 : i64, tpu.core_type = #tpu.core_type<tc>, window_params = [{pipeline_mode = #tpu.pipeline_mode<synchronous>, transform_indices = @transform_0, window_bounds = array<i64: 392, 4>}, {pipeline_mode = #tpu.pipeline_mode<synchronous>, transform_indices = @transform_1, window_bounds = array<i64: 4, 32>}, {pipeline_mode = #tpu.pipeline_mode<synchronous>, transform_indices = @transform_2, window_bounds = array<i64: 1, 32>}, {pipeline_mode = #tpu.pipeline_mode<synchronous>, transform_indices = @transform_3, window_bounds = array<i64: 1, 32>}, {pipeline_mode = #tpu.pipeline_mode<synchronous>, transform_indices = @transform_4, window_bounds = array<i64: 392, 32>}]} {
    %c0 = arith.constant 0 : index
    %c0_0 = arith.constant 0 : index
    %0 = vector.load %arg1[%c0, %c0_0] : memref<392x4xf32, #tpu.memory_space<vmem>>, vector<392x4xf32>
    %c0_1 = arith.constant 0 : index
    %c0_2 = arith.constant 0 : index
    %1 = vector.load %arg2[%c0_1, %c0_2] : memref<4x32xf32, #tpu.memory_space<vmem>>, vector<4x32xf32>
    %2 = vector.extract_strided_slice %0 {offsets = [0, 0], sizes = [392, 1], strides = [1, 1]} : vector<392x4xf32> to vector<392x1xf32>
    %3 = vector.extract_strided_slice %1 {offsets = [0, 0], sizes = [1, 32], strides = [1, 1]} : vector<4x32xf32> to vector<1x32xf32>
    %4 = vector.broadcast %2 : vector<392x1xf32> to vector<392x32xf32>
    %5 = vector.broadcast %3 : vector<1x32xf32> to vector<392x32xf32>
    %6 = arith.mulf %4, %5 : vector<392x32xf32>
    %7 = vector.extract_strided_slice %0 {offsets = [0, 1], sizes = [392, 1], strides = [1, 1]} : vector<392x4xf32> to vector<392x1xf32>
    %8 = vector.extract_strided_slice %1 {offsets = [1, 0], sizes = [1, 32], strides = [1, 1]} : vector<4x32xf32> to vector<1x32xf32>
    %9 = vector.broadcast %7 : vector<392x1xf32> to vector<392x32xf32>
    %10 = vector.broadcast %8 : vector<1x32xf32> to vector<392x32xf32>
    %11 = arith.mulf %9, %10 : vector<392x32xf32>
    %12 = arith.addf %6, %11 : vector<392x32xf32>
    %13 = vector.extract_strided_slice %0 {offsets = [0, 2], sizes = [392, 1], strides = [1, 1]} : vector<392x4xf32> to vector<392x1xf32>
    %14 = vector.extract_strided_slice %1 {offsets = [2, 0], sizes = [1, 32], strides = [1, 1]} : vector<4x32xf32> to vector<1x32xf32>
    %15 = vector.broadcast %13 : vector<392x1xf32> to vector<392x32xf32>
    %16 = vector.broadcast %14 : vector<1x32xf32> to vector<392x32xf32>
    %17 = arith.mulf %15, %16 : vector<392x32xf32>
    %18 = arith.addf %12, %17 : vector<392x32xf32>
    %19 = vector.extract_strided_slice %0 {offsets = [0, 3], sizes = [392, 1], strides = [1, 1]} : vector<392x4xf32> to vector<392x1xf32>
    %20 = vector.extract_strided_slice %1 {offsets = [3, 0], sizes = [1, 32], strides = [1, 1]} : vector<4x32xf32> to vector<1x32xf32>
    %21 = vector.broadcast %19 : vector<392x1xf32> to vector<392x32xf32>
    %22 = vector.broadcast %20 : vector<1x32xf32> to vector<392x32xf32>
    %23 = arith.mulf %21, %22 : vector<392x32xf32>
    %24 = arith.addf %18, %23 : vector<392x32xf32>
    %cst = arith.constant dense<0.000000e+00> : vector<32xf32>
    %25 = vector.multi_reduction <add>, %24, %cst [0] : vector<392x32xf32> to vector<32xf32>
    %26 = vector.shape_cast %25 : vector<32xf32> to vector<1x32xf32>
    %cst_3 = arith.constant 0.00255102036 : f32
    %27 = vector.broadcast %cst_3 : f32 to vector<1x32xf32>
    %28 = arith.mulf %26, %27 : vector<1x32xf32>
    %29 = vector.broadcast %28 : vector<1x32xf32> to vector<392x32xf32>
    %30 = arith.subf %24, %29 : vector<392x32xf32>
    %31 = arith.mulf %30, %30 : vector<392x32xf32>
    %cst_4 = arith.constant dense<0.000000e+00> : vector<32xf32>
    %32 = vector.multi_reduction <add>, %31, %cst_4 [0] : vector<392x32xf32> to vector<32xf32>
    %33 = vector.shape_cast %32 : vector<32xf32> to vector<1x32xf32>
    %cst_5 = arith.constant 0.00255102036 : f32
    %34 = vector.broadcast %cst_5 : f32 to vector<1x32xf32>
    %35 = arith.mulf %33, %34 : vector<1x32xf32>
    %cst_6 = arith.constant 9.99999974E-6 : f32
    %36 = vector.broadcast %cst_6 : f32 to vector<1x32xf32>
    %37 = arith.addf %35, %36 : vector<1x32xf32>
    %38 = math.rsqrt %37 : vector<1x32xf32>
    %39 = vector.broadcast %38 : vector<1x32xf32> to vector<392x32xf32>
    %40 = arith.mulf %30, %39 : vector<392x32xf32>
    %c0_7 = arith.constant 0 : index
    %c0_8 = arith.constant 0 : index
    %41 = vector.load %arg3[%c0_7, %c0_8] : memref<1x32xf32, #tpu.memory_space<vmem>>, vector<1x32xf32>
    %42 = vector.broadcast %41 : vector<1x32xf32> to vector<392x32xf32>
    %43 = arith.mulf %40, %42 : vector<392x32xf32>
    %c0_9 = arith.constant 0 : index
    %c0_10 = arith.constant 0 : index
    %44 = vector.load %arg4[%c0_9, %c0_10] : memref<1x32xf32, #tpu.memory_space<vmem>>, vector<1x32xf32>
    %45 = vector.broadcast %44 : vector<1x32xf32> to vector<392x32xf32>
    %46 = arith.addf %43, %45 : vector<392x32xf32>
    %cst_11 = arith.constant 0.000000e+00 : f32
    %47 = vector.broadcast %cst_11 : f32 to vector<392x32xf32>
    %48 = arith.maximumf %46, %47 : vector<392x32xf32>
    %c0_12 = arith.constant 0 : index
    %c0_13 = arith.constant 0 : index
    %49 = vector.load %arg5[%c0_12, %c0_13] : memref<392x32xf32, #tpu.memory_space<vmem>>, vector<392x32xf32>
    tpu.vector_store %arg5[%c0_12, %c0_13], %48 {strides = array<i32>} : memref<392x32xf32, #tpu.memory_space<vmem>>, vector<392x32xf32>,
    return
  }
  func.func @transform_0(%arg0: i32) -> (i32, i32) {
    %c0_i32 = arith.constant 0 : i32
    %c0_i32_0 = arith.constant 0 : i32
    %c0_i32_1 = arith.constant 0 : i32
    return %c0_i32, %c0_i32_0 : i32, i32
  }
  func.func @transform_1(%arg0: i32) -> (i32, i32) {
    %c0_i32 = arith.constant 0 : i32
    %c0_i32_0 = arith.constant 0 : i32
    %c0_i32_1 = arith.constant 0 : i32
    return %c0_i32, %c0_i32_0 : i32, i32
  }
  func.func @transform_2(%arg0: i32) -> (i32, i32) {
    %c0_i32 = arith.constant 0 : i32
    %c0_i32_0 = arith.constant 0 : i32
    %c0_i32_1 = arith.constant 0 : i32
    return %c0_i32, %c0_i32_0 : i32, i32
  }
  func.func @transform_3(%arg0: i32) -> (i32, i32) {
    %c0_i32 = arith.constant 0 : i32
    %c0_i32_0 = arith.constant 0 : i32
    %c0_i32_1 = arith.constant 0 : i32
    return %c0_i32, %c0_i32_0 : i32, i32
  }
  func.func @transform_4(%arg0: i32) -> (i32, i32) {
    %c0_i32 = arith.constant 0 : i32
    %c0_i32_0 = arith.constant 0 : i32
    %c0_i32_1 = arith.constant 0 : i32
    return %c0_i32, %c0_i32_0 : i32, i32
  }
}

module attributes {stable_mosaic.version = 11 : i64} {
  func.func @_gemm_bn_relu_kernel(%arg0: i32, %arg1: memref<98x128xf32, #tpu.memory_space<vmem>>, %arg2: memref<128x64xf32, #tpu.memory_space<vmem>>, %arg3: memref<1x64xf32, #tpu.memory_space<vmem>>, %arg4: memref<1x64xf32, #tpu.memory_space<vmem>>, %arg5: memref<98x64xf32, #tpu.memory_space<vmem>>) attributes {dimension_semantics = [#tpu.dimension_semantics<arbitrary>], iteration_bounds = array<i64: 1>, scalar_prefetch = 0 : i64, scratch_operands = 0 : i64, tpu.core_type = #tpu.core_type<tc>, window_params = [{pipeline_mode = #tpu.pipeline_mode<synchronous>, transform_indices = @transform_0, window_bounds = array<i64: 98, 128>}, {pipeline_mode = #tpu.pipeline_mode<synchronous>, transform_indices = @transform_1, window_bounds = array<i64: 128, 64>}, {pipeline_mode = #tpu.pipeline_mode<synchronous>, transform_indices = @transform_2, window_bounds = array<i64: 1, 64>}, {pipeline_mode = #tpu.pipeline_mode<synchronous>, transform_indices = @transform_3, window_bounds = array<i64: 1, 64>}, {pipeline_mode = #tpu.pipeline_mode<synchronous>, transform_indices = @transform_4, window_bounds = array<i64: 98, 64>}]} {
    %c0 = arith.constant 0 : index
    %c0_0 = arith.constant 0 : index
    %0 = vector.load %arg1[%c0, %c0_0] : memref<98x128xf32, #tpu.memory_space<vmem>>, vector<98x128xf32>
    %1 = arith.truncf %0 : vector<98x128xf32> to vector<98x128xbf16>
    %c0_1 = arith.constant 0 : index
    %c0_2 = arith.constant 0 : index
    %2 = vector.load %arg2[%c0_1, %c0_2] : memref<128x64xf32, #tpu.memory_space<vmem>>, vector<128x64xf32>
    %3 = arith.truncf %2 : vector<128x64xf32> to vector<128x64xbf16>
    %cst = arith.constant dense<0.000000e+00> : vector<98x64xf32>
    %4 = tpu.matmul %1, %3, %cst {dimension_numbers = #tpu.dot_dimension_numbers<[1], [0], [0], [1], [0, 0, 1, 1], [], []>} : vector<98x128xbf16>, vector<128x64xbf16>, vector<98x64xf32> -> vector<98x64xf32>
    %cst_3 = arith.constant dense<0.000000e+00> : vector<64xf32>
    %5 = vector.multi_reduction <add>, %4, %cst_3 [0] : vector<98x64xf32> to vector<64xf32>
    %6 = vector.shape_cast %5 : vector<64xf32> to vector<1x64xf32>
    %cst_4 = arith.constant 0.0102040814 : f32
    %7 = vector.broadcast %cst_4 : f32 to vector<1x64xf32>
    %8 = arith.mulf %6, %7 : vector<1x64xf32>
    %9 = vector.broadcast %8 : vector<1x64xf32> to vector<98x64xf32>
    %10 = arith.subf %4, %9 : vector<98x64xf32>
    %11 = arith.mulf %10, %10 : vector<98x64xf32>
    %cst_5 = arith.constant dense<0.000000e+00> : vector<64xf32>
    %12 = vector.multi_reduction <add>, %11, %cst_5 [0] : vector<98x64xf32> to vector<64xf32>
    %13 = vector.shape_cast %12 : vector<64xf32> to vector<1x64xf32>
    %cst_6 = arith.constant 0.0102040814 : f32
    %14 = vector.broadcast %cst_6 : f32 to vector<1x64xf32>
    %15 = arith.mulf %13, %14 : vector<1x64xf32>
    %cst_7 = arith.constant 9.99999974E-6 : f32
    %16 = vector.broadcast %cst_7 : f32 to vector<1x64xf32>
    %17 = arith.addf %15, %16 : vector<1x64xf32>
    %18 = math.rsqrt %17 : vector<1x64xf32>
    %19 = vector.broadcast %18 : vector<1x64xf32> to vector<98x64xf32>
    %20 = arith.mulf %10, %19 : vector<98x64xf32>
    %c0_8 = arith.constant 0 : index
    %c0_9 = arith.constant 0 : index
    %21 = vector.load %arg3[%c0_8, %c0_9] : memref<1x64xf32, #tpu.memory_space<vmem>>, vector<1x64xf32>
    %22 = vector.broadcast %21 : vector<1x64xf32> to vector<98x64xf32>
    %23 = arith.mulf %20, %22 : vector<98x64xf32>
    %c0_10 = arith.constant 0 : index
    %c0_11 = arith.constant 0 : index
    %24 = vector.load %arg4[%c0_10, %c0_11] : memref<1x64xf32, #tpu.memory_space<vmem>>, vector<1x64xf32>
    %25 = vector.broadcast %24 : vector<1x64xf32> to vector<98x64xf32>
    %26 = arith.addf %23, %25 : vector<98x64xf32>
    %cst_12 = arith.constant 0.000000e+00 : f32
    %27 = vector.broadcast %cst_12 : f32 to vector<98x64xf32>
    %28 = arith.maximumf %26, %27 : vector<98x64xf32>
    %c0_13 = arith.constant 0 : index
    %c0_14 = arith.constant 0 : index
    %29 = vector.load %arg5[%c0_13, %c0_14] : memref<98x64xf32, #tpu.memory_space<vmem>>, vector<98x64xf32>
    tpu.vector_store %arg5[%c0_13, %c0_14], %28 {strides = array<i32>} : memref<98x64xf32, #tpu.memory_space<vmem>>, vector<98x64xf32>,
    return
  }
  func.func @transform_0(%arg0: i32) -> (i32, i32) {
    %c0_i32 = arith.constant 0 : i32
    %c0_i32_0 = arith.constant 0 : i32
    %c0_i32_1 = arith.constant 0 : i32
    return %c0_i32, %c0_i32_0 : i32, i32
  }
  func.func @transform_1(%arg0: i32) -> (i32, i32) {
    %c0_i32 = arith.constant 0 : i32
    %c0_i32_0 = arith.constant 0 : i32
    %c0_i32_1 = arith.constant 0 : i32
    return %c0_i32, %c0_i32_0 : i32, i32
  }
  func.func @transform_2(%arg0: i32) -> (i32, i32) {
    %c0_i32 = arith.constant 0 : i32
    %c0_i32_0 = arith.constant 0 : i32
    %c0_i32_1 = arith.constant 0 : i32
    return %c0_i32, %c0_i32_0 : i32, i32
  }
  func.func @transform_3(%arg0: i32) -> (i32, i32) {
    %c0_i32 = arith.constant 0 : i32
    %c0_i32_0 = arith.constant 0 : i32
    %c0_i32_1 = arith.constant 0 : i32
    return %c0_i32, %c0_i32_0 : i32, i32
  }
  func.func @transform_4(%arg0: i32) -> (i32, i32) {
    %c0_i32 = arith.constant 0 : i32
    %c0_i32_0 = arith.constant 0 : i32
    %c0_i32_1 = arith.constant 0 : i32
    return %c0_i32, %c0_i32_0 : i32, i32
  }
}

module attributes {stable_mosaic.version = 11 : i64} {
  func.func @_gemm_bn_relu_kernel(%arg0: i32, %arg1: memref<18x576xf32, #tpu.memory_space<vmem>>, %arg2: memref<576x128xf32, #tpu.memory_space<vmem>>, %arg3: memref<1x128xf32, #tpu.memory_space<vmem>>, %arg4: memref<1x128xf32, #tpu.memory_space<vmem>>, %arg5: memref<18x128xf32, #tpu.memory_space<vmem>>) attributes {dimension_semantics = [#tpu.dimension_semantics<arbitrary>], iteration_bounds = array<i64: 1>, scalar_prefetch = 0 : i64, scratch_operands = 0 : i64, tpu.core_type = #tpu.core_type<tc>, window_params = [{pipeline_mode = #tpu.pipeline_mode<synchronous>, transform_indices = @transform_0, window_bounds = array<i64: 18, 576>}, {pipeline_mode = #tpu.pipeline_mode<synchronous>, transform_indices = @transform_1, window_bounds = array<i64: 576, 128>}, {pipeline_mode = #tpu.pipeline_mode<synchronous>, transform_indices = @transform_2, window_bounds = array<i64: 1, 128>}, {pipeline_mode = #tpu.pipeline_mode<synchronous>, transform_indices = @transform_3, window_bounds = array<i64: 1, 128>}, {pipeline_mode = #tpu.pipeline_mode<synchronous>, transform_indices = @transform_4, window_bounds = array<i64: 18, 128>}]} {
    %c0 = arith.constant 0 : index
    %c0_0 = arith.constant 0 : index
    %0 = vector.load %arg1[%c0, %c0_0] : memref<18x576xf32, #tpu.memory_space<vmem>>, vector<18x576xf32>
    %1 = arith.truncf %0 : vector<18x576xf32> to vector<18x576xbf16>
    %c0_1 = arith.constant 0 : index
    %c0_2 = arith.constant 0 : index
    %2 = vector.load %arg2[%c0_1, %c0_2] : memref<576x128xf32, #tpu.memory_space<vmem>>, vector<576x128xf32>
    %3 = arith.truncf %2 : vector<576x128xf32> to vector<576x128xbf16>
    %cst = arith.constant dense<0.000000e+00> : vector<18x128xf32>
    %4 = tpu.matmul %1, %3, %cst {dimension_numbers = #tpu.dot_dimension_numbers<[1], [0], [0], [1], [0, 0, 1, 1], [], []>} : vector<18x576xbf16>, vector<576x128xbf16>, vector<18x128xf32> -> vector<18x128xf32>
    %cst_3 = arith.constant dense<0.000000e+00> : vector<128xf32>
    %5 = vector.multi_reduction <add>, %4, %cst_3 [0] : vector<18x128xf32> to vector<128xf32>
    %6 = vector.shape_cast %5 : vector<128xf32> to vector<1x128xf32>
    %cst_4 = arith.constant 0.055555556 : f32
    %7 = vector.broadcast %cst_4 : f32 to vector<1x128xf32>
    %8 = arith.mulf %6, %7 : vector<1x128xf32>
    %9 = vector.broadcast %8 : vector<1x128xf32> to vector<18x128xf32>
    %10 = arith.subf %4, %9 : vector<18x128xf32>
    %11 = arith.mulf %10, %10 : vector<18x128xf32>
    %cst_5 = arith.constant dense<0.000000e+00> : vector<128xf32>
    %12 = vector.multi_reduction <add>, %11, %cst_5 [0] : vector<18x128xf32> to vector<128xf32>
    %13 = vector.shape_cast %12 : vector<128xf32> to vector<1x128xf32>
    %cst_6 = arith.constant 0.055555556 : f32
    %14 = vector.broadcast %cst_6 : f32 to vector<1x128xf32>
    %15 = arith.mulf %13, %14 : vector<1x128xf32>
    %cst_7 = arith.constant 9.99999974E-6 : f32
    %16 = vector.broadcast %cst_7 : f32 to vector<1x128xf32>
    %17 = arith.addf %15, %16 : vector<1x128xf32>
    %18 = math.rsqrt %17 : vector<1x128xf32>
    %19 = vector.broadcast %18 : vector<1x128xf32> to vector<18x128xf32>
    %20 = arith.mulf %10, %19 : vector<18x128xf32>
    %c0_8 = arith.constant 0 : index
    %c0_9 = arith.constant 0 : index
    %21 = vector.load %arg3[%c0_8, %c0_9] : memref<1x128xf32, #tpu.memory_space<vmem>>, vector<1x128xf32>
    %22 = vector.broadcast %21 : vector<1x128xf32> to vector<18x128xf32>
    %23 = arith.mulf %20, %22 : vector<18x128xf32>
    %c0_10 = arith.constant 0 : index
    %c0_11 = arith.constant 0 : index
    %24 = vector.load %arg4[%c0_10, %c0_11] : memref<1x128xf32, #tpu.memory_space<vmem>>, vector<1x128xf32>
    %25 = vector.broadcast %24 : vector<1x128xf32> to vector<18x128xf32>
    %26 = arith.addf %23, %25 : vector<18x128xf32>
    %cst_12 = arith.constant 0.000000e+00 : f32
    %27 = vector.broadcast %cst_12 : f32 to vector<18x128xf32>
    %28 = arith.maximumf %26, %27 : vector<18x128xf32>
    %c0_13 = arith.constant 0 : index
    %c0_14 = arith.constant 0 : index
    %29 = vector.load %arg5[%c0_13, %c0_14] : memref<18x128xf32, #tpu.memory_space<vmem>>, vector<18x128xf32>
    tpu.vector_store %arg5[%c0_13, %c0_14], %28 {strides = array<i32>} : memref<18x128xf32, #tpu.memory_space<vmem>>, vector<18x128xf32>,
    return
  }
  func.func @transform_0(%arg0: i32) -> (i32, i32) {
    %c0_i32 = arith.constant 0 : i32
    %c0_i32_0 = arith.constant 0 : i32
    %c0_i32_1 = arith.constant 0 : i32
    return %c0_i32, %c0_i32_0 : i32, i32
  }
  func.func @transform_1(%arg0: i32) -> (i32, i32) {
    %c0_i32 = arith.constant 0 : i32
    %c0_i32_0 = arith.constant 0 : i32
    %c0_i32_1 = arith.constant 0 : i32
    return %c0_i32, %c0_i32_0 : i32, i32
  }
  func.func @transform_2(%arg0: i32) -> (i32, i32) {
    %c0_i32 = arith.constant 0 : i32
    %c0_i32_0 = arith.constant 0 : i32
    %c0_i32_1 = arith.constant 0 : i32
    return %c0_i32, %c0_i32_0 : i32, i32
  }
  func.func @transform_3(%arg0: i32) -> (i32, i32) {
    %c0_i32 = arith.constant 0 : i32
    %c0_i32_0 = arith.constant 0 : i32
    %c0_i32_1 = arith.constant 0 : i32
    return %c0_i32, %c0_i32_0 : i32, i32
  }
  func.func @transform_4(%arg0: i32) -> (i32, i32) {
    %c0_i32 = arith.constant 0 : i32
    %c0_i32_0 = arith.constant 0 : i32
    %c0_i32_1 = arith.constant 0 : i32
    return %c0_i32, %c0_i32_0 : i32, i32
  }
}

module attributes {stable_mosaic.version = 11 : i64} {
  func.func @_bottleneck_kernel(%arg0: i32, %arg1: memref<2x1152xf32, #tpu.memory_space<vmem>>, %arg2: memref<1152x10xf32, #tpu.memory_space<vmem>>, %arg3: memref<1x10xf32, #tpu.memory_space<vmem>>, %arg4: memref<10x1152xf32, #tpu.memory_space<vmem>>, %arg5: memref<1x1152xf32, #tpu.memory_space<vmem>>, %arg6: memref<2x1152xf32, #tpu.memory_space<vmem>>) attributes {dimension_semantics = [#tpu.dimension_semantics<arbitrary>], iteration_bounds = array<i64: 1>, scalar_prefetch = 0 : i64, scratch_operands = 0 : i64, tpu.core_type = #tpu.core_type<tc>, window_params = [{pipeline_mode = #tpu.pipeline_mode<synchronous>, transform_indices = @transform_0, window_bounds = array<i64: 2, 1152>}, {pipeline_mode = #tpu.pipeline_mode<synchronous>, transform_indices = @transform_1, window_bounds = array<i64: 1152, 10>}, {pipeline_mode = #tpu.pipeline_mode<synchronous>, transform_indices = @transform_2, window_bounds = array<i64: 1, 10>}, {pipeline_mode = #tpu.pipeline_mode<synchronous>, transform_indices = @transform_3, window_bounds = array<i64: 10, 1152>}, {pipeline_mode = #tpu.pipeline_mode<synchronous>, transform_indices = @transform_4, window_bounds = array<i64: 1, 1152>}, {pipeline_mode = #tpu.pipeline_mode<synchronous>, transform_indices = @transform_5, window_bounds = array<i64: 2, 1152>}]} {
    %c0 = arith.constant 0 : index
    %c0_0 = arith.constant 0 : index
    %0 = vector.load %arg1[%c0, %c0_0] : memref<2x1152xf32, #tpu.memory_space<vmem>>, vector<2x1152xf32>
    %1 = arith.truncf %0 : vector<2x1152xf32> to vector<2x1152xbf16>
    %c0_1 = arith.constant 0 : index
    %c0_2 = arith.constant 0 : index
    %2 = vector.load %arg2[%c0_1, %c0_2] : memref<1152x10xf32, #tpu.memory_space<vmem>>, vector<1152x10xf32>
    %3 = arith.truncf %2 : vector<1152x10xf32> to vector<1152x10xbf16>
    %cst = arith.constant dense<0.000000e+00> : vector<2x10xf32>
    %4 = tpu.matmul %1, %3, %cst {dimension_numbers = #tpu.dot_dimension_numbers<[1], [0], [0], [1], [0, 0, 1, 1], [], []>} : vector<2x1152xbf16>, vector<1152x10xbf16>, vector<2x10xf32> -> vector<2x10xf32>
    %c0_3 = arith.constant 0 : index
    %c0_4 = arith.constant 0 : index
    %5 = vector.load %arg3[%c0_3, %c0_4] : memref<1x10xf32, #tpu.memory_space<vmem>>, vector<1x10xf32>
    %6 = vector.broadcast %5 : vector<1x10xf32> to vector<2x10xf32>
    %7 = arith.addf %4, %6 : vector<2x10xf32>
    %8 = arith.truncf %7 : vector<2x10xf32> to vector<2x10xbf16>
    %c0_5 = arith.constant 0 : index
    %c0_6 = arith.constant 0 : index
    %9 = vector.load %arg4[%c0_5, %c0_6] : memref<10x1152xf32, #tpu.memory_space<vmem>>, vector<10x1152xf32>
    %10 = arith.truncf %9 : vector<10x1152xf32> to vector<10x1152xbf16>
    %cst_7 = arith.constant dense<0.000000e+00> : vector<2x1152xf32>
    %11 = tpu.matmul %8, %10, %cst_7 {dimension_numbers = #tpu.dot_dimension_numbers<[1], [0], [0], [1], [0, 0, 1, 1], [], []>} : vector<2x10xbf16>, vector<10x1152xbf16>, vector<2x1152xf32> -> vector<2x1152xf32>
    %c0_8 = arith.constant 0 : index
    %c0_9 = arith.constant 0 : index
    %12 = vector.load %arg5[%c0_8, %c0_9] : memref<1x1152xf32, #tpu.memory_space<vmem>>, vector<1x1152xf32>
    %13 = vector.broadcast %12 : vector<1x1152xf32> to vector<2x1152xf32>
    %14 = arith.addf %11, %13 : vector<2x1152xf32>
    %c0_10 = arith.constant 0 : index
    %c0_11 = arith.constant 0 : index
    %15 = vector.load %arg6[%c0_10, %c0_11] : memref<2x1152xf32, #tpu.memory_space<vmem>>, vector<2x1152xf32>
    tpu.vector_store %arg6[%c0_10, %c0_11], %14 {strides = array<i32>} : memref<2x1152xf32, #tpu.memory_space<vmem>>, vector<2x1152xf32>,
    return
  }
  func.func @transform_0(%arg0: i32) -> (i32, i32) {
    %c0_i32 = arith.constant 0 : i32
    %c0_i32_0 = arith.constant 0 : i32
    %c0_i32_1 = arith.constant 0 : i32
    return %c0_i32, %c0_i32_0 : i32, i32
  }
  func.func @transform_1(%arg0: i32) -> (i32, i32) {
    %c0_i32 = arith.constant 0 : i32
    %c0_i32_0 = arith.constant 0 : i32
    %c0_i32_1 = arith.constant 0 : i32
    return %c0_i32, %c0_i32_0 : i32, i32
  }
  func.func @transform_2(%arg0: i32) -> (i32, i32) {
    %c0_i32 = arith.constant 0 : i32
    %c0_i32_0 = arith.constant 0 : i32
    %c0_i32_1 = arith.constant 0 : i32
    return %c0_i32, %c0_i32_0 : i32, i32
  }
  func.func @transform_3(%arg0: i32) -> (i32, i32) {
    %c0_i32 = arith.constant 0 : i32
    %c0_i32_0 = arith.constant 0 : i32
    %c0_i32_1 = arith.constant 0 : i32
    return %c0_i32, %c0_i32_0 : i32, i32
  }
  func.func @transform_4(%arg0: i32) -> (i32, i32) {
    %c0_i32 = arith.constant 0 : i32
    %c0_i32_0 = arith.constant 0 : i32
    %c0_i32_1 = arith.constant 0 : i32
    return %c0_i32, %c0_i32_0 : i32, i32
  }
  func.func @transform_5(%arg0: i32) -> (i32, i32) {
    %c0_i32 = arith.constant 0 : i32
    %c0_i32_0 = arith.constant 0 : i32
    %c0_i32_1 = arith.constant 0 : i32
    return %c0_i32, %c0_i32_0 : i32, i32
  }
}

module attributes {stable_mosaic.version = 11 : i64} {
  func.func @_gemm_bn_relu_kernel(%arg0: i32, %arg1: memref<98x1152xf32, #tpu.memory_space<vmem>>, %arg2: memref<1152x64xf32, #tpu.memory_space<vmem>>, %arg3: memref<1x64xf32, #tpu.memory_space<vmem>>, %arg4: memref<1x64xf32, #tpu.memory_space<vmem>>, %arg5: memref<98x64xf32, #tpu.memory_space<vmem>>) attributes {dimension_semantics = [#tpu.dimension_semantics<arbitrary>], iteration_bounds = array<i64: 1>, scalar_prefetch = 0 : i64, scratch_operands = 0 : i64, tpu.core_type = #tpu.core_type<tc>, window_params = [{pipeline_mode = #tpu.pipeline_mode<synchronous>, transform_indices = @transform_0, window_bounds = array<i64: 98, 1152>}, {pipeline_mode = #tpu.pipeline_mode<synchronous>, transform_indices = @transform_1, window_bounds = array<i64: 1152, 64>}, {pipeline_mode = #tpu.pipeline_mode<synchronous>, transform_indices = @transform_2, window_bounds = array<i64: 1, 64>}, {pipeline_mode = #tpu.pipeline_mode<synchronous>, transform_indices = @transform_3, window_bounds = array<i64: 1, 64>}, {pipeline_mode = #tpu.pipeline_mode<synchronous>, transform_indices = @transform_4, window_bounds = array<i64: 98, 64>}]} {
    %c0 = arith.constant 0 : index
    %c0_0 = arith.constant 0 : index
    %0 = vector.load %arg1[%c0, %c0_0] : memref<98x1152xf32, #tpu.memory_space<vmem>>, vector<98x1152xf32>
    %1 = arith.truncf %0 : vector<98x1152xf32> to vector<98x1152xbf16>
    %c0_1 = arith.constant 0 : index
    %c0_2 = arith.constant 0 : index
    %2 = vector.load %arg2[%c0_1, %c0_2] : memref<1152x64xf32, #tpu.memory_space<vmem>>, vector<1152x64xf32>
    %3 = arith.truncf %2 : vector<1152x64xf32> to vector<1152x64xbf16>
    %cst = arith.constant dense<0.000000e+00> : vector<98x64xf32>
    %4 = tpu.matmul %1, %3, %cst {dimension_numbers = #tpu.dot_dimension_numbers<[1], [0], [0], [1], [0, 0, 1, 1], [], []>} : vector<98x1152xbf16>, vector<1152x64xbf16>, vector<98x64xf32> -> vector<98x64xf32>
    %cst_3 = arith.constant dense<0.000000e+00> : vector<64xf32>
    %5 = vector.multi_reduction <add>, %4, %cst_3 [0] : vector<98x64xf32> to vector<64xf32>
    %6 = vector.shape_cast %5 : vector<64xf32> to vector<1x64xf32>
    %cst_4 = arith.constant 0.0102040814 : f32
    %7 = vector.broadcast %cst_4 : f32 to vector<1x64xf32>
    %8 = arith.mulf %6, %7 : vector<1x64xf32>
    %9 = vector.broadcast %8 : vector<1x64xf32> to vector<98x64xf32>
    %10 = arith.subf %4, %9 : vector<98x64xf32>
    %11 = arith.mulf %10, %10 : vector<98x64xf32>
    %cst_5 = arith.constant dense<0.000000e+00> : vector<64xf32>
    %12 = vector.multi_reduction <add>, %11, %cst_5 [0] : vector<98x64xf32> to vector<64xf32>
    %13 = vector.shape_cast %12 : vector<64xf32> to vector<1x64xf32>
    %cst_6 = arith.constant 0.0102040814 : f32
    %14 = vector.broadcast %cst_6 : f32 to vector<1x64xf32>
    %15 = arith.mulf %13, %14 : vector<1x64xf32>
    %cst_7 = arith.constant 9.99999974E-6 : f32
    %16 = vector.broadcast %cst_7 : f32 to vector<1x64xf32>
    %17 = arith.addf %15, %16 : vector<1x64xf32>
    %18 = math.rsqrt %17 : vector<1x64xf32>
    %19 = vector.broadcast %18 : vector<1x64xf32> to vector<98x64xf32>
    %20 = arith.mulf %10, %19 : vector<98x64xf32>
    %c0_8 = arith.constant 0 : index
    %c0_9 = arith.constant 0 : index
    %21 = vector.load %arg3[%c0_8, %c0_9] : memref<1x64xf32, #tpu.memory_space<vmem>>, vector<1x64xf32>
    %22 = vector.broadcast %21 : vector<1x64xf32> to vector<98x64xf32>
    %23 = arith.mulf %20, %22 : vector<98x64xf32>
    %c0_10 = arith.constant 0 : index
    %c0_11 = arith.constant 0 : index
    %24 = vector.load %arg4[%c0_10, %c0_11] : memref<1x64xf32, #tpu.memory_space<vmem>>, vector<1x64xf32>
    %25 = vector.broadcast %24 : vector<1x64xf32> to vector<98x64xf32>
    %26 = arith.addf %23, %25 : vector<98x64xf32>
    %cst_12 = arith.constant 0.000000e+00 : f32
    %27 = vector.broadcast %cst_12 : f32 to vector<98x64xf32>
    %28 = arith.maximumf %26, %27 : vector<98x64xf32>
    %c0_13 = arith.constant 0 : index
    %c0_14 = arith.constant 0 : index
    %29 = vector.load %arg5[%c0_13, %c0_14] : memref<98x64xf32, #tpu.memory_space<vmem>>, vector<98x64xf32>
    tpu.vector_store %arg5[%c0_13, %c0_14], %28 {strides = array<i32>} : memref<98x64xf32, #tpu.memory_space<vmem>>, vector<98x64xf32>,
    return
  }
  func.func @transform_0(%arg0: i32) -> (i32, i32) {
    %c0_i32 = arith.constant 0 : i32
    %c0_i32_0 = arith.constant 0 : i32
    %c0_i32_1 = arith.constant 0 : i32
    return %c0_i32, %c0_i32_0 : i32, i32
  }
  func.func @transform_1(%arg0: i32) -> (i32, i32) {
    %c0_i32 = arith.constant 0 : i32
    %c0_i32_0 = arith.constant 0 : i32
    %c0_i32_1 = arith.constant 0 : i32
    return %c0_i32, %c0_i32_0 : i32, i32
  }
  func.func @transform_2(%arg0: i32) -> (i32, i32) {
    %c0_i32 = arith.constant 0 : i32
    %c0_i32_0 = arith.constant 0 : i32
    %c0_i32_1 = arith.constant 0 : i32
    return %c0_i32, %c0_i32_0 : i32, i32
  }
  func.func @transform_3(%arg0: i32) -> (i32, i32) {
    %c0_i32 = arith.constant 0 : i32
    %c0_i32_0 = arith.constant 0 : i32
    %c0_i32_1 = arith.constant 0 : i32
    return %c0_i32, %c0_i32_0 : i32, i32
  }
  func.func @transform_4(%arg0: i32) -> (i32, i32) {
    %c0_i32 = arith.constant 0 : i32
    %c0_i32_0 = arith.constant 0 : i32
    %c0_i32_1 = arith.constant 0 : i32
    return %c0_i32, %c0_i32_0 : i32, i32
  }
}

module attributes {stable_mosaic.version = 11 : i64} {
  func.func @_gemm_bn_relu_kernel(%arg0: i32, %arg1: memref<98x64xf32, #tpu.memory_space<vmem>>, %arg2: memref<64x128xf32, #tpu.memory_space<vmem>>, %arg3: memref<1x128xf32, #tpu.memory_space<vmem>>, %arg4: memref<1x128xf32, #tpu.memory_space<vmem>>, %arg5: memref<98x128xf32, #tpu.memory_space<vmem>>) attributes {dimension_semantics = [#tpu.dimension_semantics<arbitrary>], iteration_bounds = array<i64: 1>, scalar_prefetch = 0 : i64, scratch_operands = 0 : i64, tpu.core_type = #tpu.core_type<tc>, window_params = [{pipeline_mode = #tpu.pipeline_mode<synchronous>, transform_indices = @transform_0, window_bounds = array<i64: 98, 64>}, {pipeline_mode = #tpu.pipeline_mode<synchronous>, transform_indices = @transform_1, window_bounds = array<i64: 64, 128>}, {pipeline_mode = #tpu.pipeline_mode<synchronous>, transform_indices = @transform_2, window_bounds = array<i64: 1, 128>}, {pipeline_mode = #tpu.pipeline_mode<synchronous>, transform_indices = @transform_3, window_bounds = array<i64: 1, 128>}, {pipeline_mode = #tpu.pipeline_mode<synchronous>, transform_indices = @transform_4, window_bounds = array<i64: 98, 128>}]} {
    %c0 = arith.constant 0 : index
    %c0_0 = arith.constant 0 : index
    %0 = vector.load %arg1[%c0, %c0_0] : memref<98x64xf32, #tpu.memory_space<vmem>>, vector<98x64xf32>
    %1 = arith.truncf %0 : vector<98x64xf32> to vector<98x64xbf16>
    %c0_1 = arith.constant 0 : index
    %c0_2 = arith.constant 0 : index
    %2 = vector.load %arg2[%c0_1, %c0_2] : memref<64x128xf32, #tpu.memory_space<vmem>>, vector<64x128xf32>
    %3 = arith.truncf %2 : vector<64x128xf32> to vector<64x128xbf16>
    %cst = arith.constant dense<0.000000e+00> : vector<98x128xf32>
    %4 = tpu.matmul %1, %3, %cst {dimension_numbers = #tpu.dot_dimension_numbers<[1], [0], [0], [1], [0, 0, 1, 1], [], []>} : vector<98x64xbf16>, vector<64x128xbf16>, vector<98x128xf32> -> vector<98x128xf32>
    %cst_3 = arith.constant dense<0.000000e+00> : vector<128xf32>
    %5 = vector.multi_reduction <add>, %4, %cst_3 [0] : vector<98x128xf32> to vector<128xf32>
    %6 = vector.shape_cast %5 : vector<128xf32> to vector<1x128xf32>
    %7 = vector.extract_strided_slice %6 {offsets = [0, 0], sizes = [1, 32], strides = [1, 1]} : vector<1x128xf32> to vector<1x32xf32>
    %8 = vector.extract_strided_slice %6 {offsets = [0, 32], sizes = [1, 32], strides = [1, 1]} : vector<1x128xf32> to vector<1x32xf32>
    %9 = arith.addf %7, %8 : vector<1x32xf32>
    %10 = vector.extract_strided_slice %6 {offsets = [0, 64], sizes = [1, 32], strides = [1, 1]} : vector<1x128xf32> to vector<1x32xf32>
    %11 = arith.addf %9, %10 : vector<1x32xf32>
    %12 = vector.extract_strided_slice %6 {offsets = [0, 96], sizes = [1, 32], strides = [1, 1]} : vector<1x128xf32> to vector<1x32xf32>
    %13 = arith.addf %11, %12 : vector<1x32xf32>
    %14 = tpu.concatenate %13, %13, %13, %13 in 1 : vector<1x32xf32>, vector<1x32xf32>, vector<1x32xf32>, vector<1x32xf32> -> vector<1x128xf32>
    %cst_4 = arith.constant 0.00255102036 : f32
    %15 = vector.broadcast %cst_4 : f32 to vector<1x128xf32>
    %16 = arith.mulf %14, %15 : vector<1x128xf32>
    %17 = vector.broadcast %16 : vector<1x128xf32> to vector<98x128xf32>
    %18 = arith.subf %4, %17 : vector<98x128xf32>
    %19 = arith.mulf %18, %18 : vector<98x128xf32>
    %cst_5 = arith.constant dense<0.000000e+00> : vector<128xf32>
    %20 = vector.multi_reduction <add>, %19, %cst_5 [0] : vector<98x128xf32> to vector<128xf32>
    %21 = vector.shape_cast %20 : vector<128xf32> to vector<1x128xf32>
    %22 = vector.extract_strided_slice %21 {offsets = [0, 0], sizes = [1, 32], strides = [1, 1]} : vector<1x128xf32> to vector<1x32xf32>
    %23 = vector.extract_strided_slice %21 {offsets = [0, 32], sizes = [1, 32], strides = [1, 1]} : vector<1x128xf32> to vector<1x32xf32>
    %24 = arith.addf %22, %23 : vector<1x32xf32>
    %25 = vector.extract_strided_slice %21 {offsets = [0, 64], sizes = [1, 32], strides = [1, 1]} : vector<1x128xf32> to vector<1x32xf32>
    %26 = arith.addf %24, %25 : vector<1x32xf32>
    %27 = vector.extract_strided_slice %21 {offsets = [0, 96], sizes = [1, 32], strides = [1, 1]} : vector<1x128xf32> to vector<1x32xf32>
    %28 = arith.addf %26, %27 : vector<1x32xf32>
    %29 = tpu.concatenate %28, %28, %28, %28 in 1 : vector<1x32xf32>, vector<1x32xf32>, vector<1x32xf32>, vector<1x32xf32> -> vector<1x128xf32>
    %cst_6 = arith.constant 0.00255102036 : f32
    %30 = vector.broadcast %cst_6 : f32 to vector<1x128xf32>
    %31 = arith.mulf %29, %30 : vector<1x128xf32>
    %cst_7 = arith.constant 9.99999974E-6 : f32
    %32 = vector.broadcast %cst_7 : f32 to vector<1x128xf32>
    %33 = arith.addf %31, %32 : vector<1x128xf32>
    %34 = math.rsqrt %33 : vector<1x128xf32>
    %35 = vector.broadcast %34 : vector<1x128xf32> to vector<98x128xf32>
    %36 = arith.mulf %18, %35 : vector<98x128xf32>
    %c0_8 = arith.constant 0 : index
    %c0_9 = arith.constant 0 : index
    %37 = vector.load %arg3[%c0_8, %c0_9] : memref<1x128xf32, #tpu.memory_space<vmem>>, vector<1x128xf32>
    %38 = vector.broadcast %37 : vector<1x128xf32> to vector<98x128xf32>
    %39 = arith.mulf %36, %38 : vector<98x128xf32>
    %c0_10 = arith.constant 0 : index
    %c0_11 = arith.constant 0 : index
    %40 = vector.load %arg4[%c0_10, %c0_11] : memref<1x128xf32, #tpu.memory_space<vmem>>, vector<1x128xf32>
    %41 = vector.broadcast %40 : vector<1x128xf32> to vector<98x128xf32>
    %42 = arith.addf %39, %41 : vector<98x128xf32>
    %cst_12 = arith.constant 0.000000e+00 : f32
    %43 = vector.broadcast %cst_12 : f32 to vector<98x128xf32>
    %44 = arith.maximumf %42, %43 : vector<98x128xf32>
    %c0_13 = arith.constant 0 : index
    %c0_14 = arith.constant 0 : index
    %45 = vector.load %arg5[%c0_13, %c0_14] : memref<98x128xf32, #tpu.memory_space<vmem>>, vector<98x128xf32>
    tpu.vector_store %arg5[%c0_13, %c0_14], %44 {strides = array<i32>} : memref<98x128xf32, #tpu.memory_space<vmem>>, vector<98x128xf32>,
    return
  }
  func.func @transform_0(%arg0: i32) -> (i32, i32) {
    %c0_i32 = arith.constant 0 : i32
    %c0_i32_0 = arith.constant 0 : i32
    %c0_i32_1 = arith.constant 0 : i32
    return %c0_i32, %c0_i32_0 : i32, i32
  }
  func.func @transform_1(%arg0: i32) -> (i32, i32) {
    %c0_i32 = arith.constant 0 : i32
    %c0_i32_0 = arith.constant 0 : i32
    %c0_i32_1 = arith.constant 0 : i32
    return %c0_i32, %c0_i32_0 : i32, i32
  }
  func.func @transform_2(%arg0: i32) -> (i32, i32) {
    %c0_i32 = arith.constant 0 : i32
    %c0_i32_0 = arith.constant 0 : i32
    %c0_i32_1 = arith.constant 0 : i32
    return %c0_i32, %c0_i32_0 : i32, i32
  }
  func.func @transform_3(%arg0: i32) -> (i32, i32) {
    %c0_i32 = arith.constant 0 : i32
    %c0_i32_0 = arith.constant 0 : i32
    %c0_i32_1 = arith.constant 0 : i32
    return %c0_i32, %c0_i32_0 : i32, i32
  }
  func.func @transform_4(%arg0: i32) -> (i32, i32) {
    %c0_i32 = arith.constant 0 : i32
    %c0_i32_0 = arith.constant 0 : i32
    %c0_i32_1 = arith.constant 0 : i32
    return %c0_i32, %c0_i32_0 : i32, i32
  }
}

module attributes {stable_mosaic.version = 11 : i64} {
  func.func @_gemm_bn_relu_kernel(%arg0: i32, %arg1: memref<392x32xf32, #tpu.memory_space<vmem>>, %arg2: memref<32x4xf32, #tpu.memory_space<vmem>>, %arg3: memref<1x4xf32, #tpu.memory_space<vmem>>, %arg4: memref<1x4xf32, #tpu.memory_space<vmem>>, %arg5: memref<392x4xf32, #tpu.memory_space<vmem>>) attributes {dimension_semantics = [#tpu.dimension_semantics<arbitrary>], iteration_bounds = array<i64: 1>, scalar_prefetch = 0 : i64, scratch_operands = 0 : i64, tpu.core_type = #tpu.core_type<tc>, window_params = [{pipeline_mode = #tpu.pipeline_mode<synchronous>, transform_indices = @transform_0, window_bounds = array<i64: 392, 32>}, {pipeline_mode = #tpu.pipeline_mode<synchronous>, transform_indices = @transform_1, window_bounds = array<i64: 32, 4>}, {pipeline_mode = #tpu.pipeline_mode<synchronous>, transform_indices = @transform_2, window_bounds = array<i64: 1, 4>}, {pipeline_mode = #tpu.pipeline_mode<synchronous>, transform_indices = @transform_3, window_bounds = array<i64: 1, 4>}, {pipeline_mode = #tpu.pipeline_mode<synchronous>, transform_indices = @transform_4, window_bounds = array<i64: 392, 4>}]} {
    %c0 = arith.constant 0 : index
    %c0_0 = arith.constant 0 : index
    %0 = vector.load %arg1[%c0, %c0_0] : memref<392x32xf32, #tpu.memory_space<vmem>>, vector<392x32xf32>
    %1 = arith.truncf %0 : vector<392x32xf32> to vector<392x32xbf16>
    %c0_1 = arith.constant 0 : index
    %c0_2 = arith.constant 0 : index
    %2 = vector.load %arg2[%c0_1, %c0_2] : memref<32x4xf32, #tpu.memory_space<vmem>>, vector<32x4xf32>
    %3 = arith.truncf %2 : vector<32x4xf32> to vector<32x4xbf16>
    %cst = arith.constant dense<0.000000e+00> : vector<392x4xf32>
    %4 = tpu.matmul %1, %3, %cst {dimension_numbers = #tpu.dot_dimension_numbers<[1], [0], [0], [1], [0, 0, 1, 1], [], []>} : vector<392x32xbf16>, vector<32x4xbf16>, vector<392x4xf32> -> vector<392x4xf32>
    %cst_3 = arith.constant dense<0.000000e+00> : vector<4xf32>
    %5 = vector.multi_reduction <add>, %4, %cst_3 [0] : vector<392x4xf32> to vector<4xf32>
    %6 = vector.shape_cast %5 : vector<4xf32> to vector<1x4xf32>
    %7 = vector.extract_strided_slice %6 {offsets = [0, 0], sizes = [1, 1], strides = [1, 1]} : vector<1x4xf32> to vector<1x1xf32>
    %8 = vector.extract_strided_slice %6 {offsets = [0, 1], sizes = [1, 1], strides = [1, 1]} : vector<1x4xf32> to vector<1x1xf32>
    %9 = arith.addf %7, %8 : vector<1x1xf32>
    %10 = vector.extract_strided_slice %6 {offsets = [0, 2], sizes = [1, 1], strides = [1, 1]} : vector<1x4xf32> to vector<1x1xf32>
    %11 = arith.addf %9, %10 : vector<1x1xf32>
    %12 = vector.extract_strided_slice %6 {offsets = [0, 3], sizes = [1, 1], strides = [1, 1]} : vector<1x4xf32> to vector<1x1xf32>
    %13 = arith.addf %11, %12 : vector<1x1xf32>
    %14 = tpu.concatenate %13, %13, %13, %13 in 1 : vector<1x1xf32>, vector<1x1xf32>, vector<1x1xf32>, vector<1x1xf32> -> vector<1x4xf32>
    %cst_4 = arith.constant 6.37755089E-4 : f32
    %15 = vector.broadcast %cst_4 : f32 to vector<1x4xf32>
    %16 = arith.mulf %14, %15 : vector<1x4xf32>
    %17 = vector.broadcast %16 : vector<1x4xf32> to vector<392x4xf32>
    %18 = arith.subf %4, %17 : vector<392x4xf32>
    %19 = arith.mulf %18, %18 : vector<392x4xf32>
    %cst_5 = arith.constant dense<0.000000e+00> : vector<4xf32>
    %20 = vector.multi_reduction <add>, %19, %cst_5 [0] : vector<392x4xf32> to vector<4xf32>
    %21 = vector.shape_cast %20 : vector<4xf32> to vector<1x4xf32>
    %22 = vector.extract_strided_slice %21 {offsets = [0, 0], sizes = [1, 1], strides = [1, 1]} : vector<1x4xf32> to vector<1x1xf32>
    %23 = vector.extract_strided_slice %21 {offsets = [0, 1], sizes = [1, 1], strides = [1, 1]} : vector<1x4xf32> to vector<1x1xf32>
    %24 = arith.addf %22, %23 : vector<1x1xf32>
    %25 = vector.extract_strided_slice %21 {offsets = [0, 2], sizes = [1, 1], strides = [1, 1]} : vector<1x4xf32> to vector<1x1xf32>
    %26 = arith.addf %24, %25 : vector<1x1xf32>
    %27 = vector.extract_strided_slice %21 {offsets = [0, 3], sizes = [1, 1], strides = [1, 1]} : vector<1x4xf32> to vector<1x1xf32>
    %28 = arith.addf %26, %27 : vector<1x1xf32>
    %29 = tpu.concatenate %28, %28, %28, %28 in 1 : vector<1x1xf32>, vector<1x1xf32>, vector<1x1xf32>, vector<1x1xf32> -> vector<1x4xf32>
    %cst_6 = arith.constant 6.37755089E-4 : f32
    %30 = vector.broadcast %cst_6 : f32 to vector<1x4xf32>
    %31 = arith.mulf %29, %30 : vector<1x4xf32>
    %cst_7 = arith.constant 9.99999974E-6 : f32
    %32 = vector.broadcast %cst_7 : f32 to vector<1x4xf32>
    %33 = arith.addf %31, %32 : vector<1x4xf32>
    %34 = math.rsqrt %33 : vector<1x4xf32>
    %35 = vector.broadcast %34 : vector<1x4xf32> to vector<392x4xf32>
    %36 = arith.mulf %18, %35 : vector<392x4xf32>
    %c0_8 = arith.constant 0 : index
    %c0_9 = arith.constant 0 : index
    %37 = vector.load %arg3[%c0_8, %c0_9] : memref<1x4xf32, #tpu.memory_space<vmem>>, vector<1x4xf32>
    %38 = vector.broadcast %37 : vector<1x4xf32> to vector<392x4xf32>
    %39 = arith.mulf %36, %38 : vector<392x4xf32>
    %c0_10 = arith.constant 0 : index
    %c0_11 = arith.constant 0 : index
    %40 = vector.load %arg4[%c0_10, %c0_11] : memref<1x4xf32, #tpu.memory_space<vmem>>, vector<1x4xf32>
    %41 = vector.broadcast %40 : vector<1x4xf32> to vector<392x4xf32>
    %42 = arith.addf %39, %41 : vector<392x4xf32>
    %cst_12 = arith.constant 0.000000e+00 : f32
    %43 = vector.broadcast %cst_12 : f32 to vector<392x4xf32>
    %44 = arith.maximumf %42, %43 : vector<392x4xf32>
    %c0_13 = arith.constant 0 : index
    %c0_14 = arith.constant 0 : index
    %45 = vector.load %arg5[%c0_13, %c0_14] : memref<392x4xf32, #tpu.memory_space<vmem>>, vector<392x4xf32>
    tpu.vector_store %arg5[%c0_13, %c0_14], %44 {strides = array<i32>} : memref<392x4xf32, #tpu.memory_space<vmem>>, vector<392x4xf32>,
    return
  }
  func.func @transform_0(%arg0: i32) -> (i32, i32) {
    %c0_i32 = arith.constant 0 : i32
    %c0_i32_0 = arith.constant 0 : i32
    %c0_i32_1 = arith.constant 0 : i32
    return %c0_i32, %c0_i32_0 : i32, i32
  }
  func.func @transform_1(%arg0: i32) -> (i32, i32) {
    %c0_i32 = arith.constant 0 : i32
    %c0_i32_0 = arith.constant 0 : i32
    %c0_i32_1 = arith.constant 0 : i32
    return %c0_i32, %c0_i32_0 : i32, i32
  }
  func.func @transform_2(%arg0: i32) -> (i32, i32) {
    %c0_i32 = arith.constant 0 : i32
    %c0_i32_0 = arith.constant 0 : i32
    %c0_i32_1 = arith.constant 0 : i32
    return %c0_i32, %c0_i32_0 : i32, i32
  }
  func.func @transform_3(%arg0: i32) -> (i32, i32) {
    %c0_i32 = arith.constant 0 : i32
    %c0_i32_0 = arith.constant 0 : i32
    %c0_i32_1 = arith.constant 0 : i32
    return %c0_i32, %c0_i32_0 : i32, i32
  }
  func.func @transform_4(%arg0: i32) -> (i32, i32) {
    %c0_i32 = arith.constant 0 : i32
    %c0_i32_0 = arith.constant 0 : i32
    %c0_i32_1 = arith.constant 0 : i32
    return %c0_i32, %c0_i32_0 : i32, i32
  }
}

</mosaic_0001>

<llo_original>
// kernel: cae_forward.8
$region0: #{cae_forward.8}
  #allocation0 [shape = 'u32[]', space=smem, size = 0x4, offset = 0x4, fixed_abs, tag = 'smem constant byte address 0x4 - core index']
  #allocation1 [shape = 'u32[144,128]{1,0:T(1,128)}', space=vmem, size = 0x12000, scoped, tag = 'internal scratch']
  %s0 = inlined_call_operand.vmem [shape: f32[98,128], index: 0, kind: input, shape index: {}]
  %s1 = inlined_call_operand.vmem [shape: f32[128,64], index: 1, kind: input, shape index: {}]
  %s2 = inlined_call_operand.vmem [shape: f32[1,64], index: 2, kind: input, shape index: {}]
  %s3 = inlined_call_operand.vmem [shape: f32[1,64], index: 3, kind: input, shape index: {}]
  %s4 = inlined_call_operand.vmem [shape: f32[98,64], index: 4, kind: output, shape index: {}]
  %s5 = sld [smem:[#allocation0]]
  $region26: #{cae_forward.8} parent=0
    _
  %s7 = ssub.s32 1, %s5
  %s8 = scalar_select 0, %s7, %s5
  // Predicated region
  $region2: #{cae_forward.8} parent=0 // pred_check
    _
  $region3: #{cae_forward.8} parent=0 // pred_check_branch
    %10 = sbr.rel (0) target = $region5
  $region4: #{cae_forward.8} parent=0 // pred_region
    _
  $region5: #{cae_forward.8} parent=0 // pred_fallthru
    _
  // Predicated region
  $region6: #{cae_forward.8} parent=0 // pred_check
    _
  $region7: #{cae_forward.8} parent=0 // pred_check_branch
    %12 = sbr.rel (0) target = $region9
  $region8: #{cae_forward.8} parent=0 // pred_region
    _
  $region9: #{cae_forward.8} parent=0 // pred_fallthru
    _
  // Predicated region
  $region10: #{cae_forward.8} parent=0 // pred_check
    _
  $region11: #{cae_forward.8} parent=0 // pred_check_branch
    %14 = sbr.rel (0) target = $region13
  $region12: #{cae_forward.8} parent=0 // pred_region
    _
  $region13: #{cae_forward.8} parent=0 // pred_fallthru
    _
  // Predicated region
  $region14: #{cae_forward.8} parent=0 // pred_check
    _
  $region15: #{cae_forward.8} parent=0 // pred_check_branch
    %16 = sbr.rel (0) target = $region17
  $region16: #{cae_forward.8} parent=0 // pred_region
    _
  $region17: #{cae_forward.8} parent=0 // pred_fallthru
    _
  %v18 = vld [vmem:[%s0] sm:$0xff]
  %v19 = vld [vmem:[%s0 + $0x8] sm:$0xff]
  %v20 = vld [vmem:[%s0 + $0x10] sm:$0xff]
  %v21 = vld [vmem:[%s0 + $0x18] sm:$0xff]
  %v22 = vld [vmem:[%s0 + $0x20] sm:$0xff]
  %v23 = vld [vmem:[%s0 + $0x28] sm:$0xff]
  %v24 = vld [vmem:[%s0 + $0x30] sm:$0xff]
  %v25 = vld [vmem:[%s0 + $0x38] sm:$0xff]
  %v26 = vld [vmem:[%s0 + $0x40] sm:$0xff]
  %v27 = vld [vmem:[%s0 + $0x48] sm:$0xff]
  %v28 = vld [vmem:[%s0 + $0x50] sm:$0xff]
  %v29 = vld [vmem:[%s0 + $0x58] sm:$0xff]
  %v30 = vld [vmem:[%s0 + $0x60] sm:$0x3]
  %v31 = vpack.c.bf16 %v19, %v18
  %v32 = vpack.c.bf16 %v21, %v20
  %v33 = vpack.c.bf16 %v23, %v22
  %v34 = vpack.c.bf16 %v25, %v24
  %v35 = vpack.c.bf16 %v27, %v26
  %v36 = vpack.c.bf16 %v29, %v28
  %v37 = vpack.c.bf16 %v30, %v30
  %v38 = vld [vmem:[%s1] sm:$0xff]
  %v39 = vld [vmem:[%s1 + $0x8] sm:$0xff]
  %v40 = vld [vmem:[%s1 + $0x10] sm:$0xff]
  %v41 = vld [vmem:[%s1 + $0x18] sm:$0xff]
  %v42 = vld [vmem:[%s1 + $0x20] sm:$0xff]
  %v43 = vld [vmem:[%s1 + $0x28] sm:$0xff]
  %v44 = vld [vmem:[%s1 + $0x30] sm:$0xff]
  %v45 = vld [vmem:[%s1 + $0x38] sm:$0xff]
  %v46 = vld [vmem:[%s1 + $0x40] sm:$0xff]
  %v47 = vld [vmem:[%s1 + $0x48] sm:$0xff]
  %v48 = vld [vmem:[%s1 + $0x50] sm:$0xff]
  %v49 = vld [vmem:[%s1 + $0x58] sm:$0xff]
  %v50 = vld [vmem:[%s1 + $0x60] sm:$0xff]
  %v51 = vld [vmem:[%s1 + $0x68] sm:$0xff]
  %v52 = vld [vmem:[%s1 + $0x70] sm:$0xff]
  %v53 = vld [vmem:[%s1 + $0x78] sm:$0xff]
  %v54 = vpack.c.bf16 %v39, %v38
  %v55 = vpack.c.bf16 %v41, %v40
  %v56 = vpack.c.bf16 %v43, %v42
  %v57 = vpack.c.bf16 %v45, %v44
  %v58 = vpack.c.bf16 %v47, %v46
  %v59 = vpack.c.bf16 %v49, %v48
  %v60 = vpack.c.bf16 %v51, %v50
  %v61 = vpack.c.bf16 %v53, %v52
  %62 = vmatprep.subr.bf16.mxu0 0
  %63 = vmatpush1.bf16.msra.mxu0 %v54
  %64 = vmatprep.subr.bf16.mxu0 0
  %65 = vmatpush1.bf16.msra.mxu0 %v55
  %66 = vmatprep.subr.bf16.mxu0 0
  %67 = vmatpush1.bf16.msra.mxu0 %v56
  %68 = vmatprep.subr.bf16.mxu0 0
  %69 = vmatpush1.bf16.msra.mxu0 %v57
  %70 = vmatprep.subr.bf16.mxu0 0
  %71 = vmatpush1.bf16.msra.mxu0 %v58
  %72 = vmatprep.subr.bf16.mxu0 0
  %73 = vmatpush1.bf16.msra.mxu0 %v59
  %74 = vmatprep.subr.bf16.mxu0 0
  %75 = vmatpush1.bf16.msra.mxu0 %v60
  %76 = vmatprep.subr.bf16.mxu0 0
  %77 = vmatpush1.bf16.msra.mxu0 %v61
  %78 = vmatprep.subr.bf16.mxu0 0
  %79 = vmatpush1.bf16.msra.mxu0 0
  %80 = vmatprep.subr.bf16.mxu0 0
  %81 = vmatpush1.bf16.msra.mxu0 0
  %82 = vmatprep.subr.bf16.mxu0 0
  %83 = vmatpush1.bf16.msra.mxu0 0
  %84 = vmatprep.subr.bf16.mxu0 0
  %85 = vmatpush1.bf16.msra.mxu0 0
  %86 = vmatprep.subr.bf16.mxu0 0
  %87 = vmatpush1.bf16.msra.mxu0 0
  %88 = vmatprep.subr.bf16.mxu0 0
  %89 = vmatpush1.bf16.msra.mxu0 0
  %90 = vmatprep.subr.bf16.mxu0 0
  %91 = vmatpush1.bf16.msra.mxu0 0
  %92 = vmatprep.subr.bf16.mxu0 0
  %93 = vmatpush1.bf16.msra.mxu0 0
  %94 = vmatprep.mubr.bf16.mxu0 0
  %95 = vmatmul.mubr.bf16.gmra.mrb[0].mxu0 %v31
  %v96 = vpop.f32.mrb[0].mxu0
  %v97 = vadd.f32 0.0, %v96
  %v98 = vpop.f32.mrb[0].mxu0
  %v99 = vpop.f32.mrb[0].mxu0
  %v100 = vadd.f32 0.0, %v99
  %v101 = vpop.f32.mrb[0].mxu0
  %102 = vmatprep.mubr.bf16.mxu0 0
  %103 = vmatmul.mubr.bf16.gmra.mrb[0].mxu0 %v32
  %v104 = vpop.f32.mrb[0].mxu0
  %v105 = vadd.f32 0.0, %v104
  %v106 = vpop.f32.mrb[0].mxu0
  %v107 = vpop.f32.mrb[0].mxu0
  %v108 = vadd.f32 0.0, %v107
  %v109 = vpop.f32.mrb[0].mxu0
  %110 = vmatprep.mubr.bf16.mxu0 0
  %111 = vmatmul.mubr.bf16.gmra.mrb[0].mxu0 %v33
  %v112 = vpop.f32.mrb[0].mxu0
  %v113 = vadd.f32 0.0, %v112
  %v114 = vpop.f32.mrb[0].mxu0
  %v115 = vpop.f32.mrb[0].mxu0
  %v116 = vadd.f32 0.0, %v115
  %v117 = vpop.f32.mrb[0].mxu0
  %118 = vmatprep.mubr.bf16.mxu0 0
  %119 = vmatmul.mubr.bf16.gmra.mrb[0].mxu0 %v34
  %v120 = vpop.f32.mrb[0].mxu0
  %v121 = vadd.f32 0.0, %v120
  %v122 = vpop.f32.mrb[0].mxu0
  %v123 = vpop.f32.mrb[0].mxu0
  %v124 = vadd.f32 0.0, %v123
  %v125 = vpop.f32.mrb[0].mxu0
  %126 = vmatprep.mubr.bf16.mxu0 0
  %127 = vmatmul.mubr.bf16.gmra.mrb[0].mxu0 %v35
  %v128 = vpop.f32.mrb[0].mxu0
  %v129 = vadd.f32 0.0, %v128
  %v130 = vpop.f32.mrb[0].mxu0
  %v131 = vpop.f32.mrb[0].mxu0
  %v132 = vadd.f32 0.0, %v131
  %v133 = vpop.f32.mrb[0].mxu0
  %134 = vmatprep.mubr.bf16.mxu0 0
  %135 = vmatmul.mubr.bf16.gmra.mrb[0].mxu0 %v36
  %v136 = vpop.f32.mrb[0].mxu0
  %v137 = vadd.f32 0.0, %v136
  %v138 = vpop.f32.mrb[0].mxu0
  %v139 = vpop.f32.mrb[0].mxu0
  %v140 = vadd.f32 0.0, %v139
  %v141 = vpop.f32.mrb[0].mxu0
  %142 = vmatprep.mubr.bf16.mxu0 0
  %143 = vmatmul.mubr.bf16.gmra.mrb[0].mxu0 %v37
  %v144 = vpop.f32.mrb[0].mxu0
  %v145 = vadd.f32 0.0, %v144
  %v146 = vpop.f32.mrb[0].mxu0
  %v147 = vpop.f32.mrb[0].mxu0
  %v148 = vpop.f32.mrb[0].mxu0
  %149 = vdwg.mxu0
  %vm150 = vcmask 523264
  %v151 = vsel %vm150, %v97, 0.0
  %v152 = vsel %vm150, %v100, 0.0
  %v153 = vadd.f32 %v151, %v152
  %v154 = vsel %vm150, %v105, 0.0
  %v155 = vadd.f32 %v153, %v154
  %v156 = vsel %vm150, %v108, 0.0
  %v157 = vadd.f32 %v155, %v156
  %v158 = vsel %vm150, %v113, 0.0
  %v159 = vadd.f32 %v157, %v158
  %v160 = vsel %vm150, %v116, 0.0
  %v161 = vadd.f32 %v159, %v160
  %v162 = vsel %vm150, %v121, 0.0
  %v163 = vadd.f32 %v161, %v162
  %v164 = vsel %vm150, %v124, 0.0
  %v165 = vadd.f32 %v163, %v164
  %v166 = vsel %vm150, %v129, 0.0
  %v167 = vadd.f32 %v165, %v166
  %v168 = vsel %vm150, %v132, 0.0
  %v169 = vadd.f32 %v167, %v168
  %v170 = vsel %vm150, %v137, 0.0
  %v171 = vadd.f32 %v169, %v170
  %v172 = vsel %vm150, %v140, 0.0
  %v173 = vadd.f32 %v171, %v172
  %vm174 = vcmask 517120
  %v175 = vsel %vm174, %v145, 0.0
  %v176 = vadd.f32 %v173, %v175
  %v177 = vrot.slane %v176, 4
  %v178 = vadd.f32 %v176, %v177
  %v179 = vrot.slane %v178, 2
  %v180 = vadd.f32 %v178, %v179
  %v181 = vrot.slane %v180, 1
  %v182 = vadd.f32 %v180, %v181
  %v183 = vmul.f32 %v182, 0.010204081
  %v184 = vsub.f32 %v97, %v183
  %v185 = vsub.f32 %v100, %v183
  %v186 = vsub.f32 %v105, %v183
  %v187 = vsub.f32 %v108, %v183
  %v188 = vsub.f32 %v113, %v183
  %v189 = vsub.f32 %v116, %v183
  %v190 = vsub.f32 %v121, %v183
  %v191 = vsub.f32 %v124, %v183
  %v192 = vsub.f32 %v129, %v183
  %v193 = vsub.f32 %v132, %v183
  %v194 = vsub.f32 %v137, %v183
  %v195 = vsub.f32 %v140, %v183
  %v196 = vsub.f32 %v145, %v183
  %v197 = vmul.f32 %v184, %v184
  %v198 = vmul.f32 %v185, %v185
  %v199 = vmul.f32 %v186, %v186
  %v200 = vmul.f32 %v187, %v187
  %v201 = vmul.f32 %v188, %v188
  %v202 = vmul.f32 %v189, %v189
  %v203 = vmul.f32 %v190, %v190
  %v204 = vmul.f32 %v191, %v191
  %v205 = vmul.f32 %v192, %v192
  %v206 = vmul.f32 %v193, %v193
  %v207 = vmul.f32 %v194, %v194
  %v208 = vmul.f32 %v195, %v195
  %v209 = vmul.f32 %v196, %v196
  %v210 = vsel %vm150, %v197, 0.0
  %v211 = vsel %vm150, %v198, 0.0
  %v212 = vadd.f32 %v210, %v211
  %v213 = vsel %vm150, %v199, 0.0
  %v214 = vadd.f32 %v212, %v213
  %v215 = vsel %vm150, %v200, 0.0
  %v216 = vadd.f32 %v214, %v215
  %v217 = vsel %vm150, %v201, 0.0
  %v218 = vadd.f32 %v216, %v217
  %v219 = vsel %vm150, %v202, 0.0
  %v220 = vadd.f32 %v218, %v219
  %v221 = vsel %vm150, %v203, 0.0
  %v222 = vadd.f32 %v220, %v221
  %v223 = vsel %vm150, %v204, 0.0
  %v224 = vadd.f32 %v222, %v223
  %v225 = vsel %vm150, %v205, 0.0
  %v226 = vadd.f32 %v224, %v225
  %v227 = vsel %vm150, %v206, 0.0
  %v228 = vadd.f32 %v226, %v227
  %v229 = vsel %vm150, %v207, 0.0
  %v230 = vadd.f32 %v228, %v229
  %v231 = vsel %vm150, %v208, 0.0
  %v232 = vadd.f32 %v230, %v231
  %v233 = vsel %vm174, %v209, 0.0
  %v234 = vadd.f32 %v232, %v233
  %v235 = vrot.slane %v234, 4
  %v236 = vadd.f32 %v234, %v235
  %v237 = vrot.slane %v236, 2
  %v238 = vadd.f32 %v236, %v237
  %v239 = vrot.slane %v238, 1
  %v240 = vadd.f32 %v238, %v239
  %v241 = vmul.f32 %v240, 0.010204081
  %v242 = vadd.f32 %v241, 1e-05
  %v243 = vrsqrt.pop %v242
  %v244 = vmul.f32 %v184, %v243
  %v245 = vmul.f32 %v185, %v243
  %v246 = vmul.f32 %v186, %v243
  %v247 = vmul.f32 %v187, %v243
  %v248 = vmul.f32 %v188, %v243
  %v249 = vmul.f32 %v189, %v243
  %v250 = vmul.f32 %v190, %v243
  %v251 = vmul.f32 %v191, %v243
  %v252 = vmul.f32 %v192, %v243
  %v253 = vmul.f32 %v193, %v243
  %v254 = vmul.f32 %v194, %v243
  %v255 = vmul.f32 %v195, %v243
  %v256 = vmul.f32 %v196, %v243
  %v257 = vld [vmem:[%s2] sm:$0x1]
  %v259 = vlaneseq
  %v260 = vshrl.u32 %v259, 7
  %v261 = vsub.s32 0, %v260
  %v262 = vrot.slane %v257, %v261
  %v264 = vmul.f32 %v244, %v262
  %v265 = vmul.f32 %v245, %v262
  %v266 = vmul.f32 %v246, %v262
  %v267 = vmul.f32 %v247, %v262
  %v268 = vmul.f32 %v248, %v262
  %v269 = vmul.f32 %v249, %v262
  %v270 = vmul.f32 %v250, %v262
  %v271 = vmul.f32 %v251, %v262
  %v272 = vmul.f32 %v252, %v262
  %v273 = vmul.f32 %v253, %v262
  %v274 = vmul.f32 %v254, %v262
  %v275 = vmul.f32 %v255, %v262
  %v276 = vmul.f32 %v256, %v262
  %v277 = vld [vmem:[%s3] sm:$0x1]
  %v279 = vlaneseq
  %v280 = vshrl.u32 %v279, 7
  %v281 = vsub.s32 0, %v280
  %v282 = vrot.slane %v277, %v281
  %v284 = vadd.f32 %v264, %v282
  %v285 = vadd.f32 %v265, %v282
  %v286 = vadd.f32 %v266, %v282
  %v287 = vadd.f32 %v267, %v282
  %v288 = vadd.f32 %v268, %v282
  %v289 = vadd.f32 %v269, %v282
  %v290 = vadd.f32 %v270, %v282
  %v291 = vadd.f32 %v271, %v282
  %v292 = vadd.f32 %v272, %v282
  %v293 = vadd.f32 %v273, %v282
  %v294 = vadd.f32 %v274, %v282
  %v295 = vadd.f32 %v275, %v282
  %v296 = vadd.f32 %v276, %v282
  %v297 = vmax.f32 %v284, 0.0
  %v298 = vmax.f32 %v285, 0.0
  %v299 = vmax.f32 %v286, 0.0
  %v300 = vmax.f32 %v287, 0.0
  %v301 = vmax.f32 %v288, 0.0
  %v302 = vmax.f32 %v289, 0.0
  %v303 = vmax.f32 %v290, 0.0
  %v304 = vmax.f32 %v291, 0.0
  %v305 = vmax.f32 %v292, 0.0
  %v306 = vmax.f32 %v293, 0.0
  %v307 = vmax.f32 %v294, 0.0
  %v308 = vmax.f32 %v295, 0.0
  %v309 = vmax.f32 %v296, 0.0
  %310 = vst.msk [vmem:[%s4] sm:$0xff] %vm150, %v297
  %311 = vst.msk [vmem:[%s4 + $0x8] sm:$0xff] %vm150, %v298
  %312 = vst.msk [vmem:[%s4 + $0x10] sm:$0xff] %vm150, %v299
  %313 = vst.msk [vmem:[%s4 + $0x18] sm:$0xff] %vm150, %v300
  %314 = vst.msk [vmem:[%s4 + $0x20] sm:$0xff] %vm150, %v301
  %315 = vst.msk [vmem:[%s4 + $0x28] sm:$0xff] %vm150, %v302
  %316 = vst.msk [vmem:[%s4 + $0x30] sm:$0xff] %vm150, %v303
  %317 = vst.msk [vmem:[%s4 + $0x38] sm:$0xff] %vm150, %v304
  %318 = vst.msk [vmem:[%s4 + $0x40] sm:$0xff] %vm150, %v305
  %319 = vst.msk [vmem:[%s4 + $0x48] sm:$0xff] %vm150, %v306
  %320 = vst.msk [vmem:[%s4 + $0x50] sm:$0xff] %vm150, %v307
  %321 = vst.msk [vmem:[%s4 + $0x58] sm:$0xff] %vm150, %v308
  %322 = vst.msk [vmem:[%s4 + $0x60] sm:$0x3] %vm174, %v309
  // Predicated region
  $region18: #{cae_forward.8} parent=0 // pred_check
    _
  $region19: #{cae_forward.8} parent=0 // pred_check_branch
    %324 = sbr.rel (0) target = $region21
  $region20: #{cae_forward.8} parent=0 // pred_region
    _
  $region21: #{cae_forward.8} parent=0 // pred_fallthru
    _
  // Predicated region
  $region22: #{cae_forward.8} parent=0 // pred_check
    _
  $region23: #{cae_forward.8} parent=0 // pred_check_branch
    %326 = sbr.rel (0) target = $region25
  $region24: #{cae_forward.8} parent=0 // pred_region
    _
  $region25: #{cae_forward.8} parent=0 // pred_fallthru
    _

// kernel: cae_forward.7
$region0: #{cae_forward.7}
  #allocation0 [shape = 'u32[]', space=smem, size = 0x4, offset = 0x4, fixed_abs, tag = 'smem constant byte address 0x4 - core index']
  #allocation1 [shape = 'u32[144,128]{1,0:T(1,128)}', space=vmem, size = 0x12000, scoped, tag = 'internal scratch']
  %s0 = inlined_call_operand.vmem [shape: f32[392,4], index: 0, kind: input, shape index: {}]
  %s1 = inlined_call_operand.vmem [shape: f32[4,32], index: 1, kind: input, shape index: {}]
  %s2 = inlined_call_operand.vmem [shape: f32[1,32], index: 2, kind: input, shape index: {}]
  %s3 = inlined_call_operand.vmem [shape: f32[1,32], index: 3, kind: input, shape index: {}]
  %s4 = inlined_call_operand.vmem [shape: f32[392,32], index: 4, kind: output, shape index: {}]
  %s5 = sld [smem:[#allocation0]]
  $region26: #{cae_forward.7} parent=0
    _
  %s7 = ssub.s32 1, %s5
  %s8 = scalar_select 0, %s7, %s5
  // Predicated region
  $region2: #{cae_forward.7} parent=0 // pred_check
    _
  $region3: #{cae_forward.7} parent=0 // pred_check_branch
    %10 = sbr.rel (0) target = $region5
  $region4: #{cae_forward.7} parent=0 // pred_region
    _
  $region5: #{cae_forward.7} parent=0 // pred_fallthru
    _
  // Predicated region
  $region6: #{cae_forward.7} parent=0 // pred_check
    _
  $region7: #{cae_forward.7} parent=0 // pred_check_branch
    %12 = sbr.rel (0) target = $region9
  $region8: #{cae_forward.7} parent=0 // pred_region
    _
  $region9: #{cae_forward.7} parent=0 // pred_fallthru
    _
  // Predicated region
  $region10: #{cae_forward.7} parent=0 // pred_check
    _
  $region11: #{cae_forward.7} parent=0 // pred_check_branch
    %14 = sbr.rel (0) target = $region13
  $region12: #{cae_forward.7} parent=0 // pred_region
    _
  $region13: #{cae_forward.7} parent=0 // pred_fallthru
    _
  // Predicated region
  $region14: #{cae_forward.7} parent=0 // pred_check
    _
  $region15: #{cae_forward.7} parent=0 // pred_check_branch
    %16 = sbr.rel (0) target = $region17
  $region16: #{cae_forward.7} parent=0 // pred_region
    _
  $region17: #{cae_forward.7} parent=0 // pred_fallthru
    _
  %v17 = vld [vmem:[%s0] sm:$0xff]
  %v18 = vld [vmem:[%s0 + $0x8] sm:$0xff]
  %v19 = vld [vmem:[%s0 + $0x10] sm:$0xff]
  %v20 = vld [vmem:[%s0 + $0x18] sm:$0xff]
  %v21 = vld [vmem:[%s0 + $0x20] sm:$0xff]
  %v22 = vld [vmem:[%s0 + $0x28] sm:$0xff]
  %v23 = vld [vmem:[%s0 + $0x30] sm:$0xff]
  %v24 = vld [vmem:[%s0 + $0x38] sm:$0xff]
  %v25 = vld [vmem:[%s0 + $0x40] sm:$0xff]
  %v26 = vld [vmem:[%s0 + $0x48] sm:$0xff]
  %v27 = vld [vmem:[%s0 + $0x50] sm:$0xff]
  %v28 = vld [vmem:[%s0 + $0x58] sm:$0xff]
  %v29 = vld [vmem:[%s0 + $0x60] sm:$0xff]
  %v30 = vld [vmem:[%s0 + $0x68] sm:$0xff]
  %v31 = vld [vmem:[%s0 + $0x70] sm:$0xff]
  %v32 = vld [vmem:[%s0 + $0x78] sm:$0xff]
  %v33 = vld [vmem:[%s0 + $0x80] sm:$0xff]
  %v34 = vld [vmem:[%s0 + $0x88] sm:$0xff]
  %v35 = vld [vmem:[%s0 + $0x90] sm:$0xff]
  %v36 = vld [vmem:[%s0 + $0x98] sm:$0xff]
  %v37 = vld [vmem:[%s0 + $0xa0] sm:$0xff]
  %v38 = vld [vmem:[%s0 + $0xa8] sm:$0xff]
  %v39 = vld [vmem:[%s0 + $0xb0] sm:$0xff]
  %v40 = vld [vmem:[%s0 + $0xb8] sm:$0xff]
  %v41 = vld [vmem:[%s0 + $0xc0] sm:$0xff]
  %v42 = vld [vmem:[%s0 + $0xc8] sm:$0xff]
  %v43 = vld [vmem:[%s0 + $0xd0] sm:$0xff]
  %v44 = vld [vmem:[%s0 + $0xd8] sm:$0xff]
  %v45 = vld [vmem:[%s0 + $0xe0] sm:$0xff]
  %v46 = vld [vmem:[%s0 + $0xe8] sm:$0xff]
  %v47 = vld [vmem:[%s0 + $0xf0] sm:$0xff]
  %v48 = vld [vmem:[%s0 + $0xf8] sm:$0xff]
  %v49 = vld [vmem:[%s0 + $0x100] sm:$0xff]
  %v50 = vld [vmem:[%s0 + $0x108] sm:$0xff]
  %v51 = vld [vmem:[%s0 + $0x110] sm:$0xff]
  %v52 = vld [vmem:[%s0 + $0x118] sm:$0xff]
  %v53 = vld [vmem:[%s0 + $0x120] sm:$0xff]
  %v54 = vld [vmem:[%s0 + $0x128] sm:$0xff]
  %v55 = vld [vmem:[%s0 + $0x130] sm:$0xff]
  %v56 = vld [vmem:[%s0 + $0x138] sm:$0xff]
  %v57 = vld [vmem:[%s0 + $0x140] sm:$0xff]
  %v58 = vld [vmem:[%s0 + $0x148] sm:$0xff]
  %v59 = vld [vmem:[%s0 + $0x150] sm:$0xff]
  %v60 = vld [vmem:[%s0 + $0x158] sm:$0xff]
  %v61 = vld [vmem:[%s0 + $0x160] sm:$0xff]
  %v62 = vld [vmem:[%s0 + $0x168] sm:$0xff]
  %v63 = vld [vmem:[%s0 + $0x170] sm:$0xff]
  %v64 = vld [vmem:[%s0 + $0x178] sm:$0xff]
  %v65 = vld [vmem:[%s0 + $0x180] sm:$0xff]
  %v66 = vld [vmem:[%s1] sm:$0xf]
  %68 = vset.pattern.permute.xlu0 0
  %69 = vperm.xlu0 %68, %v17
  %v70 = vpop.permute.xlu0 %69
  %73 = vset.pattern.permute.xlu0 0
  %74 = vperm.xlu0 %73, %v18
  %v75 = vpop.permute.xlu0 %74
  %78 = vset.pattern.permute.xlu0 0
  %79 = vperm.xlu0 %78, %v19
  %v80 = vpop.permute.xlu0 %79
  %83 = vset.pattern.permute.xlu0 0
  %84 = vperm.xlu0 %83, %v20
  %v85 = vpop.permute.xlu0 %84
  %88 = vset.pattern.permute.xlu0 0
  %89 = vperm.xlu0 %88, %v21
  %v90 = vpop.permute.xlu0 %89
  %93 = vset.pattern.permute.xlu0 0
  %94 = vperm.xlu0 %93, %v22
  %v95 = vpop.permute.xlu0 %94
  %98 = vset.pattern.permute.xlu0 0
  %99 = vperm.xlu0 %98, %v23
  %v100 = vpop.permute.xlu0 %99
  %103 = vset.pattern.permute.xlu0 0
  %104 = vperm.xlu0 %103, %v24
  %v105 = vpop.permute.xlu0 %104
  %108 = vset.pattern.permute.xlu0 0
  %109 = vperm.xlu0 %108, %v25
  %v110 = vpop.permute.xlu0 %109
  %113 = vset.pattern.permute.xlu0 0
  %114 = vperm.xlu0 %113, %v26
  %v115 = vpop.permute.xlu0 %114
  %118 = vset.pattern.permute.xlu0 0
  %119 = vperm.xlu0 %118, %v27
  %v120 = vpop.permute.xlu0 %119
  %123 = vset.pattern.permute.xlu0 0
  %124 = vperm.xlu0 %123, %v28
  %v125 = vpop.permute.xlu0 %124
  %128 = vset.pattern.permute.xlu0 0
  %129 = vperm.xlu0 %128, %v29
  %v130 = vpop.permute.xlu0 %129
  %133 = vset.pattern.permute.xlu0 0
  %134 = vperm.xlu0 %133, %v30
  %v135 = vpop.permute.xlu0 %134
  %138 = vset.pattern.permute.xlu0 0
  %139 = vperm.xlu0 %138, %v31
  %v140 = vpop.permute.xlu0 %139
  %143 = vset.pattern.permute.xlu0 0
  %144 = vperm.xlu0 %143, %v32
  %v145 = vpop.permute.xlu0 %144
  %148 = vset.pattern.permute.xlu0 0
  %149 = vperm.xlu0 %148, %v33
  %v150 = vpop.permute.xlu0 %149
  %153 = vset.pattern.permute.xlu0 0
  %154 = vperm.xlu0 %153, %v34
  %v155 = vpop.permute.xlu0 %154
  %158 = vset.pattern.permute.xlu0 0
  %159 = vperm.xlu0 %158, %v35
  %v160 = vpop.permute.xlu0 %159
  %163 = vset.pattern.permute.xlu0 0
  %164 = vperm.xlu0 %163, %v36
  %v165 = vpop.permute.xlu0 %164
  %168 = vset.pattern.permute.xlu0 0
  %169 = vperm.xlu0 %168, %v37
  %v170 = vpop.permute.xlu0 %169
  %173 = vset.pattern.permute.xlu0 0
  %174 = vperm.xlu0 %173, %v38
  %v175 = vpop.permute.xlu0 %174
  %178 = vset.pattern.permute.xlu0 0
  %179 = vperm.xlu0 %178, %v39
  %v180 = vpop.permute.xlu0 %179
  %183 = vset.pattern.permute.xlu0 0
  %184 = vperm.xlu0 %183, %v40
  %v185 = vpop.permute.xlu0 %184
  %188 = vset.pattern.permute.xlu0 0
  %189 = vperm.xlu0 %188, %v41
  %v190 = vpop.permute.xlu0 %189
  %193 = vset.pattern.permute.xlu0 0
  %194 = vperm.xlu0 %193, %v42
  %v195 = vpop.permute.xlu0 %194
  %198 = vset.pattern.permute.xlu0 0
  %199 = vperm.xlu0 %198, %v43
  %v200 = vpop.permute.xlu0 %199
  %203 = vset.pattern.permute.xlu0 0
  %204 = vperm.xlu0 %203, %v44
  %v205 = vpop.permute.xlu0 %204
  %208 = vset.pattern.permute.xlu0 0
  %209 = vperm.xlu0 %208, %v45
  %v210 = vpop.permute.xlu0 %209
  %213 = vset.pattern.permute.xlu0 0
  %214 = vperm.xlu0 %213, %v46
  %v215 = vpop.permute.xlu0 %214
  %218 = vset.pattern.permute.xlu0 0
  %219 = vperm.xlu0 %218, %v47
  %v220 = vpop.permute.xlu0 %219
  %223 = vset.pattern.permute.xlu0 0
  %224 = vperm.xlu0 %223, %v48
  %v225 = vpop.permute.xlu0 %224
  %228 = vset.pattern.permute.xlu0 0
  %229 = vperm.xlu0 %228, %v49
  %v230 = vpop.permute.xlu0 %229
  %233 = vset.pattern.permute.xlu0 0
  %234 = vperm.xlu0 %233, %v50
  %v235 = vpop.permute.xlu0 %234
  %238 = vset.pattern.permute.xlu0 0
  %239 = vperm.xlu0 %238, %v51
  %v240 = vpop.permute.xlu0 %239
  %243 = vset.pattern.permute.xlu0 0
  %244 = vperm.xlu0 %243, %v52
  %v245 = vpop.permute.xlu0 %244
  %248 = vset.pattern.permute.xlu0 0
  %249 = vperm.xlu0 %248, %v53
  %v250 = vpop.permute.xlu0 %249
  %253 = vset.pattern.permute.xlu0 0
  %254 = vperm.xlu0 %253, %v54
  %v255 = vpop.permute.xlu0 %254
  %258 = vset.pattern.permute.xlu0 0
  %259 = vperm.xlu0 %258, %v55
  %v260 = vpop.permute.xlu0 %259
  %263 = vset.pattern.permute.xlu0 0
  %264 = vperm.xlu0 %263, %v56
  %v265 = vpop.permute.xlu0 %264
  %268 = vset.pattern.permute.xlu0 0
  %269 = vperm.xlu0 %268, %v57
  %v270 = vpop.permute.xlu0 %269
  %273 = vset.pattern.permute.xlu0 0
  %274 = vperm.xlu0 %273, %v58
  %v275 = vpop.permute.xlu0 %274
  %278 = vset.pattern.permute.xlu0 0
  %279 = vperm.xlu0 %278, %v59
  %v280 = vpop.permute.xlu0 %279
  %283 = vset.pattern.permute.xlu0 0
  %284 = vperm.xlu0 %283, %v60
  %v285 = vpop.permute.xlu0 %284
  %288 = vset.pattern.permute.xlu0 0
  %289 = vperm.xlu0 %288, %v61
  %v290 = vpop.permute.xlu0 %289
  %293 = vset.pattern.permute.xlu0 0
  %294 = vperm.xlu0 %293, %v62
  %v295 = vpop.permute.xlu0 %294
  %298 = vset.pattern.permute.xlu0 0
  %299 = vperm.xlu0 %298, %v63
  %v300 = vpop.permute.xlu0 %299
  %303 = vset.pattern.permute.xlu0 0
  %304 = vperm.xlu0 %303, %v64
  %v305 = vpop.permute.xlu0 %304
  %308 = vset.pattern.permute.xlu0 0
  %309 = vperm.xlu0 %308, %v65
  %v310 = vpop.permute.xlu0 %309
  %v312 = vlaneseq
  %v313 = vshrl.u32 %v312, 7
  %v314 = vsub.s32 0, %v313
  %v315 = vrot.slane %v66, %v314
  %v316 = vmul.f32 %v70, %v315
  %v317 = vmul.f32 %v75, %v315
  %v318 = vmul.f32 %v80, %v315
  %v319 = vmul.f32 %v85, %v315
  %v320 = vmul.f32 %v90, %v315
  %v321 = vmul.f32 %v95, %v315
  %v322 = vmul.f32 %v100, %v315
  %v323 = vmul.f32 %v105, %v315
  %v324 = vmul.f32 %v110, %v315
  %v325 = vmul.f32 %v115, %v315
  %v326 = vmul.f32 %v120, %v315
  %v327 = vmul.f32 %v125, %v315
  %v328 = vmul.f32 %v130, %v315
  %v329 = vmul.f32 %v135, %v315
  %v330 = vmul.f32 %v140, %v315
  %v331 = vmul.f32 %v145, %v315
  %v332 = vmul.f32 %v150, %v315
  %v333 = vmul.f32 %v155, %v315
  %v334 = vmul.f32 %v160, %v315
  %v335 = vmul.f32 %v165, %v315
  %v336 = vmul.f32 %v170, %v315
  %v337 = vmul.f32 %v175, %v315
  %v338 = vmul.f32 %v180, %v315
  %v339 = vmul.f32 %v185, %v315
  %v340 = vmul.f32 %v190, %v315
  %v341 = vmul.f32 %v195, %v315
  %v342 = vmul.f32 %v200, %v315
  %v343 = vmul.f32 %v205, %v315
  %v344 = vmul.f32 %v210, %v315
  %v345 = vmul.f32 %v215, %v315
  %v346 = vmul.f32 %v220, %v315
  %v347 = vmul.f32 %v225, %v315
  %v348 = vmul.f32 %v230, %v315
  %v349 = vmul.f32 %v235, %v315
  %v350 = vmul.f32 %v240, %v315
  %v351 = vmul.f32 %v245, %v315
  %v352 = vmul.f32 %v250, %v315
  %v353 = vmul.f32 %v255, %v315
  %v354 = vmul.f32 %v260, %v315
  %v355 = vmul.f32 %v265, %v315
  %v356 = vmul.f32 %v270, %v315
  %v357 = vmul.f32 %v275, %v315
  %v358 = vmul.f32 %v280, %v315
  %v359 = vmul.f32 %v285, %v315
  %v360 = vmul.f32 %v290, %v315
  %v361 = vmul.f32 %v295, %v315
  %v362 = vmul.f32 %v300, %v315
  %v363 = vmul.f32 %v305, %v315
  %v364 = vmul.f32 %v310, %v315
  %365 = vset.pattern.permute.xlu0 1
  %366 = vperm.xlu0 %365, %v17
  %v367 = vpop.permute.xlu0 %366
  %369 = vset.pattern.permute.xlu0 1
  %370 = vperm.xlu0 %369, %v18
  %v371 = vpop.permute.xlu0 %370
  %373 = vset.pattern.permute.xlu0 1
  %374 = vperm.xlu0 %373, %v19
  %v375 = vpop.permute.xlu0 %374
  %377 = vset.pattern.permute.xlu0 1
  %378 = vperm.xlu0 %377, %v20
  %v379 = vpop.permute.xlu0 %378
  %381 = vset.pattern.permute.xlu0 1
  %382 = vperm.xlu0 %381, %v21
  %v383 = vpop.permute.xlu0 %382
  %385 = vset.pattern.permute.xlu0 1
  %386 = vperm.xlu0 %385, %v22
  %v387 = vpop.permute.xlu0 %386
  %389 = vset.pattern.permute.xlu0 1
  %390 = vperm.xlu0 %389, %v23
  %v391 = vpop.permute.xlu0 %390
  %393 = vset.pattern.permute.xlu0 1
  %394 = vperm.xlu0 %393, %v24
  %v395 = vpop.permute.xlu0 %394
  %397 = vset.pattern.permute.xlu0 1
  %398 = vperm.xlu0 %397, %v25
  %v399 = vpop.permute.xlu0 %398
  %401 = vset.pattern.permute.xlu0 1
  %402 = vperm.xlu0 %401, %v26
  %v403 = vpop.permute.xlu0 %402
  %405 = vset.pattern.permute.xlu0 1
  %406 = vperm.xlu0 %405, %v27
  %v407 = vpop.permute.xlu0 %406
  %409 = vset.pattern.permute.xlu0 1
  %410 = vperm.xlu0 %409, %v28
  %v411 = vpop.permute.xlu0 %410
  %413 = vset.pattern.permute.xlu0 1
  %414 = vperm.xlu0 %413, %v29
  %v415 = vpop.permute.xlu0 %414
  %417 = vset.pattern.permute.xlu0 1
  %418 = vperm.xlu0 %417, %v30
  %v419 = vpop.permute.xlu0 %418
  %421 = vset.pattern.permute.xlu0 1
  %422 = vperm.xlu0 %421, %v31
  %v423 = vpop.permute.xlu0 %422
  %425 = vset.pattern.permute.xlu0 1
  %426 = vperm.xlu0 %425, %v32
  %v427 = vpop.permute.xlu0 %426
  %429 = vset.pattern.permute.xlu0 1
  %430 = vperm.xlu0 %429, %v33
  %v431 = vpop.permute.xlu0 %430
  %433 = vset.pattern.permute.xlu0 1
  %434 = vperm.xlu0 %433, %v34
  %v435 = vpop.permute.xlu0 %434
  %437 = vset.pattern.permute.xlu0 1
  %438 = vperm.xlu0 %437, %v35
  %v439 = vpop.permute.xlu0 %438
  %441 = vset.pattern.permute.xlu0 1
  %442 = vperm.xlu0 %441, %v36
  %v443 = vpop.permute.xlu0 %442
  %445 = vset.pattern.permute.xlu0 1
  %446 = vperm.xlu0 %445, %v37
  %v447 = vpop.permute.xlu0 %446
  %449 = vset.pattern.permute.xlu0 1
  %450 = vperm.xlu0 %449, %v38
  %v451 = vpop.permute.xlu0 %450
  %453 = vset.pattern.permute.xlu0 1
  %454 = vperm.xlu0 %453, %v39
  %v455 = vpop.permute.xlu0 %454
  %457 = vset.pattern.permute.xlu0 1
  %458 = vperm.xlu0 %457, %v40
  %v459 = vpop.permute.xlu0 %458
  %461 = vset.pattern.permute.xlu0 1
  %462 = vperm.xlu0 %461, %v41
  %v463 = vpop.permute.xlu0 %462
  %465 = vset.pattern.permute.xlu0 1
  %466 = vperm.xlu0 %465, %v42
  %v467 = vpop.permute.xlu0 %466
  %469 = vset.pattern.permute.xlu0 1
  %470 = vperm.xlu0 %469, %v43
  %v471 = vpop.permute.xlu0 %470
  %473 = vset.pattern.permute.xlu0 1
  %474 = vperm.xlu0 %473, %v44
  %v475 = vpop.permute.xlu0 %474
  %477 = vset.pattern.permute.xlu0 1
  %478 = vperm.xlu0 %477, %v45
  %v479 = vpop.permute.xlu0 %478
  %481 = vset.pattern.permute.xlu0 1
  %482 = vperm.xlu0 %481, %v46
  %v483 = vpop.permute.xlu0 %482
  %485 = vset.pattern.permute.xlu0 1
  %486 = vperm.xlu0 %485, %v47
  %v487 = vpop.permute.xlu0 %486
  %489 = vset.pattern.permute.xlu0 1
  %490 = vperm.xlu0 %489, %v48
  %v491 = vpop.permute.xlu0 %490
  %493 = vset.pattern.permute.xlu0 1
  %494 = vperm.xlu0 %493, %v49
  %v495 = vpop.permute.xlu0 %494
  %497 = vset.pattern.permute.xlu0 1
  %498 = vperm.xlu0 %497, %v50
  %v499 = vpop.permute.xlu0 %498
  %501 = vset.pattern.permute.xlu0 1
  %502 = vperm.xlu0 %501, %v51
  %v503 = vpop.permute.xlu0 %502
  %505 = vset.pattern.permute.xlu0 1
  %506 = vperm.xlu0 %505, %v52
  %v507 = vpop.permute.xlu0 %506
  %509 = vset.pattern.permute.xlu0 1
  %510 = vperm.xlu0 %509, %v53
  %v511 = vpop.permute.xlu0 %510
  %513 = vset.pattern.permute.xlu0 1
  %514 = vperm.xlu0 %513, %v54
  %v515 = vpop.permute.xlu0 %514
  %517 = vset.pattern.permute.xlu0 1
  %518 = vperm.xlu0 %517, %v55
  %v519 = vpop.permute.xlu0 %518
  %521 = vset.pattern.permute.xlu0 1
  %522 = vperm.xlu0 %521, %v56
  %v523 = vpop.permute.xlu0 %522
  %525 = vset.pattern.permute.xlu0 1
  %526 = vperm.xlu0 %525, %v57
  %v527 = vpop.permute.xlu0 %526
  %529 = vset.pattern.permute.xlu0 1
  %530 = vperm.xlu0 %529, %v58
  %v531 = vpop.permute.xlu0 %530
  %533 = vset.pattern.permute.xlu0 1
  %534 = vperm.xlu0 %533, %v59
  %v535 = vpop.permute.xlu0 %534
  %537 = vset.pattern.permute.xlu0 1
  %538 = vperm.xlu0 %537, %v60
  %v539 = vpop.permute.xlu0 %538
  %541 = vset.pattern.permute.xlu0 1
  %542 = vperm.xlu0 %541, %v61
  %v543 = vpop.permute.xlu0 %542
  %545 = vset.pattern.permute.xlu0 1
  %546 = vperm.xlu0 %545, %v62
  %v547 = vpop.permute.xlu0 %546
  %549 = vset.pattern.permute.xlu0 1
  %550 = vperm.xlu0 %549, %v63
  %v551 = vpop.permute.xlu0 %550
  %553 = vset.pattern.permute.xlu0 1
  %554 = vperm.xlu0 %553, %v64
  %v555 = vpop.permute.xlu0 %554
  %557 = vset.pattern.permute.xlu0 1
  %558 = vperm.xlu0 %557, %v65
  %v559 = vpop.permute.xlu0 %558
  %v561 = vlaneseq
  %v562 = vshrl.u32 %v561, 7
  %v563 = vsub.s32 1, %v562
  %v564 = vrot.slane %v66, %v563
  %v565 = vmul.f32 %v367, %v564
  %v566 = vmul.f32 %v371, %v564
  %v567 = vmul.f32 %v375, %v564
  %v568 = vmul.f32 %v379, %v564
  %v569 = vmul.f32 %v383, %v564
  %v570 = vmul.f32 %v387, %v564
  %v571 = vmul.f32 %v391, %v564
  %v572 = vmul.f32 %v395, %v564
  %v573 = vmul.f32 %v399, %v564
  %v574 = vmul.f32 %v403, %v564
  %v575 = vmul.f32 %v407, %v564
  %v576 = vmul.f32 %v411, %v564
  %v577 = vmul.f32 %v415, %v564
  %v578 = vmul.f32 %v419, %v564
  %v579 = vmul.f32 %v423, %v564
  %v580 = vmul.f32 %v427, %v564
  %v581 = vmul.f32 %v431, %v564
  %v582 = vmul.f32 %v435, %v564
  %v583 = vmul.f32 %v439, %v564
  %v584 = vmul.f32 %v443, %v564
  %v585 = vmul.f32 %v447, %v564
  %v586 = vmul.f32 %v451, %v564
  %v587 = vmul.f32 %v455, %v564
  %v588 = vmul.f32 %v459, %v564
  %v589 = vmul.f32 %v463, %v564
  %v590 = vmul.f32 %v467, %v564
  %v591 = vmul.f32 %v471, %v564
  %v592 = vmul.f32 %v475, %v564
  %v593 = vmul.f32 %v479, %v564
  %v594 = vmul.f32 %v483, %v564
  %v595 = vmul.f32 %v487, %v564
  %v596 = vmul.f32 %v491, %v564
  %v597 = vmul.f32 %v495, %v564
  %v598 = vmul.f32 %v499, %v564
  %v599 = vmul.f32 %v503, %v564
  %v600 = vmul.f32 %v507, %v564
  %v601 = vmul.f32 %v511, %v564
  %v602 = vmul.f32 %v515, %v564
  %v603 = vmul.f32 %v519, %v564
  %v604 = vmul.f32 %v523, %v564
  %v605 = vmul.f32 %v527, %v564
  %v606 = vmul.f32 %v531, %v564
  %v607 = vmul.f32 %v535, %v564
  %v608 = vmul.f32 %v539, %v564
  %v609 = vmul.f32 %v543, %v564
  %v610 = vmul.f32 %v547, %v564
  %v611 = vmul.f32 %v551, %v564
  %v612 = vmul.f32 %v555, %v564
  %v613 = vmul.f32 %v559, %v564
  %v614 = vadd.f32 %v316, %v565
  %v615 = vadd.f32 %v317, %v566
  %v616 = vadd.f32 %v318, %v567
  %v617 = vadd.f32 %v319, %v568
  %v618 = vadd.f32 %v320, %v569
  %v619 = vadd.f32 %v321, %v570
  %v620 = vadd.f32 %v322, %v571
  %v621 = vadd.f32 %v323, %v572
  %v622 = vadd.f32 %v324, %v573
  %v623 = vadd.f32 %v325, %v574
  %v624 = vadd.f32 %v326, %v575
  %v625 = vadd.f32 %v327, %v576
  %v626 = vadd.f32 %v328, %v577
  %v627 = vadd.f32 %v329, %v578
  %v628 = vadd.f32 %v330, %v579
  %v629 = vadd.f32 %v331, %v580
  %v630 = vadd.f32 %v332, %v581
  %v631 = vadd.f32 %v333, %v582
  %v632 = vadd.f32 %v334, %v583
  %v633 = vadd.f32 %v335, %v584
  %v634 = vadd.f32 %v336, %v585
  %v635 = vadd.f32 %v337, %v586
  %v636 = vadd.f32 %v338, %v587
  %v637 = vadd.f32 %v339, %v588
  %v638 = vadd.f32 %v340, %v589
  %v639 = vadd.f32 %v341, %v590
  %v640 = vadd.f32 %v342, %v591
  %v641 = vadd.f32 %v343, %v592
  %v642 = vadd.f32 %v344, %v593
  %v643 = vadd.f32 %v345, %v594
  %v644 = vadd.f32 %v346, %v595
  %v645 = vadd.f32 %v347, %v596
  %v646 = vadd.f32 %v348, %v597
  %v647 = vadd.f32 %v349, %v598
  %v648 = vadd.f32 %v350, %v599
  %v649 = vadd.f32 %v351, %v600
  %v650 = vadd.f32 %v352, %v601
  %v651 = vadd.f32 %v353, %v602
  %v652 = vadd.f32 %v354, %v603
  %v653 = vadd.f32 %v355, %v604
  %v654 = vadd.f32 %v356, %v605
  %v655 = vadd.f32 %v357, %v606
  %v656 = vadd.f32 %v358, %v607
  %v657 = vadd.f32 %v359, %v608
  %v658 = vadd.f32 %v360, %v609
  %v659 = vadd.f32 %v361, %v610
  %v660 = vadd.f32 %v362, %v611
  %v661 = vadd.f32 %v363, %v612
  %v662 = vadd.f32 %v364, %v613
  %663 = vset.pattern.permute.xlu0 2
  %664 = vperm.xlu0 %663, %v17
  %v665 = vpop.permute.xlu0 %664
  %667 = vset.pattern.permute.xlu0 2
  %668 = vperm.xlu0 %667, %v18
  %v669 = vpop.permute.xlu0 %668
  %671 = vset.pattern.permute.xlu0 2
  %672 = vperm.xlu0 %671, %v19
  %v673 = vpop.permute.xlu0 %672
  %675 = vset.pattern.permute.xlu0 2
  %676 = vperm.xlu0 %675, %v20
  %v677 = vpop.permute.xlu0 %676
  %679 = vset.pattern.permute.xlu0 2
  %680 = vperm.xlu0 %679, %v21
  %v681 = vpop.permute.xlu0 %680
  %683 = vset.pattern.permute.xlu0 2
  %684 = vperm.xlu0 %683, %v22
  %v685 = vpop.permute.xlu0 %684
  %687 = vset.pattern.permute.xlu0 2
  %688 = vperm.xlu0 %687, %v23
  %v689 = vpop.permute.xlu0 %688
  %691 = vset.pattern.permute.xlu0 2
  %692 = vperm.xlu0 %691, %v24
  %v693 = vpop.permute.xlu0 %692
  %695 = vset.pattern.permute.xlu0 2
  %696 = vperm.xlu0 %695, %v25
  %v697 = vpop.permute.xlu0 %696
  %699 = vset.pattern.permute.xlu0 2
  %700 = vperm.xlu0 %699, %v26
  %v701 = vpop.permute.xlu0 %700
  %703 = vset.pattern.permute.xlu0 2
  %704 = vperm.xlu0 %703, %v27
  %v705 = vpop.permute.xlu0 %704
  %707 = vset.pattern.permute.xlu0 2
  %708 = vperm.xlu0 %707, %v28
  %v709 = vpop.permute.xlu0 %708
  %711 = vset.pattern.permute.xlu0 2
  %712 = vperm.xlu0 %711, %v29
  %v713 = vpop.permute.xlu0 %712
  %715 = vset.pattern.permute.xlu0 2
  %716 = vperm.xlu0 %715, %v30
  %v717 = vpop.permute.xlu0 %716
  %719 = vset.pattern.permute.xlu0 2
  %720 = vperm.xlu0 %719, %v31
  %v721 = vpop.permute.xlu0 %720
  %723 = vset.pattern.permute.xlu0 2
  %724 = vperm.xlu0 %723, %v32
  %v725 = vpop.permute.xlu0 %724
  %727 = vset.pattern.permute.xlu0 2
  %728 = vperm.xlu0 %727, %v33
  %v729 = vpop.permute.xlu0 %728
  %731 = vset.pattern.permute.xlu0 2
  %732 = vperm.xlu0 %731, %v34
  %v733 = vpop.permute.xlu0 %732
  %735 = vset.pattern.permute.xlu0 2
  %736 = vperm.xlu0 %735, %v35
  %v737 = vpop.permute.xlu0 %736
  %739 = vset.pattern.permute.xlu0 2
  %740 = vperm.xlu0 %739, %v36
  %v741 = vpop.permute.xlu0 %740
  %743 = vset.pattern.permute.xlu0 2
  %744 = vperm.xlu0 %743, %v37
  %v745 = vpop.permute.xlu0 %744
  %747 = vset.pattern.permute.xlu0 2
  %748 = vperm.xlu0 %747, %v38
  %v749 = vpop.permute.xlu0 %748
  %751 = vset.pattern.permute.xlu0 2
  %752 = vperm.xlu0 %751, %v39
  %v753 = vpop.permute.xlu0 %752
  %755 = vset.pattern.permute.xlu0 2
  %756 = vperm.xlu0 %755, %v40
  %v757 = vpop.permute.xlu0 %756
  %759 = vset.pattern.permute.xlu0 2
  %760 = vperm.xlu0 %759, %v41
  %v761 = vpop.permute.xlu0 %760
  %763 = vset.pattern.permute.xlu0 2
  %764 = vperm.xlu0 %763, %v42
  %v765 = vpop.permute.xlu0 %764
  %767 = vset.pattern.permute.xlu0 2
  %768 = vperm.xlu0 %767, %v43
  %v769 = vpop.permute.xlu0 %768
  %771 = vset.pattern.permute.xlu0 2
  %772 = vperm.xlu0 %771, %v44
  %v773 = vpop.permute.xlu0 %772
  %775 = vset.pattern.permute.xlu0 2
  %776 = vperm.xlu0 %775, %v45
  %v777 = vpop.permute.xlu0 %776
  %779 = vset.pattern.permute.xlu0 2
  %780 = vperm.xlu0 %779, %v46
  %v781 = vpop.permute.xlu0 %780
  %783 = vset.pattern.permute.xlu0 2
  %784 = vperm.xlu0 %783, %v47
  %v785 = vpop.permute.xlu0 %784
  %787 = vset.pattern.permute.xlu0 2
  %788 = vperm.xlu0 %787, %v48
  %v789 = vpop.permute.xlu0 %788
  %791 = vset.pattern.permute.xlu0 2
  %792 = vperm.xlu0 %791, %v49
  %v793 = vpop.permute.xlu0 %792
  %795 = vset.pattern.permute.xlu0 2
  %796 = vperm.xlu0 %795, %v50
  %v797 = vpop.permute.xlu0 %796
  %799 = vset.pattern.permute.xlu0 2
  %800 = vperm.xlu0 %799, %v51
  %v801 = vpop.permute.xlu0 %800
  %803 = vset.pattern.permute.xlu0 2
  %804 = vperm.xlu0 %803, %v52
  %v805 = vpop.permute.xlu0 %804
  %807 = vset.pattern.permute.xlu0 2
  %808 = vperm.xlu0 %807, %v53
  %v809 = vpop.permute.xlu0 %808
  %811 = vset.pattern.permute.xlu0 2
  %812 = vperm.xlu0 %811, %v54
  %v813 = vpop.permute.xlu0 %812
  %815 = vset.pattern.permute.xlu0 2
  %816 = vperm.xlu0 %815, %v55
  %v817 = vpop.permute.xlu0 %816
  %819 = vset.pattern.permute.xlu0 2
  %820 = vperm.xlu0 %819, %v56
  %v821 = vpop.permute.xlu0 %820
  %823 = vset.pattern.permute.xlu0 2
  %824 = vperm.xlu0 %823, %v57
  %v825 = vpop.permute.xlu0 %824
  %827 = vset.pattern.permute.xlu0 2
  %828 = vperm.xlu0 %827, %v58
  %v829 = vpop.permute.xlu0 %828
  %831 = vset.pattern.permute.xlu0 2
  %832 = vperm.xlu0 %831, %v59
  %v833 = vpop.permute.xlu0 %832
  %835 = vset.pattern.permute.xlu0 2
  %836 = vperm.xlu0 %835, %v60
  %v837 = vpop.permute.xlu0 %836
  %839 = vset.pattern.permute.xlu0 2
  %840 = vperm.xlu0 %839, %v61
  %v841 = vpop.permute.xlu0 %840
  %843 = vset.pattern.permute.xlu0 2
  %844 = vperm.xlu0 %843, %v62
  %v845 = vpop.permute.xlu0 %844
  %847 = vset.pattern.permute.xlu0 2
  %848 = vperm.xlu0 %847, %v63
  %v849 = vpop.permute.xlu0 %848
  %851 = vset.pattern.permute.xlu0 2
  %852 = vperm.xlu0 %851, %v64
  %v853 = vpop.permute.xlu0 %852
  %855 = vset.pattern.permute.xlu0 2
  %856 = vperm.xlu0 %855, %v65
  %v857 = vpop.permute.xlu0 %856
  %v859 = vlaneseq
  %v860 = vshrl.u32 %v859, 7
  %v861 = vsub.s32 2, %v860
  %v862 = vrot.slane %v66, %v861
  %v863 = vmul.f32 %v665, %v862
  %v864 = vmul.f32 %v669, %v862
  %v865 = vmul.f32 %v673, %v862
  %v866 = vmul.f32 %v677, %v862
  %v867 = vmul.f32 %v681, %v862
  %v868 = vmul.f32 %v685, %v862
  %v869 = vmul.f32 %v689, %v862
  %v870 = vmul.f32 %v693, %v862
  %v871 = vmul.f32 %v697, %v862
  %v872 = vmul.f32 %v701, %v862
  %v873 = vmul.f32 %v705, %v862
  %v874 = vmul.f32 %v709, %v862
  %v875 = vmul.f32 %v713, %v862
  %v876 = vmul.f32 %v717, %v862
  %v877 = vmul.f32 %v721, %v862
  %v878 = vmul.f32 %v725, %v862
  %v879 = vmul.f32 %v729, %v862
  %v880 = vmul.f32 %v733, %v862
  %v881 = vmul.f32 %v737, %v862
  %v882 = vmul.f32 %v741, %v862
  %v883 = vmul.f32 %v745, %v862
  %v884 = vmul.f32 %v749, %v862
  %v885 = vmul.f32 %v753, %v862
  %v886 = vmul.f32 %v757, %v862
  %v887 = vmul.f32 %v761, %v862
  %v888 = vmul.f32 %v765, %v862
  %v889 = vmul.f32 %v769, %v862
  %v890 = vmul.f32 %v773, %v862
  %v891 = vmul.f32 %v777, %v862
  %v892 = vmul.f32 %v781, %v862
  %v893 = vmul.f32 %v785, %v862
  %v894 = vmul.f32 %v789, %v862
  %v895 = vmul.f32 %v793, %v862
  %v896 = vmul.f32 %v797, %v862
  %v897 = vmul.f32 %v801, %v862
  %v898 = vmul.f32 %v805, %v862
  %v899 = vmul.f32 %v809, %v862
  %v900 = vmul.f32 %v813, %v862
  %v901 = vmul.f32 %v817, %v862
  %v902 = vmul.f32 %v821, %v862
  %v903 = vmul.f32 %v825, %v862
  %v904 = vmul.f32 %v829, %v862
  %v905 = vmul.f32 %v833, %v862
  %v906 = vmul.f32 %v837, %v862
  %v907 = vmul.f32 %v841, %v862
  %v908 = vmul.f32 %v845, %v862
  %v909 = vmul.f32 %v849, %v862
  %v910 = vmul.f32 %v853, %v862
  %v911 = vmul.f32 %v857, %v862
  %v912 = vadd.f32 %v614, %v863
  %v913 = vadd.f32 %v615, %v864
  %v914 = vadd.f32 %v616, %v865
  %v915 = vadd.f32 %v617, %v866
  %v916 = vadd.f32 %v618, %v867
  %v917 = vadd.f32 %v619, %v868
  %v918 = vadd.f32 %v620, %v869
  %v919 = vadd.f32 %v621, %v870
  %v920 = vadd.f32 %v622, %v871
  %v921 = vadd.f32 %v623, %v872
  %v922 = vadd.f32 %v624, %v873
  %v923 = vadd.f32 %v625, %v874
  %v924 = vadd.f32 %v626, %v875
  %v925 = vadd.f32 %v627, %v876
  %v926 = vadd.f32 %v628, %v877
  %v927 = vadd.f32 %v629, %v878
  %v928 = vadd.f32 %v630, %v879
  %v929 = vadd.f32 %v631, %v880
  %v930 = vadd.f32 %v632, %v881
  %v931 = vadd.f32 %v633, %v882
  %v932 = vadd.f32 %v634, %v883
  %v933 = vadd.f32 %v635, %v884
  %v934 = vadd.f32 %v636, %v885
  %v935 = vadd.f32 %v637, %v886
  %v936 = vadd.f32 %v638, %v887
  %v937 = vadd.f32 %v639, %v888
  %v938 = vadd.f32 %v640, %v889
  %v939 = vadd.f32 %v641, %v890
  %v940 = vadd.f32 %v642, %v891
  %v941 = vadd.f32 %v643, %v892
  %v942 = vadd.f32 %v644, %v893
  %v943 = vadd.f32 %v645, %v894
  %v944 = vadd.f32 %v646, %v895
  %v945 = vadd.f32 %v647, %v896
  %v946 = vadd.f32 %v648, %v897
  %v947 = vadd.f32 %v649, %v898
  %v948 = vadd.f32 %v650, %v899
  %v949 = vadd.f32 %v651, %v900
  %v950 = vadd.f32 %v652, %v901
  %v951 = vadd.f32 %v653, %v902
  %v952 = vadd.f32 %v654, %v903
  %v953 = vadd.f32 %v655, %v904
  %v954 = vadd.f32 %v656, %v905
  %v955 = vadd.f32 %v657, %v906
  %v956 = vadd.f32 %v658, %v907
  %v957 = vadd.f32 %v659, %v908
  %v958 = vadd.f32 %v660, %v909
  %v959 = vadd.f32 %v661, %v910
  %v960 = vadd.f32 %v662, %v911
  %961 = vset.pattern.permute.xlu0 3
  %962 = vperm.xlu0 %961, %v17
  %v963 = vpop.permute.xlu0 %962
  %965 = vset.pattern.permute.xlu0 3
  %966 = vperm.xlu0 %965, %v18
  %v967 = vpop.permute.xlu0 %966
  %969 = vset.pattern.permute.xlu0 3
  %970 = vperm.xlu0 %969, %v19
  %v971 = vpop.permute.xlu0 %970
  %973 = vset.pattern.permute.xlu0 3
  %974 = vperm.xlu0 %973, %v20
  %v975 = vpop.permute.xlu0 %974
  %977 = vset.pattern.permute.xlu0 3
  %978 = vperm.xlu0 %977, %v21
  %v979 = vpop.permute.xlu0 %978
  %981 = vset.pattern.permute.xlu0 3
  %982 = vperm.xlu0 %981, %v22
  %v983 = vpop.permute.xlu0 %982
  %985 = vset.pattern.permute.xlu0 3
  %986 = vperm.xlu0 %985, %v23
  %v987 = vpop.permute.xlu0 %986
  %989 = vset.pattern.permute.xlu0 3
  %990 = vperm.xlu0 %989, %v24
  %v991 = vpop.permute.xlu0 %990
  %993 = vset.pattern.permute.xlu0 3
  %994 = vperm.xlu0 %993, %v25
  %v995 = vpop.permute.xlu0 %994
  %997 = vset.pattern.permute.xlu0 3
  %998 = vperm.xlu0 %997, %v26
  %v999 = vpop.permute.xlu0 %998
  %1001 = vset.pattern.permute.xlu0 3
  %1002 = vperm.xlu0 %1001, %v27
  %v1003 = vpop.permute.xlu0 %1002
  %1005 = vset.pattern.permute.xlu0 3
  %1006 = vperm.xlu0 %1005, %v28
  %v1007 = vpop.permute.xlu0 %1006
  %1009 = vset.pattern.permute.xlu0 3
  %1010 = vperm.xlu0 %1009, %v29
  %v1011 = vpop.permute.xlu0 %1010
  %1013 = vset.pattern.permute.xlu0 3
  %1014 = vperm.xlu0 %1013, %v30
  %v1015 = vpop.permute.xlu0 %1014
  %1017 = vset.pattern.permute.xlu0 3
  %1018 = vperm.xlu0 %1017, %v31
  %v1019 = vpop.permute.xlu0 %1018
  %1021 = vset.pattern.permute.xlu0 3
  %1022 = vperm.xlu0 %1021, %v32
  %v1023 = vpop.permute.xlu0 %1022
  %1025 = vset.pattern.permute.xlu0 3
  %1026 = vperm.xlu0 %1025, %v33
  %v1027 = vpop.permute.xlu0 %1026
  %1029 = vset.pattern.permute.xlu0 3
  %1030 = vperm.xlu0 %1029, %v34
  %v1031 = vpop.permute.xlu0 %1030
  %1033 = vset.pattern.permute.xlu0 3
  %1034 = vperm.xlu0 %1033, %v35
  %v1035 = vpop.permute.xlu0 %1034
  %1037 = vset.pattern.permute.xlu0 3
  %1038 = vperm.xlu0 %1037, %v36
  %v1039 = vpop.permute.xlu0 %1038
  %1041 = vset.pattern.permute.xlu0 3
  %1042 = vperm.xlu0 %1041, %v37
  %v1043 = vpop.permute.xlu0 %1042
  %1045 = vset.pattern.permute.xlu0 3
  %1046 = vperm.xlu0 %1045, %v38
  %v1047 = vpop.permute.xlu0 %1046
  %1049 = vset.pattern.permute.xlu0 3
  %1050 = vperm.xlu0 %1049, %v39
  %v1051 = vpop.permute.xlu0 %1050
  %1053 = vset.pattern.permute.xlu0 3
  %1054 = vperm.xlu0 %1053, %v40
  %v1055 = vpop.permute.xlu0 %1054
  %1057 = vset.pattern.permute.xlu0 3
  %1058 = vperm.xlu0 %1057, %v41
  %v1059 = vpop.permute.xlu0 %1058
  %1061 = vset.pattern.permute.xlu0 3
  %1062 = vperm.xlu0 %1061, %v42
  %v1063 = vpop.permute.xlu0 %1062
  %1065 = vset.pattern.permute.xlu0 3
  %1066 = vperm.xlu0 %1065, %v43
  %v1067 = vpop.permute.xlu0 %1066
  %1069 = vset.pattern.permute.xlu0 3
  %1070 = vperm.xlu0 %1069, %v44
  %v1071 = vpop.permute.xlu0 %1070
  %1073 = vset.pattern.permute.xlu0 3
  %1074 = vperm.xlu0 %1073, %v45
  %v1075 = vpop.permute.xlu0 %1074
  %1077 = vset.pattern.permute.xlu0 3
  %1078 = vperm.xlu0 %1077, %v46
  %v1079 = vpop.permute.xlu0 %1078
  %1081 = vset.pattern.permute.xlu0 3
  %1082 = vperm.xlu0 %1081, %v47
  %v1083 = vpop.permute.xlu0 %1082
  %1085 = vset.pattern.permute.xlu0 3
  %1086 = vperm.xlu0 %1085, %v48
  %v1087 = vpop.permute.xlu0 %1086
  %1089 = vset.pattern.permute.xlu0 3
  %1090 = vperm.xlu0 %1089, %v49
  %v1091 = vpop.permute.xlu0 %1090
  %1093 = vset.pattern.permute.xlu0 3
  %1094 = vperm.xlu0 %1093, %v50
  %v1095 = vpop.permute.xlu0 %1094
  %1097 = vset.pattern.permute.xlu0 3
  %1098 = vperm.xlu0 %1097, %v51
  %v1099 = vpop.permute.xlu0 %1098
  %1101 = vset.pattern.permute.xlu0 3
  %1102 = vperm.xlu0 %1101, %v52
  %v1103 = vpop.permute.xlu0 %1102
  %1105 = vset.pattern.permute.xlu0 3
  %1106 = vperm.xlu0 %1105, %v53
  %v1107 = vpop.permute.xlu0 %1106
  %1109 = vset.pattern.permute.xlu0 3
  %1110 = vperm.xlu0 %1109, %v54
  %v1111 = vpop.permute.xlu0 %1110
  %1113 = vset.pattern.permute.xlu0 3
  %1114 = vperm.xlu0 %1113, %v55
  %v1115 = vpop.permute.xlu0 %1114
  %1117 = vset.pattern.permute.xlu0 3
  %1118 = vperm.xlu0 %1117, %v56
  %v1119 = vpop.permute.xlu0 %1118
  %1121 = vset.pattern.permute.xlu0 3
  %1122 = vperm.xlu0 %1121, %v57
  %v1123 = vpop.permute.xlu0 %1122
  %1125 = vset.pattern.permute.xlu0 3
  %1126 = vperm.xlu0 %1125, %v58
  %v1127 = vpop.permute.xlu0 %1126
  %1129 = vset.pattern.permute.xlu0 3
  %1130 = vperm.xlu0 %1129, %v59
  %v1131 = vpop.permute.xlu0 %1130
  %1133 = vset.pattern.permute.xlu0 3
  %1134 = vperm.xlu0 %1133, %v60
  %v1135 = vpop.permute.xlu0 %1134
  %1137 = vset.pattern.permute.xlu0 3
  %1138 = vperm.xlu0 %1137, %v61
  %v1139 = vpop.permute.xlu0 %1138
  %1141 = vset.pattern.permute.xlu0 3
  %1142 = vperm.xlu0 %1141, %v62
  %v1143 = vpop.permute.xlu0 %1142
  %1145 = vset.pattern.permute.xlu0 3
  %1146 = vperm.xlu0 %1145, %v63
  %v1147 = vpop.permute.xlu0 %1146
  %1149 = vset.pattern.permute.xlu0 3
  %1150 = vperm.xlu0 %1149, %v64
  %v1151 = vpop.permute.xlu0 %1150
  %1153 = vset.pattern.permute.xlu0 3
  %1154 = vperm.xlu0 %1153, %v65
  %v1155 = vpop.permute.xlu0 %1154
  %v1157 = vlaneseq
  %v1158 = vshrl.u32 %v1157, 7
  %v1159 = vsub.s32 3, %v1158
  %v1160 = vrot.slane %v66, %v1159
  %v1161 = vmul.f32 %v963, %v1160
  %v1162 = vmul.f32 %v967, %v1160
  %v1163 = vmul.f32 %v971, %v1160
  %v1164 = vmul.f32 %v975, %v1160
  %v1165 = vmul.f32 %v979, %v1160
  %v1166 = vmul.f32 %v983, %v1160
  %v1167 = vmul.f32 %v987, %v1160
  %v1168 = vmul.f32 %v991, %v1160
  %v1169 = vmul.f32 %v995, %v1160
  %v1170 = vmul.f32 %v999, %v1160
  %v1171 = vmul.f32 %v1003, %v1160
  %v1172 = vmul.f32 %v1007, %v1160
  %v1173 = vmul.f32 %v1011, %v1160
  %v1174 = vmul.f32 %v1015, %v1160
  %v1175 = vmul.f32 %v1019, %v1160
  %v1176 = vmul.f32 %v1023, %v1160
  %v1177 = vmul.f32 %v1027, %v1160
  %v1178 = vmul.f32 %v1031, %v1160
  %v1179 = vmul.f32 %v1035, %v1160
  %v1180 = vmul.f32 %v1039, %v1160
  %v1181 = vmul.f32 %v1043, %v1160
  %v1182 = vmul.f32 %v1047, %v1160
  %v1183 = vmul.f32 %v1051, %v1160
  %v1184 = vmul.f32 %v1055, %v1160
  %v1185 = vmul.f32 %v1059, %v1160
  %v1186 = vmul.f32 %v1063, %v1160
  %v1187 = vmul.f32 %v1067, %v1160
  %v1188 = vmul.f32 %v1071, %v1160
  %v1189 = vmul.f32 %v1075, %v1160
  %v1190 = vmul.f32 %v1079, %v1160
  %v1191 = vmul.f32 %v1083, %v1160
  %v1192 = vmul.f32 %v1087, %v1160
  %v1193 = vmul.f32 %v1091, %v1160
  %v1194 = vmul.f32 %v1095, %v1160
  %v1195 = vmul.f32 %v1099, %v1160
  %v1196 = vmul.f32 %v1103, %v1160
  %v1197 = vmul.f32 %v1107, %v1160
  %v1198 = vmul.f32 %v1111, %v1160
  %v1199 = vmul.f32 %v1115, %v1160
  %v1200 = vmul.f32 %v1119, %v1160
  %v1201 = vmul.f32 %v1123, %v1160
  %v1202 = vmul.f32 %v1127, %v1160
  %v1203 = vmul.f32 %v1131, %v1160
  %v1204 = vmul.f32 %v1135, %v1160
  %v1205 = vmul.f32 %v1139, %v1160
  %v1206 = vmul.f32 %v1143, %v1160
  %v1207 = vmul.f32 %v1147, %v1160
  %v1208 = vmul.f32 %v1151, %v1160
  %v1209 = vmul.f32 %v1155, %v1160
  %v1210 = vadd.f32 %v912, %v1161
  %v1211 = vadd.f32 %v913, %v1162
  %v1212 = vadd.f32 %v914, %v1163
  %v1213 = vadd.f32 %v915, %v1164
  %v1214 = vadd.f32 %v916, %v1165
  %v1215 = vadd.f32 %v917, %v1166
  %v1216 = vadd.f32 %v918, %v1167
  %v1217 = vadd.f32 %v919, %v1168
  %v1218 = vadd.f32 %v920, %v1169
  %v1219 = vadd.f32 %v921, %v1170
  %v1220 = vadd.f32 %v922, %v1171
  %v1221 = vadd.f32 %v923, %v1172
  %v1222 = vadd.f32 %v924, %v1173
  %v1223 = vadd.f32 %v925, %v1174
  %v1224 = vadd.f32 %v926, %v1175
  %v1225 = vadd.f32 %v927, %v1176
  %v1226 = vadd.f32 %v928, %v1177
  %v1227 = vadd.f32 %v929, %v1178
  %v1228 = vadd.f32 %v930, %v1179
  %v1229 = vadd.f32 %v931, %v1180
  %v1230 = vadd.f32 %v932, %v1181
  %v1231 = vadd.f32 %v933, %v1182
  %v1232 = vadd.f32 %v934, %v1183
  %v1233 = vadd.f32 %v935, %v1184
  %v1234 = vadd.f32 %v936, %v1185
  %v1235 = vadd.f32 %v937, %v1186
  %v1236 = vadd.f32 %v938, %v1187
  %v1237 = vadd.f32 %v939, %v1188
  %v1238 = vadd.f32 %v940, %v1189
  %v1239 = vadd.f32 %v941, %v1190
  %v1240 = vadd.f32 %v942, %v1191
  %v1241 = vadd.f32 %v943, %v1192
  %v1242 = vadd.f32 %v944, %v1193
  %v1243 = vadd.f32 %v945, %v1194
  %v1244 = vadd.f32 %v946, %v1195
  %v1245 = vadd.f32 %v947, %v1196
  %v1246 = vadd.f32 %v948, %v1197
  %v1247 = vadd.f32 %v949, %v1198
  %v1248 = vadd.f32 %v950, %v1199
  %v1249 = vadd.f32 %v951, %v1200
  %v1250 = vadd.f32 %v952, %v1201
  %v1251 = vadd.f32 %v953, %v1202
  %v1252 = vadd.f32 %v954, %v1203
  %v1253 = vadd.f32 %v955, %v1204
  %v1254 = vadd.f32 %v956, %v1205
  %v1255 = vadd.f32 %v957, %v1206
  %v1256 = vadd.f32 %v958, %v1207
  %v1257 = vadd.f32 %v959, %v1208
  %v1258 = vadd.f32 %v960, %v1209
  %vm1259 = vcmask 261120
  %v1260 = vsel %vm1259, %v1210, 0.0
  %v1261 = vsel %vm1259, %v1211, 0.0
  %v1262 = vadd.f32 %v1260, %v1261
  %v1263 = vsel %vm1259, %v1212, 0.0
  %v1264 = vadd.f32 %v1262, %v1263
  %v1265 = vsel %vm1259, %v1213, 0.0
  %v1266 = vadd.f32 %v1264, %v1265
  %v1267 = vsel %vm1259, %v1214, 0.0
  %v1268 = vadd.f32 %v1266, %v1267
  %v1269 = vsel %vm1259, %v1215, 0.0
  %v1270 = vadd.f32 %v1268, %v1269
  %v1271 = vsel %vm1259, %v1216, 0.0
  %v1272 = vadd.f32 %v1270, %v1271
  %v1273 = vsel %vm1259, %v1217, 0.0
  %v1274 = vadd.f32 %v1272, %v1273
  %v1275 = vsel %vm1259, %v1218, 0.0
  %v1276 = vadd.f32 %v1274, %v1275
  %v1277 = vsel %vm1259, %v1219, 0.0
  %v1278 = vadd.f32 %v1276, %v1277
  %v1279 = vsel %vm1259, %v1220, 0.0
  %v1280 = vadd.f32 %v1278, %v1279
  %v1281 = vsel %vm1259, %v1221, 0.0
  %v1282 = vadd.f32 %v1280, %v1281
  %v1283 = vsel %vm1259, %v1222, 0.0
  %v1284 = vadd.f32 %v1282, %v1283
  %v1285 = vsel %vm1259, %v1223, 0.0
  %v1286 = vadd.f32 %v1284, %v1285
  %v1287 = vsel %vm1259, %v1224, 0.0
  %v1288 = vadd.f32 %v1286, %v1287
  %v1289 = vsel %vm1259, %v1225, 0.0
  %v1290 = vadd.f32 %v1288, %v1289
  %v1291 = vsel %vm1259, %v1226, 0.0
  %v1292 = vadd.f32 %v1290, %v1291
  %v1293 = vsel %vm1259, %v1227, 0.0
  %v1294 = vadd.f32 %v1292, %v1293
  %v1295 = vsel %vm1259, %v1228, 0.0
  %v1296 = vadd.f32 %v1294, %v1295
  %v1297 = vsel %vm1259, %v1229, 0.0
  %v1298 = vadd.f32 %v1296, %v1297
  %v1299 = vsel %vm1259, %v1230, 0.0
  %v1300 = vadd.f32 %v1298, %v1299
  %v1301 = vsel %vm1259, %v1231, 0.0
  %v1302 = vadd.f32 %v1300, %v1301
  %v1303 = vsel %vm1259, %v1232, 0.0
  %v1304 = vadd.f32 %v1302, %v1303
  %v1305 = vsel %vm1259, %v1233, 0.0
  %v1306 = vadd.f32 %v1304, %v1305
  %v1307 = vsel %vm1259, %v1234, 0.0
  %v1308 = vadd.f32 %v1306, %v1307
  %v1309 = vsel %vm1259, %v1235, 0.0
  %v1310 = vadd.f32 %v1308, %v1309
  %v1311 = vsel %vm1259, %v1236, 0.0
  %v1312 = vadd.f32 %v1310, %v1311
  %v1313 = vsel %vm1259, %v1237, 0.0
  %v1314 = vadd.f32 %v1312, %v1313
  %v1315 = vsel %vm1259, %v1238, 0.0
  %v1316 = vadd.f32 %v1314, %v1315
  %v1317 = vsel %vm1259, %v1239, 0.0
  %v1318 = vadd.f32 %v1316, %v1317
  %v1319 = vsel %vm1259, %v1240, 0.0
  %v1320 = vadd.f32 %v1318, %v1319
  %v1321 = vsel %vm1259, %v1241, 0.0
  %v1322 = vadd.f32 %v1320, %v1321
  %v1323 = vsel %vm1259, %v1242, 0.0
  %v1324 = vadd.f32 %v1322, %v1323
  %v1325 = vsel %vm1259, %v1243, 0.0
  %v1326 = vadd.f32 %v1324, %v1325
  %v1327 = vsel %vm1259, %v1244, 0.0
  %v1328 = vadd.f32 %v1326, %v1327
  %v1329 = vsel %vm1259, %v1245, 0.0
  %v1330 = vadd.f32 %v1328, %v1329
  %v1331 = vsel %vm1259, %v1246, 0.0
  %v1332 = vadd.f32 %v1330, %v1331
  %v1333 = vsel %vm1259, %v1247, 0.0
  %v1334 = vadd.f32 %v1332, %v1333
  %v1335 = vsel %vm1259, %v1248, 0.0
  %v1336 = vadd.f32 %v1334, %v1335
  %v1337 = vsel %vm1259, %v1249, 0.0
  %v1338 = vadd.f32 %v1336, %v1337
  %v1339 = vsel %vm1259, %v1250, 0.0
  %v1340 = vadd.f32 %v1338, %v1339
  %v1341 = vsel %vm1259, %v1251, 0.0
  %v1342 = vadd.f32 %v1340, %v1341
  %v1343 = vsel %vm1259, %v1252, 0.0
  %v1344 = vadd.f32 %v1342, %v1343
  %v1345 = vsel %vm1259, %v1253, 0.0
  %v1346 = vadd.f32 %v1344, %v1345
  %v1347 = vsel %vm1259, %v1254, 0.0
  %v1348 = vadd.f32 %v1346, %v1347
  %v1349 = vsel %vm1259, %v1255, 0.0
  %v1350 = vadd.f32 %v1348, %v1349
  %v1351 = vsel %vm1259, %v1256, 0.0
  %v1352 = vadd.f32 %v1350, %v1351
  %v1353 = vsel %vm1259, %v1257, 0.0
  %v1354 = vadd.f32 %v1352, %v1353
  %v1355 = vsel %vm1259, %v1258, 0.0
  %v1356 = vadd.f32 %v1354, %v1355
  %v1357 = vrot.slane %v1356, 4
  %v1358 = vadd.f32 %v1356, %v1357
  %v1359 = vrot.slane %v1358, 2
  %v1360 = vadd.f32 %v1358, %v1359
  %v1361 = vrot.slane %v1360, 1
  %v1362 = vadd.f32 %v1360, %v1361
  %v1363 = vmul.f32 %v1362, 0.0025510204
  %v1364 = vsub.f32 %v1210, %v1363
  %v1365 = vsub.f32 %v1211, %v1363
  %v1366 = vsub.f32 %v1212, %v1363
  %v1367 = vsub.f32 %v1213, %v1363
  %v1368 = vsub.f32 %v1214, %v1363
  %v1369 = vsub.f32 %v1215, %v1363
  %v1370 = vsub.f32 %v1216, %v1363
  %v1371 = vsub.f32 %v1217, %v1363
  %v1372 = vsub.f32 %v1218, %v1363
  %v1373 = vsub.f32 %v1219, %v1363
  %v1374 = vsub.f32 %v1220, %v1363
  %v1375 = vsub.f32 %v1221, %v1363
  %v1376 = vsub.f32 %v1222, %v1363
  %v1377 = vsub.f32 %v1223, %v1363
  %v1378 = vsub.f32 %v1224, %v1363
  %v1379 = vsub.f32 %v1225, %v1363
  %v1380 = vsub.f32 %v1226, %v1363
  %v1381 = vsub.f32 %v1227, %v1363
  %v1382 = vsub.f32 %v1228, %v1363
  %v1383 = vsub.f32 %v1229, %v1363
  %v1384 = vsub.f32 %v1230, %v1363
  %v1385 = vsub.f32 %v1231, %v1363
  %v1386 = vsub.f32 %v1232, %v1363
  %v1387 = vsub.f32 %v1233, %v1363
  %v1388 = vsub.f32 %v1234, %v1363
  %v1389 = vsub.f32 %v1235, %v1363
  %v1390 = vsub.f32 %v1236, %v1363
  %v1391 = vsub.f32 %v1237, %v1363
  %v1392 = vsub.f32 %v1238, %v1363
  %v1393 = vsub.f32 %v1239, %v1363
  %v1394 = vsub.f32 %v1240, %v1363
  %v1395 = vsub.f32 %v1241, %v1363
  %v1396 = vsub.f32 %v1242, %v1363
  %v1397 = vsub.f32 %v1243, %v1363
  %v1398 = vsub.f32 %v1244, %v1363
  %v1399 = vsub.f32 %v1245, %v1363
  %v1400 = vsub.f32 %v1246, %v1363
  %v1401 = vsub.f32 %v1247, %v1363
  %v1402 = vsub.f32 %v1248, %v1363
  %v1403 = vsub.f32 %v1249, %v1363
  %v1404 = vsub.f32 %v1250, %v1363
  %v1405 = vsub.f32 %v1251, %v1363
  %v1406 = vsub.f32 %v1252, %v1363
  %v1407 = vsub.f32 %v1253, %v1363
  %v1408 = vsub.f32 %v1254, %v1363
  %v1409 = vsub.f32 %v1255, %v1363
  %v1410 = vsub.f32 %v1256, %v1363
  %v1411 = vsub.f32 %v1257, %v1363
  %v1412 = vsub.f32 %v1258, %v1363
  %v1413 = vmul.f32 %v1364, %v1364
  %v1414 = vmul.f32 %v1365, %v1365
  %v1415 = vmul.f32 %v1366, %v1366
  %v1416 = vmul.f32 %v1367, %v1367
  %v1417 = vmul.f32 %v1368, %v1368
  %v1418 = vmul.f32 %v1369, %v1369
  %v1419 = vmul.f32 %v1370, %v1370
  %v1420 = vmul.f32 %v1371, %v1371
  %v1421 = vmul.f32 %v1372, %v1372
  %v1422 = vmul.f32 %v1373, %v1373
  %v1423 = vmul.f32 %v1374, %v1374
  %v1424 = vmul.f32 %v1375, %v1375
  %v1425 = vmul.f32 %v1376, %v1376
  %v1426 = vmul.f32 %v1377, %v1377
  %v1427 = vmul.f32 %v1378, %v1378
  %v1428 = vmul.f32 %v1379, %v1379
  %v1429 = vmul.f32 %v1380, %v1380
  %v1430 = vmul.f32 %v1381, %v1381
  %v1431 = vmul.f32 %v1382, %v1382
  %v1432 = vmul.f32 %v1383, %v1383
  %v1433 = vmul.f32 %v1384, %v1384
  %v1434 = vmul.f32 %v1385, %v1385
  %v1435 = vmul.f32 %v1386, %v1386
  %v1436 = vmul.f32 %v1387, %v1387
  %v1437 = vmul.f32 %v1388, %v1388
  %v1438 = vmul.f32 %v1389, %v1389
  %v1439 = vmul.f32 %v1390, %v1390
  %v1440 = vmul.f32 %v1391, %v1391
  %v1441 = vmul.f32 %v1392, %v1392
  %v1442 = vmul.f32 %v1393, %v1393
  %v1443 = vmul.f32 %v1394, %v1394
  %v1444 = vmul.f32 %v1395, %v1395
  %v1445 = vmul.f32 %v1396, %v1396
  %v1446 = vmul.f32 %v1397, %v1397
  %v1447 = vmul.f32 %v1398, %v1398
  %v1448 = vmul.f32 %v1399, %v1399
  %v1449 = vmul.f32 %v1400, %v1400
  %v1450 = vmul.f32 %v1401, %v1401
  %v1451 = vmul.f32 %v1402, %v1402
  %v1452 = vmul.f32 %v1403, %v1403
  %v1453 = vmul.f32 %v1404, %v1404
  %v1454 = vmul.f32 %v1405, %v1405
  %v1455 = vmul.f32 %v1406, %v1406
  %v1456 = vmul.f32 %v1407, %v1407
  %v1457 = vmul.f32 %v1408, %v1408
  %v1458 = vmul.f32 %v1409, %v1409
  %v1459 = vmul.f32 %v1410, %v1410
  %v1460 = vmul.f32 %v1411, %v1411
  %v1461 = vmul.f32 %v1412, %v1412
  %v1462 = vsel %vm1259, %v1413, 0.0
  %v1463 = vsel %vm1259, %v1414, 0.0
  %v1464 = vadd.f32 %v1462, %v1463
  %v1465 = vsel %vm1259, %v1415, 0.0
  %v1466 = vadd.f32 %v1464, %v1465
  %v1467 = vsel %vm1259, %v1416, 0.0
  %v1468 = vadd.f32 %v1466, %v1467
  %v1469 = vsel %vm1259, %v1417, 0.0
  %v1470 = vadd.f32 %v1468, %v1469
  %v1471 = vsel %vm1259, %v1418, 0.0
  %v1472 = vadd.f32 %v1470, %v1471
  %v1473 = vsel %vm1259, %v1419, 0.0
  %v1474 = vadd.f32 %v1472, %v1473
  %v1475 = vsel %vm1259, %v1420, 0.0
  %v1476 = vadd.f32 %v1474, %v1475
  %v1477 = vsel %vm1259, %v1421, 0.0
  %v1478 = vadd.f32 %v1476, %v1477
  %v1479 = vsel %vm1259, %v1422, 0.0
  %v1480 = vadd.f32 %v1478, %v1479
  %v1481 = vsel %vm1259, %v1423, 0.0
  %v1482 = vadd.f32 %v1480, %v1481
  %v1483 = vsel %vm1259, %v1424, 0.0
  %v1484 = vadd.f32 %v1482, %v1483
  %v1485 = vsel %vm1259, %v1425, 0.0
  %v1486 = vadd.f32 %v1484, %v1485
  %v1487 = vsel %vm1259, %v1426, 0.0
  %v1488 = vadd.f32 %v1486, %v1487
  %v1489 = vsel %vm1259, %v1427, 0.0
  %v1490 = vadd.f32 %v1488, %v1489
  %v1491 = vsel %vm1259, %v1428, 0.0
  %v1492 = vadd.f32 %v1490, %v1491
  %v1493 = vsel %vm1259, %v1429, 0.0
  %v1494 = vadd.f32 %v1492, %v1493
  %v1495 = vsel %vm1259, %v1430, 0.0
  %v1496 = vadd.f32 %v1494, %v1495
  %v1497 = vsel %vm1259, %v1431, 0.0
  %v1498 = vadd.f32 %v1496, %v1497
  %v1499 = vsel %vm1259, %v1432, 0.0
  %v1500 = vadd.f32 %v1498, %v1499
  %v1501 = vsel %vm1259, %v1433, 0.0
  %v1502 = vadd.f32 %v1500, %v1501
  %v1503 = vsel %vm1259, %v1434, 0.0
  %v1504 = vadd.f32 %v1502, %v1503
  %v1505 = vsel %vm1259, %v1435, 0.0
  %v1506 = vadd.f32 %v1504, %v1505
  %v1507 = vsel %vm1259, %v1436, 0.0
  %v1508 = vadd.f32 %v1506, %v1507
  %v1509 = vsel %vm1259, %v1437, 0.0
  %v1510 = vadd.f32 %v1508, %v1509
  %v1511 = vsel %vm1259, %v1438, 0.0
  %v1512 = vadd.f32 %v1510, %v1511
  %v1513 = vsel %vm1259, %v1439, 0.0
  %v1514 = vadd.f32 %v1512, %v1513
  %v1515 = vsel %vm1259, %v1440, 0.0
  %v1516 = vadd.f32 %v1514, %v1515
  %v1517 = vsel %vm1259, %v1441, 0.0
  %v1518 = vadd.f32 %v1516, %v1517
  %v1519 = vsel %vm1259, %v1442, 0.0
  %v1520 = vadd.f32 %v1518, %v1519
  %v1521 = vsel %vm1259, %v1443, 0.0
  %v1522 = vadd.f32 %v1520, %v1521
  %v1523 = vsel %vm1259, %v1444, 0.0
  %v1524 = vadd.f32 %v1522, %v1523
  %v1525 = vsel %vm1259, %v1445, 0.0
  %v1526 = vadd.f32 %v1524, %v1525
  %v1527 = vsel %vm1259, %v1446, 0.0
  %v1528 = vadd.f32 %v1526, %v1527
  %v1529 = vsel %vm1259, %v1447, 0.0
  %v1530 = vadd.f32 %v1528, %v1529
  %v1531 = vsel %vm1259, %v1448, 0.0
  %v1532 = vadd.f32 %v1530, %v1531
  %v1533 = vsel %vm1259, %v1449, 0.0
  %v1534 = vadd.f32 %v1532, %v1533
  %v1535 = vsel %vm1259, %v1450, 0.0
  %v1536 = vadd.f32 %v1534, %v1535
  %v1537 = vsel %vm1259, %v1451, 0.0
  %v1538 = vadd.f32 %v1536, %v1537
  %v1539 = vsel %vm1259, %v1452, 0.0
  %v1540 = vadd.f32 %v1538, %v1539
  %v1541 = vsel %vm1259, %v1453, 0.0
  %v1542 = vadd.f32 %v1540, %v1541
  %v1543 = vsel %vm1259, %v1454, 0.0
  %v1544 = vadd.f32 %v1542, %v1543
  %v1545 = vsel %vm1259, %v1455, 0.0
  %v1546 = vadd.f32 %v1544, %v1545
  %v1547 = vsel %vm1259, %v1456, 0.0
  %v1548 = vadd.f32 %v1546, %v1547
  %v1549 = vsel %vm1259, %v1457, 0.0
  %v1550 = vadd.f32 %v1548, %v1549
  %v1551 = vsel %vm1259, %v1458, 0.0
  %v1552 = vadd.f32 %v1550, %v1551
  %v1553 = vsel %vm1259, %v1459, 0.0
  %v1554 = vadd.f32 %v1552, %v1553
  %v1555 = vsel %vm1259, %v1460, 0.0
  %v1556 = vadd.f32 %v1554, %v1555
  %v1557 = vsel %vm1259, %v1461, 0.0
  %v1558 = vadd.f32 %v1556, %v1557
  %v1559 = vrot.slane %v1558, 4
  %v1560 = vadd.f32 %v1558, %v1559
  %v1561 = vrot.slane %v1560, 2
  %v1562 = vadd.f32 %v1560, %v1561
  %v1563 = vrot.slane %v1562, 1
  %v1564 = vadd.f32 %v1562, %v1563
  %v1565 = vmul.f32 %v1564, 0.0025510204
  %v1566 = vadd.f32 %v1565, 1e-05
  %v1567 = vrsqrt.pop %v1566
  %v1568 = vmul.f32 %v1364, %v1567
  %v1569 = vmul.f32 %v1365, %v1567
  %v1570 = vmul.f32 %v1366, %v1567
  %v1571 = vmul.f32 %v1367, %v1567
  %v1572 = vmul.f32 %v1368, %v1567
  %v1573 = vmul.f32 %v1369, %v1567
  %v1574 = vmul.f32 %v1370, %v1567
  %v1575 = vmul.f32 %v1371, %v1567
  %v1576 = vmul.f32 %v1372, %v1567
  %v1577 = vmul.f32 %v1373, %v1567
  %v1578 = vmul.f32 %v1374, %v1567
  %v1579 = vmul.f32 %v1375, %v1567
  %v1580 = vmul.f32 %v1376, %v1567
  %v1581 = vmul.f32 %v1377, %v1567
  %v1582 = vmul.f32 %v1378, %v1567
  %v1583 = vmul.f32 %v1379, %v1567
  %v1584 = vmul.f32 %v1380, %v1567
  %v1585 = vmul.f32 %v1381, %v1567
  %v1586 = vmul.f32 %v1382, %v1567
  %v1587 = vmul.f32 %v1383, %v1567
  %v1588 = vmul.f32 %v1384, %v1567
  %v1589 = vmul.f32 %v1385, %v1567
  %v1590 = vmul.f32 %v1386, %v1567
  %v1591 = vmul.f32 %v1387, %v1567
  %v1592 = vmul.f32 %v1388, %v1567
  %v1593 = vmul.f32 %v1389, %v1567
  %v1594 = vmul.f32 %v1390, %v1567
  %v1595 = vmul.f32 %v1391, %v1567
  %v1596 = vmul.f32 %v1392, %v1567
  %v1597 = vmul.f32 %v1393, %v1567
  %v1598 = vmul.f32 %v1394, %v1567
  %v1599 = vmul.f32 %v1395, %v1567
  %v1600 = vmul.f32 %v1396, %v1567
  %v1601 = vmul.f32 %v1397, %v1567
  %v1602 = vmul.f32 %v1398, %v1567
  %v1603 = vmul.f32 %v1399, %v1567
  %v1604 = vmul.f32 %v1400, %v1567
  %v1605 = vmul.f32 %v1401, %v1567
  %v1606 = vmul.f32 %v1402, %v1567
  %v1607 = vmul.f32 %v1403, %v1567
  %v1608 = vmul.f32 %v1404, %v1567
  %v1609 = vmul.f32 %v1405, %v1567
  %v1610 = vmul.f32 %v1406, %v1567
  %v1611 = vmul.f32 %v1407, %v1567
  %v1612 = vmul.f32 %v1408, %v1567
  %v1613 = vmul.f32 %v1409, %v1567
  %v1614 = vmul.f32 %v1410, %v1567
  %v1615 = vmul.f32 %v1411, %v1567
  %v1616 = vmul.f32 %v1412, %v1567
  %v1617 = vld [vmem:[%s2] sm:$0x1]
  %v1619 = vlaneseq
  %v1620 = vshrl.u32 %v1619, 7
  %v1621 = vsub.s32 0, %v1620
  %v1622 = vrot.slane %v1617, %v1621
  %v1624 = vmul.f32 %v1568, %v1622
  %v1625 = vmul.f32 %v1569, %v1622
  %v1626 = vmul.f32 %v1570, %v1622
  %v1627 = vmul.f32 %v1571, %v1622
  %v1628 = vmul.f32 %v1572, %v1622
  %v1629 = vmul.f32 %v1573, %v1622
  %v1630 = vmul.f32 %v1574, %v1622
  %v1631 = vmul.f32 %v1575, %v1622
  %v1632 = vmul.f32 %v1576, %v1622
  %v1633 = vmul.f32 %v1577, %v1622
  %v1634 = vmul.f32 %v1578, %v1622
  %v1635 = vmul.f32 %v1579, %v1622
  %v1636 = vmul.f32 %v1580, %v1622
  %v1637 = vmul.f32 %v1581, %v1622
  %v1638 = vmul.f32 %v1582, %v1622
  %v1639 = vmul.f32 %v1583, %v1622
  %v1640 = vmul.f32 %v1584, %v1622
  %v1641 = vmul.f32 %v1585, %v1622
  %v1642 = vmul.f32 %v1586, %v1622
  %v1643 = vmul.f32 %v1587, %v1622
  %v1644 = vmul.f32 %v1588, %v1622
  %v1645 = vmul.f32 %v1589, %v1622
  %v1646 = vmul.f32 %v1590, %v1622
  %v1647 = vmul.f32 %v1591, %v1622
  %v1648 = vmul.f32 %v1592, %v1622
  %v1649 = vmul.f32 %v1593, %v1622
  %v1650 = vmul.f32 %v1594, %v1622
  %v1651 = vmul.f32 %v1595, %v1622
  %v1652 = vmul.f32 %v1596, %v1622
  %v1653 = vmul.f32 %v1597, %v1622
  %v1654 = vmul.f32 %v1598, %v1622
  %v1655 = vmul.f32 %v1599, %v1622
  %v1656 = vmul.f32 %v1600, %v1622
  %v1657 = vmul.f32 %v1601, %v1622
  %v1658 = vmul.f32 %v1602, %v1622
  %v1659 = vmul.f32 %v1603, %v1622
  %v1660 = vmul.f32 %v1604, %v1622
  %v1661 = vmul.f32 %v1605, %v1622
  %v1662 = vmul.f32 %v1606, %v1622
  %v1663 = vmul.f32 %v1607, %v1622
  %v1664 = vmul.f32 %v1608, %v1622
  %v1665 = vmul.f32 %v1609, %v1622
  %v1666 = vmul.f32 %v1610, %v1622
  %v1667 = vmul.f32 %v1611, %v1622
  %v1668 = vmul.f32 %v1612, %v1622
  %v1669 = vmul.f32 %v1613, %v1622
  %v1670 = vmul.f32 %v1614, %v1622
  %v1671 = vmul.f32 %v1615, %v1622
  %v1672 = vmul.f32 %v1616, %v1622
  %v1673 = vld [vmem:[%s3] sm:$0x1]
  %v1675 = vlaneseq
  %v1676 = vshrl.u32 %v1675, 7
  %v1677 = vsub.s32 0, %v1676
  %v1678 = vrot.slane %v1673, %v1677
  %v1680 = vadd.f32 %v1624, %v1678
  %v1681 = vadd.f32 %v1625, %v1678
  %v1682 = vadd.f32 %v1626, %v1678
  %v1683 = vadd.f32 %v1627, %v1678
  %v1684 = vadd.f32 %v1628, %v1678
  %v1685 = vadd.f32 %v1629, %v1678
  %v1686 = vadd.f32 %v1630, %v1678
  %v1687 = vadd.f32 %v1631, %v1678
  %v1688 = vadd.f32 %v1632, %v1678
  %v1689 = vadd.f32 %v1633, %v1678
  %v1690 = vadd.f32 %v1634, %v1678
  %v1691 = vadd.f32 %v1635, %v1678
  %v1692 = vadd.f32 %v1636, %v1678
  %v1693 = vadd.f32 %v1637, %v1678
  %v1694 = vadd.f32 %v1638, %v1678
  %v1695 = vadd.f32 %v1639, %v1678
  %v1696 = vadd.f32 %v1640, %v1678
  %v1697 = vadd.f32 %v1641, %v1678
  %v1698 = vadd.f32 %v1642, %v1678
  %v1699 = vadd.f32 %v1643, %v1678
  %v1700 = vadd.f32 %v1644, %v1678
  %v1701 = vadd.f32 %v1645, %v1678
  %v1702 = vadd.f32 %v1646, %v1678
  %v1703 = vadd.f32 %v1647, %v1678
  %v1704 = vadd.f32 %v1648, %v1678
  %v1705 = vadd.f32 %v1649, %v1678
  %v1706 = vadd.f32 %v1650, %v1678
  %v1707 = vadd.f32 %v1651, %v1678
  %v1708 = vadd.f32 %v1652, %v1678
  %v1709 = vadd.f32 %v1653, %v1678
  %v1710 = vadd.f32 %v1654, %v1678
  %v1711 = vadd.f32 %v1655, %v1678
  %v1712 = vadd.f32 %v1656, %v1678
  %v1713 = vadd.f32 %v1657, %v1678
  %v1714 = vadd.f32 %v1658, %v1678
  %v1715 = vadd.f32 %v1659, %v1678
  %v1716 = vadd.f32 %v1660, %v1678
  %v1717 = vadd.f32 %v1661, %v1678
  %v1718 = vadd.f32 %v1662, %v1678
  %v1719 = vadd.f32 %v1663, %v1678
  %v1720 = vadd.f32 %v1664, %v1678
  %v1721 = vadd.f32 %v1665, %v1678
  %v1722 = vadd.f32 %v1666, %v1678
  %v1723 = vadd.f32 %v1667, %v1678
  %v1724 = vadd.f32 %v1668, %v1678
  %v1725 = vadd.f32 %v1669, %v1678
  %v1726 = vadd.f32 %v1670, %v1678
  %v1727 = vadd.f32 %v1671, %v1678
  %v1728 = vadd.f32 %v1672, %v1678
  %v1729 = vmax.f32 %v1680, 0.0
  %v1730 = vmax.f32 %v1681, 0.0
  %v1731 = vmax.f32 %v1682, 0.0
  %v1732 = vmax.f32 %v1683, 0.0
  %v1733 = vmax.f32 %v1684, 0.0
  %v1734 = vmax.f32 %v1685, 0.0
  %v1735 = vmax.f32 %v1686, 0.0
  %v1736 = vmax.f32 %v1687, 0.0
  %v1737 = vmax.f32 %v1688, 0.0
  %v1738 = vmax.f32 %v1689, 0.0
  %v1739 = vmax.f32 %v1690, 0.0
  %v1740 = vmax.f32 %v1691, 0.0
  %v1741 = vmax.f32 %v1692, 0.0
  %v1742 = vmax.f32 %v1693, 0.0
  %v1743 = vmax.f32 %v1694, 0.0
  %v1744 = vmax.f32 %v1695, 0.0
  %v1745 = vmax.f32 %v1696, 0.0
  %v1746 = vmax.f32 %v1697, 0.0
  %v1747 = vmax.f32 %v1698, 0.0
  %v1748 = vmax.f32 %v1699, 0.0
  %v1749 = vmax.f32 %v1700, 0.0
  %v1750 = vmax.f32 %v1701, 0.0
  %v1751 = vmax.f32 %v1702, 0.0
  %v1752 = vmax.f32 %v1703, 0.0
  %v1753 = vmax.f32 %v1704, 0.0
  %v1754 = vmax.f32 %v1705, 0.0
  %v1755 = vmax.f32 %v1706, 0.0
  %v1756 = vmax.f32 %v1707, 0.0
  %v1757 = vmax.f32 %v1708, 0.0
  %v1758 = vmax.f32 %v1709, 0.0
  %v1759 = vmax.f32 %v1710, 0.0
  %v1760 = vmax.f32 %v1711, 0.0
  %v1761 = vmax.f32 %v1712, 0.0
  %v1762 = vmax.f32 %v1713, 0.0
  %v1763 = vmax.f32 %v1714, 0.0
  %v1764 = vmax.f32 %v1715, 0.0
  %v1765 = vmax.f32 %v1716, 0.0
  %v1766 = vmax.f32 %v1717, 0.0
  %v1767 = vmax.f32 %v1718, 0.0
  %v1768 = vmax.f32 %v1719, 0.0
  %v1769 = vmax.f32 %v1720, 0.0
  %v1770 = vmax.f32 %v1721, 0.0
  %v1771 = vmax.f32 %v1722, 0.0
  %v1772 = vmax.f32 %v1723, 0.0
  %v1773 = vmax.f32 %v1724, 0.0
  %v1774 = vmax.f32 %v1725, 0.0
  %v1775 = vmax.f32 %v1726, 0.0
  %v1776 = vmax.f32 %v1727, 0.0
  %v1777 = vmax.f32 %v1728, 0.0
  %1778 = vst.msk [vmem:[%s4] sm:$0xff] %vm1259, %v1729
  %1779 = vst.msk [vmem:[%s4 + $0x8] sm:$0xff] %vm1259, %v1730
  %1780 = vst.msk [vmem:[%s4 + $0x10] sm:$0xff] %vm1259, %v1731
  %1781 = vst.msk [vmem:[%s4 + $0x18] sm:$0xff] %vm1259, %v1732
  %1782 = vst.msk [vmem:[%s4 + $0x20] sm:$0xff] %vm1259, %v1733
  %1783 = vst.msk [vmem:[%s4 + $0x28] sm:$0xff] %vm1259, %v1734
  %1784 = vst.msk [vmem:[%s4 + $0x30] sm:$0xff] %vm1259, %v1735
  %1785 = vst.msk [vmem:[%s4 + $0x38] sm:$0xff] %vm1259, %v1736
  %1786 = vst.msk [vmem:[%s4 + $0x40] sm:$0xff] %vm1259, %v1737
  %1787 = vst.msk [vmem:[%s4 + $0x48] sm:$0xff] %vm1259, %v1738
  %1788 = vst.msk [vmem:[%s4 + $0x50] sm:$0xff] %vm1259, %v1739
  %1789 = vst.msk [vmem:[%s4 + $0x58] sm:$0xff] %vm1259, %v1740
  %1790 = vst.msk [vmem:[%s4 + $0x60] sm:$0xff] %vm1259, %v1741
  %1791 = vst.msk [vmem:[%s4 + $0x68] sm:$0xff] %vm1259, %v1742
  %1792 = vst.msk [vmem:[%s4 + $0x70] sm:$0xff] %vm1259, %v1743
  %1793 = vst.msk [vmem:[%s4 + $0x78] sm:$0xff] %vm1259, %v1744
  %1794 = vst.msk [vmem:[%s4 + $0x80] sm:$0xff] %vm1259, %v1745
  %1795 = vst.msk [vmem:[%s4 + $0x88] sm:$0xff] %vm1259, %v1746
  %1796 = vst.msk [vmem:[%s4 + $0x90] sm:$0xff] %vm1259, %v1747
  %1797 = vst.msk [vmem:[%s4 + $0x98] sm:$0xff] %vm1259, %v1748
  %1798 = vst.msk [vmem:[%s4 + $0xa0] sm:$0xff] %vm1259, %v1749
  %1799 = vst.msk [vmem:[%s4 + $0xa8] sm:$0xff] %vm1259, %v1750
  %1800 = vst.msk [vmem:[%s4 + $0xb0] sm:$0xff] %vm1259, %v1751
  %1801 = vst.msk [vmem:[%s4 + $0xb8] sm:$0xff] %vm1259, %v1752
  %1802 = vst.msk [vmem:[%s4 + $0xc0] sm:$0xff] %vm1259, %v1753
  %1803 = vst.msk [vmem:[%s4 + $0xc8] sm:$0xff] %vm1259, %v1754
  %1804 = vst.msk [vmem:[%s4 + $0xd0] sm:$0xff] %vm1259, %v1755
  %1805 = vst.msk [vmem:[%s4 + $0xd8] sm:$0xff] %vm1259, %v1756
  %1806 = vst.msk [vmem:[%s4 + $0xe0] sm:$0xff] %vm1259, %v1757
  %1807 = vst.msk [vmem:[%s4 + $0xe8] sm:$0xff] %vm1259, %v1758
  %1808 = vst.msk [vmem:[%s4 + $0xf0] sm:$0xff] %vm1259, %v1759
  %1809 = vst.msk [vmem:[%s4 + $0xf8] sm:$0xff] %vm1259, %v1760
  %1810 = vst.msk [vmem:[%s4 + $0x100] sm:$0xff] %vm1259, %v1761
  %1811 = vst.msk [vmem:[%s4 + $0x108] sm:$0xff] %vm1259, %v1762
  %1812 = vst.msk [vmem:[%s4 + $0x110] sm:$0xff] %vm1259, %v1763
  %1813 = vst.msk [vmem:[%s4 + $0x118] sm:$0xff] %vm1259, %v1764
  %1814 = vst.msk [vmem:[%s4 + $0x120] sm:$0xff] %vm1259, %v1765
  %1815 = vst.msk [vmem:[%s4 + $0x128] sm:$0xff] %vm1259, %v1766
  %1816 = vst.msk [vmem:[%s4 + $0x130] sm:$0xff] %vm1259, %v1767
  %1817 = vst.msk [vmem:[%s4 + $0x138] sm:$0xff] %vm1259, %v1768
  %1818 = vst.msk [vmem:[%s4 + $0x140] sm:$0xff] %vm1259, %v1769
  %1819 = vst.msk [vmem:[%s4 + $0x148] sm:$0xff] %vm1259, %v1770
  %1820 = vst.msk [vmem:[%s4 + $0x150] sm:$0xff] %vm1259, %v1771
  %1821 = vst.msk [vmem:[%s4 + $0x158] sm:$0xff] %vm1259, %v1772
  %1822 = vst.msk [vmem:[%s4 + $0x160] sm:$0xff] %vm1259, %v1773
  %1823 = vst.msk [vmem:[%s4 + $0x168] sm:$0xff] %vm1259, %v1774
  %1824 = vst.msk [vmem:[%s4 + $0x170] sm:$0xff] %vm1259, %v1775
  %1825 = vst.msk [vmem:[%s4 + $0x178] sm:$0xff] %vm1259, %v1776
  %1826 = vst.msk [vmem:[%s4 + $0x180] sm:$0xff] %vm1259, %v1777
  // Predicated region
  $region18: #{cae_forward.7} parent=0 // pred_check
    _
  $region19: #{cae_forward.7} parent=0 // pred_check_branch
    %1828 = sbr.rel (0) target = $region21
  $region20: #{cae_forward.7} parent=0 // pred_region
    _
  $region21: #{cae_forward.7} parent=0 // pred_fallthru
    _
  // Predicated region
  $region22: #{cae_forward.7} parent=0 // pred_check
    _
  $region23: #{cae_forward.7} parent=0 // pred_check_branch
    %1830 = sbr.rel (0) target = $region25
  $region24: #{cae_forward.7} parent=0 // pred_region
    _
  $region25: #{cae_forward.7} parent=0 // pred_fallthru
    _

// kernel: cae_forward.9
$region0: #{cae_forward.9}
  #allocation0 [shape = 'u32[]', space=smem, size = 0x4, offset = 0x4, fixed_abs, tag = 'smem constant byte address 0x4 - core index']
  #allocation1 [shape = 'u32[144,128]{1,0:T(1,128)}', space=vmem, size = 0x12000, scoped, tag = 'internal scratch']
  %s0 = inlined_call_operand.vmem [shape: f32[18,576], index: 0, kind: input, shape index: {}]
  %s1 = inlined_call_operand.vmem [shape: f32[576,128], index: 1, kind: input, shape index: {}]
  %s2 = inlined_call_operand.vmem [shape: f32[1,128], index: 2, kind: input, shape index: {}]
  %s3 = inlined_call_operand.vmem [shape: f32[1,128], index: 3, kind: input, shape index: {}]
  %s4 = inlined_call_operand.vmem [shape: f32[18,128], index: 4, kind: output, shape index: {}]
  %s5 = sld [smem:[#allocation0]]
  $region26: #{cae_forward.9} parent=0
    _
  %s7 = ssub.s32 1, %s5
  %s8 = scalar_select 0, %s7, %s5
  // Predicated region
  $region2: #{cae_forward.9} parent=0 // pred_check
    _
  $region3: #{cae_forward.9} parent=0 // pred_check_branch
    %10 = sbr.rel (0) target = $region5
  $region4: #{cae_forward.9} parent=0 // pred_region
    _
  $region5: #{cae_forward.9} parent=0 // pred_fallthru
    _
  // Predicated region
  $region6: #{cae_forward.9} parent=0 // pred_check
    _
  $region7: #{cae_forward.9} parent=0 // pred_check_branch
    %12 = sbr.rel (0) target = $region9
  $region8: #{cae_forward.9} parent=0 // pred_region
    _
  $region9: #{cae_forward.9} parent=0 // pred_fallthru
    _
  // Predicated region
  $region10: #{cae_forward.9} parent=0 // pred_check
    _
  $region11: #{cae_forward.9} parent=0 // pred_check_branch
    %14 = sbr.rel (0) target = $region13
  $region12: #{cae_forward.9} parent=0 // pred_region
    _
  $region13: #{cae_forward.9} parent=0 // pred_fallthru
    _
  // Predicated region
  $region14: #{cae_forward.9} parent=0 // pred_check
    _
  $region15: #{cae_forward.9} parent=0 // pred_check_branch
    %16 = sbr.rel (0) target = $region17
  $region16: #{cae_forward.9} parent=0 // pred_region
    _
  $region17: #{cae_forward.9} parent=0 // pred_fallthru
    _
  %v18 = vld [vmem:[%s0] sm:$0xff]
  %v19 = vld [vmem:[%s0 + $0x8] sm:$0xff]
  %v20 = vld [vmem:[%s0 + $0x10] sm:$0xff]
  %v21 = vld [vmem:[%s0 + $0x18] sm:$0xff]
  %v22 = vld [vmem:[%s0 + $0x20] sm:$0xff]
  %v23 = vld [vmem:[%s0 + $0x28] sm:$0xff]
  %v24 = vld [vmem:[%s0 + $0x30] sm:$0xff]
  %v25 = vld [vmem:[%s0 + $0x38] sm:$0xff]
  %v26 = vld [vmem:[%s0 + $0x40] sm:$0xff]
  %v27 = vld [vmem:[%s0 + $0x48] sm:$0xff]
  %v28 = vld [vmem:[%s0 + $0x50] sm:$0x3]
  %v29 = vld [vmem:[%s0 + $0x58] sm:$0x3]
  %v30 = vld [vmem:[%s0 + $0x60] sm:$0x3]
  %v31 = vld [vmem:[%s0 + $0x68] sm:$0x3]
  %v32 = vld [vmem:[%s0 + $0x70] sm:$0x3]
  %v33 = vpack.c.bf16 %v23, %v18
  %v34 = vpack.c.bf16 %v24, %v19
  %v35 = vpack.c.bf16 %v25, %v20
  %v36 = vpack.c.bf16 %v26, %v21
  %v37 = vpack.c.bf16 %v27, %v22
  %v38 = vpack.c.bf16 %v28, %v28
  %v39 = vpack.c.bf16 %v29, %v29
  %v40 = vpack.c.bf16 %v30, %v30
  %v41 = vpack.c.bf16 %v31, %v31
  %v42 = vpack.c.bf16 %v32, %v32
  %v43 = vld [vmem:[%s1] sm:$0xff]
  %v44 = vld [vmem:[%s1 + $0x8] sm:$0xff]
  %v45 = vld [vmem:[%s1 + $0x10] sm:$0xff]
  %v46 = vld [vmem:[%s1 + $0x18] sm:$0xff]
  %v47 = vld [vmem:[%s1 + $0x20] sm:$0xff]
  %v48 = vld [vmem:[%s1 + $0x28] sm:$0xff]
  %v49 = vld [vmem:[%s1 + $0x30] sm:$0xff]
  %v50 = vld [vmem:[%s1 + $0x38] sm:$0xff]
  %v51 = vld [vmem:[%s1 + $0x40] sm:$0xff]
  %v52 = vld [vmem:[%s1 + $0x48] sm:$0xff]
  %v53 = vld [vmem:[%s1 + $0x50] sm:$0xff]
  %v54 = vld [vmem:[%s1 + $0x58] sm:$0xff]
  %v55 = vld [vmem:[%s1 + $0x60] sm:$0xff]
  %v56 = vld [vmem:[%s1 + $0x68] sm:$0xff]
  %v57 = vld [vmem:[%s1 + $0x70] sm:$0xff]
  %v58 = vld [vmem:[%s1 + $0x78] sm:$0xff]
  %v59 = vld [vmem:[%s1 + $0x80] sm:$0xff]
  %v60 = vld [vmem:[%s1 + $0x88] sm:$0xff]
  %v61 = vld [vmem:[%s1 + $0x90] sm:$0xff]
  %v62 = vld [vmem:[%s1 + $0x98] sm:$0xff]
  %v63 = vld [vmem:[%s1 + $0xa0] sm:$0xff]
  %v64 = vld [vmem:[%s1 + $0xa8] sm:$0xff]
  %v65 = vld [vmem:[%s1 + $0xb0] sm:$0xff]
  %v66 = vld [vmem:[%s1 + $0xb8] sm:$0xff]
  %v67 = vld [vmem:[%s1 + $0xc0] sm:$0xff]
  %v68 = vld [vmem:[%s1 + $0xc8] sm:$0xff]
  %v69 = vld [vmem:[%s1 + $0xd0] sm:$0xff]
  %v70 = vld [vmem:[%s1 + $0xd8] sm:$0xff]
  %v71 = vld [vmem:[%s1 + $0xe0] sm:$0xff]
  %v72 = vld [vmem:[%s1 + $0xe8] sm:$0xff]
  %v73 = vld [vmem:[%s1 + $0xf0] sm:$0xff]
  %v74 = vld [vmem:[%s1 + $0xf8] sm:$0xff]
  %v75 = vld [vmem:[%s1 + $0x100] sm:$0xff]
  %v76 = vld [vmem:[%s1 + $0x108] sm:$0xff]
  %v77 = vld [vmem:[%s1 + $0x110] sm:$0xff]
  %v78 = vld [vmem:[%s1 + $0x118] sm:$0xff]
  %v79 = vld [vmem:[%s1 + $0x120] sm:$0xff]
  %v80 = vld [vmem:[%s1 + $0x128] sm:$0xff]
  %v81 = vld [vmem:[%s1 + $0x130] sm:$0xff]
  %v82 = vld [vmem:[%s1 + $0x138] sm:$0xff]
  %v83 = vld [vmem:[%s1 + $0x140] sm:$0xff]
  %v84 = vld [vmem:[%s1 + $0x148] sm:$0xff]
  %v85 = vld [vmem:[%s1 + $0x150] sm:$0xff]
  %v86 = vld [vmem:[%s1 + $0x158] sm:$0xff]
  %v87 = vld [vmem:[%s1 + $0x160] sm:$0xff]
  %v88 = vld [vmem:[%s1 + $0x168] sm:$0xff]
  %v89 = vld [vmem:[%s1 + $0x170] sm:$0xff]
  %v90 = vld [vmem:[%s1 + $0x178] sm:$0xff]
  %v91 = vld [vmem:[%s1 + $0x180] sm:$0xff]
  %v92 = vld [vmem:[%s1 + $0x188] sm:$0xff]
  %v93 = vld [vmem:[%s1 + $0x190] sm:$0xff]
  %v94 = vld [vmem:[%s1 + $0x198] sm:$0xff]
  %v95 = vld [vmem:[%s1 + $0x1a0] sm:$0xff]
  %v96 = vld [vmem:[%s1 + $0x1a8] sm:$0xff]
  %v97 = vld [vmem:[%s1 + $0x1b0] sm:$0xff]
  %v98 = vld [vmem:[%s1 + $0x1b8] sm:$0xff]
  %v99 = vld [vmem:[%s1 + $0x1c0] sm:$0xff]
  %v100 = vld [vmem:[%s1 + $0x1c8] sm:$0xff]
  %v101 = vld [vmem:[%s1 + $0x1d0] sm:$0xff]
  %v102 = vld [vmem:[%s1 + $0x1d8] sm:$0xff]
  %v103 = vld [vmem:[%s1 + $0x1e0] sm:$0xff]
  %v104 = vld [vmem:[%s1 + $0x1e8] sm:$0xff]
  %v105 = vld [vmem:[%s1 + $0x1f0] sm:$0xff]
  %v106 = vld [vmem:[%s1 + $0x1f8] sm:$0xff]
  %v107 = vld [vmem:[%s1 + $0x200] sm:$0xff]
  %v108 = vld [vmem:[%s1 + $0x208] sm:$0xff]
  %v109 = vld [vmem:[%s1 + $0x210] sm:$0xff]
  %v110 = vld [vmem:[%s1 + $0x218] sm:$0xff]
  %v111 = vld [vmem:[%s1 + $0x220] sm:$0xff]
  %v112 = vld [vmem:[%s1 + $0x228] sm:$0xff]
  %v113 = vld [vmem:[%s1 + $0x230] sm:$0xff]
  %v114 = vld [vmem:[%s1 + $0x238] sm:$0xff]
  %v115 = vpack.c.bf16 %v44, %v43
  %v116 = vpack.c.bf16 %v46, %v45
  %v117 = vpack.c.bf16 %v48, %v47
  %v118 = vpack.c.bf16 %v50, %v49
  %v119 = vpack.c.bf16 %v52, %v51
  %v120 = vpack.c.bf16 %v54, %v53
  %v121 = vpack.c.bf16 %v56, %v55
  %v122 = vpack.c.bf16 %v58, %v57
  %v123 = vpack.c.bf16 %v60, %v59
  %v124 = vpack.c.bf16 %v62, %v61
  %v125 = vpack.c.bf16 %v64, %v63
  %v126 = vpack.c.bf16 %v66, %v65
  %v127 = vpack.c.bf16 %v68, %v67
  %v128 = vpack.c.bf16 %v70, %v69
  %v129 = vpack.c.bf16 %v72, %v71
  %v130 = vpack.c.bf16 %v74, %v73
  %v131 = vpack.c.bf16 %v76, %v75
  %v132 = vpack.c.bf16 %v78, %v77
  %v133 = vpack.c.bf16 %v80, %v79
  %v134 = vpack.c.bf16 %v82, %v81
  %v135 = vpack.c.bf16 %v84, %v83
  %v136 = vpack.c.bf16 %v86, %v85
  %v137 = vpack.c.bf16 %v88, %v87
  %v138 = vpack.c.bf16 %v90, %v89
  %v139 = vpack.c.bf16 %v92, %v91
  %v140 = vpack.c.bf16 %v94, %v93
  %v141 = vpack.c.bf16 %v96, %v95
  %v142 = vpack.c.bf16 %v98, %v97
  %v143 = vpack.c.bf16 %v100, %v99
  %v144 = vpack.c.bf16 %v102, %v101
  %v145 = vpack.c.bf16 %v104, %v103
  %v146 = vpack.c.bf16 %v106, %v105
  %v147 = vpack.c.bf16 %v108, %v107
  %v148 = vpack.c.bf16 %v110, %v109
  %v149 = vpack.c.bf16 %v112, %v111
  %v150 = vpack.c.bf16 %v114, %v113
  %vm151 = vcmask 523264
  %v153 = vsel %vm151, %v37, 0
  %v156 = vsel %vm151, %v42, 0
  %158 = vmatprep.subr.bf16.mxu0 0
  %159 = vmatpush1.bf16.msra.mxu0 %v115
  %160 = vmatprep.subr.bf16.mxu0 0
  %161 = vmatpush1.bf16.msra.mxu0 %v116
  %162 = vmatprep.subr.bf16.mxu0 0
  %163 = vmatpush1.bf16.msra.mxu0 %v117
  %164 = vmatprep.subr.bf16.mxu0 0
  %165 = vmatpush1.bf16.msra.mxu0 %v118
  %166 = vmatprep.subr.bf16.mxu0 0
  %167 = vmatpush1.bf16.msra.mxu0 %v119
  %168 = vmatprep.subr.bf16.mxu0 0
  %169 = vmatpush1.bf16.msra.mxu0 %v120
  %170 = vmatprep.subr.bf16.mxu0 0
  %171 = vmatpush1.bf16.msra.mxu0 %v121
  %172 = vmatprep.subr.bf16.mxu0 0
  %173 = vmatpush1.bf16.msra.mxu0 %v122
  %174 = vmatprep.subr.bf16.mxu0 0
  %175 = vmatpush1.bf16.msra.mxu0 %v123
  %176 = vmatprep.subr.bf16.mxu0 0
  %177 = vmatpush1.bf16.msra.mxu0 %v124
  %178 = vmatprep.subr.bf16.mxu0 0
  %179 = vmatpush1.bf16.msra.mxu0 %v125
  %180 = vmatprep.subr.bf16.mxu0 0
  %181 = vmatpush1.bf16.msra.mxu0 %v126
  %182 = vmatprep.subr.bf16.mxu0 0
  %183 = vmatpush1.bf16.msra.mxu0 %v127
  %184 = vmatprep.subr.bf16.mxu0 0
  %185 = vmatpush1.bf16.msra.mxu0 %v128
  %186 = vmatprep.subr.bf16.mxu0 0
  %187 = vmatpush1.bf16.msra.mxu0 %v129
  %188 = vmatprep.subr.bf16.mxu0 0
  %189 = vmatpush1.bf16.msra.mxu0 %v130
  %190 = vmatprep.mubr.bf16.mxu0 %v34
  %191 = vmatmul.mubr.bf16.gmra.mrb[0].mxu0 %v33
  %v192 = vpop.f32.mrb[0].mxu0
  %v193 = vadd.f32 0.0, %v192
  %v194 = vpop.f32.mrb[0].mxu0
  %v195 = vpop.f32.mrb[0].mxu0
  %v196 = vadd.f32 0.0, %v195
  %v197 = vpop.f32.mrb[0].mxu0
  %198 = vmatprep.mubr.bf16.mxu0 %v39
  %199 = vmatmul.mubr.bf16.gmra.mrb[0].mxu0 %v38
  %v200 = vpop.f32.mrb[0].mxu0
  %v201 = vadd.f32 0.0, %v200
  %v202 = vpop.f32.mrb[0].mxu0
  %v203 = vpop.f32.mrb[0].mxu0
  %v204 = vpop.f32.mrb[0].mxu0
  %205 = vdwg.mxu0
  %206 = vmatprep.subr.bf16.mxu0 0
  %207 = vmatpush1.bf16.msra.mxu0 %v131
  %208 = vmatprep.subr.bf16.mxu0 0
  %209 = vmatpush1.bf16.msra.mxu0 %v132
  %210 = vmatprep.subr.bf16.mxu0 0
  %211 = vmatpush1.bf16.msra.mxu0 %v133
  %212 = vmatprep.subr.bf16.mxu0 0
  %213 = vmatpush1.bf16.msra.mxu0 %v134
  %214 = vmatprep.subr.bf16.mxu0 0
  %215 = vmatpush1.bf16.msra.mxu0 %v135
  %216 = vmatprep.subr.bf16.mxu0 0
  %217 = vmatpush1.bf16.msra.mxu0 %v136
  %218 = vmatprep.subr.bf16.mxu0 0
  %219 = vmatpush1.bf16.msra.mxu0 %v137
  %220 = vmatprep.subr.bf16.mxu0 0
  %221 = vmatpush1.bf16.msra.mxu0 %v138
  %222 = vmatprep.subr.bf16.mxu0 0
  %223 = vmatpush1.bf16.msra.mxu0 %v139
  %224 = vmatprep.subr.bf16.mxu0 0
  %225 = vmatpush1.bf16.msra.mxu0 %v140
  %226 = vmatprep.subr.bf16.mxu0 0
  %227 = vmatpush1.bf16.msra.mxu0 %v141
  %228 = vmatprep.subr.bf16.mxu0 0
  %229 = vmatpush1.bf16.msra.mxu0 %v142
  %230 = vmatprep.subr.bf16.mxu0 0
  %231 = vmatpush1.bf16.msra.mxu0 %v143
  %232 = vmatprep.subr.bf16.mxu0 0
  %233 = vmatpush1.bf16.msra.mxu0 %v144
  %234 = vmatprep.subr.bf16.mxu0 0
  %235 = vmatpush1.bf16.msra.mxu0 %v145
  %236 = vmatprep.subr.bf16.mxu0 0
  %237 = vmatpush1.bf16.msra.mxu0 %v146
  %238 = vmatprep.mubr.bf16.mxu0 %v36
  %239 = vmatmul.mubr.bf16.gmra.mrb[0].mxu0 %v35
  %v240 = vpop.f32.mrb[0].mxu0
  %v241 = vadd.f32 %v193, %v240
  %v242 = vpop.f32.mrb[0].mxu0
  %v243 = vpop.f32.mrb[0].mxu0
  %v244 = vadd.f32 %v196, %v243
  %v245 = vpop.f32.mrb[0].mxu0
  %246 = vmatprep.mubr.bf16.mxu0 %v41
  %247 = vmatmul.mubr.bf16.gmra.mrb[0].mxu0 %v40
  %v248 = vpop.f32.mrb[0].mxu0
  %v249 = vadd.f32 %v201, %v248
  %v250 = vpop.f32.mrb[0].mxu0
  %v251 = vpop.f32.mrb[0].mxu0
  %v252 = vpop.f32.mrb[0].mxu0
  %253 = vdwg.mxu0
  %254 = vmatprep.subr.bf16.mxu0 0
  %255 = vmatpush1.bf16.msra.mxu0 %v147
  %256 = vmatprep.subr.bf16.mxu0 0
  %257 = vmatpush1.bf16.msra.mxu0 %v148
  %258 = vmatprep.subr.bf16.mxu0 0
  %259 = vmatpush1.bf16.msra.mxu0 %v149
  %260 = vmatprep.subr.bf16.mxu0 0
  %261 = vmatpush1.bf16.msra.mxu0 %v150
  %262 = vmatprep.subr.bf16.mxu0 0
  %263 = vmatpush1.bf16.msra.mxu0 0
  %264 = vmatprep.subr.bf16.mxu0 0
  %265 = vmatpush1.bf16.msra.mxu0 0
  %266 = vmatprep.subr.bf16.mxu0 0
  %267 = vmatpush1.bf16.msra.mxu0 0
  %268 = vmatprep.subr.bf16.mxu0 0
  %269 = vmatpush1.bf16.msra.mxu0 0
  %270 = vmatprep.subr.bf16.mxu0 0
  %271 = vmatpush1.bf16.msra.mxu0 0
  %272 = vmatprep.subr.bf16.mxu0 0
  %273 = vmatpush1.bf16.msra.mxu0 0
  %274 = vmatprep.subr.bf16.mxu0 0
  %275 = vmatpush1.bf16.msra.mxu0 0
  %276 = vmatprep.subr.bf16.mxu0 0
  %277 = vmatpush1.bf16.msra.mxu0 0
  %278 = vmatprep.subr.bf16.mxu0 0
  %279 = vmatpush1.bf16.msra.mxu0 0
  %280 = vmatprep.subr.bf16.mxu0 0
  %281 = vmatpush1.bf16.msra.mxu0 0
  %282 = vmatprep.subr.bf16.mxu0 0
  %283 = vmatpush1.bf16.msra.mxu0 0
  %284 = vmatprep.subr.bf16.mxu0 0
  %285 = vmatpush1.bf16.msra.mxu0 0
  %286 = vmatprep.mubr.bf16.mxu0 0
  %287 = vmatmul.mubr.bf16.gmra.mrb[0].mxu0 %v153
  %v288 = vpop.f32.mrb[0].mxu0
  %v289 = vadd.f32 %v241, %v288
  %v290 = vpop.f32.mrb[0].mxu0
  %v291 = vpop.f32.mrb[0].mxu0
  %v292 = vadd.f32 %v244, %v291
  %v293 = vpop.f32.mrb[0].mxu0
  %294 = vmatprep.mubr.bf16.mxu0 0
  %295 = vmatmul.mubr.bf16.gmra.mrb[0].mxu0 %v156
  %v296 = vpop.f32.mrb[0].mxu0
  %v297 = vadd.f32 %v249, %v296
  %v298 = vpop.f32.mrb[0].mxu0
  %v299 = vpop.f32.mrb[0].mxu0
  %v300 = vpop.f32.mrb[0].mxu0
  %301 = vdwg.mxu0
  %v302 = vadd.f32 %v289, %v292
  %vm303 = vcmask 1041408
  %v304 = vsel %vm303, %v297, 0.0
  %v305 = vadd.f32 %v302, %v304
  %v306 = vrot.slane %v305, 4
  %v307 = vadd.f32 %v305, %v306
  %v308 = vrot.slane %v307, 2
  %v309 = vadd.f32 %v307, %v308
  %v310 = vrot.slane %v309, 1
  %v311 = vadd.f32 %v309, %v310
  %v312 = vmul.f32 %v311, 0.055555556
  %v313 = vsub.f32 %v289, %v312
  %v314 = vsub.f32 %v292, %v312
  %v315 = vsub.f32 %v297, %v312
  %v316 = vmul.f32 %v313, %v313
  %v317 = vmul.f32 %v314, %v314
  %v318 = vmul.f32 %v315, %v315
  %v319 = vadd.f32 %v316, %v317
  %v320 = vsel %vm303, %v318, 0.0
  %v321 = vadd.f32 %v319, %v320
  %v322 = vrot.slane %v321, 4
  %v323 = vadd.f32 %v321, %v322
  %v324 = vrot.slane %v323, 2
  %v325 = vadd.f32 %v323, %v324
  %v326 = vrot.slane %v325, 1
  %v327 = vadd.f32 %v325, %v326
  %v328 = vmul.f32 %v327, 0.055555556
  %v329 = vadd.f32 %v328, 1e-05
  %v330 = vrsqrt.pop %v329
  %v331 = vmul.f32 %v313, %v330
  %v332 = vmul.f32 %v314, %v330
  %v333 = vmul.f32 %v315, %v330
  %v334 = vld [vmem:[%s2] sm:$0x1]
  %v336 = vlaneseq
  %v337 = vshrl.u32 %v336, 7
  %v338 = vsub.s32 0, %v337
  %v339 = vrot.slane %v334, %v338
  %v341 = vmul.f32 %v331, %v339
  %v342 = vmul.f32 %v332, %v339
  %v343 = vmul.f32 %v333, %v339
  %v344 = vld [vmem:[%s3] sm:$0x1]
  %v346 = vlaneseq
  %v347 = vshrl.u32 %v346, 7
  %v348 = vsub.s32 0, %v347
  %v349 = vrot.slane %v344, %v348
  %v351 = vadd.f32 %v341, %v349
  %v352 = vadd.f32 %v342, %v349
  %v353 = vadd.f32 %v343, %v349
  %v354 = vmax.f32 %v351, 0.0
  %v355 = vmax.f32 %v352, 0.0
  %v356 = vmax.f32 %v353, 0.0
  %357 = vst [vmem:[%s4] sm:$0xff] %v354
  %358 = vst [vmem:[%s4 + $0x8] sm:$0xff] %v355
  %359 = vst [vmem:[%s4 + $0x10] sm:$0x3] %v356
  // Predicated region
  $region18: #{cae_forward.9} parent=0 // pred_check
    _
  $region19: #{cae_forward.9} parent=0 // pred_check_branch
    %361 = sbr.rel (0) target = $region21
  $region20: #{cae_forward.9} parent=0 // pred_region
    _
  $region21: #{cae_forward.9} parent=0 // pred_fallthru
    _
  // Predicated region
  $region22: #{cae_forward.9} parent=0 // pred_check
    _
  $region23: #{cae_forward.9} parent=0 // pred_check_branch
    %363 = sbr.rel (0) target = $region25
  $region24: #{cae_forward.9} parent=0 // pred_region
    _
  $region25: #{cae_forward.9} parent=0 // pred_fallthru
    _

// kernel: cae_forward.10
$region0: #{cae_forward.10}
  #allocation0 [shape = 'u32[]', space=smem, size = 0x4, offset = 0x4, fixed_abs, tag = 'smem constant byte address 0x4 - core index']
  #allocation1 [shape = 'u32[144,128]{1,0:T(1,128)}', space=vmem, size = 0x12000, scoped, tag = 'internal scratch']
  %s0 = inlined_call_operand.vmem [shape: f32[2,1152], index: 0, kind: input, shape index: {}]
  %s1 = inlined_call_operand.vmem [shape: f32[1152,10], index: 1, kind: input, shape index: {}]
  %s2 = inlined_call_operand.vmem [shape: f32[1,10], index: 2, kind: input, shape index: {}]
  %s3 = inlined_call_operand.vmem [shape: f32[10,1152], index: 3, kind: input, shape index: {}]
  %s4 = inlined_call_operand.vmem [shape: f32[1,1152], index: 4, kind: input, shape index: {}]
  %s5 = inlined_call_operand.vmem [shape: f32[2,1152], index: 5, kind: output, shape index: {}]
  %s6 = sld [smem:[#allocation0]]
  $region30: #{cae_forward.10} parent=0
    _
  %s8 = ssub.s32 1, %s6
  %s9 = scalar_select 0, %s8, %s6
  // Predicated region
  $region2: #{cae_forward.10} parent=0 // pred_check
    _
  $region3: #{cae_forward.10} parent=0 // pred_check_branch
    %11 = sbr.rel (0) target = $region5
  $region4: #{cae_forward.10} parent=0 // pred_region
    _
  $region5: #{cae_forward.10} parent=0 // pred_fallthru
    _
  // Predicated region
  $region6: #{cae_forward.10} parent=0 // pred_check
    _
  $region7: #{cae_forward.10} parent=0 // pred_check_branch
    %13 = sbr.rel (0) target = $region9
  $region8: #{cae_forward.10} parent=0 // pred_region
    _
  $region9: #{cae_forward.10} parent=0 // pred_fallthru
    _
  // Predicated region
  $region10: #{cae_forward.10} parent=0 // pred_check
    _
  $region11: #{cae_forward.10} parent=0 // pred_check_branch
    %15 = sbr.rel (0) target = $region13
  $region12: #{cae_forward.10} parent=0 // pred_region
    _
  $region13: #{cae_forward.10} parent=0 // pred_fallthru
    _
  // Predicated region
  $region14: #{cae_forward.10} parent=0 // pred_check
    _
  $region15: #{cae_forward.10} parent=0 // pred_check_branch
    %17 = sbr.rel (0) target = $region17
  $region16: #{cae_forward.10} parent=0 // pred_region
    _
  $region17: #{cae_forward.10} parent=0 // pred_fallthru
    _
  // Predicated region
  $region18: #{cae_forward.10} parent=0 // pred_check
    _
  $region19: #{cae_forward.10} parent=0 // pred_check_branch
    %19 = sbr.rel (0) target = $region21
  $region20: #{cae_forward.10} parent=0 // pred_region
    _
  $region21: #{cae_forward.10} parent=0 // pred_fallthru
    _
  %v21 = vld [vmem:[%s0] sm:$0xff]
  %v22 = vld [vmem:[%s0 + $0x8] sm:$0xff]
  %v23 = vld [vmem:[%s0 + $0x10] sm:$0x3]
  %v27 = vcombine.high %v21, %v21
  %v29 = vunpack.c.l.s4 1983009808
  %v30 = vunpack.c.0.s8 %v29
  %v31 = vlaneseq
  %v32 = vshrl.u32 %v31, 7
  %v33 = vsub.s32 %v30, %v32
  %v34 = vrot.slane %v21, %v33
  %v36 = vunpack.c.l.s4 1983009808
  %v37 = vunpack.c.0.s8 %v36
  %v38 = vlaneseq
  %v39 = vshrl.u32 %v38, 7
  %v40 = vsub.s32 %v37, %v39
  %v41 = vrot.slane %v27, %v40
  %v42 = vcombine.high %v34, %v34
  %v43 = vcombine.high %v41, %v41
  %v44 = vcombine.high %v22, %v22
  %v46 = vunpack.c.l.s4 1983009808
  %v47 = vunpack.c.0.s8 %v46
  %v48 = vlaneseq
  %v49 = vshrl.u32 %v48, 7
  %v50 = vsub.s32 %v47, %v49
  %v51 = vrot.slane %v22, %v50
  %v53 = vunpack.c.l.s4 1983009808
  %v54 = vunpack.c.0.s8 %v53
  %v55 = vlaneseq
  %v56 = vshrl.u32 %v55, 7
  %v57 = vsub.s32 %v54, %v56
  %v58 = vrot.slane %v44, %v57
  %v59 = vcombine.high %v51, %v51
  %v60 = vcombine.high %v58, %v58
  %v62 = vunpack.c.l.s4 1983009808
  %v63 = vunpack.c.0.s8 %v62
  %v64 = vlaneseq
  %v65 = vshrl.u32 %v64, 7
  %v66 = vsub.s32 %v63, %v65
  %v67 = vrot.slane %v23, %v66
  %v77 = vpack.c.bf16 %v34, %v34
  %v78 = vpack.c.bf16 %v42, %v42
  %v79 = vpack.c.bf16 %v41, %v41
  %v80 = vpack.c.bf16 %v43, %v43
  %v81 = vpack.c.bf16 %v51, %v51
  %v82 = vpack.c.bf16 %v59, %v59
  %v83 = vpack.c.bf16 %v58, %v58
  %v84 = vpack.c.bf16 %v60, %v60
  %v85 = vpack.c.bf16 %v67, %v67
  %v86 = vld [vmem:[%s1] sm:$0xff]
  %v87 = vld [vmem:[%s1 + $0x8] sm:$0xff]
  %v88 = vld [vmem:[%s1 + $0x10] sm:$0xff]
  %v89 = vld [vmem:[%s1 + $0x18] sm:$0xff]
  %v90 = vld [vmem:[%s1 + $0x20] sm:$0xff]
  %v91 = vld [vmem:[%s1 + $0x28] sm:$0xff]
  %v92 = vld [vmem:[%s1 + $0x30] sm:$0xff]
  %v93 = vld [vmem:[%s1 + $0x38] sm:$0xff]
  %v94 = vld [vmem:[%s1 + $0x40] sm:$0xff]
  %v95 = vld [vmem:[%s1 + $0x48] sm:$0xff]
  %v96 = vld [vmem:[%s1 + $0x50] sm:$0xff]
  %v97 = vld [vmem:[%s1 + $0x58] sm:$0xff]
  %v98 = vld [vmem:[%s1 + $0x60] sm:$0xff]
  %v99 = vld [vmem:[%s1 + $0x68] sm:$0xff]
  %v100 = vld [vmem:[%s1 + $0x70] sm:$0xff]
  %v101 = vld [vmem:[%s1 + $0x78] sm:$0xff]
  %v102 = vld [vmem:[%s1 + $0x80] sm:$0xff]
  %v103 = vld [vmem:[%s1 + $0x88] sm:$0xff]
  %v104 = vld [vmem:[%s1 + $0x90] sm:$0xff]
  %v105 = vld [vmem:[%s1 + $0x98] sm:$0xff]
  %v106 = vld [vmem:[%s1 + $0xa0] sm:$0xff]
  %v107 = vld [vmem:[%s1 + $0xa8] sm:$0xff]
  %v108 = vld [vmem:[%s1 + $0xb0] sm:$0xff]
  %v109 = vld [vmem:[%s1 + $0xb8] sm:$0xff]
  %v110 = vld [vmem:[%s1 + $0xc0] sm:$0xff]
  %v111 = vld [vmem:[%s1 + $0xc8] sm:$0xff]
  %v112 = vld [vmem:[%s1 + $0xd0] sm:$0xff]
  %v113 = vld [vmem:[%s1 + $0xd8] sm:$0xff]
  %v114 = vld [vmem:[%s1 + $0xe0] sm:$0xff]
  %v115 = vld [vmem:[%s1 + $0xe8] sm:$0xff]
  %v116 = vld [vmem:[%s1 + $0xf0] sm:$0xff]
  %v117 = vld [vmem:[%s1 + $0xf8] sm:$0xff]
  %v118 = vld [vmem:[%s1 + $0x100] sm:$0xff]
  %v119 = vld [vmem:[%s1 + $0x108] sm:$0xff]
  %v120 = vld [vmem:[%s1 + $0x110] sm:$0xff]
  %v121 = vld [vmem:[%s1 + $0x118] sm:$0xff]
  %v122 = vld [vmem:[%s1 + $0x120] sm:$0xff]
  %v123 = vld [vmem:[%s1 + $0x128] sm:$0xff]
  %v124 = vld [vmem:[%s1 + $0x130] sm:$0xff]
  %v125 = vld [vmem:[%s1 + $0x138] sm:$0xff]
  %v126 = vld [vmem:[%s1 + $0x140] sm:$0xff]
  %v127 = vld [vmem:[%s1 + $0x148] sm:$0xff]
  %v128 = vld [vmem:[%s1 + $0x150] sm:$0xff]
  %v129 = vld [vmem:[%s1 + $0x158] sm:$0xff]
  %v130 = vld [vmem:[%s1 + $0x160] sm:$0xff]
  %v131 = vld [vmem:[%s1 + $0x168] sm:$0xff]
  %v132 = vld [vmem:[%s1 + $0x170] sm:$0xff]
  %v133 = vld [vmem:[%s1 + $0x178] sm:$0xff]
  %v134 = vld [vmem:[%s1 + $0x180] sm:$0xff]
  %v135 = vld [vmem:[%s1 + $0x188] sm:$0xff]
  %v136 = vld [vmem:[%s1 + $0x190] sm:$0xff]
  %v137 = vld [vmem:[%s1 + $0x198] sm:$0xff]
  %v138 = vld [vmem:[%s1 + $0x1a0] sm:$0xff]
  %v139 = vld [vmem:[%s1 + $0x1a8] sm:$0xff]
  %v140 = vld [vmem:[%s1 + $0x1b0] sm:$0xff]
  %v141 = vld [vmem:[%s1 + $0x1b8] sm:$0xff]
  %v142 = vld [vmem:[%s1 + $0x1c0] sm:$0xff]
  %v143 = vld [vmem:[%s1 + $0x1c8] sm:$0xff]
  %v144 = vld [vmem:[%s1 + $0x1d0] sm:$0xff]
  %v145 = vld [vmem:[%s1 + $0x1d8] sm:$0xff]
  %v146 = vld [vmem:[%s1 + $0x1e0] sm:$0xff]
  %v147 = vld [vmem:[%s1 + $0x1e8] sm:$0xff]
  %v148 = vld [vmem:[%s1 + $0x1f0] sm:$0xff]
  %v149 = vld [vmem:[%s1 + $0x1f8] sm:$0xff]
  %v150 = vld [vmem:[%s1 + $0x200] sm:$0xff]
  %v151 = vld [vmem:[%s1 + $0x208] sm:$0xff]
  %v152 = vld [vmem:[%s1 + $0x210] sm:$0xff]
  %v153 = vld [vmem:[%s1 + $0x218] sm:$0xff]
  %v154 = vld [vmem:[%s1 + $0x220] sm:$0xff]
  %v155 = vld [vmem:[%s1 + $0x228] sm:$0xff]
  %v156 = vld [vmem:[%s1 + $0x230] sm:$0xff]
  %v157 = vld [vmem:[%s1 + $0x238] sm:$0xff]
  %v158 = vld [vmem:[%s1 + $0x240] sm:$0xff]
  %v159 = vld [vmem:[%s1 + $0x248] sm:$0xff]
  %v160 = vld [vmem:[%s1 + $0x250] sm:$0xff]
  %v161 = vld [vmem:[%s1 + $0x258] sm:$0xff]
  %v162 = vld [vmem:[%s1 + $0x260] sm:$0xff]
  %v163 = vld [vmem:[%s1 + $0x268] sm:$0xff]
  %v164 = vld [vmem:[%s1 + $0x270] sm:$0xff]
  %v165 = vld [vmem:[%s1 + $0x278] sm:$0xff]
  %v166 = vld [vmem:[%s1 + $0x280] sm:$0xff]
  %v167 = vld [vmem:[%s1 + $0x288] sm:$0xff]
  %v168 = vld [vmem:[%s1 + $0x290] sm:$0xff]
  %v169 = vld [vmem:[%s1 + $0x298] sm:$0xff]
  %v170 = vld [vmem:[%s1 + $0x2a0] sm:$0xff]
  %v171 = vld [vmem:[%s1 + $0x2a8] sm:$0xff]
  %v172 = vld [vmem:[%s1 + $0x2b0] sm:$0xff]
  %v173 = vld [vmem:[%s1 + $0x2b8] sm:$0xff]
  %v174 = vld [vmem:[%s1 + $0x2c0] sm:$0xff]
  %v175 = vld [vmem:[%s1 + $0x2c8] sm:$0xff]
  %v176 = vld [vmem:[%s1 + $0x2d0] sm:$0xff]
  %v177 = vld [vmem:[%s1 + $0x2d8] sm:$0xff]
  %v178 = vld [vmem:[%s1 + $0x2e0] sm:$0xff]
  %v179 = vld [vmem:[%s1 + $0x2e8] sm:$0xff]
  %v180 = vld [vmem:[%s1 + $0x2f0] sm:$0xff]
  %v181 = vld [vmem:[%s1 + $0x2f8] sm:$0xff]
  %v182 = vld [vmem:[%s1 + $0x300] sm:$0xff]
  %v183 = vld [vmem:[%s1 + $0x308] sm:$0xff]
  %v184 = vld [vmem:[%s1 + $0x310] sm:$0xff]
  %v185 = vld [vmem:[%s1 + $0x318] sm:$0xff]
  %v186 = vld [vmem:[%s1 + $0x320] sm:$0xff]
  %v187 = vld [vmem:[%s1 + $0x328] sm:$0xff]
  %v188 = vld [vmem:[%s1 + $0x330] sm:$0xff]
  %v189 = vld [vmem:[%s1 + $0x338] sm:$0xff]
  %v190 = vld [vmem:[%s1 + $0x340] sm:$0xff]
  %v191 = vld [vmem:[%s1 + $0x348] sm:$0xff]
  %v192 = vld [vmem:[%s1 + $0x350] sm:$0xff]
  %v193 = vld [vmem:[%s1 + $0x358] sm:$0xff]
  %v194 = vld [vmem:[%s1 + $0x360] sm:$0xff]
  %v195 = vld [vmem:[%s1 + $0x368] sm:$0xff]
  %v196 = vld [vmem:[%s1 + $0x370] sm:$0xff]
  %v197 = vld [vmem:[%s1 + $0x378] sm:$0xff]
  %v198 = vld [vmem:[%s1 + $0x380] sm:$0xff]
  %v199 = vld [vmem:[%s1 + $0x388] sm:$0xff]
  %v200 = vld [vmem:[%s1 + $0x390] sm:$0xff]
  %v201 = vld [vmem:[%s1 + $0x398] sm:$0xff]
  %v202 = vld [vmem:[%s1 + $0x3a0] sm:$0xff]
  %v203 = vld [vmem:[%s1 + $0x3a8] sm:$0xff]
  %v204 = vld [vmem:[%s1 + $0x3b0] sm:$0xff]
  %v205 = vld [vmem:[%s1 + $0x3b8] sm:$0xff]
  %v206 = vld [vmem:[%s1 + $0x3c0] sm:$0xff]
  %v207 = vld [vmem:[%s1 + $0x3c8] sm:$0xff]
  %v208 = vld [vmem:[%s1 + $0x3d0] sm:$0xff]
  %v209 = vld [vmem:[%s1 + $0x3d8] sm:$0xff]
  %v210 = vld [vmem:[%s1 + $0x3e0] sm:$0xff]
  %v211 = vld [vmem:[%s1 + $0x3e8] sm:$0xff]
  %v212 = vld [vmem:[%s1 + $0x3f0] sm:$0xff]
  %v213 = vld [vmem:[%s1 + $0x3f8] sm:$0xff]
  %v214 = vld [vmem:[%s1 + $0x400] sm:$0xff]
  %v215 = vld [vmem:[%s1 + $0x408] sm:$0xff]
  %v216 = vld [vmem:[%s1 + $0x410] sm:$0xff]
  %v217 = vld [vmem:[%s1 + $0x418] sm:$0xff]
  %v218 = vld [vmem:[%s1 + $0x420] sm:$0xff]
  %v219 = vld [vmem:[%s1 + $0x428] sm:$0xff]
  %v220 = vld [vmem:[%s1 + $0x430] sm:$0xff]
  %v221 = vld [vmem:[%s1 + $0x438] sm:$0xff]
  %v222 = vld [vmem:[%s1 + $0x440] sm:$0xff]
  %v223 = vld [vmem:[%s1 + $0x448] sm:$0xff]
  %v224 = vld [vmem:[%s1 + $0x450] sm:$0xff]
  %v225 = vld [vmem:[%s1 + $0x458] sm:$0xff]
  %v226 = vld [vmem:[%s1 + $0x460] sm:$0xff]
  %v227 = vld [vmem:[%s1 + $0x468] sm:$0xff]
  %v228 = vld [vmem:[%s1 + $0x470] sm:$0xff]
  %v229 = vld [vmem:[%s1 + $0x478] sm:$0xff]
  %v230 = vpack.c.bf16 %v87, %v86
  %v231 = vpack.c.bf16 %v89, %v88
  %v232 = vpack.c.bf16 %v91, %v90
  %v233 = vpack.c.bf16 %v93, %v92
  %v234 = vpack.c.bf16 %v95, %v94
  %v235 = vpack.c.bf16 %v97, %v96
  %v236 = vpack.c.bf16 %v99, %v98
  %v237 = vpack.c.bf16 %v101, %v100
  %v238 = vpack.c.bf16 %v103, %v102
  %v239 = vpack.c.bf16 %v105, %v104
  %v240 = vpack.c.bf16 %v107, %v106
  %v241 = vpack.c.bf16 %v109, %v108
  %v242 = vpack.c.bf16 %v111, %v110
  %v243 = vpack.c.bf16 %v113, %v112
  %v244 = vpack.c.bf16 %v115, %v114
  %v245 = vpack.c.bf16 %v117, %v116
  %v246 = vpack.c.bf16 %v119, %v118
  %v247 = vpack.c.bf16 %v121, %v120
  %v248 = vpack.c.bf16 %v123, %v122
  %v249 = vpack.c.bf16 %v125, %v124
  %v250 = vpack.c.bf16 %v127, %v126
  %v251 = vpack.c.bf16 %v129, %v128
  %v252 = vpack.c.bf16 %v131, %v130
  %v253 = vpack.c.bf16 %v133, %v132
  %v254 = vpack.c.bf16 %v135, %v134
  %v255 = vpack.c.bf16 %v137, %v136
  %v256 = vpack.c.bf16 %v139, %v138
  %v257 = vpack.c.bf16 %v141, %v140
  %v258 = vpack.c.bf16 %v143, %v142
  %v259 = vpack.c.bf16 %v145, %v144
  %v260 = vpack.c.bf16 %v147, %v146
  %v261 = vpack.c.bf16 %v149, %v148
  %v262 = vpack.c.bf16 %v151, %v150
  %v263 = vpack.c.bf16 %v153, %v152
  %v264 = vpack.c.bf16 %v155, %v154
  %v265 = vpack.c.bf16 %v157, %v156
  %v266 = vpack.c.bf16 %v159, %v158
  %v267 = vpack.c.bf16 %v161, %v160
  %v268 = vpack.c.bf16 %v163, %v162
  %v269 = vpack.c.bf16 %v165, %v164
  %v270 = vpack.c.bf16 %v167, %v166
  %v271 = vpack.c.bf16 %v169, %v168
  %v272 = vpack.c.bf16 %v171, %v170
  %v273 = vpack.c.bf16 %v173, %v172
  %v274 = vpack.c.bf16 %v175, %v174
  %v275 = vpack.c.bf16 %v177, %v176
  %v276 = vpack.c.bf16 %v179, %v178
  %v277 = vpack.c.bf16 %v181, %v180
  %v278 = vpack.c.bf16 %v183, %v182
  %v279 = vpack.c.bf16 %v185, %v184
  %v280 = vpack.c.bf16 %v187, %v186
  %v281 = vpack.c.bf16 %v189, %v188
  %v282 = vpack.c.bf16 %v191, %v190
  %v283 = vpack.c.bf16 %v193, %v192
  %v284 = vpack.c.bf16 %v195, %v194
  %v285 = vpack.c.bf16 %v197, %v196
  %v286 = vpack.c.bf16 %v199, %v198
  %v287 = vpack.c.bf16 %v201, %v200
  %v288 = vpack.c.bf16 %v203, %v202
  %v289 = vpack.c.bf16 %v205, %v204
  %v290 = vpack.c.bf16 %v207, %v206
  %v291 = vpack.c.bf16 %v209, %v208
  %v292 = vpack.c.bf16 %v211, %v210
  %v293 = vpack.c.bf16 %v213, %v212
  %v294 = vpack.c.bf16 %v215, %v214
  %v295 = vpack.c.bf16 %v217, %v216
  %v296 = vpack.c.bf16 %v219, %v218
  %v297 = vpack.c.bf16 %v221, %v220
  %v298 = vpack.c.bf16 %v223, %v222
  %v299 = vpack.c.bf16 %v225, %v224
  %v300 = vpack.c.bf16 %v227, %v226
  %v301 = vpack.c.bf16 %v229, %v228
  %v302 = vld [vmem:[%s2] sm:$0x1]
  %v304 = vlaneseq
  %v305 = vshrl.u32 %v304, 7
  %v306 = vsub.s32 0, %v305
  %v307 = vrot.slane %v302, %v306
  %309 = vmatprep.subr.bf16.mxu0 0
  %310 = vmatpush1.bf16.msra.mxu0 %v230
  %311 = vmatprep.subr.bf16.mxu0 0
  %312 = vmatpush1.bf16.msra.mxu0 %v231
  %313 = vmatprep.subr.bf16.mxu0 0
  %314 = vmatpush1.bf16.msra.mxu0 %v232
  %315 = vmatprep.subr.bf16.mxu0 0
  %316 = vmatpush1.bf16.msra.mxu0 %v233
  %317 = vmatprep.subr.bf16.mxu0 0
  %318 = vmatpush1.bf16.msra.mxu0 %v234
  %319 = vmatprep.subr.bf16.mxu0 0
  %320 = vmatpush1.bf16.msra.mxu0 %v235
  %321 = vmatprep.subr.bf16.mxu0 0
  %322 = vmatpush1.bf16.msra.mxu0 %v236
  %323 = vmatprep.subr.bf16.mxu0 0
  %324 = vmatpush1.bf16.msra.mxu0 %v237
  %325 = vmatprep.subr.bf16.mxu0 0
  %326 = vmatpush1.bf16.msra.mxu0 %v238
  %327 = vmatprep.subr.bf16.mxu0 0
  %328 = vmatpush1.bf16.msra.mxu0 %v239
  %329 = vmatprep.subr.bf16.mxu0 0
  %330 = vmatpush1.bf16.msra.mxu0 %v240
  %331 = vmatprep.subr.bf16.mxu0 0
  %332 = vmatpush1.bf16.msra.mxu0 %v241
  %333 = vmatprep.subr.bf16.mxu0 0
  %334 = vmatpush1.bf16.msra.mxu0 %v242
  %335 = vmatprep.subr.bf16.mxu0 0
  %336 = vmatpush1.bf16.msra.mxu0 %v243
  %337 = vmatprep.subr.bf16.mxu0 0
  %338 = vmatpush1.bf16.msra.mxu0 %v244
  %339 = vmatprep.subr.bf16.mxu0 0
  %340 = vmatpush1.bf16.msra.mxu0 %v245
  %341 = vmatprep.mubr.bf16.mxu0 %v78
  %342 = vmatmul.mubr.bf16.gmra.mrb[0].mxu0 %v77
  %v343 = vpop.f32.mrb[0].mxu0
  %v344 = vadd.f32 %v307, %v343
  %v345 = vpop.f32.mrb[0].mxu0
  %v346 = vpop.f32.mrb[0].mxu0
  %v347 = vpop.f32.mrb[0].mxu0
  %348 = vdwg.mxu0
  %349 = vmatprep.subr.bf16.mxu0 0
  %350 = vmatpush1.bf16.msra.mxu0 %v246
  %351 = vmatprep.subr.bf16.mxu0 0
  %352 = vmatpush1.bf16.msra.mxu0 %v247
  %353 = vmatprep.subr.bf16.mxu0 0
  %354 = vmatpush1.bf16.msra.mxu0 %v248
  %355 = vmatprep.subr.bf16.mxu0 0
  %356 = vmatpush1.bf16.msra.mxu0 %v249
  %357 = vmatprep.subr.bf16.mxu0 0
  %358 = vmatpush1.bf16.msra.mxu0 %v250
  %359 = vmatprep.subr.bf16.mxu0 0
  %360 = vmatpush1.bf16.msra.mxu0 %v251
  %361 = vmatprep.subr.bf16.mxu0 0
  %362 = vmatpush1.bf16.msra.mxu0 %v252
  %363 = vmatprep.subr.bf16.mxu0 0
  %364 = vmatpush1.bf16.msra.mxu0 %v253
  %365 = vmatprep.subr.bf16.mxu0 0
  %366 = vmatpush1.bf16.msra.mxu0 %v254
  %367 = vmatprep.subr.bf16.mxu0 0
  %368 = vmatpush1.bf16.msra.mxu0 %v255
  %369 = vmatprep.subr.bf16.mxu0 0
  %370 = vmatpush1.bf16.msra.mxu0 %v256
  %371 = vmatprep.subr.bf16.mxu0 0
  %372 = vmatpush1.bf16.msra.mxu0 %v257
  %373 = vmatprep.subr.bf16.mxu0 0
  %374 = vmatpush1.bf16.msra.mxu0 %v258
  %375 = vmatprep.subr.bf16.mxu0 0
  %376 = vmatpush1.bf16.msra.mxu0 %v259
  %377 = vmatprep.subr.bf16.mxu0 0
  %378 = vmatpush1.bf16.msra.mxu0 %v260
  %379 = vmatprep.subr.bf16.mxu0 0
  %380 = vmatpush1.bf16.msra.mxu0 %v261
  %381 = vmatprep.mubr.bf16.mxu0 %v80
  %382 = vmatmul.mubr.bf16.gmra.mrb[0].mxu0 %v79
  %v383 = vpop.f32.mrb[0].mxu0
  %v384 = vadd.f32 %v344, %v383
  %v385 = vpop.f32.mrb[0].mxu0
  %v386 = vpop.f32.mrb[0].mxu0
  %v387 = vpop.f32.mrb[0].mxu0
  %388 = vdwg.mxu0
  %389 = vmatprep.subr.bf16.mxu0 0
  %390 = vmatpush1.bf16.msra.mxu0 %v262
  %391 = vmatprep.subr.bf16.mxu0 0
  %392 = vmatpush1.bf16.msra.mxu0 %v263
  %393 = vmatprep.subr.bf16.mxu0 0
  %394 = vmatpush1.bf16.msra.mxu0 %v264
  %395 = vmatprep.subr.bf16.mxu0 0
  %396 = vmatpush1.bf16.msra.mxu0 %v265
  %397 = vmatprep.subr.bf16.mxu0 0
  %398 = vmatpush1.bf16.msra.mxu0 %v266
  %399 = vmatprep.subr.bf16.mxu0 0
  %400 = vmatpush1.bf16.msra.mxu0 %v267
  %401 = vmatprep.subr.bf16.mxu0 0
  %402 = vmatpush1.bf16.msra.mxu0 %v268
  %403 = vmatprep.subr.bf16.mxu0 0
  %404 = vmatpush1.bf16.msra.mxu0 %v269
  %405 = vmatprep.subr.bf16.mxu0 0
  %406 = vmatpush1.bf16.msra.mxu0 %v270
  %407 = vmatprep.subr.bf16.mxu0 0
  %408 = vmatpush1.bf16.msra.mxu0 %v271
  %409 = vmatprep.subr.bf16.mxu0 0
  %410 = vmatpush1.bf16.msra.mxu0 %v272
  %411 = vmatprep.subr.bf16.mxu0 0
  %412 = vmatpush1.bf16.msra.mxu0 %v273
  %413 = vmatprep.subr.bf16.mxu0 0
  %414 = vmatpush1.bf16.msra.mxu0 %v274
  %415 = vmatprep.subr.bf16.mxu0 0
  %416 = vmatpush1.bf16.msra.mxu0 %v275
  %417 = vmatprep.subr.bf16.mxu0 0
  %418 = vmatpush1.bf16.msra.mxu0 %v276
  %419 = vmatprep.subr.bf16.mxu0 0
  %420 = vmatpush1.bf16.msra.mxu0 %v277
  %421 = vmatprep.mubr.bf16.mxu0 %v82
  %422 = vmatmul.mubr.bf16.gmra.mrb[0].mxu0 %v81
  %v423 = vpop.f32.mrb[0].mxu0
  %v424 = vadd.f32 %v384, %v423
  %v425 = vpop.f32.mrb[0].mxu0
  %v426 = vpop.f32.mrb[0].mxu0
  %v427 = vpop.f32.mrb[0].mxu0
  %428 = vdwg.mxu0
  %429 = vmatprep.subr.bf16.mxu0 0
  %430 = vmatpush1.bf16.msra.mxu0 %v278
  %431 = vmatprep.subr.bf16.mxu0 0
  %432 = vmatpush1.bf16.msra.mxu0 %v279
  %433 = vmatprep.subr.bf16.mxu0 0
  %434 = vmatpush1.bf16.msra.mxu0 %v280
  %435 = vmatprep.subr.bf16.mxu0 0
  %436 = vmatpush1.bf16.msra.mxu0 %v281
  %437 = vmatprep.subr.bf16.mxu0 0
  %438 = vmatpush1.bf16.msra.mxu0 %v282
  %439 = vmatprep.subr.bf16.mxu0 0
  %440 = vmatpush1.bf16.msra.mxu0 %v283
  %441 = vmatprep.subr.bf16.mxu0 0
  %442 = vmatpush1.bf16.msra.mxu0 %v284
  %443 = vmatprep.subr.bf16.mxu0 0
  %444 = vmatpush1.bf16.msra.mxu0 %v285
  %445 = vmatprep.subr.bf16.mxu0 0
  %446 = vmatpush1.bf16.msra.mxu0 %v286
  %447 = vmatprep.subr.bf16.mxu0 0
  %448 = vmatpush1.bf16.msra.mxu0 %v287
  %449 = vmatprep.subr.bf16.mxu0 0
  %450 = vmatpush1.bf16.msra.mxu0 %v288
  %451 = vmatprep.subr.bf16.mxu0 0
  %452 = vmatpush1.bf16.msra.mxu0 %v289
  %453 = vmatprep.subr.bf16.mxu0 0
  %454 = vmatpush1.bf16.msra.mxu0 %v290
  %455 = vmatprep.subr.bf16.mxu0 0
  %456 = vmatpush1.bf16.msra.mxu0 %v291
  %457 = vmatprep.subr.bf16.mxu0 0
  %458 = vmatpush1.bf16.msra.mxu0 %v292
  %459 = vmatprep.subr.bf16.mxu0 0
  %460 = vmatpush1.bf16.msra.mxu0 %v293
  %461 = vmatprep.mubr.bf16.mxu0 %v84
  %462 = vmatmul.mubr.bf16.gmra.mrb[0].mxu0 %v83
  %v463 = vpop.f32.mrb[0].mxu0
  %v464 = vadd.f32 %v424, %v463
  %v465 = vpop.f32.mrb[0].mxu0
  %v466 = vpop.f32.mrb[0].mxu0
  %v467 = vpop.f32.mrb[0].mxu0
  %468 = vdwg.mxu0
  %469 = vmatprep.subr.bf16.mxu0 0
  %470 = vmatpush1.bf16.msra.mxu0 %v294
  %471 = vmatprep.subr.bf16.mxu0 0
  %472 = vmatpush1.bf16.msra.mxu0 %v295
  %473 = vmatprep.subr.bf16.mxu0 0
  %474 = vmatpush1.bf16.msra.mxu0 %v296
  %475 = vmatprep.subr.bf16.mxu0 0
  %476 = vmatpush1.bf16.msra.mxu0 %v297
  %477 = vmatprep.subr.bf16.mxu0 0
  %478 = vmatpush1.bf16.msra.mxu0 %v298
  %479 = vmatprep.subr.bf16.mxu0 0
  %480 = vmatpush1.bf16.msra.mxu0 %v299
  %481 = vmatprep.subr.bf16.mxu0 0
  %482 = vmatpush1.bf16.msra.mxu0 %v300
  %483 = vmatprep.subr.bf16.mxu0 0
  %484 = vmatpush1.bf16.msra.mxu0 %v301
  %485 = vmatprep.subr.bf16.mxu0 0
  %486 = vmatpush1.bf16.msra.mxu0 0
  %487 = vmatprep.subr.bf16.mxu0 0
  %488 = vmatpush1.bf16.msra.mxu0 0
  %489 = vmatprep.subr.bf16.mxu0 0
  %490 = vmatpush1.bf16.msra.mxu0 0
  %491 = vmatprep.subr.bf16.mxu0 0
  %492 = vmatpush1.bf16.msra.mxu0 0
  %493 = vmatprep.subr.bf16.mxu0 0
  %494 = vmatpush1.bf16.msra.mxu0 0
  %495 = vmatprep.subr.bf16.mxu0 0
  %496 = vmatpush1.bf16.msra.mxu0 0
  %497 = vmatprep.subr.bf16.mxu0 0
  %498 = vmatpush1.bf16.msra.mxu0 0
  %499 = vmatprep.subr.bf16.mxu0 0
  %500 = vmatpush1.bf16.msra.mxu0 0
  %501 = vmatprep.mubr.bf16.mxu0 0
  %502 = vmatmul.mubr.bf16.gmra.mrb[0].mxu0 %v85
  %v503 = vpop.f32.mrb[0].mxu0
  %v504 = vadd.f32 %v464, %v503
  %v505 = vpop.f32.mrb[0].mxu0
  %v506 = vpop.f32.mrb[0].mxu0
  %v507 = vpop.f32.mrb[0].mxu0
  %508 = vdwg.mxu0
  %v509 = vpack.c.bf16 %v504, %v504
  %v510 = vld [vmem:[%s3] sm:$0xff]
  %v511 = vld [vmem:[%s3 + $0x8] sm:$0xff]
  %v512 = vld [vmem:[%s3 + $0x10] sm:$0xff]
  %v513 = vld [vmem:[%s3 + $0x18] sm:$0xff]
  %v514 = vld [vmem:[%s3 + $0x20] sm:$0xff]
  %v515 = vld [vmem:[%s3 + $0x28] sm:$0xff]
  %v516 = vld [vmem:[%s3 + $0x30] sm:$0xff]
  %v517 = vld [vmem:[%s3 + $0x38] sm:$0xff]
  %v518 = vld [vmem:[%s3 + $0x40] sm:$0xff]
  %v519 = vld [vmem:[%s3 + $0x48] sm:$0x3]
  %v520 = vld [vmem:[%s3 + $0x50] sm:$0x3]
  %v521 = vld [vmem:[%s3 + $0x58] sm:$0x3]
  %v522 = vld [vmem:[%s3 + $0x60] sm:$0x3]
  %v523 = vld [vmem:[%s3 + $0x68] sm:$0x3]
  %v524 = vld [vmem:[%s3 + $0x70] sm:$0x3]
  %v525 = vld [vmem:[%s3 + $0x78] sm:$0x3]
  %v526 = vld [vmem:[%s3 + $0x80] sm:$0x3]
  %v527 = vld [vmem:[%s3 + $0x88] sm:$0x3]
  %v528 = vpack.c.bf16 %v519, %v510
  %v529 = vpack.c.bf16 %v520, %v511
  %v530 = vpack.c.bf16 %v521, %v512
  %v531 = vpack.c.bf16 %v522, %v513
  %v532 = vpack.c.bf16 %v523, %v514
  %v533 = vpack.c.bf16 %v524, %v515
  %v534 = vpack.c.bf16 %v525, %v516
  %v535 = vpack.c.bf16 %v526, %v517
  %v536 = vpack.c.bf16 %v527, %v518
  %v537 = vld [vmem:[%s4] sm:$0xff]
  %v538 = vld [vmem:[%s4 + $0x8] sm:$0x1]
  %v541 = vlaneseq
  %v542 = vshrl.u32 %v541, 7
  %v543 = vsub.s32 0, %v542
  %v544 = vrot.slane %v537, %v543
  %v545 = vlaneseq
  %v546 = vshrl.u32 %v545, 7
  %v547 = vsub.s32 1, %v546
  %v548 = vrot.slane %v537, %v547
  %v549 = vlaneseq
  %v550 = vshrl.u32 %v549, 7
  %v551 = vsub.s32 2, %v550
  %v552 = vrot.slane %v537, %v551
  %v553 = vlaneseq
  %v554 = vshrl.u32 %v553, 7
  %v555 = vsub.s32 3, %v554
  %v556 = vrot.slane %v537, %v555
  %v557 = vlaneseq
  %v558 = vshrl.u32 %v557, 7
  %v559 = vsub.s32 4, %v558
  %v560 = vrot.slane %v537, %v559
  %v561 = vlaneseq
  %v562 = vshrl.u32 %v561, 7
  %v563 = vsub.s32 5, %v562
  %v564 = vrot.slane %v537, %v563
  %v565 = vlaneseq
  %v566 = vshrl.u32 %v565, 7
  %v567 = vsub.s32 6, %v566
  %v568 = vrot.slane %v537, %v567
  %v569 = vlaneseq
  %v570 = vshrl.u32 %v569, 7
  %v571 = vsub.s32 7, %v570
  %v572 = vrot.slane %v537, %v571
  %v573 = vlaneseq
  %v574 = vshrl.u32 %v573, 7
  %v575 = vsub.s32 0, %v574
  %v576 = vrot.slane %v538, %v575
  %vm586 = vcmask 80896
  %v588 = vsel %vm586, %v509, 0
  %vm590 = vcmask 1044480
  %v592 = vsel %vm590, %v528, 0
  %v595 = vsel %vm590, %v529, 0
  %v598 = vsel %vm590, %v530, 0
  %v601 = vsel %vm590, %v531, 0
  %v604 = vsel %vm590, %v532, 0
  %v607 = vsel %vm590, %v533, 0
  %v610 = vsel %vm590, %v534, 0
  %v613 = vsel %vm590, %v535, 0
  %v616 = vsel %vm590, %v536, 0
  %618 = vmatprep.subr.bf16.mxu0 %v595
  %619 = vmatpush1.bf16.msra.mxu0 %v592
  %620 = vmatprep.subr.bf16.mxu0 0
  %621 = vmatpush1.bf16.msra.mxu0 0
  %622 = vmatprep.subr.bf16.mxu0 0
  %623 = vmatpush1.bf16.msra.mxu0 0
  %624 = vmatprep.subr.bf16.mxu0 0
  %625 = vmatpush1.bf16.msra.mxu0 0
  %626 = vmatprep.subr.bf16.mxu0 0
  %627 = vmatpush1.bf16.msra.mxu0 0
  %628 = vmatprep.subr.bf16.mxu0 0
  %629 = vmatpush1.bf16.msra.mxu0 0
  %630 = vmatprep.subr.bf16.mxu0 0
  %631 = vmatpush1.bf16.msra.mxu0 0
  %632 = vmatprep.subr.bf16.mxu0 0
  %633 = vmatpush1.bf16.msra.mxu0 0
  %634 = vmatprep.subr.bf16.mxu0 0
  %635 = vmatpush1.bf16.msra.mxu0 0
  %636 = vmatprep.subr.bf16.mxu0 0
  %637 = vmatpush1.bf16.msra.mxu0 0
  %638 = vmatprep.subr.bf16.mxu0 0
  %639 = vmatpush1.bf16.msra.mxu0 0
  %640 = vmatprep.subr.bf16.mxu0 0
  %641 = vmatpush1.bf16.msra.mxu0 0
  %642 = vmatprep.subr.bf16.mxu0 0
  %643 = vmatpush1.bf16.msra.mxu0 0
  %644 = vmatprep.subr.bf16.mxu0 0
  %645 = vmatpush1.bf16.msra.mxu0 0
  %646 = vmatprep.subr.bf16.mxu0 0
  %647 = vmatpush1.bf16.msra.mxu0 0
  %648 = vmatprep.subr.bf16.mxu0 0
  %649 = vmatpush1.bf16.msra.mxu0 0
  %650 = vmatprep.mubr.bf16.mxu0 0
  %651 = vmatmul.mubr.bf16.gmra.mrb[0].mxu0 %v588
  %v652 = vpop.f32.mrb[0].mxu0
  %v653 = vadd.f32 %v544, %v652
  %v654 = vpop.f32.mrb[0].mxu0
  %v655 = vadd.f32 %v548, %v654
  %v656 = vpop.f32.mrb[0].mxu0
  %v657 = vpop.f32.mrb[0].mxu0
  %658 = vdwg.mxu0
  %659 = vmatprep.subr.bf16.mxu0 %v601
  %660 = vmatpush1.bf16.msra.mxu0 %v598
  %661 = vmatprep.subr.bf16.mxu0 0
  %662 = vmatpush1.bf16.msra.mxu0 0
  %663 = vmatprep.subr.bf16.mxu0 0
  %664 = vmatpush1.bf16.msra.mxu0 0
  %665 = vmatprep.subr.bf16.mxu0 0
  %666 = vmatpush1.bf16.msra.mxu0 0
  %667 = vmatprep.subr.bf16.mxu0 0
  %668 = vmatpush1.bf16.msra.mxu0 0
  %669 = vmatprep.subr.bf16.mxu0 0
  %670 = vmatpush1.bf16.msra.mxu0 0
  %671 = vmatprep.subr.bf16.mxu0 0
  %672 = vmatpush1.bf16.msra.mxu0 0
  %673 = vmatprep.subr.bf16.mxu0 0
  %674 = vmatpush1.bf16.msra.mxu0 0
  %675 = vmatprep.subr.bf16.mxu0 0
  %676 = vmatpush1.bf16.msra.mxu0 0
  %677 = vmatprep.subr.bf16.mxu0 0
  %678 = vmatpush1.bf16.msra.mxu0 0
  %679 = vmatprep.subr.bf16.mxu0 0
  %680 = vmatpush1.bf16.msra.mxu0 0
  %681 = vmatprep.subr.bf16.mxu0 0
  %682 = vmatpush1.bf16.msra.mxu0 0
  %683 = vmatprep.subr.bf16.mxu0 0
  %684 = vmatpush1.bf16.msra.mxu0 0
  %685 = vmatprep.subr.bf16.mxu0 0
  %686 = vmatpush1.bf16.msra.mxu0 0
  %687 = vmatprep.subr.bf16.mxu0 0
  %688 = vmatpush1.bf16.msra.mxu0 0
  %689 = vmatprep.subr.bf16.mxu0 0
  %690 = vmatpush1.bf16.msra.mxu0 0
  %691 = vmatprep.mubr.bf16.mxu0 0
  %692 = vmatmul.mubr.bf16.gmra.mrb[0].mxu0 %v588
  %v693 = vpop.f32.mrb[0].mxu0
  %v694 = vadd.f32 %v552, %v693
  %v695 = vpop.f32.mrb[0].mxu0
  %v696 = vadd.f32 %v556, %v695
  %v697 = vpop.f32.mrb[0].mxu0
  %v698 = vpop.f32.mrb[0].mxu0
  %699 = vdwg.mxu0
  %700 = vmatprep.subr.bf16.mxu0 %v607
  %701 = vmatpush1.bf16.msra.mxu0 %v604
  %702 = vmatprep.subr.bf16.mxu0 0
  %703 = vmatpush1.bf16.msra.mxu0 0
  %704 = vmatprep.subr.bf16.mxu0 0
  %705 = vmatpush1.bf16.msra.mxu0 0
  %706 = vmatprep.subr.bf16.mxu0 0
  %707 = vmatpush1.bf16.msra.mxu0 0
  %708 = vmatprep.subr.bf16.mxu0 0
  %709 = vmatpush1.bf16.msra.mxu0 0
  %710 = vmatprep.subr.bf16.mxu0 0
  %711 = vmatpush1.bf16.msra.mxu0 0
  %712 = vmatprep.subr.bf16.mxu0 0
  %713 = vmatpush1.bf16.msra.mxu0 0
  %714 = vmatprep.subr.bf16.mxu0 0
  %715 = vmatpush1.bf16.msra.mxu0 0
  %716 = vmatprep.subr.bf16.mxu0 0
  %717 = vmatpush1.bf16.msra.mxu0 0
  %718 = vmatprep.subr.bf16.mxu0 0
  %719 = vmatpush1.bf16.msra.mxu0 0
  %720 = vmatprep.subr.bf16.mxu0 0
  %721 = vmatpush1.bf16.msra.mxu0 0
  %722 = vmatprep.subr.bf16.mxu0 0
  %723 = vmatpush1.bf16.msra.mxu0 0
  %724 = vmatprep.subr.bf16.mxu0 0
  %725 = vmatpush1.bf16.msra.mxu0 0
  %726 = vmatprep.subr.bf16.mxu0 0
  %727 = vmatpush1.bf16.msra.mxu0 0
  %728 = vmatprep.subr.bf16.mxu0 0
  %729 = vmatpush1.bf16.msra.mxu0 0
  %730 = vmatprep.subr.bf16.mxu0 0
  %731 = vmatpush1.bf16.msra.mxu0 0
  %732 = vmatprep.mubr.bf16.mxu0 0
  %733 = vmatmul.mubr.bf16.gmra.mrb[0].mxu0 %v588
  %v734 = vpop.f32.mrb[0].mxu0
  %v735 = vadd.f32 %v560, %v734
  %v736 = vpop.f32.mrb[0].mxu0
  %v737 = vadd.f32 %v564, %v736
  %v738 = vpop.f32.mrb[0].mxu0
  %v739 = vpop.f32.mrb[0].mxu0
  %740 = vdwg.mxu0
  %741 = vmatprep.subr.bf16.mxu0 %v613
  %742 = vmatpush1.bf16.msra.mxu0 %v610
  %743 = vmatprep.subr.bf16.mxu0 0
  %744 = vmatpush1.bf16.msra.mxu0 0
  %745 = vmatprep.subr.bf16.mxu0 0
  %746 = vmatpush1.bf16.msra.mxu0 0
  %747 = vmatprep.subr.bf16.mxu0 0
  %748 = vmatpush1.bf16.msra.mxu0 0
  %749 = vmatprep.subr.bf16.mxu0 0
  %750 = vmatpush1.bf16.msra.mxu0 0
  %751 = vmatprep.subr.bf16.mxu0 0
  %752 = vmatpush1.bf16.msra.mxu0 0
  %753 = vmatprep.subr.bf16.mxu0 0
  %754 = vmatpush1.bf16.msra.mxu0 0
  %755 = vmatprep.subr.bf16.mxu0 0
  %756 = vmatpush1.bf16.msra.mxu0 0
  %757 = vmatprep.subr.bf16.mxu0 0
  %758 = vmatpush1.bf16.msra.mxu0 0
  %759 = vmatprep.subr.bf16.mxu0 0
  %760 = vmatpush1.bf16.msra.mxu0 0
  %761 = vmatprep.subr.bf16.mxu0 0
  %762 = vmatpush1.bf16.msra.mxu0 0
  %763 = vmatprep.subr.bf16.mxu0 0
  %764 = vmatpush1.bf16.msra.mxu0 0
  %765 = vmatprep.subr.bf16.mxu0 0
  %766 = vmatpush1.bf16.msra.mxu0 0
  %767 = vmatprep.subr.bf16.mxu0 0
  %768 = vmatpush1.bf16.msra.mxu0 0
  %769 = vmatprep.subr.bf16.mxu0 0
  %770 = vmatpush1.bf16.msra.mxu0 0
  %771 = vmatprep.subr.bf16.mxu0 0
  %772 = vmatpush1.bf16.msra.mxu0 0
  %773 = vmatprep.mubr.bf16.mxu0 0
  %774 = vmatmul.mubr.bf16.gmra.mrb[0].mxu0 %v588
  %v775 = vpop.f32.mrb[0].mxu0
  %v776 = vadd.f32 %v568, %v775
  %v777 = vpop.f32.mrb[0].mxu0
  %v778 = vadd.f32 %v572, %v777
  %v779 = vpop.f32.mrb[0].mxu0
  %v780 = vpop.f32.mrb[0].mxu0
  %781 = vdwg.mxu0
  %782 = vmatprep.subr.bf16.mxu0 0
  %783 = vmatpush1.bf16.msra.mxu0 %v616
  %784 = vmatprep.subr.bf16.mxu0 0
  %785 = vmatpush1.bf16.msra.mxu0 0
  %786 = vmatprep.subr.bf16.mxu0 0
  %787 = vmatpush1.bf16.msra.mxu0 0
  %788 = vmatprep.subr.bf16.mxu0 0
  %789 = vmatpush1.bf16.msra.mxu0 0
  %790 = vmatprep.subr.bf16.mxu0 0
  %791 = vmatpush1.bf16.msra.mxu0 0
  %792 = vmatprep.subr.bf16.mxu0 0
  %793 = vmatpush1.bf16.msra.mxu0 0
  %794 = vmatprep.subr.bf16.mxu0 0
  %795 = vmatpush1.bf16.msra.mxu0 0
  %796 = vmatprep.subr.bf16.mxu0 0
  %797 = vmatpush1.bf16.msra.mxu0 0
  %798 = vmatprep.subr.bf16.mxu0 0
  %799 = vmatpush1.bf16.msra.mxu0 0
  %800 = vmatprep.subr.bf16.mxu0 0
  %801 = vmatpush1.bf16.msra.mxu0 0
  %802 = vmatprep.subr.bf16.mxu0 0
  %803 = vmatpush1.bf16.msra.mxu0 0
  %804 = vmatprep.subr.bf16.mxu0 0
  %805 = vmatpush1.bf16.msra.mxu0 0
  %806 = vmatprep.subr.bf16.mxu0 0
  %807 = vmatpush1.bf16.msra.mxu0 0
  %808 = vmatprep.subr.bf16.mxu0 0
  %809 = vmatpush1.bf16.msra.mxu0 0
  %810 = vmatprep.subr.bf16.mxu0 0
  %811 = vmatpush1.bf16.msra.mxu0 0
  %812 = vmatprep.subr.bf16.mxu0 0
  %813 = vmatpush1.bf16.msra.mxu0 0
  %814 = vmatprep.mubr.bf16.mxu0 0
  %815 = vmatmul.mubr.bf16.gmra.mrb[0].mxu0 %v588
  %v816 = vpop.f32.mrb[0].mxu0
  %v817 = vadd.f32 %v576, %v816
  %v818 = vpop.f32.mrb[0].mxu0
  %v819 = vpop.f32.mrb[0].mxu0
  %v820 = vpop.f32.mrb[0].mxu0
  %821 = vdwg.mxu0
  %v831 = vcombine.low %v653, %v655
  %v832 = vcombine.low %v694, %v696
  %v834 = vunpack.c.l.s4 1983009808
  %v835 = vunpack.c.0.s8 %v834
  %v836 = vlaneseq
  %v837 = vshrl.u32 %v836, 7
  %v838 = vsub.s32 %v835, %v837
  %v839 = vrot.slane %v831, %v838
  %v841 = vunpack.c.l.s4 1983009808
  %v842 = vunpack.c.0.s8 %v841
  %v843 = vlaneseq
  %v844 = vshrl.u32 %v843, 7
  %v845 = vsub.s32 %v842, %v844
  %v846 = vrot.slane %v832, %v845
  %v847 = vcombine.low %v839, %v846
  %v848 = vcombine.low %v735, %v737
  %v849 = vcombine.low %v776, %v778
  %v851 = vunpack.c.l.s4 1983009808
  %v852 = vunpack.c.0.s8 %v851
  %v853 = vlaneseq
  %v854 = vshrl.u32 %v853, 7
  %v855 = vsub.s32 %v852, %v854
  %v856 = vrot.slane %v848, %v855
  %v858 = vunpack.c.l.s4 1983009808
  %v859 = vunpack.c.0.s8 %v858
  %v860 = vlaneseq
  %v861 = vshrl.u32 %v860, 7
  %v862 = vsub.s32 %v859, %v861
  %v863 = vrot.slane %v849, %v862
  %v864 = vcombine.low %v856, %v863
  %v866 = vunpack.c.l.s4 1983009808
  %v867 = vunpack.c.0.s8 %v866
  %v868 = vlaneseq
  %v869 = vshrl.u32 %v868, 7
  %v870 = vsub.s32 %v867, %v869
  %v871 = vrot.slane %v817, %v870
  %875 = vst [vmem:[%s5] sm:$0xff] %v847
  %876 = vst [vmem:[%s5 + $0x8] sm:$0xff] %v864
  %877 = vst [vmem:[%s5 + $0x10] sm:$0x3] %v871
  // Predicated region
  $region22: #{cae_forward.10} parent=0 // pred_check
    _
  $region23: #{cae_forward.10} parent=0 // pred_check_branch
    %879 = sbr.rel (0) target = $region25
  $region24: #{cae_forward.10} parent=0 // pred_region
    _
  $region25: #{cae_forward.10} parent=0 // pred_fallthru
    _
  // Predicated region
  $region26: #{cae_forward.10} parent=0 // pred_check
    _
  $region27: #{cae_forward.10} parent=0 // pred_check_branch
    %881 = sbr.rel (0) target = $region29
  $region28: #{cae_forward.10} parent=0 // pred_region
    _
  $region29: #{cae_forward.10} parent=0 // pred_fallthru
    _

// kernel: cae_forward.12
$region0: #{cae_forward.12}
  #allocation0 [shape = 'u32[]', space=smem, size = 0x4, offset = 0x4, fixed_abs, tag = 'smem constant byte address 0x4 - core index']
  #allocation1 [shape = 'u32[144,128]{1,0:T(1,128)}', space=vmem, size = 0x12000, scoped, tag = 'internal scratch']
  %s0 = inlined_call_operand.vmem [shape: f32[98,64], index: 0, kind: input, shape index: {}]
  %s1 = inlined_call_operand.vmem [shape: f32[64,128], index: 1, kind: input, shape index: {}]
  %s2 = inlined_call_operand.vmem [shape: f32[1,128], index: 2, kind: input, shape index: {}]
  %s3 = inlined_call_operand.vmem [shape: f32[1,128], index: 3, kind: input, shape index: {}]
  %s4 = inlined_call_operand.vmem [shape: f32[98,128], index: 4, kind: output, shape index: {}]
  %s5 = sld [smem:[#allocation0]]
  $region26: #{cae_forward.12} parent=0
    _
  %s7 = ssub.s32 1, %s5
  %s8 = scalar_select 0, %s7, %s5
  // Predicated region
  $region2: #{cae_forward.12} parent=0 // pred_check
    _
  $region3: #{cae_forward.12} parent=0 // pred_check_branch
    %10 = sbr.rel (0) target = $region5
  $region4: #{cae_forward.12} parent=0 // pred_region
    _
  $region5: #{cae_forward.12} parent=0 // pred_fallthru
    _
  // Predicated region
  $region6: #{cae_forward.12} parent=0 // pred_check
    _
  $region7: #{cae_forward.12} parent=0 // pred_check_branch
    %12 = sbr.rel (0) target = $region9
  $region8: #{cae_forward.12} parent=0 // pred_region
    _
  $region9: #{cae_forward.12} parent=0 // pred_fallthru
    _
  // Predicated region
  $region10: #{cae_forward.12} parent=0 // pred_check
    _
  $region11: #{cae_forward.12} parent=0 // pred_check_branch
    %14 = sbr.rel (0) target = $region13
  $region12: #{cae_forward.12} parent=0 // pred_region
    _
  $region13: #{cae_forward.12} parent=0 // pred_fallthru
    _
  // Predicated region
  $region14: #{cae_forward.12} parent=0 // pred_check
    _
  $region15: #{cae_forward.12} parent=0 // pred_check_branch
    %16 = sbr.rel (0) target = $region17
  $region16: #{cae_forward.12} parent=0 // pred_region
    _
  $region17: #{cae_forward.12} parent=0 // pred_fallthru
    _
  %v18 = vld [vmem:[%s0] sm:$0xff]
  %v19 = vld [vmem:[%s0 + $0x8] sm:$0xff]
  %v20 = vld [vmem:[%s0 + $0x10] sm:$0xff]
  %v21 = vld [vmem:[%s0 + $0x18] sm:$0xff]
  %v22 = vld [vmem:[%s0 + $0x20] sm:$0xff]
  %v23 = vld [vmem:[%s0 + $0x28] sm:$0xff]
  %v24 = vld [vmem:[%s0 + $0x30] sm:$0xff]
  %v25 = vld [vmem:[%s0 + $0x38] sm:$0xff]
  %v26 = vld [vmem:[%s0 + $0x40] sm:$0xff]
  %v27 = vld [vmem:[%s0 + $0x48] sm:$0xff]
  %v28 = vld [vmem:[%s0 + $0x50] sm:$0xff]
  %v29 = vld [vmem:[%s0 + $0x58] sm:$0xff]
  %v30 = vld [vmem:[%s0 + $0x60] sm:$0x3]
  %v31 = vpack.c.bf16 %v19, %v18
  %v32 = vpack.c.bf16 %v21, %v20
  %v33 = vpack.c.bf16 %v23, %v22
  %v34 = vpack.c.bf16 %v25, %v24
  %v35 = vpack.c.bf16 %v27, %v26
  %v36 = vpack.c.bf16 %v29, %v28
  %v37 = vpack.c.bf16 %v30, %v30
  %v38 = vld [vmem:[%s1] sm:$0xff]
  %v39 = vld [vmem:[%s1 + $0x8] sm:$0xff]
  %v40 = vld [vmem:[%s1 + $0x10] sm:$0xff]
  %v41 = vld [vmem:[%s1 + $0x18] sm:$0xff]
  %v42 = vld [vmem:[%s1 + $0x20] sm:$0xff]
  %v43 = vld [vmem:[%s1 + $0x28] sm:$0xff]
  %v44 = vld [vmem:[%s1 + $0x30] sm:$0xff]
  %v45 = vld [vmem:[%s1 + $0x38] sm:$0xff]
  %v46 = vpack.c.bf16 %v39, %v38
  %v47 = vpack.c.bf16 %v41, %v40
  %v48 = vpack.c.bf16 %v43, %v42
  %v49 = vpack.c.bf16 %v45, %v44
  %vm50 = vcmask 523264
  %v52 = vsel %vm50, %v31, 0
  %v55 = vsel %vm50, %v32, 0
  %v58 = vsel %vm50, %v33, 0
  %v61 = vsel %vm50, %v34, 0
  %v64 = vsel %vm50, %v35, 0
  %v67 = vsel %vm50, %v36, 0
  %v70 = vsel %vm50, %v37, 0
  %72 = vmatprep.subr.bf16.mxu0 0
  %73 = vmatpush1.bf16.msra.mxu0 %v46
  %74 = vmatprep.subr.bf16.mxu0 0
  %75 = vmatpush1.bf16.msra.mxu0 %v47
  %76 = vmatprep.subr.bf16.mxu0 0
  %77 = vmatpush1.bf16.msra.mxu0 %v48
  %78 = vmatprep.subr.bf16.mxu0 0
  %79 = vmatpush1.bf16.msra.mxu0 %v49
  %80 = vmatprep.subr.bf16.mxu0 0
  %81 = vmatpush1.bf16.msra.mxu0 0
  %82 = vmatprep.subr.bf16.mxu0 0
  %83 = vmatpush1.bf16.msra.mxu0 0
  %84 = vmatprep.subr.bf16.mxu0 0
  %85 = vmatpush1.bf16.msra.mxu0 0
  %86 = vmatprep.subr.bf16.mxu0 0
  %87 = vmatpush1.bf16.msra.mxu0 0
  %88 = vmatprep.subr.bf16.mxu0 0
  %89 = vmatpush1.bf16.msra.mxu0 0
  %90 = vmatprep.subr.bf16.mxu0 0
  %91 = vmatpush1.bf16.msra.mxu0 0
  %92 = vmatprep.subr.bf16.mxu0 0
  %93 = vmatpush1.bf16.msra.mxu0 0
  %94 = vmatprep.subr.bf16.mxu0 0
  %95 = vmatpush1.bf16.msra.mxu0 0
  %96 = vmatprep.subr.bf16.mxu0 0
  %97 = vmatpush1.bf16.msra.mxu0 0
  %98 = vmatprep.subr.bf16.mxu0 0
  %99 = vmatpush1.bf16.msra.mxu0 0
  %100 = vmatprep.subr.bf16.mxu0 0
  %101 = vmatpush1.bf16.msra.mxu0 0
  %102 = vmatprep.subr.bf16.mxu0 0
  %103 = vmatpush1.bf16.msra.mxu0 0
  %104 = vmatprep.mubr.bf16.mxu0 0
  %105 = vmatmul.mubr.bf16.gmra.mrb[0].mxu0 %v52
  %v106 = vpop.f32.mrb[0].mxu0
  %v107 = vadd.f32 0.0, %v106
  %v108 = vpop.f32.mrb[0].mxu0
  %v109 = vpop.f32.mrb[0].mxu0
  %v110 = vadd.f32 0.0, %v109
  %v111 = vpop.f32.mrb[0].mxu0
  %112 = vmatprep.mubr.bf16.mxu0 0
  %113 = vmatmul.mubr.bf16.gmra.mrb[0].mxu0 %v55
  %v114 = vpop.f32.mrb[0].mxu0
  %v115 = vadd.f32 0.0, %v114
  %v116 = vpop.f32.mrb[0].mxu0
  %v117 = vpop.f32.mrb[0].mxu0
  %v118 = vadd.f32 0.0, %v117
  %v119 = vpop.f32.mrb[0].mxu0
  %120 = vmatprep.mubr.bf16.mxu0 0
  %121 = vmatmul.mubr.bf16.gmra.mrb[0].mxu0 %v58
  %v122 = vpop.f32.mrb[0].mxu0
  %v123 = vadd.f32 0.0, %v122
  %v124 = vpop.f32.mrb[0].mxu0
  %v125 = vpop.f32.mrb[0].mxu0
  %v126 = vadd.f32 0.0, %v125
  %v127 = vpop.f32.mrb[0].mxu0
  %128 = vmatprep.mubr.bf16.mxu0 0
  %129 = vmatmul.mubr.bf16.gmra.mrb[0].mxu0 %v61
  %v130 = vpop.f32.mrb[0].mxu0
  %v131 = vadd.f32 0.0, %v130
  %v132 = vpop.f32.mrb[0].mxu0
  %v133 = vpop.f32.mrb[0].mxu0
  %v134 = vadd.f32 0.0, %v133
  %v135 = vpop.f32.mrb[0].mxu0
  %136 = vmatprep.mubr.bf16.mxu0 0
  %137 = vmatmul.mubr.bf16.gmra.mrb[0].mxu0 %v64
  %v138 = vpop.f32.mrb[0].mxu0
  %v139 = vadd.f32 0.0, %v138
  %v140 = vpop.f32.mrb[0].mxu0
  %v141 = vpop.f32.mrb[0].mxu0
  %v142 = vadd.f32 0.0, %v141
  %v143 = vpop.f32.mrb[0].mxu0
  %144 = vmatprep.mubr.bf16.mxu0 0
  %145 = vmatmul.mubr.bf16.gmra.mrb[0].mxu0 %v67
  %v146 = vpop.f32.mrb[0].mxu0
  %v147 = vadd.f32 0.0, %v146
  %v148 = vpop.f32.mrb[0].mxu0
  %v149 = vpop.f32.mrb[0].mxu0
  %v150 = vadd.f32 0.0, %v149
  %v151 = vpop.f32.mrb[0].mxu0
  %152 = vmatprep.mubr.bf16.mxu0 0
  %153 = vmatmul.mubr.bf16.gmra.mrb[0].mxu0 %v70
  %v154 = vpop.f32.mrb[0].mxu0
  %v155 = vadd.f32 0.0, %v154
  %v156 = vpop.f32.mrb[0].mxu0
  %v157 = vpop.f32.mrb[0].mxu0
  %v158 = vpop.f32.mrb[0].mxu0
  %159 = vdwg.mxu0
  %v160 = vadd.f32 %v107, %v110
  %v161 = vadd.f32 %v160, %v115
  %v162 = vadd.f32 %v161, %v118
  %v163 = vadd.f32 %v162, %v123
  %v164 = vadd.f32 %v163, %v126
  %v165 = vadd.f32 %v164, %v131
  %v166 = vadd.f32 %v165, %v134
  %v167 = vadd.f32 %v166, %v139
  %v168 = vadd.f32 %v167, %v142
  %v169 = vadd.f32 %v168, %v147
  %v170 = vadd.f32 %v169, %v150
  %vm171 = vcmask 1041408
  %v172 = vsel %vm171, %v155, 0.0
  %v173 = vadd.f32 %v170, %v172
  %v174 = vrot.slane %v173, 4
  %v175 = vadd.f32 %v173, %v174
  %v176 = vrot.slane %v175, 2
  %v177 = vadd.f32 %v175, %v176
  %v178 = vrot.slane %v177, 1
  %v179 = vadd.f32 %v177, %v178
  %181 = vrot.lane.b32.xlu0 %v179, 96
  %v182 = vpop.permute.xlu0 %181
  %v184 = vadd.f32 %v179, %v182
  %185 = vrot.lane.b32.xlu0 %v179, 64
  %v186 = vpop.permute.xlu0 %185
  %v188 = vadd.f32 %v184, %v186
  %189 = vrot.lane.b32.xlu0 %v179, 32
  %v190 = vpop.permute.xlu0 %189
  %v192 = vadd.f32 %v188, %v190
  %194 = vrot.lane.b32.xlu0 %v192, 32
  %v195 = vpop.permute.xlu0 %194
  %197 = vrot.lane.b32.xlu0 %v192, 64
  %v198 = vpop.permute.xlu0 %197
  %200 = vrot.lane.b32.xlu0 %v192, 96
  %v201 = vpop.permute.xlu0 %200
  %vm203 = vcmask 261120
  %v204 = vsel %vm203, %v192, %v195
  %v205 = vsel %vm50, %v204, %v198
  %vm206 = vcmask 785408
  %v207 = vsel %vm206, %v205, %v201
  %v208 = vmul.f32 %v207, 0.0025510204
  %v209 = vlaneseq
  %v210 = vshrl.u32 %v209, 7
  %v211 = vsub.s32 0, %v210
  %v212 = vrot.slane %v208, %v211
  %v213 = vsub.f32 %v107, %v212
  %v214 = vsub.f32 %v110, %v212
  %v215 = vsub.f32 %v115, %v212
  %v216 = vsub.f32 %v118, %v212
  %v217 = vsub.f32 %v123, %v212
  %v218 = vsub.f32 %v126, %v212
  %v219 = vsub.f32 %v131, %v212
  %v220 = vsub.f32 %v134, %v212
  %v221 = vsub.f32 %v139, %v212
  %v222 = vsub.f32 %v142, %v212
  %v223 = vsub.f32 %v147, %v212
  %v224 = vsub.f32 %v150, %v212
  %v225 = vsub.f32 %v155, %v212
  %v226 = vmul.f32 %v213, %v213
  %v227 = vmul.f32 %v214, %v214
  %v228 = vmul.f32 %v215, %v215
  %v229 = vmul.f32 %v216, %v216
  %v230 = vmul.f32 %v217, %v217
  %v231 = vmul.f32 %v218, %v218
  %v232 = vmul.f32 %v219, %v219
  %v233 = vmul.f32 %v220, %v220
  %v234 = vmul.f32 %v221, %v221
  %v235 = vmul.f32 %v222, %v222
  %v236 = vmul.f32 %v223, %v223
  %v237 = vmul.f32 %v224, %v224
  %v238 = vmul.f32 %v225, %v225
  %v239 = vadd.f32 %v226, %v227
  %v240 = vadd.f32 %v239, %v228
  %v241 = vadd.f32 %v240, %v229
  %v242 = vadd.f32 %v241, %v230
  %v243 = vadd.f32 %v242, %v231
  %v244 = vadd.f32 %v243, %v232
  %v245 = vadd.f32 %v244, %v233
  %v246 = vadd.f32 %v245, %v234
  %v247 = vadd.f32 %v246, %v235
  %v248 = vadd.f32 %v247, %v236
  %v249 = vadd.f32 %v248, %v237
  %v250 = vsel %vm171, %v238, 0.0
  %v251 = vadd.f32 %v249, %v250
  %v252 = vrot.slane %v251, 4
  %v253 = vadd.f32 %v251, %v252
  %v254 = vrot.slane %v253, 2
  %v255 = vadd.f32 %v253, %v254
  %v256 = vrot.slane %v255, 1
  %v257 = vadd.f32 %v255, %v256
  %259 = vrot.lane.b32.xlu0 %v257, 96
  %v260 = vpop.permute.xlu0 %259
  %v262 = vadd.f32 %v257, %v260
  %263 = vrot.lane.b32.xlu0 %v257, 64
  %v264 = vpop.permute.xlu0 %263
  %v266 = vadd.f32 %v262, %v264
  %267 = vrot.lane.b32.xlu0 %v257, 32
  %v268 = vpop.permute.xlu0 %267
  %v270 = vadd.f32 %v266, %v268
  %272 = vrot.lane.b32.xlu0 %v270, 32
  %v273 = vpop.permute.xlu0 %272
  %275 = vrot.lane.b32.xlu0 %v270, 64
  %v276 = vpop.permute.xlu0 %275
  %278 = vrot.lane.b32.xlu0 %v270, 96
  %v279 = vpop.permute.xlu0 %278
  %v281 = vsel %vm203, %v270, %v273
  %v282 = vsel %vm50, %v281, %v276
  %v283 = vsel %vm206, %v282, %v279
  %v284 = vmul.f32 %v283, 0.0025510204
  %v285 = vadd.f32 %v284, 1e-05
  %v286 = vrsqrt.pop %v285
  %v287 = vlaneseq
  %v288 = vshrl.u32 %v287, 7
  %v289 = vsub.s32 0, %v288
  %v290 = vrot.slane %v286, %v289
  %v291 = vmul.f32 %v213, %v290
  %v292 = vmul.f32 %v214, %v290
  %v293 = vmul.f32 %v215, %v290
  %v294 = vmul.f32 %v216, %v290
  %v295 = vmul.f32 %v217, %v290
  %v296 = vmul.f32 %v218, %v290
  %v297 = vmul.f32 %v219, %v290
  %v298 = vmul.f32 %v220, %v290
  %v299 = vmul.f32 %v221, %v290
  %v300 = vmul.f32 %v222, %v290
  %v301 = vmul.f32 %v223, %v290
  %v302 = vmul.f32 %v224, %v290
  %v303 = vmul.f32 %v225, %v290
  %v304 = vld [vmem:[%s2] sm:$0x1]
  %v306 = vlaneseq
  %v307 = vshrl.u32 %v306, 7
  %v308 = vsub.s32 0, %v307
  %v309 = vrot.slane %v304, %v308
  %v311 = vmul.f32 %v291, %v309
  %v312 = vmul.f32 %v292, %v309
  %v313 = vmul.f32 %v293, %v309
  %v314 = vmul.f32 %v294, %v309
  %v315 = vmul.f32 %v295, %v309
  %v316 = vmul.f32 %v296, %v309
  %v317 = vmul.f32 %v297, %v309
  %v318 = vmul.f32 %v298, %v309
  %v319 = vmul.f32 %v299, %v309
  %v320 = vmul.f32 %v300, %v309
  %v321 = vmul.f32 %v301, %v309
  %v322 = vmul.f32 %v302, %v309
  %v323 = vmul.f32 %v303, %v309
  %v324 = vld [vmem:[%s3] sm:$0x1]
  %v326 = vlaneseq
  %v327 = vshrl.u32 %v326, 7
  %v328 = vsub.s32 0, %v327
  %v329 = vrot.slane %v324, %v328
  %v331 = vadd.f32 %v311, %v329
  %v332 = vadd.f32 %v312, %v329
  %v333 = vadd.f32 %v313, %v329
  %v334 = vadd.f32 %v314, %v329
  %v335 = vadd.f32 %v315, %v329
  %v336 = vadd.f32 %v316, %v329
  %v337 = vadd.f32 %v317, %v329
  %v338 = vadd.f32 %v318, %v329
  %v339 = vadd.f32 %v319, %v329
  %v340 = vadd.f32 %v320, %v329
  %v341 = vadd.f32 %v321, %v329
  %v342 = vadd.f32 %v322, %v329
  %v343 = vadd.f32 %v323, %v329
  %v344 = vmax.f32 %v331, 0.0
  %v345 = vmax.f32 %v332, 0.0
  %v346 = vmax.f32 %v333, 0.0
  %v347 = vmax.f32 %v334, 0.0
  %v348 = vmax.f32 %v335, 0.0
  %v349 = vmax.f32 %v336, 0.0
  %v350 = vmax.f32 %v337, 0.0
  %v351 = vmax.f32 %v338, 0.0
  %v352 = vmax.f32 %v339, 0.0
  %v353 = vmax.f32 %v340, 0.0
  %v354 = vmax.f32 %v341, 0.0
  %v355 = vmax.f32 %v342, 0.0
  %v356 = vmax.f32 %v343, 0.0
  %357 = vst [vmem:[%s4] sm:$0xff] %v344
  %358 = vst [vmem:[%s4 + $0x8] sm:$0xff] %v345
  %359 = vst [vmem:[%s4 + $0x10] sm:$0xff] %v346
  %360 = vst [vmem:[%s4 + $0x18] sm:$0xff] %v347
  %361 = vst [vmem:[%s4 + $0x20] sm:$0xff] %v348
  %362 = vst [vmem:[%s4 + $0x28] sm:$0xff] %v349
  %363 = vst [vmem:[%s4 + $0x30] sm:$0xff] %v350
  %364 = vst [vmem:[%s4 + $0x38] sm:$0xff] %v351
  %365 = vst [vmem:[%s4 + $0x40] sm:$0xff] %v352
  %366 = vst [vmem:[%s4 + $0x48] sm:$0xff] %v353
  %367 = vst [vmem:[%s4 + $0x50] sm:$0xff] %v354
  %368 = vst [vmem:[%s4 + $0x58] sm:$0xff] %v355
  %369 = vst [vmem:[%s4 + $0x60] sm:$0x3] %v356
  // Predicated region
  $region18: #{cae_forward.12} parent=0 // pred_check
    _
  $region19: #{cae_forward.12} parent=0 // pred_check_branch
    %371 = sbr.rel (0) target = $region21
  $region20: #{cae_forward.12} parent=0 // pred_region
    _
  $region21: #{cae_forward.12} parent=0 // pred_fallthru
    _
  // Predicated region
  $region22: #{cae_forward.12} parent=0 // pred_check
    _
  $region23: #{cae_forward.12} parent=0 // pred_check_branch
    %373 = sbr.rel (0) target = $region25
  $region24: #{cae_forward.12} parent=0 // pred_region
    _
  $region25: #{cae_forward.12} parent=0 // pred_fallthru
    _

// kernel: cae_forward.11
$region0: #{cae_forward.11}
  #allocation0 [shape = 'u32[]', space=smem, size = 0x4, offset = 0x4, fixed_abs, tag = 'smem constant byte address 0x4 - core index']
  #allocation1 [shape = 'u32[144,128]{1,0:T(1,128)}', space=vmem, size = 0x12000, scoped, tag = 'internal scratch']
  %s0 = inlined_call_operand.vmem [shape: f32[98,1152], index: 0, kind: input, shape index: {}]
  %s1 = inlined_call_operand.vmem [shape: f32[1152,64], index: 1, kind: input, shape index: {}]
  %s2 = inlined_call_operand.vmem [shape: f32[1,64], index: 2, kind: input, shape index: {}]
  %s3 = inlined_call_operand.vmem [shape: f32[1,64], index: 3, kind: input, shape index: {}]
  %s4 = inlined_call_operand.vmem [shape: f32[98,64], index: 4, kind: output, shape index: {}]
  %s5 = sld [smem:[#allocation0]]
  $region26: #{cae_forward.11} parent=0
    _
  %s7 = ssub.s32 1, %s5
  %s8 = scalar_select 0, %s7, %s5
  // Predicated region
  $region2: #{cae_forward.11} parent=0 // pred_check
    _
  $region3: #{cae_forward.11} parent=0 // pred_check_branch
    %10 = sbr.rel (0) target = $region5
  $region4: #{cae_forward.11} parent=0 // pred_region
    _
  $region5: #{cae_forward.11} parent=0 // pred_fallthru
    _
  // Predicated region
  $region6: #{cae_forward.11} parent=0 // pred_check
    _
  $region7: #{cae_forward.11} parent=0 // pred_check_branch
    %12 = sbr.rel (0) target = $region9
  $region8: #{cae_forward.11} parent=0 // pred_region
    _
  $region9: #{cae_forward.11} parent=0 // pred_fallthru
    _
  // Predicated region
  $region10: #{cae_forward.11} parent=0 // pred_check
    _
  $region11: #{cae_forward.11} parent=0 // pred_check_branch
    %14 = sbr.rel (0) target = $region13
  $region12: #{cae_forward.11} parent=0 // pred_region
    _
  $region13: #{cae_forward.11} parent=0 // pred_fallthru
    _
  // Predicated region
  $region14: #{cae_forward.11} parent=0 // pred_check
    _
  $region15: #{cae_forward.11} parent=0 // pred_check_branch
    %16 = sbr.rel (0) target = $region17
  $region16: #{cae_forward.11} parent=0 // pred_region
    _
  $region17: #{cae_forward.11} parent=0 // pred_fallthru
    _
  %v18 = vld [vmem:[%s0] sm:$0xff]
  %v19 = vld [vmem:[%s0 + $0x8] sm:$0xff]
  %v20 = vld [vmem:[%s0 + $0x10] sm:$0xff]
  %v21 = vld [vmem:[%s0 + $0x18] sm:$0xff]
  %v22 = vld [vmem:[%s0 + $0x20] sm:$0xff]
  %v23 = vld [vmem:[%s0 + $0x28] sm:$0xff]
  %v24 = vld [vmem:[%s0 + $0x30] sm:$0xff]
  %v25 = vld [vmem:[%s0 + $0x38] sm:$0xff]
  %v26 = vld [vmem:[%s0 + $0x40] sm:$0xff]
  %v27 = vld [vmem:[%s0 + $0x48] sm:$0xff]
  %v28 = vld [vmem:[%s0 + $0x50] sm:$0xff]
  %v29 = vld [vmem:[%s0 + $0x58] sm:$0xff]
  %v30 = vld [vmem:[%s0 + $0x60] sm:$0xff]
  %v31 = vld [vmem:[%s0 + $0x68] sm:$0xff]
  %v32 = vld [vmem:[%s0 + $0x70] sm:$0xff]
  %v33 = vld [vmem:[%s0 + $0x78] sm:$0xff]
  %v34 = vld [vmem:[%s0 + $0x80] sm:$0xff]
  %v35 = vld [vmem:[%s0 + $0x88] sm:$0xff]
  %v36 = vld [vmem:[%s0 + $0x90] sm:$0xff]
  %v37 = vld [vmem:[%s0 + $0x98] sm:$0xff]
  %v38 = vld [vmem:[%s0 + $0xa0] sm:$0xff]
  %v39 = vld [vmem:[%s0 + $0xa8] sm:$0xff]
  %v40 = vld [vmem:[%s0 + $0xb0] sm:$0xff]
  %v41 = vld [vmem:[%s0 + $0xb8] sm:$0xff]
  %v42 = vld [vmem:[%s0 + $0xc0] sm:$0xff]
  %v43 = vld [vmem:[%s0 + $0xc8] sm:$0xff]
  %v44 = vld [vmem:[%s0 + $0xd0] sm:$0xff]
  %v45 = vld [vmem:[%s0 + $0xd8] sm:$0xff]
  %v46 = vld [vmem:[%s0 + $0xe0] sm:$0xff]
  %v47 = vld [vmem:[%s0 + $0xe8] sm:$0xff]
  %v48 = vld [vmem:[%s0 + $0xf0] sm:$0xff]
  %v49 = vld [vmem:[%s0 + $0xf8] sm:$0xff]
  %v50 = vld [vmem:[%s0 + $0x100] sm:$0xff]
  %v51 = vld [vmem:[%s0 + $0x108] sm:$0xff]
  %v52 = vld [vmem:[%s0 + $0x110] sm:$0xff]
  %v53 = vld [vmem:[%s0 + $0x118] sm:$0xff]
  %v54 = vld [vmem:[%s0 + $0x120] sm:$0xff]
  %v55 = vld [vmem:[%s0 + $0x128] sm:$0xff]
  %v56 = vld [vmem:[%s0 + $0x130] sm:$0xff]
  %v57 = vld [vmem:[%s0 + $0x138] sm:$0xff]
  %v58 = vld [vmem:[%s0 + $0x140] sm:$0xff]
  %v59 = vld [vmem:[%s0 + $0x148] sm:$0xff]
  %v60 = vld [vmem:[%s0 + $0x150] sm:$0xff]
  %v61 = vld [vmem:[%s0 + $0x158] sm:$0xff]
  %v62 = vld [vmem:[%s0 + $0x160] sm:$0xff]
  %v63 = vld [vmem:[%s0 + $0x168] sm:$0xff]
  %v64 = vld [vmem:[%s0 + $0x170] sm:$0xff]
  %v65 = vld [vmem:[%s0 + $0x178] sm:$0xff]
  %v66 = vld [vmem:[%s0 + $0x180] sm:$0xff]
  %v67 = vld [vmem:[%s0 + $0x188] sm:$0xff]
  %v68 = vld [vmem:[%s0 + $0x190] sm:$0xff]
  %v69 = vld [vmem:[%s0 + $0x198] sm:$0xff]
  %v70 = vld [vmem:[%s0 + $0x1a0] sm:$0xff]
  %v71 = vld [vmem:[%s0 + $0x1a8] sm:$0xff]
  %v72 = vld [vmem:[%s0 + $0x1b0] sm:$0xff]
  %v73 = vld [vmem:[%s0 + $0x1b8] sm:$0xff]
  %v74 = vld [vmem:[%s0 + $0x1c0] sm:$0xff]
  %v75 = vld [vmem:[%s0 + $0x1c8] sm:$0xff]
  %v76 = vld [vmem:[%s0 + $0x1d0] sm:$0xff]
  %v77 = vld [vmem:[%s0 + $0x1d8] sm:$0xff]
  %v78 = vld [vmem:[%s0 + $0x1e0] sm:$0xff]
  %v79 = vld [vmem:[%s0 + $0x1e8] sm:$0xff]
  %v80 = vld [vmem:[%s0 + $0x1f0] sm:$0xff]
  %v81 = vld [vmem:[%s0 + $0x1f8] sm:$0xff]
  %v82 = vld [vmem:[%s0 + $0x200] sm:$0xff]
  %v83 = vld [vmem:[%s0 + $0x208] sm:$0xff]
  %v84 = vld [vmem:[%s0 + $0x210] sm:$0xff]
  %v85 = vld [vmem:[%s0 + $0x218] sm:$0xff]
  %v86 = vld [vmem:[%s0 + $0x220] sm:$0xff]
  %v87 = vld [vmem:[%s0 + $0x228] sm:$0xff]
  %v88 = vld [vmem:[%s0 + $0x230] sm:$0xff]
  %v89 = vld [vmem:[%s0 + $0x238] sm:$0xff]
  %v90 = vld [vmem:[%s0 + $0x240] sm:$0xff]
  %v91 = vld [vmem:[%s0 + $0x248] sm:$0xff]
  %v92 = vld [vmem:[%s0 + $0x250] sm:$0xff]
  %v93 = vld [vmem:[%s0 + $0x258] sm:$0xff]
  %v94 = vld [vmem:[%s0 + $0x260] sm:$0xff]
  %v95 = vld [vmem:[%s0 + $0x268] sm:$0xff]
  %v96 = vld [vmem:[%s0 + $0x270] sm:$0xff]
  %v97 = vld [vmem:[%s0 + $0x278] sm:$0xff]
  %v98 = vld [vmem:[%s0 + $0x280] sm:$0xff]
  %v99 = vld [vmem:[%s0 + $0x288] sm:$0xff]
  %v100 = vld [vmem:[%s0 + $0x290] sm:$0xff]
  %v101 = vld [vmem:[%s0 + $0x298] sm:$0xff]
  %v102 = vld [vmem:[%s0 + $0x2a0] sm:$0xff]
  %v103 = vld [vmem:[%s0 + $0x2a8] sm:$0xff]
  %v104 = vld [vmem:[%s0 + $0x2b0] sm:$0xff]
  %v105 = vld [vmem:[%s0 + $0x2b8] sm:$0xff]
  %v106 = vld [vmem:[%s0 + $0x2c0] sm:$0xff]
  %v107 = vld [vmem:[%s0 + $0x2c8] sm:$0xff]
  %v108 = vld [vmem:[%s0 + $0x2d0] sm:$0xff]
  %v109 = vld [vmem:[%s0 + $0x2d8] sm:$0xff]
  %v110 = vld [vmem:[%s0 + $0x2e0] sm:$0xff]
  %v111 = vld [vmem:[%s0 + $0x2e8] sm:$0xff]
  %v112 = vld [vmem:[%s0 + $0x2f0] sm:$0xff]
  %v113 = vld [vmem:[%s0 + $0x2f8] sm:$0xff]
  %v114 = vld [vmem:[%s0 + $0x300] sm:$0xff]
  %v115 = vld [vmem:[%s0 + $0x308] sm:$0xff]
  %v116 = vld [vmem:[%s0 + $0x310] sm:$0xff]
  %v117 = vld [vmem:[%s0 + $0x318] sm:$0xff]
  %v118 = vld [vmem:[%s0 + $0x320] sm:$0xff]
  %v119 = vld [vmem:[%s0 + $0x328] sm:$0xff]
  %v120 = vld [vmem:[%s0 + $0x330] sm:$0xff]
  %v121 = vld [vmem:[%s0 + $0x338] sm:$0xff]
  %v122 = vld [vmem:[%s0 + $0x340] sm:$0xff]
  %v123 = vld [vmem:[%s0 + $0x348] sm:$0xff]
  %v124 = vld [vmem:[%s0 + $0x350] sm:$0xff]
  %v125 = vld [vmem:[%s0 + $0x358] sm:$0xff]
  %v126 = vld [vmem:[%s0 + $0x360] sm:$0x3]
  %v127 = vld [vmem:[%s0 + $0x368] sm:$0x3]
  %v128 = vld [vmem:[%s0 + $0x370] sm:$0x3]
  %v129 = vld [vmem:[%s0 + $0x378] sm:$0x3]
  %v130 = vld [vmem:[%s0 + $0x380] sm:$0x3]
  %v131 = vld [vmem:[%s0 + $0x388] sm:$0x3]
  %v132 = vld [vmem:[%s0 + $0x390] sm:$0x3]
  %v133 = vld [vmem:[%s0 + $0x398] sm:$0x3]
  %v134 = vld [vmem:[%s0 + $0x3a0] sm:$0x3]
  %v135 = vpack.c.bf16 %v27, %v18
  %v136 = vpack.c.bf16 %v28, %v19
  %v137 = vpack.c.bf16 %v29, %v20
  %v138 = vpack.c.bf16 %v30, %v21
  %v139 = vpack.c.bf16 %v31, %v22
  %v140 = vpack.c.bf16 %v32, %v23
  %v141 = vpack.c.bf16 %v33, %v24
  %v142 = vpack.c.bf16 %v34, %v25
  %v143 = vpack.c.bf16 %v35, %v26
  %v144 = vpack.c.bf16 %v45, %v36
  %v145 = vpack.c.bf16 %v46, %v37
  %v146 = vpack.c.bf16 %v47, %v38
  %v147 = vpack.c.bf16 %v48, %v39
  %v148 = vpack.c.bf16 %v49, %v40
  %v149 = vpack.c.bf16 %v50, %v41
  %v150 = vpack.c.bf16 %v51, %v42
  %v151 = vpack.c.bf16 %v52, %v43
  %v152 = vpack.c.bf16 %v53, %v44
  %v153 = vpack.c.bf16 %v63, %v54
  %v154 = vpack.c.bf16 %v64, %v55
  %v155 = vpack.c.bf16 %v65, %v56
  %v156 = vpack.c.bf16 %v66, %v57
  %v157 = vpack.c.bf16 %v67, %v58
  %v158 = vpack.c.bf16 %v68, %v59
  %v159 = vpack.c.bf16 %v69, %v60
  %v160 = vpack.c.bf16 %v70, %v61
  %v161 = vpack.c.bf16 %v71, %v62
  %v162 = vpack.c.bf16 %v81, %v72
  %v163 = vpack.c.bf16 %v82, %v73
  %v164 = vpack.c.bf16 %v83, %v74
  %v165 = vpack.c.bf16 %v84, %v75
  %v166 = vpack.c.bf16 %v85, %v76
  %v167 = vpack.c.bf16 %v86, %v77
  %v168 = vpack.c.bf16 %v87, %v78
  %v169 = vpack.c.bf16 %v88, %v79
  %v170 = vpack.c.bf16 %v89, %v80
  %v171 = vpack.c.bf16 %v99, %v90
  %v172 = vpack.c.bf16 %v100, %v91
  %v173 = vpack.c.bf16 %v101, %v92
  %v174 = vpack.c.bf16 %v102, %v93
  %v175 = vpack.c.bf16 %v103, %v94
  %v176 = vpack.c.bf16 %v104, %v95
  %v177 = vpack.c.bf16 %v105, %v96
  %v178 = vpack.c.bf16 %v106, %v97
  %v179 = vpack.c.bf16 %v107, %v98
  %v180 = vpack.c.bf16 %v117, %v108
  %v181 = vpack.c.bf16 %v118, %v109
  %v182 = vpack.c.bf16 %v119, %v110
  %v183 = vpack.c.bf16 %v120, %v111
  %v184 = vpack.c.bf16 %v121, %v112
  %v185 = vpack.c.bf16 %v122, %v113
  %v186 = vpack.c.bf16 %v123, %v114
  %v187 = vpack.c.bf16 %v124, %v115
  %v188 = vpack.c.bf16 %v125, %v116
  %v189 = vpack.c.bf16 %v126, %v126
  %v190 = vpack.c.bf16 %v127, %v127
  %v191 = vpack.c.bf16 %v128, %v128
  %v192 = vpack.c.bf16 %v129, %v129
  %v193 = vpack.c.bf16 %v130, %v130
  %v194 = vpack.c.bf16 %v131, %v131
  %v195 = vpack.c.bf16 %v132, %v132
  %v196 = vpack.c.bf16 %v133, %v133
  %v197 = vpack.c.bf16 %v134, %v134
  %v198 = vld [vmem:[%s1] sm:$0xff]
  %v199 = vld [vmem:[%s1 + $0x8] sm:$0xff]
  %v200 = vld [vmem:[%s1 + $0x10] sm:$0xff]
  %v201 = vld [vmem:[%s1 + $0x18] sm:$0xff]
  %v202 = vld [vmem:[%s1 + $0x20] sm:$0xff]
  %v203 = vld [vmem:[%s1 + $0x28] sm:$0xff]
  %v204 = vld [vmem:[%s1 + $0x30] sm:$0xff]
  %v205 = vld [vmem:[%s1 + $0x38] sm:$0xff]
  %v206 = vld [vmem:[%s1 + $0x40] sm:$0xff]
  %v207 = vld [vmem:[%s1 + $0x48] sm:$0xff]
  %v208 = vld [vmem:[%s1 + $0x50] sm:$0xff]
  %v209 = vld [vmem:[%s1 + $0x58] sm:$0xff]
  %v210 = vld [vmem:[%s1 + $0x60] sm:$0xff]
  %v211 = vld [vmem:[%s1 + $0x68] sm:$0xff]
  %v212 = vld [vmem:[%s1 + $0x70] sm:$0xff]
  %v213 = vld [vmem:[%s1 + $0x78] sm:$0xff]
  %v214 = vld [vmem:[%s1 + $0x80] sm:$0xff]
  %v215 = vld [vmem:[%s1 + $0x88] sm:$0xff]
  %v216 = vld [vmem:[%s1 + $0x90] sm:$0xff]
  %v217 = vld [vmem:[%s1 + $0x98] sm:$0xff]
  %v218 = vld [vmem:[%s1 + $0xa0] sm:$0xff]
  %v219 = vld [vmem:[%s1 + $0xa8] sm:$0xff]
  %v220 = vld [vmem:[%s1 + $0xb0] sm:$0xff]
  %v221 = vld [vmem:[%s1 + $0xb8] sm:$0xff]
  %v222 = vld [vmem:[%s1 + $0xc0] sm:$0xff]
  %v223 = vld [vmem:[%s1 + $0xc8] sm:$0xff]
  %v224 = vld [vmem:[%s1 + $0xd0] sm:$0xff]
  %v225 = vld [vmem:[%s1 + $0xd8] sm:$0xff]
  %v226 = vld [vmem:[%s1 + $0xe0] sm:$0xff]
  %v227 = vld [vmem:[%s1 + $0xe8] sm:$0xff]
  %v228 = vld [vmem:[%s1 + $0xf0] sm:$0xff]
  %v229 = vld [vmem:[%s1 + $0xf8] sm:$0xff]
  %v230 = vld [vmem:[%s1 + $0x100] sm:$0xff]
  %v231 = vld [vmem:[%s1 + $0x108] sm:$0xff]
  %v232 = vld [vmem:[%s1 + $0x110] sm:$0xff]
  %v233 = vld [vmem:[%s1 + $0x118] sm:$0xff]
  %v234 = vld [vmem:[%s1 + $0x120] sm:$0xff]
  %v235 = vld [vmem:[%s1 + $0x128] sm:$0xff]
  %v236 = vld [vmem:[%s1 + $0x130] sm:$0xff]
  %v237 = vld [vmem:[%s1 + $0x138] sm:$0xff]
  %v238 = vld [vmem:[%s1 + $0x140] sm:$0xff]
  %v239 = vld [vmem:[%s1 + $0x148] sm:$0xff]
  %v240 = vld [vmem:[%s1 + $0x150] sm:$0xff]
  %v241 = vld [vmem:[%s1 + $0x158] sm:$0xff]
  %v242 = vld [vmem:[%s1 + $0x160] sm:$0xff]
  %v243 = vld [vmem:[%s1 + $0x168] sm:$0xff]
  %v244 = vld [vmem:[%s1 + $0x170] sm:$0xff]
  %v245 = vld [vmem:[%s1 + $0x178] sm:$0xff]
  %v246 = vld [vmem:[%s1 + $0x180] sm:$0xff]
  %v247 = vld [vmem:[%s1 + $0x188] sm:$0xff]
  %v248 = vld [vmem:[%s1 + $0x190] sm:$0xff]
  %v249 = vld [vmem:[%s1 + $0x198] sm:$0xff]
  %v250 = vld [vmem:[%s1 + $0x1a0] sm:$0xff]
  %v251 = vld [vmem:[%s1 + $0x1a8] sm:$0xff]
  %v252 = vld [vmem:[%s1 + $0x1b0] sm:$0xff]
  %v253 = vld [vmem:[%s1 + $0x1b8] sm:$0xff]
  %v254 = vld [vmem:[%s1 + $0x1c0] sm:$0xff]
  %v255 = vld [vmem:[%s1 + $0x1c8] sm:$0xff]
  %v256 = vld [vmem:[%s1 + $0x1d0] sm:$0xff]
  %v257 = vld [vmem:[%s1 + $0x1d8] sm:$0xff]
  %v258 = vld [vmem:[%s1 + $0x1e0] sm:$0xff]
  %v259 = vld [vmem:[%s1 + $0x1e8] sm:$0xff]
  %v260 = vld [vmem:[%s1 + $0x1f0] sm:$0xff]
  %v261 = vld [vmem:[%s1 + $0x1f8] sm:$0xff]
  %v262 = vld [vmem:[%s1 + $0x200] sm:$0xff]
  %v263 = vld [vmem:[%s1 + $0x208] sm:$0xff]
  %v264 = vld [vmem:[%s1 + $0x210] sm:$0xff]
  %v265 = vld [vmem:[%s1 + $0x218] sm:$0xff]
  %v266 = vld [vmem:[%s1 + $0x220] sm:$0xff]
  %v267 = vld [vmem:[%s1 + $0x228] sm:$0xff]
  %v268 = vld [vmem:[%s1 + $0x230] sm:$0xff]
  %v269 = vld [vmem:[%s1 + $0x238] sm:$0xff]
  %v270 = vld [vmem:[%s1 + $0x240] sm:$0xff]
  %v271 = vld [vmem:[%s1 + $0x248] sm:$0xff]
  %v272 = vld [vmem:[%s1 + $0x250] sm:$0xff]
  %v273 = vld [vmem:[%s1 + $0x258] sm:$0xff]
  %v274 = vld [vmem:[%s1 + $0x260] sm:$0xff]
  %v275 = vld [vmem:[%s1 + $0x268] sm:$0xff]
  %v276 = vld [vmem:[%s1 + $0x270] sm:$0xff]
  %v277 = vld [vmem:[%s1 + $0x278] sm:$0xff]
  %v278 = vld [vmem:[%s1 + $0x280] sm:$0xff]
  %v279 = vld [vmem:[%s1 + $0x288] sm:$0xff]
  %v280 = vld [vmem:[%s1 + $0x290] sm:$0xff]
  %v281 = vld [vmem:[%s1 + $0x298] sm:$0xff]
  %v282 = vld [vmem:[%s1 + $0x2a0] sm:$0xff]
  %v283 = vld [vmem:[%s1 + $0x2a8] sm:$0xff]
  %v284 = vld [vmem:[%s1 + $0x2b0] sm:$0xff]
  %v285 = vld [vmem:[%s1 + $0x2b8] sm:$0xff]
  %v286 = vld [vmem:[%s1 + $0x2c0] sm:$0xff]
  %v287 = vld [vmem:[%s1 + $0x2c8] sm:$0xff]
  %v288 = vld [vmem:[%s1 + $0x2d0] sm:$0xff]
  %v289 = vld [vmem:[%s1 + $0x2d8] sm:$0xff]
  %v290 = vld [vmem:[%s1 + $0x2e0] sm:$0xff]
  %v291 = vld [vmem:[%s1 + $0x2e8] sm:$0xff]
  %v292 = vld [vmem:[%s1 + $0x2f0] sm:$0xff]
  %v293 = vld [vmem:[%s1 + $0x2f8] sm:$0xff]
  %v294 = vld [vmem:[%s1 + $0x300] sm:$0xff]
  %v295 = vld [vmem:[%s1 + $0x308] sm:$0xff]
  %v296 = vld [vmem:[%s1 + $0x310] sm:$0xff]
  %v297 = vld [vmem:[%s1 + $0x318] sm:$0xff]
  %v298 = vld [vmem:[%s1 + $0x320] sm:$0xff]
  %v299 = vld [vmem:[%s1 + $0x328] sm:$0xff]
  %v300 = vld [vmem:[%s1 + $0x330] sm:$0xff]
  %v301 = vld [vmem:[%s1 + $0x338] sm:$0xff]
  %v302 = vld [vmem:[%s1 + $0x340] sm:$0xff]
  %v303 = vld [vmem:[%s1 + $0x348] sm:$0xff]
  %v304 = vld [vmem:[%s1 + $0x350] sm:$0xff]
  %v305 = vld [vmem:[%s1 + $0x358] sm:$0xff]
  %v306 = vld [vmem:[%s1 + $0x360] sm:$0xff]
  %v307 = vld [vmem:[%s1 + $0x368] sm:$0xff]
  %v308 = vld [vmem:[%s1 + $0x370] sm:$0xff]
  %v309 = vld [vmem:[%s1 + $0x378] sm:$0xff]
  %v310 = vld [vmem:[%s1 + $0x380] sm:$0xff]
  %v311 = vld [vmem:[%s1 + $0x388] sm:$0xff]
  %v312 = vld [vmem:[%s1 + $0x390] sm:$0xff]
  %v313 = vld [vmem:[%s1 + $0x398] sm:$0xff]
  %v314 = vld [vmem:[%s1 + $0x3a0] sm:$0xff]
  %v315 = vld [vmem:[%s1 + $0x3a8] sm:$0xff]
  %v316 = vld [vmem:[%s1 + $0x3b0] sm:$0xff]
  %v317 = vld [vmem:[%s1 + $0x3b8] sm:$0xff]
  %v318 = vld [vmem:[%s1 + $0x3c0] sm:$0xff]
  %v319 = vld [vmem:[%s1 + $0x3c8] sm:$0xff]
  %v320 = vld [vmem:[%s1 + $0x3d0] sm:$0xff]
  %v321 = vld [vmem:[%s1 + $0x3d8] sm:$0xff]
  %v322 = vld [vmem:[%s1 + $0x3e0] sm:$0xff]
  %v323 = vld [vmem:[%s1 + $0x3e8] sm:$0xff]
  %v324 = vld [vmem:[%s1 + $0x3f0] sm:$0xff]
  %v325 = vld [vmem:[%s1 + $0x3f8] sm:$0xff]
  %v326 = vld [vmem:[%s1 + $0x400] sm:$0xff]
  %v327 = vld [vmem:[%s1 + $0x408] sm:$0xff]
  %v328 = vld [vmem:[%s1 + $0x410] sm:$0xff]
  %v329 = vld [vmem:[%s1 + $0x418] sm:$0xff]
  %v330 = vld [vmem:[%s1 + $0x420] sm:$0xff]
  %v331 = vld [vmem:[%s1 + $0x428] sm:$0xff]
  %v332 = vld [vmem:[%s1 + $0x430] sm:$0xff]
  %v333 = vld [vmem:[%s1 + $0x438] sm:$0xff]
  %v334 = vld [vmem:[%s1 + $0x440] sm:$0xff]
  %v335 = vld [vmem:[%s1 + $0x448] sm:$0xff]
  %v336 = vld [vmem:[%s1 + $0x450] sm:$0xff]
  %v337 = vld [vmem:[%s1 + $0x458] sm:$0xff]
  %v338 = vld [vmem:[%s1 + $0x460] sm:$0xff]
  %v339 = vld [vmem:[%s1 + $0x468] sm:$0xff]
  %v340 = vld [vmem:[%s1 + $0x470] sm:$0xff]
  %v341 = vld [vmem:[%s1 + $0x478] sm:$0xff]
  %v342 = vpack.c.bf16 %v199, %v198
  %v343 = vpack.c.bf16 %v201, %v200
  %v344 = vpack.c.bf16 %v203, %v202
  %v345 = vpack.c.bf16 %v205, %v204
  %v346 = vpack.c.bf16 %v207, %v206
  %v347 = vpack.c.bf16 %v209, %v208
  %v348 = vpack.c.bf16 %v211, %v210
  %v349 = vpack.c.bf16 %v213, %v212
  %v350 = vpack.c.bf16 %v215, %v214
  %v351 = vpack.c.bf16 %v217, %v216
  %v352 = vpack.c.bf16 %v219, %v218
  %v353 = vpack.c.bf16 %v221, %v220
  %v354 = vpack.c.bf16 %v223, %v222
  %v355 = vpack.c.bf16 %v225, %v224
  %v356 = vpack.c.bf16 %v227, %v226
  %v357 = vpack.c.bf16 %v229, %v228
  %v358 = vpack.c.bf16 %v231, %v230
  %v359 = vpack.c.bf16 %v233, %v232
  %v360 = vpack.c.bf16 %v235, %v234
  %v361 = vpack.c.bf16 %v237, %v236
  %v362 = vpack.c.bf16 %v239, %v238
  %v363 = vpack.c.bf16 %v241, %v240
  %v364 = vpack.c.bf16 %v243, %v242
  %v365 = vpack.c.bf16 %v245, %v244
  %v366 = vpack.c.bf16 %v247, %v246
  %v367 = vpack.c.bf16 %v249, %v248
  %v368 = vpack.c.bf16 %v251, %v250
  %v369 = vpack.c.bf16 %v253, %v252
  %v370 = vpack.c.bf16 %v255, %v254
  %v371 = vpack.c.bf16 %v257, %v256
  %v372 = vpack.c.bf16 %v259, %v258
  %v373 = vpack.c.bf16 %v261, %v260
  %v374 = vpack.c.bf16 %v263, %v262
  %v375 = vpack.c.bf16 %v265, %v264
  %v376 = vpack.c.bf16 %v267, %v266
  %v377 = vpack.c.bf16 %v269, %v268
  %v378 = vpack.c.bf16 %v271, %v270
  %v379 = vpack.c.bf16 %v273, %v272
  %v380 = vpack.c.bf16 %v275, %v274
  %v381 = vpack.c.bf16 %v277, %v276
  %v382 = vpack.c.bf16 %v279, %v278
  %v383 = vpack.c.bf16 %v281, %v280
  %v384 = vpack.c.bf16 %v283, %v282
  %v385 = vpack.c.bf16 %v285, %v284
  %v386 = vpack.c.bf16 %v287, %v286
  %v387 = vpack.c.bf16 %v289, %v288
  %v388 = vpack.c.bf16 %v291, %v290
  %v389 = vpack.c.bf16 %v293, %v292
  %v390 = vpack.c.bf16 %v295, %v294
  %v391 = vpack.c.bf16 %v297, %v296
  %v392 = vpack.c.bf16 %v299, %v298
  %v393 = vpack.c.bf16 %v301, %v300
  %v394 = vpack.c.bf16 %v303, %v302
  %v395 = vpack.c.bf16 %v305, %v304
  %v396 = vpack.c.bf16 %v307, %v306
  %v397 = vpack.c.bf16 %v309, %v308
  %v398 = vpack.c.bf16 %v311, %v310
  %v399 = vpack.c.bf16 %v313, %v312
  %v400 = vpack.c.bf16 %v315, %v314
  %v401 = vpack.c.bf16 %v317, %v316
  %v402 = vpack.c.bf16 %v319, %v318
  %v403 = vpack.c.bf16 %v321, %v320
  %v404 = vpack.c.bf16 %v323, %v322
  %v405 = vpack.c.bf16 %v325, %v324
  %v406 = vpack.c.bf16 %v327, %v326
  %v407 = vpack.c.bf16 %v329, %v328
  %v408 = vpack.c.bf16 %v331, %v330
  %v409 = vpack.c.bf16 %v333, %v332
  %v410 = vpack.c.bf16 %v335, %v334
  %v411 = vpack.c.bf16 %v337, %v336
  %v412 = vpack.c.bf16 %v339, %v338
  %v413 = vpack.c.bf16 %v341, %v340
  %414 = vmatprep.subr.bf16.mxu0 0
  %415 = vmatpush1.bf16.msra.mxu0 %v342
  %416 = vmatprep.subr.bf16.mxu0 0
  %417 = vmatpush1.bf16.msra.mxu0 %v343
  %418 = vmatprep.subr.bf16.mxu0 0
  %419 = vmatpush1.bf16.msra.mxu0 %v344
  %420 = vmatprep.subr.bf16.mxu0 0
  %421 = vmatpush1.bf16.msra.mxu0 %v345
  %422 = vmatprep.subr.bf16.mxu0 0
  %423 = vmatpush1.bf16.msra.mxu0 %v346
  %424 = vmatprep.subr.bf16.mxu0 0
  %425 = vmatpush1.bf16.msra.mxu0 %v347
  %426 = vmatprep.subr.bf16.mxu0 0
  %427 = vmatpush1.bf16.msra.mxu0 %v348
  %428 = vmatprep.subr.bf16.mxu0 0
  %429 = vmatpush1.bf16.msra.mxu0 %v349
  %430 = vmatprep.subr.bf16.mxu0 0
  %431 = vmatpush1.bf16.msra.mxu0 %v350
  %432 = vmatprep.subr.bf16.mxu0 0
  %433 = vmatpush1.bf16.msra.mxu0 %v351
  %434 = vmatprep.subr.bf16.mxu0 0
  %435 = vmatpush1.bf16.msra.mxu0 %v352
  %436 = vmatprep.subr.bf16.mxu0 0
  %437 = vmatpush1.bf16.msra.mxu0 %v353
  %438 = vmatprep.subr.bf16.mxu0 0
  %439 = vmatpush1.bf16.msra.mxu0 %v354
  %440 = vmatprep.subr.bf16.mxu0 0
  %441 = vmatpush1.bf16.msra.mxu0 %v355
  %442 = vmatprep.subr.bf16.mxu0 0
  %443 = vmatpush1.bf16.msra.mxu0 %v356
  %444 = vmatprep.subr.bf16.mxu0 0
  %445 = vmatpush1.bf16.msra.mxu0 %v357
  %446 = vmatprep.mubr.bf16.mxu0 %v136
  %447 = vmatmul.mubr.bf16.gmra.mrb[0].mxu0 %v135
  %v448 = vpop.f32.mrb[0].mxu0
  %v449 = vadd.f32 0.0, %v448
  %v450 = vpop.f32.mrb[0].mxu0
  %v451 = vpop.f32.mrb[0].mxu0
  %v452 = vadd.f32 0.0, %v451
  %v453 = vpop.f32.mrb[0].mxu0
  %454 = vmatprep.mubr.bf16.mxu0 %v145
  %455 = vmatmul.mubr.bf16.gmra.mrb[0].mxu0 %v144
  %v456 = vpop.f32.mrb[0].mxu0
  %v457 = vadd.f32 0.0, %v456
  %v458 = vpop.f32.mrb[0].mxu0
  %v459 = vpop.f32.mrb[0].mxu0
  %v460 = vadd.f32 0.0, %v459
  %v461 = vpop.f32.mrb[0].mxu0
  %462 = vmatprep.mubr.bf16.mxu0 %v154
  %463 = vmatmul.mubr.bf16.gmra.mrb[0].mxu0 %v153
  %v464 = vpop.f32.mrb[0].mxu0
  %v465 = vadd.f32 0.0, %v464
  %v466 = vpop.f32.mrb[0].mxu0
  %v467 = vpop.f32.mrb[0].mxu0
  %v468 = vadd.f32 0.0, %v467
  %v469 = vpop.f32.mrb[0].mxu0
  %470 = vmatprep.mubr.bf16.mxu0 %v163
  %471 = vmatmul.mubr.bf16.gmra.mrb[0].mxu0 %v162
  %v472 = vpop.f32.mrb[0].mxu0
  %v473 = vadd.f32 0.0, %v472
  %v474 = vpop.f32.mrb[0].mxu0
  %v475 = vpop.f32.mrb[0].mxu0
  %v476 = vadd.f32 0.0, %v475
  %v477 = vpop.f32.mrb[0].mxu0
  %478 = vmatprep.mubr.bf16.mxu0 %v172
  %479 = vmatmul.mubr.bf16.gmra.mrb[0].mxu0 %v171
  %v480 = vpop.f32.mrb[0].mxu0
  %v481 = vadd.f32 0.0, %v480
  %v482 = vpop.f32.mrb[0].mxu0
  %v483 = vpop.f32.mrb[0].mxu0
  %v484 = vadd.f32 0.0, %v483
  %v485 = vpop.f32.mrb[0].mxu0
  %486 = vmatprep.mubr.bf16.mxu0 %v181
  %487 = vmatmul.mubr.bf16.gmra.mrb[0].mxu0 %v180
  %v488 = vpop.f32.mrb[0].mxu0
  %v489 = vadd.f32 0.0, %v488
  %v490 = vpop.f32.mrb[0].mxu0
  %v491 = vpop.f32.mrb[0].mxu0
  %v492 = vadd.f32 0.0, %v491
  %v493 = vpop.f32.mrb[0].mxu0
  %494 = vmatprep.mubr.bf16.mxu0 %v190
  %495 = vmatmul.mubr.bf16.gmra.mrb[0].mxu0 %v189
  %v496 = vpop.f32.mrb[0].mxu0
  %v497 = vadd.f32 0.0, %v496
  %v498 = vpop.f32.mrb[0].mxu0
  %v499 = vpop.f32.mrb[0].mxu0
  %v500 = vpop.f32.mrb[0].mxu0
  %501 = vdwg.mxu0
  %502 = vmatprep.subr.bf16.mxu0 0
  %503 = vmatpush1.bf16.msra.mxu0 %v358
  %504 = vmatprep.subr.bf16.mxu0 0
  %505 = vmatpush1.bf16.msra.mxu0 %v359
  %506 = vmatprep.subr.bf16.mxu0 0
  %507 = vmatpush1.bf16.msra.mxu0 %v360
  %508 = vmatprep.subr.bf16.mxu0 0
  %509 = vmatpush1.bf16.msra.mxu0 %v361
  %510 = vmatprep.subr.bf16.mxu0 0
  %511 = vmatpush1.bf16.msra.mxu0 %v362
  %512 = vmatprep.subr.bf16.mxu0 0
  %513 = vmatpush1.bf16.msra.mxu0 %v363
  %514 = vmatprep.subr.bf16.mxu0 0
  %515 = vmatpush1.bf16.msra.mxu0 %v364
  %516 = vmatprep.subr.bf16.mxu0 0
  %517 = vmatpush1.bf16.msra.mxu0 %v365
  %518 = vmatprep.subr.bf16.mxu0 0
  %519 = vmatpush1.bf16.msra.mxu0 %v366
  %520 = vmatprep.subr.bf16.mxu0 0
  %521 = vmatpush1.bf16.msra.mxu0 %v367
  %522 = vmatprep.subr.bf16.mxu0 0
  %523 = vmatpush1.bf16.msra.mxu0 %v368
  %524 = vmatprep.subr.bf16.mxu0 0
  %525 = vmatpush1.bf16.msra.mxu0 %v369
  %526 = vmatprep.subr.bf16.mxu0 0
  %527 = vmatpush1.bf16.msra.mxu0 %v370
  %528 = vmatprep.subr.bf16.mxu0 0
  %529 = vmatpush1.bf16.msra.mxu0 %v371
  %530 = vmatprep.subr.bf16.mxu0 0
  %531 = vmatpush1.bf16.msra.mxu0 %v372
  %532 = vmatprep.subr.bf16.mxu0 0
  %533 = vmatpush1.bf16.msra.mxu0 %v373
  %534 = vmatprep.mubr.bf16.mxu0 %v138
  %535 = vmatmul.mubr.bf16.gmra.mrb[0].mxu0 %v137
  %v536 = vpop.f32.mrb[0].mxu0
  %v537 = vadd.f32 %v449, %v536
  %v538 = vpop.f32.mrb[0].mxu0
  %v539 = vpop.f32.mrb[0].mxu0
  %v540 = vadd.f32 %v452, %v539
  %v541 = vpop.f32.mrb[0].mxu0
  %542 = vmatprep.mubr.bf16.mxu0 %v147
  %543 = vmatmul.mubr.bf16.gmra.mrb[0].mxu0 %v146
  %v544 = vpop.f32.mrb[0].mxu0
  %v545 = vadd.f32 %v457, %v544
  %v546 = vpop.f32.mrb[0].mxu0
  %v547 = vpop.f32.mrb[0].mxu0
  %v548 = vadd.f32 %v460, %v547
  %v549 = vpop.f32.mrb[0].mxu0
  %550 = vmatprep.mubr.bf16.mxu0 %v156
  %551 = vmatmul.mubr.bf16.gmra.mrb[0].mxu0 %v155
  %v552 = vpop.f32.mrb[0].mxu0
  %v553 = vadd.f32 %v465, %v552
  %v554 = vpop.f32.mrb[0].mxu0
  %v555 = vpop.f32.mrb[0].mxu0
  %v556 = vadd.f32 %v468, %v555
  %v557 = vpop.f32.mrb[0].mxu0
  %558 = vmatprep.mubr.bf16.mxu0 %v165
  %559 = vmatmul.mubr.bf16.gmra.mrb[0].mxu0 %v164
  %v560 = vpop.f32.mrb[0].mxu0
  %v561 = vadd.f32 %v473, %v560
  %v562 = vpop.f32.mrb[0].mxu0
  %v563 = vpop.f32.mrb[0].mxu0
  %v564 = vadd.f32 %v476, %v563
  %v565 = vpop.f32.mrb[0].mxu0
  %566 = vmatprep.mubr.bf16.mxu0 %v174
  %567 = vmatmul.mubr.bf16.gmra.mrb[0].mxu0 %v173
  %v568 = vpop.f32.mrb[0].mxu0
  %v569 = vadd.f32 %v481, %v568
  %v570 = vpop.f32.mrb[0].mxu0
  %v571 = vpop.f32.mrb[0].mxu0
  %v572 = vadd.f32 %v484, %v571
  %v573 = vpop.f32.mrb[0].mxu0
  %574 = vmatprep.mubr.bf16.mxu0 %v183
  %575 = vmatmul.mubr.bf16.gmra.mrb[0].mxu0 %v182
  %v576 = vpop.f32.mrb[0].mxu0
  %v577 = vadd.f32 %v489, %v576
  %v578 = vpop.f32.mrb[0].mxu0
  %v579 = vpop.f32.mrb[0].mxu0
  %v580 = vadd.f32 %v492, %v579
  %v581 = vpop.f32.mrb[0].mxu0
  %582 = vmatprep.mubr.bf16.mxu0 %v192
  %583 = vmatmul.mubr.bf16.gmra.mrb[0].mxu0 %v191
  %v584 = vpop.f32.mrb[0].mxu0
  %v585 = vadd.f32 %v497, %v584
  %v586 = vpop.f32.mrb[0].mxu0
  %v587 = vpop.f32.mrb[0].mxu0
  %v588 = vpop.f32.mrb[0].mxu0
  %589 = vdwg.mxu0
  %590 = vmatprep.subr.bf16.mxu0 0
  %591 = vmatpush1.bf16.msra.mxu0 %v374
  %592 = vmatprep.subr.bf16.mxu0 0
  %593 = vmatpush1.bf16.msra.mxu0 %v375
  %594 = vmatprep.subr.bf16.mxu0 0
  %595 = vmatpush1.bf16.msra.mxu0 %v376
  %596 = vmatprep.subr.bf16.mxu0 0
  %597 = vmatpush1.bf16.msra.mxu0 %v377
  %598 = vmatprep.subr.bf16.mxu0 0
  %599 = vmatpush1.bf16.msra.mxu0 %v378
  %600 = vmatprep.subr.bf16.mxu0 0
  %601 = vmatpush1.bf16.msra.mxu0 %v379
  %602 = vmatprep.subr.bf16.mxu0 0
  %603 = vmatpush1.bf16.msra.mxu0 %v380
  %604 = vmatprep.subr.bf16.mxu0 0
  %605 = vmatpush1.bf16.msra.mxu0 %v381
  %606 = vmatprep.subr.bf16.mxu0 0
  %607 = vmatpush1.bf16.msra.mxu0 %v382
  %608 = vmatprep.subr.bf16.mxu0 0
  %609 = vmatpush1.bf16.msra.mxu0 %v383
  %610 = vmatprep.subr.bf16.mxu0 0
  %611 = vmatpush1.bf16.msra.mxu0 %v384
  %612 = vmatprep.subr.bf16.mxu0 0
  %613 = vmatpush1.bf16.msra.mxu0 %v385
  %614 = vmatprep.subr.bf16.mxu0 0
  %615 = vmatpush1.bf16.msra.mxu0 %v386
  %616 = vmatprep.subr.bf16.mxu0 0
  %617 = vmatpush1.bf16.msra.mxu0 %v387
  %618 = vmatprep.subr.bf16.mxu0 0
  %619 = vmatpush1.bf16.msra.mxu0 %v388
  %620 = vmatprep.subr.bf16.mxu0 0
  %621 = vmatpush1.bf16.msra.mxu0 %v389
  %622 = vmatprep.mubr.bf16.mxu0 %v140
  %623 = vmatmul.mubr.bf16.gmra.mrb[0].mxu0 %v139
  %v624 = vpop.f32.mrb[0].mxu0
  %v625 = vadd.f32 %v537, %v624
  %v626 = vpop.f32.mrb[0].mxu0
  %v627 = vpop.f32.mrb[0].mxu0
  %v628 = vadd.f32 %v540, %v627
  %v629 = vpop.f32.mrb[0].mxu0
  %630 = vmatprep.mubr.bf16.mxu0 %v149
  %631 = vmatmul.mubr.bf16.gmra.mrb[0].mxu0 %v148
  %v632 = vpop.f32.mrb[0].mxu0
  %v633 = vadd.f32 %v545, %v632
  %v634 = vpop.f32.mrb[0].mxu0
  %v635 = vpop.f32.mrb[0].mxu0
  %v636 = vadd.f32 %v548, %v635
  %v637 = vpop.f32.mrb[0].mxu0
  %638 = vmatprep.mubr.bf16.mxu0 %v158
  %639 = vmatmul.mubr.bf16.gmra.mrb[0].mxu0 %v157
  %v640 = vpop.f32.mrb[0].mxu0
  %v641 = vadd.f32 %v553, %v640
  %v642 = vpop.f32.mrb[0].mxu0
  %v643 = vpop.f32.mrb[0].mxu0
  %v644 = vadd.f32 %v556, %v643
  %v645 = vpop.f32.mrb[0].mxu0
  %646 = vmatprep.mubr.bf16.mxu0 %v167
  %647 = vmatmul.mubr.bf16.gmra.mrb[0].mxu0 %v166
  %v648 = vpop.f32.mrb[0].mxu0
  %v649 = vadd.f32 %v561, %v648
  %v650 = vpop.f32.mrb[0].mxu0
  %v651 = vpop.f32.mrb[0].mxu0
  %v652 = vadd.f32 %v564, %v651
  %v653 = vpop.f32.mrb[0].mxu0
  %654 = vmatprep.mubr.bf16.mxu0 %v176
  %655 = vmatmul.mubr.bf16.gmra.mrb[0].mxu0 %v175
  %v656 = vpop.f32.mrb[0].mxu0
  %v657 = vadd.f32 %v569, %v656
  %v658 = vpop.f32.mrb[0].mxu0
  %v659 = vpop.f32.mrb[0].mxu0
  %v660 = vadd.f32 %v572, %v659
  %v661 = vpop.f32.mrb[0].mxu0
  %662 = vmatprep.mubr.bf16.mxu0 %v185
  %663 = vmatmul.mubr.bf16.gmra.mrb[0].mxu0 %v184
  %v664 = vpop.f32.mrb[0].mxu0
  %v665 = vadd.f32 %v577, %v664
  %v666 = vpop.f32.mrb[0].mxu0
  %v667 = vpop.f32.mrb[0].mxu0
  %v668 = vadd.f32 %v580, %v667
  %v669 = vpop.f32.mrb[0].mxu0
  %670 = vmatprep.mubr.bf16.mxu0 %v194
  %671 = vmatmul.mubr.bf16.gmra.mrb[0].mxu0 %v193
  %v672 = vpop.f32.mrb[0].mxu0
  %v673 = vadd.f32 %v585, %v672
  %v674 = vpop.f32.mrb[0].mxu0
  %v675 = vpop.f32.mrb[0].mxu0
  %v676 = vpop.f32.mrb[0].mxu0
  %677 = vdwg.mxu0
  %678 = vmatprep.subr.bf16.mxu0 0
  %679 = vmatpush1.bf16.msra.mxu0 %v390
  %680 = vmatprep.subr.bf16.mxu0 0
  %681 = vmatpush1.bf16.msra.mxu0 %v391
  %682 = vmatprep.subr.bf16.mxu0 0
  %683 = vmatpush1.bf16.msra.mxu0 %v392
  %684 = vmatprep.subr.bf16.mxu0 0
  %685 = vmatpush1.bf16.msra.mxu0 %v393
  %686 = vmatprep.subr.bf16.mxu0 0
  %687 = vmatpush1.bf16.msra.mxu0 %v394
  %688 = vmatprep.subr.bf16.mxu0 0
  %689 = vmatpush1.bf16.msra.mxu0 %v395
  %690 = vmatprep.subr.bf16.mxu0 0
  %691 = vmatpush1.bf16.msra.mxu0 %v396
  %692 = vmatprep.subr.bf16.mxu0 0
  %693 = vmatpush1.bf16.msra.mxu0 %v397
  %694 = vmatprep.subr.bf16.mxu0 0
  %695 = vmatpush1.bf16.msra.mxu0 %v398
  %696 = vmatprep.subr.bf16.mxu0 0
  %697 = vmatpush1.bf16.msra.mxu0 %v399
  %698 = vmatprep.subr.bf16.mxu0 0
  %699 = vmatpush1.bf16.msra.mxu0 %v400
  %700 = vmatprep.subr.bf16.mxu0 0
  %701 = vmatpush1.bf16.msra.mxu0 %v401
  %702 = vmatprep.subr.bf16.mxu0 0
  %703 = vmatpush1.bf16.msra.mxu0 %v402
  %704 = vmatprep.subr.bf16.mxu0 0
  %705 = vmatpush1.bf16.msra.mxu0 %v403
  %706 = vmatprep.subr.bf16.mxu0 0
  %707 = vmatpush1.bf16.msra.mxu0 %v404
  %708 = vmatprep.subr.bf16.mxu0 0
  %709 = vmatpush1.bf16.msra.mxu0 %v405
  %710 = vmatprep.mubr.bf16.mxu0 %v142
  %711 = vmatmul.mubr.bf16.gmra.mrb[0].mxu0 %v141
  %v712 = vpop.f32.mrb[0].mxu0
  %v713 = vadd.f32 %v625, %v712
  %v714 = vpop.f32.mrb[0].mxu0
  %v715 = vpop.f32.mrb[0].mxu0
  %v716 = vadd.f32 %v628, %v715
  %v717 = vpop.f32.mrb[0].mxu0
  %718 = vmatprep.mubr.bf16.mxu0 %v151
  %719 = vmatmul.mubr.bf16.gmra.mrb[0].mxu0 %v150
  %v720 = vpop.f32.mrb[0].mxu0
  %v721 = vadd.f32 %v633, %v720
  %v722 = vpop.f32.mrb[0].mxu0
  %v723 = vpop.f32.mrb[0].mxu0
  %v724 = vadd.f32 %v636, %v723
  %v725 = vpop.f32.mrb[0].mxu0
  %726 = vmatprep.mubr.bf16.mxu0 %v160
  %727 = vmatmul.mubr.bf16.gmra.mrb[0].mxu0 %v159
  %v728 = vpop.f32.mrb[0].mxu0
  %v729 = vadd.f32 %v641, %v728
  %v730 = vpop.f32.mrb[0].mxu0
  %v731 = vpop.f32.mrb[0].mxu0
  %v732 = vadd.f32 %v644, %v731
  %v733 = vpop.f32.mrb[0].mxu0
  %734 = vmatprep.mubr.bf16.mxu0 %v169
  %735 = vmatmul.mubr.bf16.gmra.mrb[0].mxu0 %v168
  %v736 = vpop.f32.mrb[0].mxu0
  %v737 = vadd.f32 %v649, %v736
  %v738 = vpop.f32.mrb[0].mxu0
  %v739 = vpop.f32.mrb[0].mxu0
  %v740 = vadd.f32 %v652, %v739
  %v741 = vpop.f32.mrb[0].mxu0
  %742 = vmatprep.mubr.bf16.mxu0 %v178
  %743 = vmatmul.mubr.bf16.gmra.mrb[0].mxu0 %v177
  %v744 = vpop.f32.mrb[0].mxu0
  %v745 = vadd.f32 %v657, %v744
  %v746 = vpop.f32.mrb[0].mxu0
  %v747 = vpop.f32.mrb[0].mxu0
  %v748 = vadd.f32 %v660, %v747
  %v749 = vpop.f32.mrb[0].mxu0
  %750 = vmatprep.mubr.bf16.mxu0 %v187
  %751 = vmatmul.mubr.bf16.gmra.mrb[0].mxu0 %v186
  %v752 = vpop.f32.mrb[0].mxu0
  %v753 = vadd.f32 %v665, %v752
  %v754 = vpop.f32.mrb[0].mxu0
  %v755 = vpop.f32.mrb[0].mxu0
  %v756 = vadd.f32 %v668, %v755
  %v757 = vpop.f32.mrb[0].mxu0
  %758 = vmatprep.mubr.bf16.mxu0 %v196
  %759 = vmatmul.mubr.bf16.gmra.mrb[0].mxu0 %v195
  %v760 = vpop.f32.mrb[0].mxu0
  %v761 = vadd.f32 %v673, %v760
  %v762 = vpop.f32.mrb[0].mxu0
  %v763 = vpop.f32.mrb[0].mxu0
  %v764 = vpop.f32.mrb[0].mxu0
  %765 = vdwg.mxu0
  %766 = vmatprep.subr.bf16.mxu0 0
  %767 = vmatpush1.bf16.msra.mxu0 %v406
  %768 = vmatprep.subr.bf16.mxu0 0
  %769 = vmatpush1.bf16.msra.mxu0 %v407
  %770 = vmatprep.subr.bf16.mxu0 0
  %771 = vmatpush1.bf16.msra.mxu0 %v408
  %772 = vmatprep.subr.bf16.mxu0 0
  %773 = vmatpush1.bf16.msra.mxu0 %v409
  %774 = vmatprep.subr.bf16.mxu0 0
  %775 = vmatpush1.bf16.msra.mxu0 %v410
  %776 = vmatprep.subr.bf16.mxu0 0
  %777 = vmatpush1.bf16.msra.mxu0 %v411
  %778 = vmatprep.subr.bf16.mxu0 0
  %779 = vmatpush1.bf16.msra.mxu0 %v412
  %780 = vmatprep.subr.bf16.mxu0 0
  %781 = vmatpush1.bf16.msra.mxu0 %v413
  %782 = vmatprep.subr.bf16.mxu0 0
  %783 = vmatpush1.bf16.msra.mxu0 0
  %784 = vmatprep.subr.bf16.mxu0 0
  %785 = vmatpush1.bf16.msra.mxu0 0
  %786 = vmatprep.subr.bf16.mxu0 0
  %787 = vmatpush1.bf16.msra.mxu0 0
  %788 = vmatprep.subr.bf16.mxu0 0
  %789 = vmatpush1.bf16.msra.mxu0 0
  %790 = vmatprep.subr.bf16.mxu0 0
  %791 = vmatpush1.bf16.msra.mxu0 0
  %792 = vmatprep.subr.bf16.mxu0 0
  %793 = vmatpush1.bf16.msra.mxu0 0
  %794 = vmatprep.subr.bf16.mxu0 0
  %795 = vmatpush1.bf16.msra.mxu0 0
  %796 = vmatprep.subr.bf16.mxu0 0
  %797 = vmatpush1.bf16.msra.mxu0 0
  %798 = vmatprep.mubr.bf16.mxu0 0
  %799 = vmatmul.mubr.bf16.gmra.mrb[0].mxu0 %v143
  %v800 = vpop.f32.mrb[0].mxu0
  %v801 = vadd.f32 %v713, %v800
  %v802 = vpop.f32.mrb[0].mxu0
  %v803 = vpop.f32.mrb[0].mxu0
  %v804 = vadd.f32 %v716, %v803
  %v805 = vpop.f32.mrb[0].mxu0
  %806 = vmatprep.mubr.bf16.mxu0 0
  %807 = vmatmul.mubr.bf16.gmra.mrb[0].mxu0 %v152
  %v808 = vpop.f32.mrb[0].mxu0
  %v809 = vadd.f32 %v721, %v808
  %v810 = vpop.f32.mrb[0].mxu0
  %v811 = vpop.f32.mrb[0].mxu0
  %v812 = vadd.f32 %v724, %v811
  %v813 = vpop.f32.mrb[0].mxu0
  %814 = vmatprep.mubr.bf16.mxu0 0
  %815 = vmatmul.mubr.bf16.gmra.mrb[0].mxu0 %v161
  %v816 = vpop.f32.mrb[0].mxu0
  %v817 = vadd.f32 %v729, %v816
  %v818 = vpop.f32.mrb[0].mxu0
  %v819 = vpop.f32.mrb[0].mxu0
  %v820 = vadd.f32 %v732, %v819
  %v821 = vpop.f32.mrb[0].mxu0
  %822 = vmatprep.mubr.bf16.mxu0 0
  %823 = vmatmul.mubr.bf16.gmra.mrb[0].mxu0 %v170
  %v824 = vpop.f32.mrb[0].mxu0
  %v825 = vadd.f32 %v737, %v824
  %v826 = vpop.f32.mrb[0].mxu0
  %v827 = vpop.f32.mrb[0].mxu0
  %v828 = vadd.f32 %v740, %v827
  %v829 = vpop.f32.mrb[0].mxu0
  %830 = vmatprep.mubr.bf16.mxu0 0
  %831 = vmatmul.mubr.bf16.gmra.mrb[0].mxu0 %v179
  %v832 = vpop.f32.mrb[0].mxu0
  %v833 = vadd.f32 %v745, %v832
  %v834 = vpop.f32.mrb[0].mxu0
  %v835 = vpop.f32.mrb[0].mxu0
  %v836 = vadd.f32 %v748, %v835
  %v837 = vpop.f32.mrb[0].mxu0
  %838 = vmatprep.mubr.bf16.mxu0 0
  %839 = vmatmul.mubr.bf16.gmra.mrb[0].mxu0 %v188
  %v840 = vpop.f32.mrb[0].mxu0
  %v841 = vadd.f32 %v753, %v840
  %v842 = vpop.f32.mrb[0].mxu0
  %v843 = vpop.f32.mrb[0].mxu0
  %v844 = vadd.f32 %v756, %v843
  %v845 = vpop.f32.mrb[0].mxu0
  %846 = vmatprep.mubr.bf16.mxu0 0
  %847 = vmatmul.mubr.bf16.gmra.mrb[0].mxu0 %v197
  %v848 = vpop.f32.mrb[0].mxu0
  %v849 = vadd.f32 %v761, %v848
  %v850 = vpop.f32.mrb[0].mxu0
  %v851 = vpop.f32.mrb[0].mxu0
  %v852 = vpop.f32.mrb[0].mxu0
  %853 = vdwg.mxu0
  %vm854 = vcmask 523264
  %v855 = vsel %vm854, %v801, 0.0
  %v856 = vsel %vm854, %v804, 0.0
  %v857 = vadd.f32 %v855, %v856
  %v858 = vsel %vm854, %v809, 0.0
  %v859 = vadd.f32 %v857, %v858
  %v860 = vsel %vm854, %v812, 0.0
  %v861 = vadd.f32 %v859, %v860
  %v862 = vsel %vm854, %v817, 0.0
  %v863 = vadd.f32 %v861, %v862
  %v864 = vsel %vm854, %v820, 0.0
  %v865 = vadd.f32 %v863, %v864
  %v866 = vsel %vm854, %v825, 0.0
  %v867 = vadd.f32 %v865, %v866
  %v868 = vsel %vm854, %v828, 0.0
  %v869 = vadd.f32 %v867, %v868
  %v870 = vsel %vm854, %v833, 0.0
  %v871 = vadd.f32 %v869, %v870
  %v872 = vsel %vm854, %v836, 0.0
  %v873 = vadd.f32 %v871, %v872
  %v874 = vsel %vm854, %v841, 0.0
  %v875 = vadd.f32 %v873, %v874
  %v876 = vsel %vm854, %v844, 0.0
  %v877 = vadd.f32 %v875, %v876
  %vm878 = vcmask 517120
  %v879 = vsel %vm878, %v849, 0.0
  %v880 = vadd.f32 %v877, %v879
  %v881 = vrot.slane %v880, 4
  %v882 = vadd.f32 %v880, %v881
  %v883 = vrot.slane %v882, 2
  %v884 = vadd.f32 %v882, %v883
  %v885 = vrot.slane %v884, 1
  %v886 = vadd.f32 %v884, %v885
  %v887 = vmul.f32 %v886, 0.010204081
  %v888 = vsub.f32 %v801, %v887
  %v889 = vsub.f32 %v804, %v887
  %v890 = vsub.f32 %v809, %v887
  %v891 = vsub.f32 %v812, %v887
  %v892 = vsub.f32 %v817, %v887
  %v893 = vsub.f32 %v820, %v887
  %v894 = vsub.f32 %v825, %v887
  %v895 = vsub.f32 %v828, %v887
  %v896 = vsub.f32 %v833, %v887
  %v897 = vsub.f32 %v836, %v887
  %v898 = vsub.f32 %v841, %v887
  %v899 = vsub.f32 %v844, %v887
  %v900 = vsub.f32 %v849, %v887
  %v901 = vmul.f32 %v888, %v888
  %v902 = vmul.f32 %v889, %v889
  %v903 = vmul.f32 %v890, %v890
  %v904 = vmul.f32 %v891, %v891
  %v905 = vmul.f32 %v892, %v892
  %v906 = vmul.f32 %v893, %v893
  %v907 = vmul.f32 %v894, %v894
  %v908 = vmul.f32 %v895, %v895
  %v909 = vmul.f32 %v896, %v896
  %v910 = vmul.f32 %v897, %v897
  %v911 = vmul.f32 %v898, %v898
  %v912 = vmul.f32 %v899, %v899
  %v913 = vmul.f32 %v900, %v900
  %v914 = vsel %vm854, %v901, 0.0
  %v915 = vsel %vm854, %v902, 0.0
  %v916 = vadd.f32 %v914, %v915
  %v917 = vsel %vm854, %v903, 0.0
  %v918 = vadd.f32 %v916, %v917
  %v919 = vsel %vm854, %v904, 0.0
  %v920 = vadd.f32 %v918, %v919
  %v921 = vsel %vm854, %v905, 0.0
  %v922 = vadd.f32 %v920, %v921
  %v923 = vsel %vm854, %v906, 0.0
  %v924 = vadd.f32 %v922, %v923
  %v925 = vsel %vm854, %v907, 0.0
  %v926 = vadd.f32 %v924, %v925
  %v927 = vsel %vm854, %v908, 0.0
  %v928 = vadd.f32 %v926, %v927
  %v929 = vsel %vm854, %v909, 0.0
  %v930 = vadd.f32 %v928, %v929
  %v931 = vsel %vm854, %v910, 0.0
  %v932 = vadd.f32 %v930, %v931
  %v933 = vsel %vm854, %v911, 0.0
  %v934 = vadd.f32 %v932, %v933
  %v935 = vsel %vm854, %v912, 0.0
  %v936 = vadd.f32 %v934, %v935
  %v937 = vsel %vm878, %v913, 0.0
  %v938 = vadd.f32 %v936, %v937
  %v939 = vrot.slane %v938, 4
  %v940 = vadd.f32 %v938, %v939
  %v941 = vrot.slane %v940, 2
  %v942 = vadd.f32 %v940, %v941
  %v943 = vrot.slane %v942, 1
  %v944 = vadd.f32 %v942, %v943
  %v945 = vmul.f32 %v944, 0.010204081
  %v946 = vadd.f32 %v945, 1e-05
  %v947 = vrsqrt.pop %v946
  %v948 = vmul.f32 %v888, %v947
  %v949 = vmul.f32 %v889, %v947
  %v950 = vmul.f32 %v890, %v947
  %v951 = vmul.f32 %v891, %v947
  %v952 = vmul.f32 %v892, %v947
  %v953 = vmul.f32 %v893, %v947
  %v954 = vmul.f32 %v894, %v947
  %v955 = vmul.f32 %v895, %v947
  %v956 = vmul.f32 %v896, %v947
  %v957 = vmul.f32 %v897, %v947
  %v958 = vmul.f32 %v898, %v947
  %v959 = vmul.f32 %v899, %v947
  %v960 = vmul.f32 %v900, %v947
  %v961 = vld [vmem:[%s2] sm:$0x1]
  %v963 = vlaneseq
  %v964 = vshrl.u32 %v963, 7
  %v965 = vsub.s32 0, %v964
  %v966 = vrot.slane %v961, %v965
  %v968 = vmul.f32 %v948, %v966
  %v969 = vmul.f32 %v949, %v966
  %v970 = vmul.f32 %v950, %v966
  %v971 = vmul.f32 %v951, %v966
  %v972 = vmul.f32 %v952, %v966
  %v973 = vmul.f32 %v953, %v966
  %v974 = vmul.f32 %v954, %v966
  %v975 = vmul.f32 %v955, %v966
  %v976 = vmul.f32 %v956, %v966
  %v977 = vmul.f32 %v957, %v966
  %v978 = vmul.f32 %v958, %v966
  %v979 = vmul.f32 %v959, %v966
  %v980 = vmul.f32 %v960, %v966
  %v981 = vld [vmem:[%s3] sm:$0x1]
  %v983 = vlaneseq
  %v984 = vshrl.u32 %v983, 7
  %v985 = vsub.s32 0, %v984
  %v986 = vrot.slane %v981, %v985
  %v988 = vadd.f32 %v968, %v986
  %v989 = vadd.f32 %v969, %v986
  %v990 = vadd.f32 %v970, %v986
  %v991 = vadd.f32 %v971, %v986
  %v992 = vadd.f32 %v972, %v986
  %v993 = vadd.f32 %v973, %v986
  %v994 = vadd.f32 %v974, %v986
  %v995 = vadd.f32 %v975, %v986
  %v996 = vadd.f32 %v976, %v986
  %v997 = vadd.f32 %v977, %v986
  %v998 = vadd.f32 %v978, %v986
  %v999 = vadd.f32 %v979, %v986
  %v1000 = vadd.f32 %v980, %v986
  %v1001 = vmax.f32 %v988, 0.0
  %v1002 = vmax.f32 %v989, 0.0
  %v1003 = vmax.f32 %v990, 0.0
  %v1004 = vmax.f32 %v991, 0.0
  %v1005 = vmax.f32 %v992, 0.0
  %v1006 = vmax.f32 %v993, 0.0
  %v1007 = vmax.f32 %v994, 0.0
  %v1008 = vmax.f32 %v995, 0.0
  %v1009 = vmax.f32 %v996, 0.0
  %v1010 = vmax.f32 %v997, 0.0
  %v1011 = vmax.f32 %v998, 0.0
  %v1012 = vmax.f32 %v999, 0.0
  %v1013 = vmax.f32 %v1000, 0.0
  %1014 = vst.msk [vmem:[%s4] sm:$0xff] %vm854, %v1001
  %1015 = vst.msk [vmem:[%s4 + $0x8] sm:$0xff] %vm854, %v1002
  %1016 = vst.msk [vmem:[%s4 + $0x10] sm:$0xff] %vm854, %v1003
  %1017 = vst.msk [vmem:[%s4 + $0x18] sm:$0xff] %vm854, %v1004
  %1018 = vst.msk [vmem:[%s4 + $0x20] sm:$0xff] %vm854, %v1005
  %1019 = vst.msk [vmem:[%s4 + $0x28] sm:$0xff] %vm854, %v1006
  %1020 = vst.msk [vmem:[%s4 + $0x30] sm:$0xff] %vm854, %v1007
  %1021 = vst.msk [vmem:[%s4 + $0x38] sm:$0xff] %vm854, %v1008
  %1022 = vst.msk [vmem:[%s4 + $0x40] sm:$0xff] %vm854, %v1009
  %1023 = vst.msk [vmem:[%s4 + $0x48] sm:$0xff] %vm854, %v1010
  %1024 = vst.msk [vmem:[%s4 + $0x50] sm:$0xff] %vm854, %v1011
  %1025 = vst.msk [vmem:[%s4 + $0x58] sm:$0xff] %vm854, %v1012
  %1026 = vst.msk [vmem:[%s4 + $0x60] sm:$0x3] %vm878, %v1013
  // Predicated region
  $region18: #{cae_forward.11} parent=0 // pred_check
    _
  $region19: #{cae_forward.11} parent=0 // pred_check_branch
    %1028 = sbr.rel (0) target = $region21
  $region20: #{cae_forward.11} parent=0 // pred_region
    _
  $region21: #{cae_forward.11} parent=0 // pred_fallthru
    _
  // Predicated region
  $region22: #{cae_forward.11} parent=0 // pred_check
    _
  $region23: #{cae_forward.11} parent=0 // pred_check_branch
    %1030 = sbr.rel (0) target = $region25
  $region24: #{cae_forward.11} parent=0 // pred_region
    _
  $region25: #{cae_forward.11} parent=0 // pred_fallthru
    _

// kernel: cae_forward.13
$region0: #{cae_forward.13}
  #allocation0 [shape = 'u32[]', space=smem, size = 0x4, offset = 0x4, fixed_abs, tag = 'smem constant byte address 0x4 - core index']
  #allocation1 [shape = 'u32[144,128]{1,0:T(1,128)}', space=vmem, size = 0x12000, scoped, tag = 'internal scratch']
  %s0 = inlined_call_operand.vmem [shape: f32[392,32], index: 0, kind: input, shape index: {}]
  %s1 = inlined_call_operand.vmem [shape: f32[32,4], index: 1, kind: input, shape index: {}]
  %s2 = inlined_call_operand.vmem [shape: f32[1,4], index: 2, kind: input, shape index: {}]
  %s3 = inlined_call_operand.vmem [shape: f32[1,4], index: 3, kind: input, shape index: {}]
  %s4 = inlined_call_operand.vmem [shape: f32[392,4], index: 4, kind: output, shape index: {}]
  %s5 = sld [smem:[#allocation0]]
  $region26: #{cae_forward.13} parent=0
    _
  %s7 = ssub.s32 1, %s5
  %s8 = scalar_select 0, %s7, %s5
  // Predicated region
  $region2: #{cae_forward.13} parent=0 // pred_check
    _
  $region3: #{cae_forward.13} parent=0 // pred_check_branch
    %10 = sbr.rel (0) target = $region5
  $region4: #{cae_forward.13} parent=0 // pred_region
    _
  $region5: #{cae_forward.13} parent=0 // pred_fallthru
    _
  // Predicated region
  $region6: #{cae_forward.13} parent=0 // pred_check
    _
  $region7: #{cae_forward.13} parent=0 // pred_check_branch
    %12 = sbr.rel (0) target = $region9
  $region8: #{cae_forward.13} parent=0 // pred_region
    _
  $region9: #{cae_forward.13} parent=0 // pred_fallthru
    _
  // Predicated region
  $region10: #{cae_forward.13} parent=0 // pred_check
    _
  $region11: #{cae_forward.13} parent=0 // pred_check_branch
    %14 = sbr.rel (0) target = $region13
  $region12: #{cae_forward.13} parent=0 // pred_region
    _
  $region13: #{cae_forward.13} parent=0 // pred_fallthru
    _
  // Predicated region
  $region14: #{cae_forward.13} parent=0 // pred_check
    _
  $region15: #{cae_forward.13} parent=0 // pred_check_branch
    %16 = sbr.rel (0) target = $region17
  $region16: #{cae_forward.13} parent=0 // pred_region
    _
  $region17: #{cae_forward.13} parent=0 // pred_fallthru
    _
  %v18 = vld [vmem:[%s0] sm:$0xff]
  %v19 = vld [vmem:[%s0 + $0x8] sm:$0xff]
  %v20 = vld [vmem:[%s0 + $0x10] sm:$0xff]
  %v21 = vld [vmem:[%s0 + $0x18] sm:$0xff]
  %v22 = vld [vmem:[%s0 + $0x20] sm:$0xff]
  %v23 = vld [vmem:[%s0 + $0x28] sm:$0xff]
  %v24 = vld [vmem:[%s0 + $0x30] sm:$0xff]
  %v25 = vld [vmem:[%s0 + $0x38] sm:$0xff]
  %v26 = vld [vmem:[%s0 + $0x40] sm:$0xff]
  %v27 = vld [vmem:[%s0 + $0x48] sm:$0xff]
  %v28 = vld [vmem:[%s0 + $0x50] sm:$0xff]
  %v29 = vld [vmem:[%s0 + $0x58] sm:$0xff]
  %v30 = vld [vmem:[%s0 + $0x60] sm:$0xff]
  %v31 = vld [vmem:[%s0 + $0x68] sm:$0xff]
  %v32 = vld [vmem:[%s0 + $0x70] sm:$0xff]
  %v33 = vld [vmem:[%s0 + $0x78] sm:$0xff]
  %v34 = vld [vmem:[%s0 + $0x80] sm:$0xff]
  %v35 = vld [vmem:[%s0 + $0x88] sm:$0xff]
  %v36 = vld [vmem:[%s0 + $0x90] sm:$0xff]
  %v37 = vld [vmem:[%s0 + $0x98] sm:$0xff]
  %v38 = vld [vmem:[%s0 + $0xa0] sm:$0xff]
  %v39 = vld [vmem:[%s0 + $0xa8] sm:$0xff]
  %v40 = vld [vmem:[%s0 + $0xb0] sm:$0xff]
  %v41 = vld [vmem:[%s0 + $0xb8] sm:$0xff]
  %v42 = vld [vmem:[%s0 + $0xc0] sm:$0xff]
  %v43 = vld [vmem:[%s0 + $0xc8] sm:$0xff]
  %v44 = vld [vmem:[%s0 + $0xd0] sm:$0xff]
  %v45 = vld [vmem:[%s0 + $0xd8] sm:$0xff]
  %v46 = vld [vmem:[%s0 + $0xe0] sm:$0xff]
  %v47 = vld [vmem:[%s0 + $0xe8] sm:$0xff]
  %v48 = vld [vmem:[%s0 + $0xf0] sm:$0xff]
  %v49 = vld [vmem:[%s0 + $0xf8] sm:$0xff]
  %v50 = vld [vmem:[%s0 + $0x100] sm:$0xff]
  %v51 = vld [vmem:[%s0 + $0x108] sm:$0xff]
  %v52 = vld [vmem:[%s0 + $0x110] sm:$0xff]
  %v53 = vld [vmem:[%s0 + $0x118] sm:$0xff]
  %v54 = vld [vmem:[%s0 + $0x120] sm:$0xff]
  %v55 = vld [vmem:[%s0 + $0x128] sm:$0xff]
  %v56 = vld [vmem:[%s0 + $0x130] sm:$0xff]
  %v57 = vld [vmem:[%s0 + $0x138] sm:$0xff]
  %v58 = vld [vmem:[%s0 + $0x140] sm:$0xff]
  %v59 = vld [vmem:[%s0 + $0x148] sm:$0xff]
  %v60 = vld [vmem:[%s0 + $0x150] sm:$0xff]
  %v61 = vld [vmem:[%s0 + $0x158] sm:$0xff]
  %v62 = vld [vmem:[%s0 + $0x160] sm:$0xff]
  %v63 = vld [vmem:[%s0 + $0x168] sm:$0xff]
  %v64 = vld [vmem:[%s0 + $0x170] sm:$0xff]
  %v65 = vld [vmem:[%s0 + $0x178] sm:$0xff]
  %v66 = vld [vmem:[%s0 + $0x180] sm:$0xff]
  %v67 = vpack.c.bf16 %v19, %v18
  %v68 = vpack.c.bf16 %v21, %v20
  %v69 = vpack.c.bf16 %v23, %v22
  %v70 = vpack.c.bf16 %v25, %v24
  %v71 = vpack.c.bf16 %v27, %v26
  %v72 = vpack.c.bf16 %v29, %v28
  %v73 = vpack.c.bf16 %v31, %v30
  %v74 = vpack.c.bf16 %v33, %v32
  %v75 = vpack.c.bf16 %v35, %v34
  %v76 = vpack.c.bf16 %v37, %v36
  %v77 = vpack.c.bf16 %v39, %v38
  %v78 = vpack.c.bf16 %v41, %v40
  %v79 = vpack.c.bf16 %v43, %v42
  %v80 = vpack.c.bf16 %v45, %v44
  %v81 = vpack.c.bf16 %v47, %v46
  %v82 = vpack.c.bf16 %v49, %v48
  %v83 = vpack.c.bf16 %v51, %v50
  %v84 = vpack.c.bf16 %v53, %v52
  %v85 = vpack.c.bf16 %v55, %v54
  %v86 = vpack.c.bf16 %v57, %v56
  %v87 = vpack.c.bf16 %v59, %v58
  %v88 = vpack.c.bf16 %v61, %v60
  %v89 = vpack.c.bf16 %v63, %v62
  %v90 = vpack.c.bf16 %v65, %v64
  %v91 = vpack.c.bf16 %v66, %v66
  %v92 = vld [vmem:[%s1] sm:$0xff]
  %v93 = vld [vmem:[%s1 + $0x8] sm:$0xff]
  %v94 = vld [vmem:[%s1 + $0x10] sm:$0xff]
  %v95 = vld [vmem:[%s1 + $0x18] sm:$0xff]
  %v96 = vpack.c.bf16 %v93, %v92
  %v97 = vpack.c.bf16 %v95, %v94
  %vm98 = vcmask 261120
  %v100 = vsel %vm98, %v67, 0
  %v103 = vsel %vm98, %v68, 0
  %v106 = vsel %vm98, %v69, 0
  %v109 = vsel %vm98, %v70, 0
  %v112 = vsel %vm98, %v71, 0
  %v115 = vsel %vm98, %v72, 0
  %v118 = vsel %vm98, %v73, 0
  %v121 = vsel %vm98, %v74, 0
  %v124 = vsel %vm98, %v75, 0
  %v127 = vsel %vm98, %v76, 0
  %v130 = vsel %vm98, %v77, 0
  %v133 = vsel %vm98, %v78, 0
  %v136 = vsel %vm98, %v79, 0
  %v139 = vsel %vm98, %v80, 0
  %v142 = vsel %vm98, %v81, 0
  %v145 = vsel %vm98, %v82, 0
  %v148 = vsel %vm98, %v83, 0
  %v151 = vsel %vm98, %v84, 0
  %v154 = vsel %vm98, %v85, 0
  %v157 = vsel %vm98, %v86, 0
  %v160 = vsel %vm98, %v87, 0
  %v163 = vsel %vm98, %v88, 0
  %v166 = vsel %vm98, %v89, 0
  %v169 = vsel %vm98, %v90, 0
  %v172 = vsel %vm98, %v91, 0
  %174 = vmatprep.subr.bf16.mxu0 0
  %175 = vmatpush1.bf16.msra.mxu0 %v96
  %176 = vmatprep.subr.bf16.mxu0 0
  %177 = vmatpush1.bf16.msra.mxu0 %v97
  %178 = vmatprep.subr.bf16.mxu0 0
  %179 = vmatpush1.bf16.msra.mxu0 0
  %180 = vmatprep.subr.bf16.mxu0 0
  %181 = vmatpush1.bf16.msra.mxu0 0
  %182 = vmatprep.subr.bf16.mxu0 0
  %183 = vmatpush1.bf16.msra.mxu0 0
  %184 = vmatprep.subr.bf16.mxu0 0
  %185 = vmatpush1.bf16.msra.mxu0 0
  %186 = vmatprep.subr.bf16.mxu0 0
  %187 = vmatpush1.bf16.msra.mxu0 0
  %188 = vmatprep.subr.bf16.mxu0 0
  %189 = vmatpush1.bf16.msra.mxu0 0
  %190 = vmatprep.subr.bf16.mxu0 0
  %191 = vmatpush1.bf16.msra.mxu0 0
  %192 = vmatprep.subr.bf16.mxu0 0
  %193 = vmatpush1.bf16.msra.mxu0 0
  %194 = vmatprep.subr.bf16.mxu0 0
  %195 = vmatpush1.bf16.msra.mxu0 0
  %196 = vmatprep.subr.bf16.mxu0 0
  %197 = vmatpush1.bf16.msra.mxu0 0
  %198 = vmatprep.subr.bf16.mxu0 0
  %199 = vmatpush1.bf16.msra.mxu0 0
  %200 = vmatprep.subr.bf16.mxu0 0
  %201 = vmatpush1.bf16.msra.mxu0 0
  %202 = vmatprep.subr.bf16.mxu0 0
  %203 = vmatpush1.bf16.msra.mxu0 0
  %204 = vmatprep.subr.bf16.mxu0 0
  %205 = vmatpush1.bf16.msra.mxu0 0
  %206 = vmatprep.mubr.bf16.mxu0 0
  %207 = vmatmul.mubr.bf16.gmra.mrb[0].mxu0 %v100
  %v208 = vpop.f32.mrb[0].mxu0
  %v209 = vadd.f32 0.0, %v208
  %v210 = vpop.f32.mrb[0].mxu0
  %v211 = vpop.f32.mrb[0].mxu0
  %v212 = vadd.f32 0.0, %v211
  %v213 = vpop.f32.mrb[0].mxu0
  %214 = vmatprep.mubr.bf16.mxu0 0
  %215 = vmatmul.mubr.bf16.gmra.mrb[0].mxu0 %v103
  %v216 = vpop.f32.mrb[0].mxu0
  %v217 = vadd.f32 0.0, %v216
  %v218 = vpop.f32.mrb[0].mxu0
  %v219 = vpop.f32.mrb[0].mxu0
  %v220 = vadd.f32 0.0, %v219
  %v221 = vpop.f32.mrb[0].mxu0
  %222 = vmatprep.mubr.bf16.mxu0 0
  %223 = vmatmul.mubr.bf16.gmra.mrb[0].mxu0 %v106
  %v224 = vpop.f32.mrb[0].mxu0
  %v225 = vadd.f32 0.0, %v224
  %v226 = vpop.f32.mrb[0].mxu0
  %v227 = vpop.f32.mrb[0].mxu0
  %v228 = vadd.f32 0.0, %v227
  %v229 = vpop.f32.mrb[0].mxu0
  %230 = vmatprep.mubr.bf16.mxu0 0
  %231 = vmatmul.mubr.bf16.gmra.mrb[0].mxu0 %v109
  %v232 = vpop.f32.mrb[0].mxu0
  %v233 = vadd.f32 0.0, %v232
  %v234 = vpop.f32.mrb[0].mxu0
  %v235 = vpop.f32.mrb[0].mxu0
  %v236 = vadd.f32 0.0, %v235
  %v237 = vpop.f32.mrb[0].mxu0
  %238 = vmatprep.mubr.bf16.mxu0 0
  %239 = vmatmul.mubr.bf16.gmra.mrb[0].mxu0 %v112
  %v240 = vpop.f32.mrb[0].mxu0
  %v241 = vadd.f32 0.0, %v240
  %v242 = vpop.f32.mrb[0].mxu0
  %v243 = vpop.f32.mrb[0].mxu0
  %v244 = vadd.f32 0.0, %v243
  %v245 = vpop.f32.mrb[0].mxu0
  %246 = vmatprep.mubr.bf16.mxu0 0
  %247 = vmatmul.mubr.bf16.gmra.mrb[0].mxu0 %v115
  %v248 = vpop.f32.mrb[0].mxu0
  %v249 = vadd.f32 0.0, %v248
  %v250 = vpop.f32.mrb[0].mxu0
  %v251 = vpop.f32.mrb[0].mxu0
  %v252 = vadd.f32 0.0, %v251
  %v253 = vpop.f32.mrb[0].mxu0
  %254 = vmatprep.mubr.bf16.mxu0 0
  %255 = vmatmul.mubr.bf16.gmra.mrb[0].mxu0 %v118
  %v256 = vpop.f32.mrb[0].mxu0
  %v257 = vadd.f32 0.0, %v256
  %v258 = vpop.f32.mrb[0].mxu0
  %v259 = vpop.f32.mrb[0].mxu0
  %v260 = vadd.f32 0.0, %v259
  %v261 = vpop.f32.mrb[0].mxu0
  %262 = vmatprep.mubr.bf16.mxu0 0
  %263 = vmatmul.mubr.bf16.gmra.mrb[0].mxu0 %v121
  %v264 = vpop.f32.mrb[0].mxu0
  %v265 = vadd.f32 0.0, %v264
  %v266 = vpop.f32.mrb[0].mxu0
  %v267 = vpop.f32.mrb[0].mxu0
  %v268 = vadd.f32 0.0, %v267
  %v269 = vpop.f32.mrb[0].mxu0
  %270 = vmatprep.mubr.bf16.mxu0 0
  %271 = vmatmul.mubr.bf16.gmra.mrb[0].mxu0 %v124
  %v272 = vpop.f32.mrb[0].mxu0
  %v273 = vadd.f32 0.0, %v272
  %v274 = vpop.f32.mrb[0].mxu0
  %v275 = vpop.f32.mrb[0].mxu0
  %v276 = vadd.f32 0.0, %v275
  %v277 = vpop.f32.mrb[0].mxu0
  %278 = vmatprep.mubr.bf16.mxu0 0
  %279 = vmatmul.mubr.bf16.gmra.mrb[0].mxu0 %v127
  %v280 = vpop.f32.mrb[0].mxu0
  %v281 = vadd.f32 0.0, %v280
  %v282 = vpop.f32.mrb[0].mxu0
  %v283 = vpop.f32.mrb[0].mxu0
  %v284 = vadd.f32 0.0, %v283
  %v285 = vpop.f32.mrb[0].mxu0
  %286 = vmatprep.mubr.bf16.mxu0 0
  %287 = vmatmul.mubr.bf16.gmra.mrb[0].mxu0 %v130
  %v288 = vpop.f32.mrb[0].mxu0
  %v289 = vadd.f32 0.0, %v288
  %v290 = vpop.f32.mrb[0].mxu0
  %v291 = vpop.f32.mrb[0].mxu0
  %v292 = vadd.f32 0.0, %v291
  %v293 = vpop.f32.mrb[0].mxu0
  %294 = vmatprep.mubr.bf16.mxu0 0
  %295 = vmatmul.mubr.bf16.gmra.mrb[0].mxu0 %v133
  %v296 = vpop.f32.mrb[0].mxu0
  %v297 = vadd.f32 0.0, %v296
  %v298 = vpop.f32.mrb[0].mxu0
  %v299 = vpop.f32.mrb[0].mxu0
  %v300 = vadd.f32 0.0, %v299
  %v301 = vpop.f32.mrb[0].mxu0
  %302 = vmatprep.mubr.bf16.mxu0 0
  %303 = vmatmul.mubr.bf16.gmra.mrb[0].mxu0 %v136
  %v304 = vpop.f32.mrb[0].mxu0
  %v305 = vadd.f32 0.0, %v304
  %v306 = vpop.f32.mrb[0].mxu0
  %v307 = vpop.f32.mrb[0].mxu0
  %v308 = vadd.f32 0.0, %v307
  %v309 = vpop.f32.mrb[0].mxu0
  %310 = vmatprep.mubr.bf16.mxu0 0
  %311 = vmatmul.mubr.bf16.gmra.mrb[0].mxu0 %v139
  %v312 = vpop.f32.mrb[0].mxu0
  %v313 = vadd.f32 0.0, %v312
  %v314 = vpop.f32.mrb[0].mxu0
  %v315 = vpop.f32.mrb[0].mxu0
  %v316 = vadd.f32 0.0, %v315
  %v317 = vpop.f32.mrb[0].mxu0
  %318 = vmatprep.mubr.bf16.mxu0 0
  %319 = vmatmul.mubr.bf16.gmra.mrb[0].mxu0 %v142
  %v320 = vpop.f32.mrb[0].mxu0
  %v321 = vadd.f32 0.0, %v320
  %v322 = vpop.f32.mrb[0].mxu0
  %v323 = vpop.f32.mrb[0].mxu0
  %v324 = vadd.f32 0.0, %v323
  %v325 = vpop.f32.mrb[0].mxu0
  %326 = vmatprep.mubr.bf16.mxu0 0
  %327 = vmatmul.mubr.bf16.gmra.mrb[0].mxu0 %v145
  %v328 = vpop.f32.mrb[0].mxu0
  %v329 = vadd.f32 0.0, %v328
  %v330 = vpop.f32.mrb[0].mxu0
  %v331 = vpop.f32.mrb[0].mxu0
  %v332 = vadd.f32 0.0, %v331
  %v333 = vpop.f32.mrb[0].mxu0
  %334 = vmatprep.mubr.bf16.mxu0 0
  %335 = vmatmul.mubr.bf16.gmra.mrb[0].mxu0 %v148
  %v336 = vpop.f32.mrb[0].mxu0
  %v337 = vadd.f32 0.0, %v336
  %v338 = vpop.f32.mrb[0].mxu0
  %v339 = vpop.f32.mrb[0].mxu0
  %v340 = vadd.f32 0.0, %v339
  %v341 = vpop.f32.mrb[0].mxu0
  %342 = vmatprep.mubr.bf16.mxu0 0
  %343 = vmatmul.mubr.bf16.gmra.mrb[0].mxu0 %v151
  %v344 = vpop.f32.mrb[0].mxu0
  %v345 = vadd.f32 0.0, %v344
  %v346 = vpop.f32.mrb[0].mxu0
  %v347 = vpop.f32.mrb[0].mxu0
  %v348 = vadd.f32 0.0, %v347
  %v349 = vpop.f32.mrb[0].mxu0
  %350 = vmatprep.mubr.bf16.mxu0 0
  %351 = vmatmul.mubr.bf16.gmra.mrb[0].mxu0 %v154
  %v352 = vpop.f32.mrb[0].mxu0
  %v353 = vadd.f32 0.0, %v352
  %v354 = vpop.f32.mrb[0].mxu0
  %v355 = vpop.f32.mrb[0].mxu0
  %v356 = vadd.f32 0.0, %v355
  %v357 = vpop.f32.mrb[0].mxu0
  %358 = vmatprep.mubr.bf16.mxu0 0
  %359 = vmatmul.mubr.bf16.gmra.mrb[0].mxu0 %v157
  %v360 = vpop.f32.mrb[0].mxu0
  %v361 = vadd.f32 0.0, %v360
  %v362 = vpop.f32.mrb[0].mxu0
  %v363 = vpop.f32.mrb[0].mxu0
  %v364 = vadd.f32 0.0, %v363
  %v365 = vpop.f32.mrb[0].mxu0
  %366 = vmatprep.mubr.bf16.mxu0 0
  %367 = vmatmul.mubr.bf16.gmra.mrb[0].mxu0 %v160
  %v368 = vpop.f32.mrb[0].mxu0
  %v369 = vadd.f32 0.0, %v368
  %v370 = vpop.f32.mrb[0].mxu0
  %v371 = vpop.f32.mrb[0].mxu0
  %v372 = vadd.f32 0.0, %v371
  %v373 = vpop.f32.mrb[0].mxu0
  %374 = vmatprep.mubr.bf16.mxu0 0
  %375 = vmatmul.mubr.bf16.gmra.mrb[0].mxu0 %v163
  %v376 = vpop.f32.mrb[0].mxu0
  %v377 = vadd.f32 0.0, %v376
  %v378 = vpop.f32.mrb[0].mxu0
  %v379 = vpop.f32.mrb[0].mxu0
  %v380 = vadd.f32 0.0, %v379
  %v381 = vpop.f32.mrb[0].mxu0
  %382 = vmatprep.mubr.bf16.mxu0 0
  %383 = vmatmul.mubr.bf16.gmra.mrb[0].mxu0 %v166
  %v384 = vpop.f32.mrb[0].mxu0
  %v385 = vadd.f32 0.0, %v384
  %v386 = vpop.f32.mrb[0].mxu0
  %v387 = vpop.f32.mrb[0].mxu0
  %v388 = vadd.f32 0.0, %v387
  %v389 = vpop.f32.mrb[0].mxu0
  %390 = vmatprep.mubr.bf16.mxu0 0
  %391 = vmatmul.mubr.bf16.gmra.mrb[0].mxu0 %v169
  %v392 = vpop.f32.mrb[0].mxu0
  %v393 = vadd.f32 0.0, %v392
  %v394 = vpop.f32.mrb[0].mxu0
  %v395 = vpop.f32.mrb[0].mxu0
  %v396 = vadd.f32 0.0, %v395
  %v397 = vpop.f32.mrb[0].mxu0
  %398 = vmatprep.mubr.bf16.mxu0 0
  %399 = vmatmul.mubr.bf16.gmra.mrb[0].mxu0 %v172
  %v400 = vpop.f32.mrb[0].mxu0
  %v401 = vadd.f32 0.0, %v400
  %v402 = vpop.f32.mrb[0].mxu0
  %v403 = vpop.f32.mrb[0].mxu0
  %v404 = vpop.f32.mrb[0].mxu0
  %405 = vdwg.mxu0
  %vm406 = vcmask 31744
  %v407 = vsel %vm406, %v209, 0.0
  %v408 = vsel %vm406, %v212, 0.0
  %v409 = vadd.f32 %v407, %v408
  %v410 = vsel %vm406, %v217, 0.0
  %v411 = vadd.f32 %v409, %v410
  %v412 = vsel %vm406, %v220, 0.0
  %v413 = vadd.f32 %v411, %v412
  %v414 = vsel %vm406, %v225, 0.0
  %v415 = vadd.f32 %v413, %v414
  %v416 = vsel %vm406, %v228, 0.0
  %v417 = vadd.f32 %v415, %v416
  %v418 = vsel %vm406, %v233, 0.0
  %v419 = vadd.f32 %v417, %v418
  %v420 = vsel %vm406, %v236, 0.0
  %v421 = vadd.f32 %v419, %v420
  %v422 = vsel %vm406, %v241, 0.0
  %v423 = vadd.f32 %v421, %v422
  %v424 = vsel %vm406, %v244, 0.0
  %v425 = vadd.f32 %v423, %v424
  %v426 = vsel %vm406, %v249, 0.0
  %v427 = vadd.f32 %v425, %v426
  %v428 = vsel %vm406, %v252, 0.0
  %v429 = vadd.f32 %v427, %v428
  %v430 = vsel %vm406, %v257, 0.0
  %v431 = vadd.f32 %v429, %v430
  %v432 = vsel %vm406, %v260, 0.0
  %v433 = vadd.f32 %v431, %v432
  %v434 = vsel %vm406, %v265, 0.0
  %v435 = vadd.f32 %v433, %v434
  %v436 = vsel %vm406, %v268, 0.0
  %v437 = vadd.f32 %v435, %v436
  %v438 = vsel %vm406, %v273, 0.0
  %v439 = vadd.f32 %v437, %v438
  %v440 = vsel %vm406, %v276, 0.0
  %v441 = vadd.f32 %v439, %v440
  %v442 = vsel %vm406, %v281, 0.0
  %v443 = vadd.f32 %v441, %v442
  %v444 = vsel %vm406, %v284, 0.0
  %v445 = vadd.f32 %v443, %v444
  %v446 = vsel %vm406, %v289, 0.0
  %v447 = vadd.f32 %v445, %v446
  %v448 = vsel %vm406, %v292, 0.0
  %v449 = vadd.f32 %v447, %v448
  %v450 = vsel %vm406, %v297, 0.0
  %v451 = vadd.f32 %v449, %v450
  %v452 = vsel %vm406, %v300, 0.0
  %v453 = vadd.f32 %v451, %v452
  %v454 = vsel %vm406, %v305, 0.0
  %v455 = vadd.f32 %v453, %v454
  %v456 = vsel %vm406, %v308, 0.0
  %v457 = vadd.f32 %v455, %v456
  %v458 = vsel %vm406, %v313, 0.0
  %v459 = vadd.f32 %v457, %v458
  %v460 = vsel %vm406, %v316, 0.0
  %v461 = vadd.f32 %v459, %v460
  %v462 = vsel %vm406, %v321, 0.0
  %v463 = vadd.f32 %v461, %v462
  %v464 = vsel %vm406, %v324, 0.0
  %v465 = vadd.f32 %v463, %v464
  %v466 = vsel %vm406, %v329, 0.0
  %v467 = vadd.f32 %v465, %v466
  %v468 = vsel %vm406, %v332, 0.0
  %v469 = vadd.f32 %v467, %v468
  %v470 = vsel %vm406, %v337, 0.0
  %v471 = vadd.f32 %v469, %v470
  %v472 = vsel %vm406, %v340, 0.0
  %v473 = vadd.f32 %v471, %v472
  %v474 = vsel %vm406, %v345, 0.0
  %v475 = vadd.f32 %v473, %v474
  %v476 = vsel %vm406, %v348, 0.0
  %v477 = vadd.f32 %v475, %v476
  %v478 = vsel %vm406, %v353, 0.0
  %v479 = vadd.f32 %v477, %v478
  %v480 = vsel %vm406, %v356, 0.0
  %v481 = vadd.f32 %v479, %v480
  %v482 = vsel %vm406, %v361, 0.0
  %v483 = vadd.f32 %v481, %v482
  %v484 = vsel %vm406, %v364, 0.0
  %v485 = vadd.f32 %v483, %v484
  %v486 = vsel %vm406, %v369, 0.0
  %v487 = vadd.f32 %v485, %v486
  %v488 = vsel %vm406, %v372, 0.0
  %v489 = vadd.f32 %v487, %v488
  %v490 = vsel %vm406, %v377, 0.0
  %v491 = vadd.f32 %v489, %v490
  %v492 = vsel %vm406, %v380, 0.0
  %v493 = vadd.f32 %v491, %v492
  %v494 = vsel %vm406, %v385, 0.0
  %v495 = vadd.f32 %v493, %v494
  %v496 = vsel %vm406, %v388, 0.0
  %v497 = vadd.f32 %v495, %v496
  %v498 = vsel %vm406, %v393, 0.0
  %v499 = vadd.f32 %v497, %v498
  %v500 = vsel %vm406, %v396, 0.0
  %v501 = vadd.f32 %v499, %v500
  %v502 = vsel %vm406, %v401, 0.0
  %v503 = vadd.f32 %v501, %v502
  %v504 = vrot.slane %v503, 4
  %v505 = vadd.f32 %v503, %v504
  %v506 = vrot.slane %v505, 2
  %v507 = vadd.f32 %v505, %v506
  %v508 = vrot.slane %v507, 1
  %v509 = vadd.f32 %v507, %v508
  %511 = vrot.lane.b32.xlu0 %v509, 127
  %v512 = vpop.permute.xlu0 %511
  %v514 = vadd.f32 %v509, %v512
  %515 = vrot.lane.b32.xlu0 %v509, 126
  %v516 = vpop.permute.xlu0 %515
  %v518 = vadd.f32 %v514, %v516
  %519 = vrot.lane.b32.xlu0 %v509, 125
  %v520 = vpop.permute.xlu0 %519
  %v522 = vadd.f32 %v518, %v520
  %524 = vrot.lane.b32.xlu0 %v522, 1
  %v525 = vpop.permute.xlu0 %524
  %527 = vrot.lane.b32.xlu0 %v522, 2
  %v528 = vpop.permute.xlu0 %527
  %530 = vrot.lane.b32.xlu0 %v522, 3
  %v531 = vpop.permute.xlu0 %530
  %vm533 = vcmask 7168
  %v534 = vsel %vm533, %v522, %v525
  %vm535 = vcmask 15360
  %v536 = vsel %vm535, %v534, %v528
  %vm537 = vcmask 23552
  %v538 = vsel %vm537, %v536, %v531
  %v539 = vmul.f32 %v538, 0.0006377551
  %v540 = vlaneseq
  %v541 = vshrl.u32 %v540, 7
  %v542 = vsub.s32 0, %v541
  %v543 = vrot.slane %v539, %v542
  %v544 = vsub.f32 %v209, %v543
  %v545 = vsub.f32 %v212, %v543
  %v546 = vsub.f32 %v217, %v543
  %v547 = vsub.f32 %v220, %v543
  %v548 = vsub.f32 %v225, %v543
  %v549 = vsub.f32 %v228, %v543
  %v550 = vsub.f32 %v233, %v543
  %v551 = vsub.f32 %v236, %v543
  %v552 = vsub.f32 %v241, %v543
  %v553 = vsub.f32 %v244, %v543
  %v554 = vsub.f32 %v249, %v543
  %v555 = vsub.f32 %v252, %v543
  %v556 = vsub.f32 %v257, %v543
  %v557 = vsub.f32 %v260, %v543
  %v558 = vsub.f32 %v265, %v543
  %v559 = vsub.f32 %v268, %v543
  %v560 = vsub.f32 %v273, %v543
  %v561 = vsub.f32 %v276, %v543
  %v562 = vsub.f32 %v281, %v543
  %v563 = vsub.f32 %v284, %v543
  %v564 = vsub.f32 %v289, %v543
  %v565 = vsub.f32 %v292, %v543
  %v566 = vsub.f32 %v297, %v543
  %v567 = vsub.f32 %v300, %v543
  %v568 = vsub.f32 %v305, %v543
  %v569 = vsub.f32 %v308, %v543
  %v570 = vsub.f32 %v313, %v543
  %v571 = vsub.f32 %v316, %v543
  %v572 = vsub.f32 %v321, %v543
  %v573 = vsub.f32 %v324, %v543
  %v574 = vsub.f32 %v329, %v543
  %v575 = vsub.f32 %v332, %v543
  %v576 = vsub.f32 %v337, %v543
  %v577 = vsub.f32 %v340, %v543
  %v578 = vsub.f32 %v345, %v543
  %v579 = vsub.f32 %v348, %v543
  %v580 = vsub.f32 %v353, %v543
  %v581 = vsub.f32 %v356, %v543
  %v582 = vsub.f32 %v361, %v543
  %v583 = vsub.f32 %v364, %v543
  %v584 = vsub.f32 %v369, %v543
  %v585 = vsub.f32 %v372, %v543
  %v586 = vsub.f32 %v377, %v543
  %v587 = vsub.f32 %v380, %v543
  %v588 = vsub.f32 %v385, %v543
  %v589 = vsub.f32 %v388, %v543
  %v590 = vsub.f32 %v393, %v543
  %v591 = vsub.f32 %v396, %v543
  %v592 = vsub.f32 %v401, %v543
  %v593 = vmul.f32 %v544, %v544
  %v594 = vmul.f32 %v545, %v545
  %v595 = vmul.f32 %v546, %v546
  %v596 = vmul.f32 %v547, %v547
  %v597 = vmul.f32 %v548, %v548
  %v598 = vmul.f32 %v549, %v549
  %v599 = vmul.f32 %v550, %v550
  %v600 = vmul.f32 %v551, %v551
  %v601 = vmul.f32 %v552, %v552
  %v602 = vmul.f32 %v553, %v553
  %v603 = vmul.f32 %v554, %v554
  %v604 = vmul.f32 %v555, %v555
  %v605 = vmul.f32 %v556, %v556
  %v606 = vmul.f32 %v557, %v557
  %v607 = vmul.f32 %v558, %v558
  %v608 = vmul.f32 %v559, %v559
  %v609 = vmul.f32 %v560, %v560
  %v610 = vmul.f32 %v561, %v561
  %v611 = vmul.f32 %v562, %v562
  %v612 = vmul.f32 %v563, %v563
  %v613 = vmul.f32 %v564, %v564
  %v614 = vmul.f32 %v565, %v565
  %v615 = vmul.f32 %v566, %v566
  %v616 = vmul.f32 %v567, %v567
  %v617 = vmul.f32 %v568, %v568
  %v618 = vmul.f32 %v569, %v569
  %v619 = vmul.f32 %v570, %v570
  %v620 = vmul.f32 %v571, %v571
  %v621 = vmul.f32 %v572, %v572
  %v622 = vmul.f32 %v573, %v573
  %v623 = vmul.f32 %v574, %v574
  %v624 = vmul.f32 %v575, %v575
  %v625 = vmul.f32 %v576, %v576
  %v626 = vmul.f32 %v577, %v577
  %v627 = vmul.f32 %v578, %v578
  %v628 = vmul.f32 %v579, %v579
  %v629 = vmul.f32 %v580, %v580
  %v630 = vmul.f32 %v581, %v581
  %v631 = vmul.f32 %v582, %v582
  %v632 = vmul.f32 %v583, %v583
  %v633 = vmul.f32 %v584, %v584
  %v634 = vmul.f32 %v585, %v585
  %v635 = vmul.f32 %v586, %v586
  %v636 = vmul.f32 %v587, %v587
  %v637 = vmul.f32 %v588, %v588
  %v638 = vmul.f32 %v589, %v589
  %v639 = vmul.f32 %v590, %v590
  %v640 = vmul.f32 %v591, %v591
  %v641 = vmul.f32 %v592, %v592
  %v642 = vsel %vm406, %v593, 0.0
  %v643 = vsel %vm406, %v594, 0.0
  %v644 = vadd.f32 %v642, %v643
  %v645 = vsel %vm406, %v595, 0.0
  %v646 = vadd.f32 %v644, %v645
  %v647 = vsel %vm406, %v596, 0.0
  %v648 = vadd.f32 %v646, %v647
  %v649 = vsel %vm406, %v597, 0.0
  %v650 = vadd.f32 %v648, %v649
  %v651 = vsel %vm406, %v598, 0.0
  %v652 = vadd.f32 %v650, %v651
  %v653 = vsel %vm406, %v599, 0.0
  %v654 = vadd.f32 %v652, %v653
  %v655 = vsel %vm406, %v600, 0.0
  %v656 = vadd.f32 %v654, %v655
  %v657 = vsel %vm406, %v601, 0.0
  %v658 = vadd.f32 %v656, %v657
  %v659 = vsel %vm406, %v602, 0.0
  %v660 = vadd.f32 %v658, %v659
  %v661 = vsel %vm406, %v603, 0.0
  %v662 = vadd.f32 %v660, %v661
  %v663 = vsel %vm406, %v604, 0.0
  %v664 = vadd.f32 %v662, %v663
  %v665 = vsel %vm406, %v605, 0.0
  %v666 = vadd.f32 %v664, %v665
  %v667 = vsel %vm406, %v606, 0.0
  %v668 = vadd.f32 %v666, %v667
  %v669 = vsel %vm406, %v607, 0.0
  %v670 = vadd.f32 %v668, %v669
  %v671 = vsel %vm406, %v608, 0.0
  %v672 = vadd.f32 %v670, %v671
  %v673 = vsel %vm406, %v609, 0.0
  %v674 = vadd.f32 %v672, %v673
  %v675 = vsel %vm406, %v610, 0.0
  %v676 = vadd.f32 %v674, %v675
  %v677 = vsel %vm406, %v611, 0.0
  %v678 = vadd.f32 %v676, %v677
  %v679 = vsel %vm406, %v612, 0.0
  %v680 = vadd.f32 %v678, %v679
  %v681 = vsel %vm406, %v613, 0.0
  %v682 = vadd.f32 %v680, %v681
  %v683 = vsel %vm406, %v614, 0.0
  %v684 = vadd.f32 %v682, %v683
  %v685 = vsel %vm406, %v615, 0.0
  %v686 = vadd.f32 %v684, %v685
  %v687 = vsel %vm406, %v616, 0.0
  %v688 = vadd.f32 %v686, %v687
  %v689 = vsel %vm406, %v617, 0.0
  %v690 = vadd.f32 %v688, %v689
  %v691 = vsel %vm406, %v618, 0.0
  %v692 = vadd.f32 %v690, %v691
  %v693 = vsel %vm406, %v619, 0.0
  %v694 = vadd.f32 %v692, %v693
  %v695 = vsel %vm406, %v620, 0.0
  %v696 = vadd.f32 %v694, %v695
  %v697 = vsel %vm406, %v621, 0.0
  %v698 = vadd.f32 %v696, %v697
  %v699 = vsel %vm406, %v622, 0.0
  %v700 = vadd.f32 %v698, %v699
  %v701 = vsel %vm406, %v623, 0.0
  %v702 = vadd.f32 %v700, %v701
  %v703 = vsel %vm406, %v624, 0.0
  %v704 = vadd.f32 %v702, %v703
  %v705 = vsel %vm406, %v625, 0.0
  %v706 = vadd.f32 %v704, %v705
  %v707 = vsel %vm406, %v626, 0.0
  %v708 = vadd.f32 %v706, %v707
  %v709 = vsel %vm406, %v627, 0.0
  %v710 = vadd.f32 %v708, %v709
  %v711 = vsel %vm406, %v628, 0.0
  %v712 = vadd.f32 %v710, %v711
  %v713 = vsel %vm406, %v629, 0.0
  %v714 = vadd.f32 %v712, %v713
  %v715 = vsel %vm406, %v630, 0.0
  %v716 = vadd.f32 %v714, %v715
  %v717 = vsel %vm406, %v631, 0.0
  %v718 = vadd.f32 %v716, %v717
  %v719 = vsel %vm406, %v632, 0.0
  %v720 = vadd.f32 %v718, %v719
  %v721 = vsel %vm406, %v633, 0.0
  %v722 = vadd.f32 %v720, %v721
  %v723 = vsel %vm406, %v634, 0.0
  %v724 = vadd.f32 %v722, %v723
  %v725 = vsel %vm406, %v635, 0.0
  %v726 = vadd.f32 %v724, %v725
  %v727 = vsel %vm406, %v636, 0.0
  %v728 = vadd.f32 %v726, %v727
  %v729 = vsel %vm406, %v637, 0.0
  %v730 = vadd.f32 %v728, %v729
  %v731 = vsel %vm406, %v638, 0.0
  %v732 = vadd.f32 %v730, %v731
  %v733 = vsel %vm406, %v639, 0.0
  %v734 = vadd.f32 %v732, %v733
  %v735 = vsel %vm406, %v640, 0.0
  %v736 = vadd.f32 %v734, %v735
  %v737 = vsel %vm406, %v641, 0.0
  %v738 = vadd.f32 %v736, %v737
  %v739 = vrot.slane %v738, 4
  %v740 = vadd.f32 %v738, %v739
  %v741 = vrot.slane %v740, 2
  %v742 = vadd.f32 %v740, %v741
  %v743 = vrot.slane %v742, 1
  %v744 = vadd.f32 %v742, %v743
  %746 = vrot.lane.b32.xlu0 %v744, 127
  %v747 = vpop.permute.xlu0 %746
  %v749 = vadd.f32 %v744, %v747
  %750 = vrot.lane.b32.xlu0 %v744, 126
  %v751 = vpop.permute.xlu0 %750
  %v753 = vadd.f32 %v749, %v751
  %754 = vrot.lane.b32.xlu0 %v744, 125
  %v755 = vpop.permute.xlu0 %754
  %v757 = vadd.f32 %v753, %v755
  %759 = vrot.lane.b32.xlu0 %v757, 1
  %v760 = vpop.permute.xlu0 %759
  %762 = vrot.lane.b32.xlu0 %v757, 2
  %v763 = vpop.permute.xlu0 %762
  %765 = vrot.lane.b32.xlu0 %v757, 3
  %v766 = vpop.permute.xlu0 %765
  %v768 = vsel %vm533, %v757, %v760
  %v769 = vsel %vm535, %v768, %v763
  %v770 = vsel %vm537, %v769, %v766
  %v771 = vmul.f32 %v770, 0.0006377551
  %v772 = vadd.f32 %v771, 1e-05
  %v773 = vrsqrt.pop %v772
  %v774 = vlaneseq
  %v775 = vshrl.u32 %v774, 7
  %v776 = vsub.s32 0, %v775
  %v777 = vrot.slane %v773, %v776
  %v778 = vmul.f32 %v544, %v777
  %v779 = vmul.f32 %v545, %v777
  %v780 = vmul.f32 %v546, %v777
  %v781 = vmul.f32 %v547, %v777
  %v782 = vmul.f32 %v548, %v777
  %v783 = vmul.f32 %v549, %v777
  %v784 = vmul.f32 %v550, %v777
  %v785 = vmul.f32 %v551, %v777
  %v786 = vmul.f32 %v552, %v777
  %v787 = vmul.f32 %v553, %v777
  %v788 = vmul.f32 %v554, %v777
  %v789 = vmul.f32 %v555, %v777
  %v790 = vmul.f32 %v556, %v777
  %v791 = vmul.f32 %v557, %v777
  %v792 = vmul.f32 %v558, %v777
  %v793 = vmul.f32 %v559, %v777
  %v794 = vmul.f32 %v560, %v777
  %v795 = vmul.f32 %v561, %v777
  %v796 = vmul.f32 %v562, %v777
  %v797 = vmul.f32 %v563, %v777
  %v798 = vmul.f32 %v564, %v777
  %v799 = vmul.f32 %v565, %v777
  %v800 = vmul.f32 %v566, %v777
  %v801 = vmul.f32 %v567, %v777
  %v802 = vmul.f32 %v568, %v777
  %v803 = vmul.f32 %v569, %v777
  %v804 = vmul.f32 %v570, %v777
  %v805 = vmul.f32 %v571, %v777
  %v806 = vmul.f32 %v572, %v777
  %v807 = vmul.f32 %v573, %v777
  %v808 = vmul.f32 %v574, %v777
  %v809 = vmul.f32 %v575, %v777
  %v810 = vmul.f32 %v576, %v777
  %v811 = vmul.f32 %v577, %v777
  %v812 = vmul.f32 %v578, %v777
  %v813 = vmul.f32 %v579, %v777
  %v814 = vmul.f32 %v580, %v777
  %v815 = vmul.f32 %v581, %v777
  %v816 = vmul.f32 %v582, %v777
  %v817 = vmul.f32 %v583, %v777
  %v818 = vmul.f32 %v584, %v777
  %v819 = vmul.f32 %v585, %v777
  %v820 = vmul.f32 %v586, %v777
  %v821 = vmul.f32 %v587, %v777
  %v822 = vmul.f32 %v588, %v777
  %v823 = vmul.f32 %v589, %v777
  %v824 = vmul.f32 %v590, %v777
  %v825 = vmul.f32 %v591, %v777
  %v826 = vmul.f32 %v592, %v777
  %v827 = vld [vmem:[%s2] sm:$0x1]
  %v829 = vlaneseq
  %v830 = vshrl.u32 %v829, 7
  %v831 = vsub.s32 0, %v830
  %v832 = vrot.slane %v827, %v831
  %v834 = vmul.f32 %v778, %v832
  %v835 = vmul.f32 %v779, %v832
  %v836 = vmul.f32 %v780, %v832
  %v837 = vmul.f32 %v781, %v832
  %v838 = vmul.f32 %v782, %v832
  %v839 = vmul.f32 %v783, %v832
  %v840 = vmul.f32 %v784, %v832
  %v841 = vmul.f32 %v785, %v832
  %v842 = vmul.f32 %v786, %v832
  %v843 = vmul.f32 %v787, %v832
  %v844 = vmul.f32 %v788, %v832
  %v845 = vmul.f32 %v789, %v832
  %v846 = vmul.f32 %v790, %v832
  %v847 = vmul.f32 %v791, %v832
  %v848 = vmul.f32 %v792, %v832
  %v849 = vmul.f32 %v793, %v832
  %v850 = vmul.f32 %v794, %v832
  %v851 = vmul.f32 %v795, %v832
  %v852 = vmul.f32 %v796, %v832
  %v853 = vmul.f32 %v797, %v832
  %v854 = vmul.f32 %v798, %v832
  %v855 = vmul.f32 %v799, %v832
  %v856 = vmul.f32 %v800, %v832
  %v857 = vmul.f32 %v801, %v832
  %v858 = vmul.f32 %v802, %v832
  %v859 = vmul.f32 %v803, %v832
  %v860 = vmul.f32 %v804, %v832
  %v861 = vmul.f32 %v805, %v832
  %v862 = vmul.f32 %v806, %v832
  %v863 = vmul.f32 %v807, %v832
  %v864 = vmul.f32 %v808, %v832
  %v865 = vmul.f32 %v809, %v832
  %v866 = vmul.f32 %v810, %v832
  %v867 = vmul.f32 %v811, %v832
  %v868 = vmul.f32 %v812, %v832
  %v869 = vmul.f32 %v813, %v832
  %v870 = vmul.f32 %v814, %v832
  %v871 = vmul.f32 %v815, %v832
  %v872 = vmul.f32 %v816, %v832
  %v873 = vmul.f32 %v817, %v832
  %v874 = vmul.f32 %v818, %v832
  %v875 = vmul.f32 %v819, %v832
  %v876 = vmul.f32 %v820, %v832
  %v877 = vmul.f32 %v821, %v832
  %v878 = vmul.f32 %v822, %v832
  %v879 = vmul.f32 %v823, %v832
  %v880 = vmul.f32 %v824, %v832
  %v881 = vmul.f32 %v825, %v832
  %v882 = vmul.f32 %v826, %v832
  %v883 = vld [vmem:[%s3] sm:$0x1]
  %v885 = vlaneseq
  %v886 = vshrl.u32 %v885, 7
  %v887 = vsub.s32 0, %v886
  %v888 = vrot.slane %v883, %v887
  %v890 = vadd.f32 %v834, %v888
  %v891 = vadd.f32 %v835, %v888
  %v892 = vadd.f32 %v836, %v888
  %v893 = vadd.f32 %v837, %v888
  %v894 = vadd.f32 %v838, %v888
  %v895 = vadd.f32 %v839, %v888
  %v896 = vadd.f32 %v840, %v888
  %v897 = vadd.f32 %v841, %v888
  %v898 = vadd.f32 %v842, %v888
  %v899 = vadd.f32 %v843, %v888
  %v900 = vadd.f32 %v844, %v888
  %v901 = vadd.f32 %v845, %v888
  %v902 = vadd.f32 %v846, %v888
  %v903 = vadd.f32 %v847, %v888
  %v904 = vadd.f32 %v848, %v888
  %v905 = vadd.f32 %v849, %v888
  %v906 = vadd.f32 %v850, %v888
  %v907 = vadd.f32 %v851, %v888
  %v908 = vadd.f32 %v852, %v888
  %v909 = vadd.f32 %v853, %v888
  %v910 = vadd.f32 %v854, %v888
  %v911 = vadd.f32 %v855, %v888
  %v912 = vadd.f32 %v856, %v888
  %v913 = vadd.f32 %v857, %v888
  %v914 = vadd.f32 %v858, %v888
  %v915 = vadd.f32 %v859, %v888
  %v916 = vadd.f32 %v860, %v888
  %v917 = vadd.f32 %v861, %v888
  %v918 = vadd.f32 %v862, %v888
  %v919 = vadd.f32 %v863, %v888
  %v920 = vadd.f32 %v864, %v888
  %v921 = vadd.f32 %v865, %v888
  %v922 = vadd.f32 %v866, %v888
  %v923 = vadd.f32 %v867, %v888
  %v924 = vadd.f32 %v868, %v888
  %v925 = vadd.f32 %v869, %v888
  %v926 = vadd.f32 %v870, %v888
  %v927 = vadd.f32 %v871, %v888
  %v928 = vadd.f32 %v872, %v888
  %v929 = vadd.f32 %v873, %v888
  %v930 = vadd.f32 %v874, %v888
  %v931 = vadd.f32 %v875, %v888
  %v932 = vadd.f32 %v876, %v888
  %v933 = vadd.f32 %v877, %v888
  %v934 = vadd.f32 %v878, %v888
  %v935 = vadd.f32 %v879, %v888
  %v936 = vadd.f32 %v880, %v888
  %v937 = vadd.f32 %v881, %v888
  %v938 = vadd.f32 %v882, %v888
  %v939 = vmax.f32 %v890, 0.0
  %v940 = vmax.f32 %v891, 0.0
  %v941 = vmax.f32 %v892, 0.0
  %v942 = vmax.f32 %v893, 0.0
  %v943 = vmax.f32 %v894, 0.0
  %v944 = vmax.f32 %v895, 0.0
  %v945 = vmax.f32 %v896, 0.0
  %v946 = vmax.f32 %v897, 0.0
  %v947 = vmax.f32 %v898, 0.0
  %v948 = vmax.f32 %v899, 0.0
  %v949 = vmax.f32 %v900, 0.0
  %v950 = vmax.f32 %v901, 0.0
  %v951 = vmax.f32 %v902, 0.0
  %v952 = vmax.f32 %v903, 0.0
  %v953 = vmax.f32 %v904, 0.0
  %v954 = vmax.f32 %v905, 0.0
  %v955 = vmax.f32 %v906, 0.0
  %v956 = vmax.f32 %v907, 0.0
  %v957 = vmax.f32 %v908, 0.0
  %v958 = vmax.f32 %v909, 0.0
  %v959 = vmax.f32 %v910, 0.0
  %v960 = vmax.f32 %v911, 0.0
  %v961 = vmax.f32 %v912, 0.0
  %v962 = vmax.f32 %v913, 0.0
  %v963 = vmax.f32 %v914, 0.0
  %v964 = vmax.f32 %v915, 0.0
  %v965 = vmax.f32 %v916, 0.0
  %v966 = vmax.f32 %v917, 0.0
  %v967 = vmax.f32 %v918, 0.0
  %v968 = vmax.f32 %v919, 0.0
  %v969 = vmax.f32 %v920, 0.0
  %v970 = vmax.f32 %v921, 0.0
  %v971 = vmax.f32 %v922, 0.0
  %v972 = vmax.f32 %v923, 0.0
  %v973 = vmax.f32 %v924, 0.0
  %v974 = vmax.f32 %v925, 0.0
  %v975 = vmax.f32 %v926, 0.0
  %v976 = vmax.f32 %v927, 0.0
  %v977 = vmax.f32 %v928, 0.0
  %v978 = vmax.f32 %v929, 0.0
  %v979 = vmax.f32 %v930, 0.0
  %v980 = vmax.f32 %v931, 0.0
  %v981 = vmax.f32 %v932, 0.0
  %v982 = vmax.f32 %v933, 0.0
  %v983 = vmax.f32 %v934, 0.0
  %v984 = vmax.f32 %v935, 0.0
  %v985 = vmax.f32 %v936, 0.0
  %v986 = vmax.f32 %v937, 0.0
  %v987 = vmax.f32 %v938, 0.0
  %988 = vst.msk [vmem:[%s4] sm:$0xff] %vm406, %v939
  %989 = vst.msk [vmem:[%s4 + $0x8] sm:$0xff] %vm406, %v940
  %990 = vst.msk [vmem:[%s4 + $0x10] sm:$0xff] %vm406, %v941
  %991 = vst.msk [vmem:[%s4 + $0x18] sm:$0xff] %vm406, %v942
  %992 = vst.msk [vmem:[%s4 + $0x20] sm:$0xff] %vm406, %v943
  %993 = vst.msk [vmem:[%s4 + $0x28] sm:$0xff] %vm406, %v944
  %994 = vst.msk [vmem:[%s4 + $0x30] sm:$0xff] %vm406, %v945
  %995 = vst.msk [vmem:[%s4 + $0x38] sm:$0xff] %vm406, %v946
  %996 = vst.msk [vmem:[%s4 + $0x40] sm:$0xff] %vm406, %v947
  %997 = vst.msk [vmem:[%s4 + $0x48] sm:$0xff] %vm406, %v948
  %998 = vst.msk [vmem:[%s4 + $0x50] sm:$0xff] %vm406, %v949
  %999 = vst.msk [vmem:[%s4 + $0x58] sm:$0xff] %vm406, %v950
  %1000 = vst.msk [vmem:[%s4 + $0x60] sm:$0xff] %vm406, %v951
  %1001 = vst.msk [vmem:[%s4 + $0x68] sm:$0xff] %vm406, %v952
  %1002 = vst.msk [vmem:[%s4 + $0x70] sm:$0xff] %vm406, %v953
  %1003 = vst.msk [vmem:[%s4 + $0x78] sm:$0xff] %vm406, %v954
  %1004 = vst.msk [vmem:[%s4 + $0x80] sm:$0xff] %vm406, %v955
  %1005 = vst.msk [vmem:[%s4 + $0x88] sm:$0xff] %vm406, %v956
  %1006 = vst.msk [vmem:[%s4 + $0x90] sm:$0xff] %vm406, %v957
  %1007 = vst.msk [vmem:[%s4 + $0x98] sm:$0xff] %vm406, %v958
  %1008 = vst.msk [vmem:[%s4 + $0xa0] sm:$0xff] %vm406, %v959
  %1009 = vst.msk [vmem:[%s4 + $0xa8] sm:$0xff] %vm406, %v960
  %1010 = vst.msk [vmem:[%s4 + $0xb0] sm:$0xff] %vm406, %v961
  %1011 = vst.msk [vmem:[%s4 + $0xb8] sm:$0xff] %vm406, %v962
  %1012 = vst.msk [vmem:[%s4 + $0xc0] sm:$0xff] %vm406, %v963
  %1013 = vst.msk [vmem:[%s4 + $0xc8] sm:$0xff] %vm406, %v964
  %1014 = vst.msk [vmem:[%s4 + $0xd0] sm:$0xff] %vm406, %v965
  %1015 = vst.msk [vmem:[%s4 + $0xd8] sm:$0xff] %vm406, %v966
  %1016 = vst.msk [vmem:[%s4 + $0xe0] sm:$0xff] %vm406, %v967
  %1017 = vst.msk [vmem:[%s4 + $0xe8] sm:$0xff] %vm406, %v968
  %1018 = vst.msk [vmem:[%s4 + $0xf0] sm:$0xff] %vm406, %v969
  %1019 = vst.msk [vmem:[%s4 + $0xf8] sm:$0xff] %vm406, %v970
  %1020 = vst.msk [vmem:[%s4 + $0x100] sm:$0xff] %vm406, %v971
  %1021 = vst.msk [vmem:[%s4 + $0x108] sm:$0xff] %vm406, %v972
  %1022 = vst.msk [vmem:[%s4 + $0x110] sm:$0xff] %vm406, %v973
  %1023 = vst.msk [vmem:[%s4 + $0x118] sm:$0xff] %vm406, %v974
  %1024 = vst.msk [vmem:[%s4 + $0x120] sm:$0xff] %vm406, %v975
  %1025 = vst.msk [vmem:[%s4 + $0x128] sm:$0xff] %vm406, %v976
  %1026 = vst.msk [vmem:[%s4 + $0x130] sm:$0xff] %vm406, %v977
  %1027 = vst.msk [vmem:[%s4 + $0x138] sm:$0xff] %vm406, %v978
  %1028 = vst.msk [vmem:[%s4 + $0x140] sm:$0xff] %vm406, %v979
  %1029 = vst.msk [vmem:[%s4 + $0x148] sm:$0xff] %vm406, %v980
  %1030 = vst.msk [vmem:[%s4 + $0x150] sm:$0xff] %vm406, %v981
  %1031 = vst.msk [vmem:[%s4 + $0x158] sm:$0xff] %vm406, %v982
  %1032 = vst.msk [vmem:[%s4 + $0x160] sm:$0xff] %vm406, %v983
  %1033 = vst.msk [vmem:[%s4 + $0x168] sm:$0xff] %vm406, %v984
  %1034 = vst.msk [vmem:[%s4 + $0x170] sm:$0xff] %vm406, %v985
  %1035 = vst.msk [vmem:[%s4 + $0x178] sm:$0xff] %vm406, %v986
  %1036 = vst.msk [vmem:[%s4 + $0x180] sm:$0xff] %vm406, %v987
  // Predicated region
  $region18: #{cae_forward.13} parent=0 // pred_check
    _
  $region19: #{cae_forward.13} parent=0 // pred_check_branch
    %1038 = sbr.rel (0) target = $region21
  $region20: #{cae_forward.13} parent=0 // pred_region
    _
  $region21: #{cae_forward.13} parent=0 // pred_fallthru
    _
  // Predicated region
  $region22: #{cae_forward.13} parent=0 // pred_check
    _
  $region23: #{cae_forward.13} parent=0 // pred_check_branch
    %1040 = sbr.rel (0) target = $region25
  $region24: #{cae_forward.13} parent=0 // pred_region
    _
  $region25: #{cae_forward.13} parent=0 // pred_fallthru
    _

</llo_original>
